<compile_context>
chip_gen: v7x
topology: tpu7x:2x2x1
jax: 0.10.0
libtpu: 0.0.40
codegen_flags: <defaults>
</compile_context>

<pallas_src>
import jax
import jax.numpy as jnp
import numpy as np
from jax.experimental import pallas as pl
from jax.experimental.pallas import tpu as pltpu

_PAD_DTYPE = jnp.bfloat16          # dtype of the padded depthwise scratch


def _round_up(x, m):
    return (x + m - 1) // m * m


def _vmem_capacity_bytes():
    """Per-core VMEM capacity; conservative 64 MiB (v7x) fallback if the query fails."""
    try:
        cap = int(pltpu.get_tpu_info().vmem_capacity_bytes)
        if cap > 0:
            return cap
    except Exception:
        pass
    return 64 << 20


def _num_tensorcores():
    """Best-effort TensorCore count per chip (v5e/v6e: 1, v7x: 2); defaults to 1."""
    try:
        info = pltpu.get_tpu_info()
        for name in ("num_cores", "core_count", "num_tensorcores"):
            v = getattr(info, name, None)
            if v:
                return int(v)
    except Exception:
        pass
    try:
        return int(getattr(jax.devices()[0], "num_cores", 1) or 1)
    except Exception:
        return 1


def _geometry(H, W, K, stride):
    pad = K // 2
    # Interior column offset aligned to the bf16 sublane packing (16) so the big interior
    # store into the padded scratch is unmasked.
    pad_l = 0 if pad == 0 else _round_up(pad, 16)
    Ho = (H + 2 * pad - K) // stride + 1
    Wo = (W + 2 * pad - K) // stride + 1
    H_ext = H + 2 * pad
    W_ext = pad_l + W + pad
    return pad, pad_l, Ho, Wo, H_ext, W_ext


def _pick_batch_block(N, live_bytes, budget, num_cores):
    """Largest divisor of N whose live-bytes estimate fits the VMEM budget; on multi-TC chips
    keep at least num_cores grid steps so the parallel batch axis has work for every core."""
    best = 1
    for cand in range(1, N + 1):
        if N % cand:
            continue
        if live_bytes(cand) > budget:
            continue
        if num_cores > 1 and cand > 1 and (N // cand) < num_cores:
            continue
        best = cand
    return best


def _prepare_params(p, Cin, Cexp, Cout):
    """Fold BN scales into the conv weights, zero-pad every channel axis to a multiple of 128
    (lane-dense) and cast the 1x1-conv weights to bf16.  Zero channel padding is semantics
    preserving: padded channels stay exactly 0 through every stage and are sliced off in the
    wrapper."""
    Cin_p, Cexp_p, Cout_p = (_round_up(c, 128) for c in (Cin, Cexp, Cout))
    Csq = p["w_se1"].shape[1]
    Csq_p = _round_up(Csq, 128)

    def pad2(a, r, c):
        return jnp.pad(a, ((0, r - a.shape[0]), (0, c - a.shape[1])))

    w_exp = pad2(p["w_exp"] * p["bn1_s"], Cin_p, Cexp_p).astype(jnp.bfloat16)
    b1 = pad2(p["bn1_b"], 1, Cexp_p)
    w_dw = jnp.pad(p["w_dw"] * p["bn2_s"][0],
                   ((0, 0), (0, 0), (0, Cexp_p - Cexp)))
    b2 = pad2(p["bn2_b"], 1, Cexp_p)
    w_se1 = pad2(p["w_se1"], Cexp_p, Csq_p)
    b_se1 = pad2(p["b_se1"], 1, Csq_p)
    w_se2 = pad2(p["w_se2"], Csq_p, Cexp_p)
    b_se2 = pad2(p["b_se2"], 1, Cexp_p)
    w_proj = pad2(p["w_proj"] * p["bn3_s"], Cexp_p, Cout_p).astype(jnp.bfloat16)
    b3 = pad2(p["bn3_b"], 1, Cout_p)
    ordered = [w_exp, b1, w_dw, b2, w_se1, b_se1, w_se2, b_se2, w_proj, b3]
    return ordered, (Cin_p, Cexp_p, Cout_p, Csq_p)


def _build_kernel(bn, H, W, Cin_p, Cexp_p, Cout_p, K, stride,
                  use_expand, use_se, use_residual):
    pad, pad_l, Ho, Wo, H_ext, W_ext = _geometry(H, W, K, stride)
    pad_dt = _PAD_DTYPE

    def kernel(x_ref,
               w_exp_ref, b1_ref, w_dw_ref, b2_ref,
               w_se1_ref, b_se1_ref, w_se2_ref, b_se2_ref,
               w_proj_ref, b3_ref,
               o_ref, pad_ref, acc_ref):
        # ---- 1x1 expansion conv (bf16 operands, f32 MXU accumulation) + BN bias + Swish ----
        if use_expand:
            h = jnp.dot(x_ref[...].reshape(bn * H * W, Cin_p), w_exp_ref[...],
                        preferred_element_type=jnp.float32)
            h = h + b1_ref[...]
            h = (h * jax.nn.sigmoid(h)).reshape(bn, H, W, Cexp_p)    # Swish
        else:
            h = x_ref[...]                                           # Cin_p == Cexp_p

        # ---- depthwise KxK conv (padding=K//2, stride) + BN bias + Swish ----
        # Halo strips are (re)zeroed each step: VMEM scratch is not zero-initialized and a
        # program_id==0 guard is unsafe when the parallel batch axis is split across cores.
        # TODO(synk): a zero-once-per-core flag needs initialized per-core scratch, which Pallas
        # does not provide; the strips are thin so this costs little.
        if pad > 0:
            pad_ref[:, 0:pad, :, :] = jnp.zeros((bn, pad, W_ext, Cexp_p), pad_dt)
            pad_ref[:, pad + H:H_ext, :, :] = jnp.zeros((bn, pad, W_ext, Cexp_p), pad_dt)
            pad_ref[:, :, pad_l - pad:pad_l, :] = jnp.zeros((bn, H_ext, pad, Cexp_p), pad_dt)
            pad_ref[:, :, pad_l + W:W_ext, :] = jnp.zeros((bn, H_ext, pad, Cexp_p), pad_dt)
        # Interior store is sublane-aligned (pad_l is a multiple of the bf16 packing) -> unmasked.
        pad_ref[:, pad:pad + H, pad_l:pad_l + W, :] = h.astype(pad_dt)

        w_dw = w_dw_ref[...]                               # (K, K, Cexp_p) f32, BN scale folded
        b2 = b2_ref[...].reshape(1, 1, 1, Cexp_p)

        def tap(dy, dx):
            c0 = pad_l - pad + dx
            if stride == 1:
                win = pad_ref[:, dy:dy + Ho, c0:c0 + Wo, :]
            else:
                # Strided window read straight from the scratch (no full-span load + compaction).
                # TODO(synk): fall back to a dense load + lax.slice if strided sublane loads do
                # not lower on a given TPU generation.
                win = pad_ref[:, pl.ds(dy, Ho, stride=stride),
                              pl.ds(c0, Wo, stride=stride), :]
            return win * w_dw[dy, dx, :].reshape(1, 1, 1, Cexp_p)    # bf16 * f32 -> f32

        def rows_sum(dys):
            s = None
            for dy in dys:
                for dx in range(K):
                    t = tap(dy, dx)
                    s = t if s is None else s + t
            return s

        # Accumulate several tap rows in vregs between accumulator round trips:
        # K<=3 -> one fused sum + bias + Swish + single store; larger K -> 2-row chunks.
        rows_per_chunk = K if K <= 3 else 2
        chunks = [list(range(r, min(r + rows_per_chunk, K)))
                  for r in range(0, K, rows_per_chunk)]
        if len(chunks) == 1:
            h2 = rows_sum(chunks[0]) + b2
            acc_ref[...] = h2 * jax.nn.sigmoid(h2)                   # Swish
        else:
            acc_ref[...] = rows_sum(chunks[0])
            for ch in chunks[1:-1]:
                acc_ref[...] = acc_ref[...] + rows_sum(ch)
            h2 = acc_ref[...] + rows_sum(chunks[-1]) + b2
            acc_ref[...] = h2 * jax.nn.sigmoid(h2)                   # Swish

        # acc_ref now holds the post-Swish depthwise output; SE pooling / gating and the
        # projection read it from this explicit buffer (no extra compiler-materialized temp).
        if use_se:
            pooled = jnp.mean(acc_ref[...].reshape(bn, Ho * Wo, Cexp_p), axis=1)
            s = jnp.dot(pooled, w_se1_ref[...],
                        preferred_element_type=jnp.float32) + b_se1_ref[...]
            s = s * jax.nn.sigmoid(s)                                # Swish
            s = jnp.dot(s, w_se2_ref[...],
                        preferred_element_type=jnp.float32) + b_se2_ref[...]
            gate = jax.nn.sigmoid(s)                                 # (bn, Cexp_p)
            hproj = (acc_ref[...].reshape(bn, Ho * Wo, Cexp_p)
                     * gate[:, None, :]).astype(jnp.bfloat16)
        else:
            hproj = acc_ref[...].reshape(bn, Ho * Wo, Cexp_p).astype(jnp.bfloat16)

        # ---- 1x1 projection conv (bf16 operands, f32 MXU accumulation) + BN bias ----
        out = jnp.dot(hproj.reshape(bn * Ho * Wo, Cexp_p), w_proj_ref[...],
                      preferred_element_type=jnp.float32)
        out = (out + b3_ref[...]).reshape(bn, Ho, Wo, Cout_p)

        if use_residual:                                   # eval mode: no stochastic dropout
            out = out + x_ref[...].astype(jnp.float32)

        o_ref[...] = out.astype(o_ref.dtype)               # bf16 writeback

    return kernel


def mbconv_forward(x_nchw, params, *, kernel_size, stride, expansion_factor,
                   se_ratio, batch_block=None):
    N, Cin, H, W = x_nchw.shape
    K = kernel_size
    Cexp = params["w_dw"].shape[-1]
    Cout = params["w_proj"].shape[-1]
    use_expand = expansion_factor != 1
    use_se = se_ratio > 0
    use_residual = (Cin == Cout) and (stride == 1)

    ordered, (Cin_p, Cexp_p, Cout_p, _) = _prepare_params(params, Cin, Cexp, Cout)
    pad, pad_l, Ho, Wo, H_ext, W_ext = _geometry(H, W, K, stride)

    # --- generation-aware VMEM budget + batch-block choice ---
    capacity = _vmem_capacity_bytes()            # ~64 MiB v7x, ~128 MiB v5e/v6e
    budget = int(0.8 * capacity)                 # leave headroom for compiler temporaries
    num_cores = _num_tensorcores()
    w_bytes = sum(int(a.size) * a.dtype.itemsize for a in ordered)

    def nbytes(shape, itemsize):
        return int(np.prod(shape)) * itemsize

    def live_bytes(bn):
        return (2 * nbytes((bn, H, W, Cin_p), 2)           # bf16 input block, double-buffered
                + 2 * nbytes((bn, Ho, Wo, Cout_p), 2)      # bf16 output block, double-buffered
                + 2 * w_bytes                              # weights (conservative 2x buffers)
                + nbytes((bn, H_ext, W_ext, Cexp_p), 2)    # bf16 padded depthwise scratch
                + nbytes((bn, Ho, Wo, Cexp_p), 4)          # f32 accumulator scratch
                + 2 * nbytes((bn, H, W, Cexp_p), 4))       # f32 temporaries head-room

    bn = batch_block if batch_block is not None else _pick_batch_block(
        N, live_bytes, budget, num_cores)
    assert N % bn == 0
    vmem_limit = int(min(budget, max(16 << 20, int(1.25 * live_bytes(bn)))))

    kernel = _build_kernel(bn, H, W, Cin_p, Cexp_p, Cout_p, K, stride,
                           use_expand, use_se, use_residual)

    # NCHW -> NHWC, bf16 input DMA, channels zero-padded to a lane-dense multiple of 128.
    # TODO(synk): keep the surrounding model NHWC / channel-padded (and consider feeding the
    # unpadded Cin lane width for early stages) so these layout/pad ops disappear entirely.
    x = jnp.transpose(x_nchw, (0, 2, 3, 1)).astype(jnp.bfloat16)
    x = jnp.pad(x, ((0, 0), (0, 0), (0, 0), (0, Cin_p - Cin)))

    def full_spec(a):
        nd = a.ndim
        return pl.BlockSpec(a.shape, lambda *_: (0,) * nd)

    in_specs = [pl.BlockSpec((bn, H, W, Cin_p), lambda i: (i, 0, 0, 0))]
    in_specs += [full_spec(a) for a in ordered]
    out_specs = pl.BlockSpec((bn, Ho, Wo, Cout_p), lambda i: (i, 0, 0, 0))

    grid_spec = pltpu.PrefetchScalarGridSpec(
        num_scalar_prefetch=0,
        grid=(N // bn,),                                   # batch blocks, one per step
        in_specs=in_specs,
        out_specs=out_specs,
        scratch_shapes=[pltpu.VMEM((bn, H_ext, W_ext, Cexp_p), _PAD_DTYPE),
                        pltpu.VMEM((bn, Ho, Wo, Cexp_p), jnp.float32)],
    )

    out_nhwc = pl.pallas_call(
        kernel,
        out_shape=jax.ShapeDtypeStruct((N, Ho, Wo, Cout_p), jnp.bfloat16),
        grid_spec=grid_spec,
        compiler_params=pltpu.CompilerParams(
            dimension_semantics=("parallel",),
            vmem_limit_bytes=vmem_limit),
    )(x, *ordered)

    out = out_nhwc[..., :Cout]                             # drop lane padding
    return jnp.transpose(out, (0, 3, 1, 2))                # NHWC -> NCHW (bf16)


def init_params(key, Cin, Cout, kernel_size, expansion_factor, se_ratio,
                eps=1e-5):
    """Deterministic synthetic weights matching the module's parameter shapes (raw, unfolded)."""
    Cexp = Cin * expansion_factor
    squeeze_factor = int(1.0 / se_ratio) if se_ratio > 0 else 4
    Csq = max(1, Cexp // squeeze_factor)
    ks = list(jax.random.split(key, 10))

    def nrm(k, shape, scale):
        return scale * jax.random.normal(k, shape, jnp.float32)

    def bn_fold(k, C):
        kg, kb, km, kv = jax.random.split(k, 4)
        gamma = 1.0 + 0.1 * jax.random.normal(kg, (C,), jnp.float32)
        beta = 0.1 * jax.random.normal(kb, (C,), jnp.float32)
        mean = 0.1 * jax.random.normal(km, (C,), jnp.float32)
        var = 1.0 + 0.1 * jnp.abs(jax.random.normal(kv, (C,), jnp.float32))
        scale = gamma * jax.lax.rsqrt(var + eps)
        bias = beta - mean * scale
        return scale[None, :], bias[None, :]

    bn1_s, bn1_b = bn_fold(ks[0], Cexp)
    bn2_s, bn2_b = bn_fold(ks[1], Cexp)
    bn3_s, bn3_b = bn_fold(ks[2], Cout)
    return dict(
        w_exp=nrm(ks[3], (Cin, Cexp), 1.0 / np.sqrt(Cin)),
        bn1_s=bn1_s, bn1_b=bn1_b,
        w_dw=nrm(ks[4], (kernel_size, kernel_size, Cexp), 1.0 / kernel_size),
        bn2_s=bn2_s, bn2_b=bn2_b,
        w_se1=nrm(ks[5], (Cexp, Csq), 1.0 / np.sqrt(Cexp)),
        b_se1=nrm(ks[6], (1, Csq), 0.1),
        w_se2=nrm(ks[7], (Csq, Cexp), 1.0 / np.sqrt(Csq)),
        b_se2=nrm(ks[8], (1, Cexp), 0.1),
        w_proj=nrm(ks[9], (Cexp, Cout), 1.0 / np.sqrt(Cexp)),
        bn3_s=bn3_s, bn3_b=bn3_b,
    )


def mbconv_reference(x_nchw, p, *, kernel_size, stride, expansion_factor,
                     se_ratio):
    """Pure-JAX (XLA) reference of the eval-mode module.  BatchNorm is folded exactly in f32 and
    the bf16 rounding points of the kernel (input cast, depthwise-scratch storage, 1x1-conv
    operand casts) are mirrored, so the remaining difference is accumulation order,
    transcendental rounding and the bf16 output cast."""
    N, Cin, H, W = x_nchw.shape
    K = kernel_size
    pad = K // 2
    Ho = (H + 2 * pad - K) // stride + 1
    Wo = (W + 2 * pad - K) // stride + 1
    span_h = (Ho - 1) * stride + 1
    span_w = (Wo - 1) * stride + 1
    Cout = p["w_proj"].shape[-1]
    use_residual = (Cin == Cout) and (stride == 1)

    x = jnp.transpose(x_nchw, (0, 2, 3, 1)).astype(jnp.bfloat16).astype(jnp.float32)
    h = x
    if expansion_factor != 1:
        w_exp = (p["w_exp"] * p["bn1_s"]).astype(jnp.bfloat16)
        h = jnp.einsum("nhwc,cd->nhwd", x.astype(jnp.bfloat16), w_exp,
                       preferred_element_type=jnp.float32)
        h = h + p["bn1_b"]
        h = h * jax.nn.sigmoid(h)
    h = h.astype(jnp.bfloat16).astype(jnp.float32)         # mirrors the bf16 depthwise scratch
    hp = jnp.pad(h, ((0, 0), (pad, pad), (pad, pad), (0, 0)))
    w_dw = p["w_dw"] * p["bn2_s"][0]
    acc = None
    for dy in range(K):
        row = None
        for dx in range(K):
            win = hp[:, dy:dy + span_h:stride, dx:dx + span_w:stride, :]
            term = win * w_dw[dy, dx]
            row = term if row is None else row + term
        acc = row if acc is None else acc + row
    h = acc + p["bn2_b"]
    h = h * jax.nn.sigmoid(h)
    if se_ratio > 0:
        pooled = jnp.mean(h, axis=(1, 2))
        s = pooled @ p["w_se1"] + p["b_se1"]
        s = s * jax.nn.sigmoid(s)
        s = s @ p["w_se2"] + p["b_se2"]
        h = h * jax.nn.sigmoid(s)[:, None, None, :]
    w_proj = (p["w_proj"] * p["bn3_s"]).astype(jnp.bfloat16)
    out = jnp.einsum("nhwc,cd->nhwd", h.astype(jnp.bfloat16), w_proj,
                     preferred_element_type=jnp.float32)
    out = out + p["bn3_b"]
    if use_residual:
        out = out + x
    return jnp.transpose(out, (0, 3, 1, 2))


if __name__ == "__main__":
    # Small MBConv config: in=out=4 channels, 3x3 depthwise, stride 1, expand 6, SE 0.25.
    N, Cin, H, W = 2, 4, 16, 16
    Cout, K, stride, expansion, se_ratio = 4, 3, 1, 6, 0.25

    key = jax.random.PRNGKey(0)
    kx, kp = jax.random.split(key)
    x_nchw = jax.random.normal(kx, (N, Cin, H, W), jnp.float32)
    params = init_params(kp, Cin, Cout, K, expansion, se_ratio)

    out = mbconv_forward(x_nchw, params, kernel_size=K, stride=stride,
                         expansion_factor=expansion, se_ratio=se_ratio)
    out = jax.block_until_ready(out)

    ref = mbconv_reference(x_nchw, params, kernel_size=K, stride=stride,
                           expansion_factor=expansion, se_ratio=se_ratio)
    # Tolerance covers the mirrored bf16 rounding points plus the bf16 output cast.
    np.testing.assert_allclose(np.asarray(out.astype(jnp.float32)),
                               np.asarray(ref), rtol=2e-2, atol=2e-2)

    # TODO(synk): training-mode stochastic (per-sample dropout) residual branch not implemented
    # (inference path only, matching module.eval()).
    print("KERNEL_OK")
</pallas_src>

<mosaic_0001>
module attributes {stable_mosaic.version = 11 : i64} {
  func.func @kernel(%arg0: i32, %arg1: memref<2x16x16x128xbf16, #tpu.memory_space<vmem>>, %arg2: memref<128x128xbf16, #tpu.memory_space<vmem>>, %arg3: memref<1x128xf32, #tpu.memory_space<vmem>>, %arg4: memref<3x3x128xf32, #tpu.memory_space<vmem>>, %arg5: memref<1x128xf32, #tpu.memory_space<vmem>>, %arg6: memref<128x128xf32, #tpu.memory_space<vmem>>, %arg7: memref<1x128xf32, #tpu.memory_space<vmem>>, %arg8: memref<128x128xf32, #tpu.memory_space<vmem>>, %arg9: memref<1x128xf32, #tpu.memory_space<vmem>>, %arg10: memref<128x128xbf16, #tpu.memory_space<vmem>>, %arg11: memref<1x128xf32, #tpu.memory_space<vmem>>, %arg12: memref<2x16x16x128xbf16, #tpu.memory_space<vmem>>, %arg13: memref<2x18x33x128xbf16, #tpu.memory_space<vmem>>, %arg14: memref<2x16x16x128xf32, #tpu.memory_space<vmem>>) attributes {dimension_semantics = [#tpu.dimension_semantics<parallel>], iteration_bounds = array<i64: 1>, scalar_prefetch = 0 : i64, scratch_operands = 2 : i64, tpu.core_type = #tpu.core_type<tc>, window_params = [{transform_indices = @transform_0, window_bounds = array<i64: 2, 16, 16, 128>}, {pipeline_mode = #tpu.pipeline_mode<synchronous>, transform_indices = @transform_1, window_bounds = array<i64: 128, 128>}, {pipeline_mode = #tpu.pipeline_mode<synchronous>, transform_indices = @transform_2, window_bounds = array<i64: 1, 128>}, {pipeline_mode = #tpu.pipeline_mode<synchronous>, transform_indices = @transform_3, window_bounds = array<i64: 3, 3, 128>}, {pipeline_mode = #tpu.pipeline_mode<synchronous>, transform_indices = @transform_4, window_bounds = array<i64: 1, 128>}, {pipeline_mode = #tpu.pipeline_mode<synchronous>, transform_indices = @transform_5, window_bounds = array<i64: 128, 128>}, {pipeline_mode = #tpu.pipeline_mode<synchronous>, transform_indices = @transform_6, window_bounds = array<i64: 1, 128>}, {pipeline_mode = #tpu.pipeline_mode<synchronous>, transform_indices = @transform_7, window_bounds = array<i64: 128, 128>}, {pipeline_mode = #tpu.pipeline_mode<synchronous>, transform_indices = @transform_8, window_bounds = array<i64: 1, 128>}, {pipeline_mode = #tpu.pipeline_mode<synchronous>, transform_indices = @transform_9, window_bounds = array<i64: 128, 128>}, {pipeline_mode = #tpu.pipeline_mode<synchronous>, transform_indices = @transform_10, window_bounds = array<i64: 1, 128>}, {transform_indices = @transform_11, window_bounds = array<i64: 2, 16, 16, 128>}]} {
    %c0 = arith.constant 0 : index
    %c0_0 = arith.constant 0 : index
    %c0_1 = arith.constant 0 : index
    %c0_2 = arith.constant 0 : index
    %0 = vector.load %arg1[%c0, %c0_0, %c0_1, %c0_2] : memref<2x16x16x128xbf16, #tpu.memory_space<vmem>>, vector<2x16x16x128xbf16>
    %1 = vector.shape_cast %0 : vector<2x16x16x128xbf16> to vector<512x128xbf16>
    %c0_3 = arith.constant 0 : index
    %c0_4 = arith.constant 0 : index
    %2 = vector.load %arg2[%c0_3, %c0_4] : memref<128x128xbf16, #tpu.memory_space<vmem>>, vector<128x128xbf16>
    %cst = arith.constant dense<0.000000e+00> : vector<512x128xf32>
    %3 = tpu.matmul %1, %2, %cst {dimension_numbers = #tpu.dot_dimension_numbers<[1], [0], [0], [1], [0, 0, 1, 1], [], []>} : vector<512x128xbf16>, vector<128x128xbf16>, vector<512x128xf32> -> vector<512x128xf32>
    %c0_5 = arith.constant 0 : index
    %c0_6 = arith.constant 0 : index
    %4 = vector.load %arg3[%c0_5, %c0_6] : memref<1x128xf32, #tpu.memory_space<vmem>>, vector<1x128xf32>
    %5 = vector.broadcast %4 : vector<1x128xf32> to vector<512x128xf32>
    %6 = arith.addf %3, %5 : vector<512x128xf32>
    %7 = arith.negf %6 : vector<512x128xf32>
    %8 = math.exp %7 : vector<512x128xf32>
    %cst_7 = arith.constant 1.000000e+00 : f32
    %9 = vector.broadcast %cst_7 : f32 to vector<512x128xf32>
    %10 = arith.addf %9, %8 : vector<512x128xf32>
    %11 = arith.divf %9, %10 : vector<512x128xf32>
    %12 = arith.mulf %6, %11 : vector<512x128xf32>
    %13 = vector.shape_cast %12 : vector<512x128xf32> to vector<2x16x16x128xf32>
    %cst_8 = arith.constant 0.000000e+00 : bf16
    %14 = vector.broadcast %cst_8 : bf16 to vector<2x1x33x128xbf16>
    %c0_9 = arith.constant 0 : index
    %c0_10 = arith.constant 0 : index
    %c0_11 = arith.constant 0 : index
    %c0_12 = arith.constant 0 : index
    %15 = vector.load %arg13[%c0_9, %c0_10, %c0_11, %c0_12] : memref<2x18x33x128xbf16, #tpu.memory_space<vmem>>, vector<2x1x33x128xbf16>
    tpu.vector_store %arg13[%c0_9, %c0_10, %c0_11, %c0_12], %14 {strides = array<i32>} : memref<2x18x33x128xbf16, #tpu.memory_space<vmem>>, vector<2x1x33x128xbf16>,
    %cst_13 = arith.constant 0.000000e+00 : bf16
    %16 = vector.broadcast %cst_13 : bf16 to vector<2x1x33x128xbf16>
    %c0_14 = arith.constant 0 : index
    %c17 = arith.constant 17 : index
    %c0_15 = arith.constant 0 : index
    %c0_16 = arith.constant 0 : index
    %17 = vector.load %arg13[%c0_14, %c17, %c0_15, %c0_16] : memref<2x18x33x128xbf16, #tpu.memory_space<vmem>>, vector<2x1x33x128xbf16>
    tpu.vector_store %arg13[%c0_14, %c17, %c0_15, %c0_16], %16 {strides = array<i32>} : memref<2x18x33x128xbf16, #tpu.memory_space<vmem>>, vector<2x1x33x128xbf16>,
    %cst_17 = arith.constant 0.000000e+00 : bf16
    %18 = vector.broadcast %cst_17 : bf16 to vector<2x18x1x128xbf16>
    %c0_18 = arith.constant 0 : index
    %c0_19 = arith.constant 0 : index
    %c15 = arith.constant 15 : index
    %c0_20 = arith.constant 0 : index
    %19 = vector.load %arg13[%c0_18, %c0_19, %c15, %c0_20] : memref<2x18x33x128xbf16, #tpu.memory_space<vmem>>, vector<2x18x1x128xbf16>
    tpu.vector_store %arg13[%c0_18, %c0_19, %c15, %c0_20], %18 {strides = array<i32>} : memref<2x18x33x128xbf16, #tpu.memory_space<vmem>>, vector<2x18x1x128xbf16>,
    %cst_21 = arith.constant 0.000000e+00 : bf16
    %20 = vector.broadcast %cst_21 : bf16 to vector<2x18x1x128xbf16>
    %c0_22 = arith.constant 0 : index
    %c0_23 = arith.constant 0 : index
    %c32 = arith.constant 32 : index
    %c0_24 = arith.constant 0 : index
    %21 = vector.load %arg13[%c0_22, %c0_23, %c32, %c0_24] : memref<2x18x33x128xbf16, #tpu.memory_space<vmem>>, vector<2x18x1x128xbf16>
    tpu.vector_store %arg13[%c0_22, %c0_23, %c32, %c0_24], %20 {strides = array<i32>} : memref<2x18x33x128xbf16, #tpu.memory_space<vmem>>, vector<2x18x1x128xbf16>,
    %22 = arith.truncf %13 : vector<2x16x16x128xf32> to vector<2x16x16x128xbf16>
    %c0_25 = arith.constant 0 : index
    %c1 = arith.constant 1 : index
    %c16 = arith.constant 16 : index
    %c0_26 = arith.constant 0 : index
    %23 = vector.load %arg13[%c0_25, %c1, %c16, %c0_26] : memref<2x18x33x128xbf16, #tpu.memory_space<vmem>>, vector<2x16x16x128xbf16>
    tpu.vector_store %arg13[%c0_25, %c1, %c16, %c0_26], %22 {strides = array<i32>} : memref<2x18x33x128xbf16, #tpu.memory_space<vmem>>, vector<2x16x16x128xbf16>,
    %c0_27 = arith.constant 0 : index
    %c0_28 = arith.constant 0 : index
    %c0_29 = arith.constant 0 : index
    %24 = vector.load %arg4[%c0_27, %c0_28, %c0_29] : memref<3x3x128xf32, #tpu.memory_space<vmem>>, vector<3x3x128xf32>
    %c0_30 = arith.constant 0 : index
    %c0_31 = arith.constant 0 : index
    %25 = vector.load %arg5[%c0_30, %c0_31] : memref<1x128xf32, #tpu.memory_space<vmem>>, vector<1x128xf32>
    %26 = vector.shape_cast %25 : vector<1x128xf32> to vector<1x1x1x128xf32>
    %c0_32 = arith.constant 0 : index
    %c0_33 = arith.constant 0 : index
    %c15_34 = arith.constant 15 : index
    %c0_35 = arith.constant 0 : index
    %27 = vector.load %arg13[%c0_32, %c0_33, %c15_34, %c0_35] : memref<2x18x33x128xbf16, #tpu.memory_space<vmem>>, vector<2x16x16x128xbf16>
    %28 = vector.extract_strided_slice %24 {offsets = [0, 0, 0], sizes = [1, 1, 128], strides = [1, 1, 1]} : vector<3x3x128xf32> to vector<1x1x128xf32>
    %29 = vector.shape_cast %28 : vector<1x1x128xf32> to vector<128xf32>
    %30 = vector.shape_cast %29 : vector<128xf32> to vector<1x1x1x128xf32>
    %31 = arith.extf %27 : vector<2x16x16x128xbf16> to vector<2x16x16x128xf32>
    %32 = vector.broadcast %30 : vector<1x1x1x128xf32> to vector<2x16x16x128xf32>
    %33 = arith.mulf %31, %32 : vector<2x16x16x128xf32>
    %c0_36 = arith.constant 0 : index
    %c0_37 = arith.constant 0 : index
    %c16_38 = arith.constant 16 : index
    %c0_39 = arith.constant 0 : index
    %34 = vector.load %arg13[%c0_36, %c0_37, %c16_38, %c0_39] : memref<2x18x33x128xbf16, #tpu.memory_space<vmem>>, vector<2x16x16x128xbf16>
    %35 = vector.extract_strided_slice %24 {offsets = [0, 1, 0], sizes = [1, 1, 128], strides = [1, 1, 1]} : vector<3x3x128xf32> to vector<1x1x128xf32>
    %36 = vector.shape_cast %35 : vector<1x1x128xf32> to vector<128xf32>
    %37 = vector.shape_cast %36 : vector<128xf32> to vector<1x1x1x128xf32>
    %38 = arith.extf %34 : vector<2x16x16x128xbf16> to vector<2x16x16x128xf32>
    %39 = vector.broadcast %37 : vector<1x1x1x128xf32> to vector<2x16x16x128xf32>
    %40 = arith.mulf %38, %39 : vector<2x16x16x128xf32>
    %41 = arith.addf %33, %40 : vector<2x16x16x128xf32>
    %c0_40 = arith.constant 0 : index
    %c0_41 = arith.constant 0 : index
    %c17_42 = arith.constant 17 : index
    %c0_43 = arith.constant 0 : index
    %42 = vector.load %arg13[%c0_40, %c0_41, %c17_42, %c0_43] : memref<2x18x33x128xbf16, #tpu.memory_space<vmem>>, vector<2x16x16x128xbf16>
    %43 = vector.extract_strided_slice %24 {offsets = [0, 2, 0], sizes = [1, 1, 128], strides = [1, 1, 1]} : vector<3x3x128xf32> to vector<1x1x128xf32>
    %44 = vector.shape_cast %43 : vector<1x1x128xf32> to vector<128xf32>
    %45 = vector.shape_cast %44 : vector<128xf32> to vector<1x1x1x128xf32>
    %46 = arith.extf %42 : vector<2x16x16x128xbf16> to vector<2x16x16x128xf32>
    %47 = vector.broadcast %45 : vector<1x1x1x128xf32> to vector<2x16x16x128xf32>
    %48 = arith.mulf %46, %47 : vector<2x16x16x128xf32>
    %49 = arith.addf %41, %48 : vector<2x16x16x128xf32>
    %c0_44 = arith.constant 0 : index
    %c1_45 = arith.constant 1 : index
    %c15_46 = arith.constant 15 : index
    %c0_47 = arith.constant 0 : index
    %50 = vector.load %arg13[%c0_44, %c1_45, %c15_46, %c0_47] : memref<2x18x33x128xbf16, #tpu.memory_space<vmem>>, vector<2x16x16x128xbf16>
    %51 = vector.extract_strided_slice %24 {offsets = [1, 0, 0], sizes = [1, 1, 128], strides = [1, 1, 1]} : vector<3x3x128xf32> to vector<1x1x128xf32>
    %52 = vector.shape_cast %51 : vector<1x1x128xf32> to vector<128xf32>
    %53 = vector.shape_cast %52 : vector<128xf32> to vector<1x1x1x128xf32>
    %54 = arith.extf %50 : vector<2x16x16x128xbf16> to vector<2x16x16x128xf32>
    %55 = vector.broadcast %53 : vector<1x1x1x128xf32> to vector<2x16x16x128xf32>
    %56 = arith.mulf %54, %55 : vector<2x16x16x128xf32>
    %57 = arith.addf %49, %56 : vector<2x16x16x128xf32>
    %c0_48 = arith.constant 0 : index
    %c1_49 = arith.constant 1 : index
    %c16_50 = arith.constant 16 : index
    %c0_51 = arith.constant 0 : index
    %58 = vector.load %arg13[%c0_48, %c1_49, %c16_50, %c0_51] : memref<2x18x33x128xbf16, #tpu.memory_space<vmem>>, vector<2x16x16x128xbf16>
    %59 = vector.extract_strided_slice %24 {offsets = [1, 1, 0], sizes = [1, 1, 128], strides = [1, 1, 1]} : vector<3x3x128xf32> to vector<1x1x128xf32>
    %60 = vector.shape_cast %59 : vector<1x1x128xf32> to vector<128xf32>
    %61 = vector.shape_cast %60 : vector<128xf32> to vector<1x1x1x128xf32>
    %62 = arith.extf %58 : vector<2x16x16x128xbf16> to vector<2x16x16x128xf32>
    %63 = vector.broadcast %61 : vector<1x1x1x128xf32> to vector<2x16x16x128xf32>
    %64 = arith.mulf %62, %63 : vector<2x16x16x128xf32>
    %65 = arith.addf %57, %64 : vector<2x16x16x128xf32>
    %c0_52 = arith.constant 0 : index
    %c1_53 = arith.constant 1 : index
    %c17_54 = arith.constant 17 : index
    %c0_55 = arith.constant 0 : index
    %66 = vector.load %arg13[%c0_52, %c1_53, %c17_54, %c0_55] : memref<2x18x33x128xbf16, #tpu.memory_space<vmem>>, vector<2x16x16x128xbf16>
    %67 = vector.extract_strided_slice %24 {offsets = [1, 2, 0], sizes = [1, 1, 128], strides = [1, 1, 1]} : vector<3x3x128xf32> to vector<1x1x128xf32>
    %68 = vector.shape_cast %67 : vector<1x1x128xf32> to vector<128xf32>
    %69 = vector.shape_cast %68 : vector<128xf32> to vector<1x1x1x128xf32>
    %70 = arith.extf %66 : vector<2x16x16x128xbf16> to vector<2x16x16x128xf32>
    %71 = vector.broadcast %69 : vector<1x1x1x128xf32> to vector<2x16x16x128xf32>
    %72 = arith.mulf %70, %71 : vector<2x16x16x128xf32>
    %73 = arith.addf %65, %72 : vector<2x16x16x128xf32>
    %c0_56 = arith.constant 0 : index
    %c2 = arith.constant 2 : index
    %c15_57 = arith.constant 15 : index
    %c0_58 = arith.constant 0 : index
    %74 = vector.load %arg13[%c0_56, %c2, %c15_57, %c0_58] : memref<2x18x33x128xbf16, #tpu.memory_space<vmem>>, vector<2x16x16x128xbf16>
    %75 = vector.extract_strided_slice %24 {offsets = [2, 0, 0], sizes = [1, 1, 128], strides = [1, 1, 1]} : vector<3x3x128xf32> to vector<1x1x128xf32>
    %76 = vector.shape_cast %75 : vector<1x1x128xf32> to vector<128xf32>
    %77 = vector.shape_cast %76 : vector<128xf32> to vector<1x1x1x128xf32>
    %78 = arith.extf %74 : vector<2x16x16x128xbf16> to vector<2x16x16x128xf32>
    %79 = vector.broadcast %77 : vector<1x1x1x128xf32> to vector<2x16x16x128xf32>
    %80 = arith.mulf %78, %79 : vector<2x16x16x128xf32>
    %81 = arith.addf %73, %80 : vector<2x16x16x128xf32>
    %c0_59 = arith.constant 0 : index
    %c2_60 = arith.constant 2 : index
    %c16_61 = arith.constant 16 : index
    %c0_62 = arith.constant 0 : index
    %82 = vector.load %arg13[%c0_59, %c2_60, %c16_61, %c0_62] : memref<2x18x33x128xbf16, #tpu.memory_space<vmem>>, vector<2x16x16x128xbf16>
    %83 = vector.extract_strided_slice %24 {offsets = [2, 1, 0], sizes = [1, 1, 128], strides = [1, 1, 1]} : vector<3x3x128xf32> to vector<1x1x128xf32>
    %84 = vector.shape_cast %83 : vector<1x1x128xf32> to vector<128xf32>
    %85 = vector.shape_cast %84 : vector<128xf32> to vector<1x1x1x128xf32>
    %86 = arith.extf %82 : vector<2x16x16x128xbf16> to vector<2x16x16x128xf32>
    %87 = vector.broadcast %85 : vector<1x1x1x128xf32> to vector<2x16x16x128xf32>
    %88 = arith.mulf %86, %87 : vector<2x16x16x128xf32>
    %89 = arith.addf %81, %88 : vector<2x16x16x128xf32>
    %c0_63 = arith.constant 0 : index
    %c2_64 = arith.constant 2 : index
    %c17_65 = arith.constant 17 : index
    %c0_66 = arith.constant 0 : index
    %90 = vector.load %arg13[%c0_63, %c2_64, %c17_65, %c0_66] : memref<2x18x33x128xbf16, #tpu.memory_space<vmem>>, vector<2x16x16x128xbf16>
    %91 = vector.extract_strided_slice %24 {offsets = [2, 2, 0], sizes = [1, 1, 128], strides = [1, 1, 1]} : vector<3x3x128xf32> to vector<1x1x128xf32>
    %92 = vector.shape_cast %91 : vector<1x1x128xf32> to vector<128xf32>
    %93 = vector.shape_cast %92 : vector<128xf32> to vector<1x1x1x128xf32>
    %94 = arith.extf %90 : vector<2x16x16x128xbf16> to vector<2x16x16x128xf32>
    %95 = vector.broadcast %93 : vector<1x1x1x128xf32> to vector<2x16x16x128xf32>
    %96 = arith.mulf %94, %95 : vector<2x16x16x128xf32>
    %97 = arith.addf %89, %96 : vector<2x16x16x128xf32>
    %98 = vector.broadcast %26 : vector<1x1x1x128xf32> to vector<2x16x16x128xf32>
    %99 = arith.addf %97, %98 : vector<2x16x16x128xf32>
    %100 = arith.negf %99 : vector<2x16x16x128xf32>
    %101 = math.exp %100 : vector<2x16x16x128xf32>
    %cst_67 = arith.constant 1.000000e+00 : f32
    %102 = vector.broadcast %cst_67 : f32 to vector<2x16x16x128xf32>
    %103 = arith.addf %102, %101 : vector<2x16x16x128xf32>
    %104 = arith.divf %102, %103 : vector<2x16x16x128xf32>
    %105 = arith.mulf %99, %104 : vector<2x16x16x128xf32>
    %c0_68 = arith.constant 0 : index
    %c0_69 = arith.constant 0 : index
    %c0_70 = arith.constant 0 : index
    %c0_71 = arith.constant 0 : index
    %106 = vector.load %arg14[%c0_68, %c0_69, %c0_70, %c0_71] : memref<2x16x16x128xf32, #tpu.memory_space<vmem>>, vector<2x16x16x128xf32>
    tpu.vector_store %arg14[%c0_68, %c0_69, %c0_70, %c0_71], %105 {strides = array<i32>} : memref<2x16x16x128xf32, #tpu.memory_space<vmem>>, vector<2x16x16x128xf32>,
    %c0_72 = arith.constant 0 : index
    %c0_73 = arith.constant 0 : index
    %c0_74 = arith.constant 0 : index
    %c0_75 = arith.constant 0 : index
    %107 = vector.load %arg14[%c0_72, %c0_73, %c0_74, %c0_75] : memref<2x16x16x128xf32, #tpu.memory_space<vmem>>, vector<2x16x16x128xf32>
    %108 = vector.shape_cast %107 : vector<2x16x16x128xf32> to vector<2x256x128xf32>
    %cst_76 = arith.constant dense<0.000000e+00> : vector<2x128xf32>
    %109 = vector.multi_reduction <add>, %108, %cst_76 [1] : vector<2x256x128xf32> to vector<2x128xf32>
    %cst_77 = arith.constant 2.560000e+02 : f32
    %110 = vector.broadcast %cst_77 : f32 to vector<2x128xf32>
    %111 = arith.divf %109, %110 : vector<2x128xf32>
    %c0_78 = arith.constant 0 : index
    %c0_79 = arith.constant 0 : index
    %112 = vector.load %arg6[%c0_78, %c0_79] : memref<128x128xf32, #tpu.memory_space<vmem>>, vector<128x128xf32>
    %cst_80 = arith.constant dense<0.000000e+00> : vector<2x128xf32>
    %113 = tpu.matmul %111, %112, %cst_80 {dimension_numbers = #tpu.dot_dimension_numbers<[1], [0], [0], [1], [0, 0, 1, 1], [], []>} : vector<2x128xf32>, vector<128x128xf32>, vector<2x128xf32> -> vector<2x128xf32>
    %c0_81 = arith.constant 0 : index
    %c0_82 = arith.constant 0 : index
    %114 = vector.load %arg7[%c0_81, %c0_82] : memref<1x128xf32, #tpu.memory_space<vmem>>, vector<1x128xf32>
    %115 = vector.broadcast %114 : vector<1x128xf32> to vector<2x128xf32>
    %116 = arith.addf %113, %115 : vector<2x128xf32>
    %117 = arith.negf %116 : vector<2x128xf32>
    %118 = math.exp %117 : vector<2x128xf32>
    %cst_83 = arith.constant 1.000000e+00 : f32
    %119 = vector.broadcast %cst_83 : f32 to vector<2x128xf32>
    %120 = arith.addf %119, %118 : vector<2x128xf32>
    %121 = arith.divf %119, %120 : vector<2x128xf32>
    %122 = arith.mulf %116, %121 : vector<2x128xf32>
    %c0_84 = arith.constant 0 : index
    %c0_85 = arith.constant 0 : index
    %123 = vector.load %arg8[%c0_84, %c0_85] : memref<128x128xf32, #tpu.memory_space<vmem>>, vector<128x128xf32>
    %cst_86 = arith.constant dense<0.000000e+00> : vector<2x128xf32>
    %124 = tpu.matmul %122, %123, %cst_86 {dimension_numbers = #tpu.dot_dimension_numbers<[1], [0], [0], [1], [0, 0, 1, 1], [], []>} : vector<2x128xf32>, vector<128x128xf32>, vector<2x128xf32> -> vector<2x128xf32>
    %c0_87 = arith.constant 0 : index
    %c0_88 = arith.constant 0 : index
    %125 = vector.load %arg9[%c0_87, %c0_88] : memref<1x128xf32, #tpu.memory_space<vmem>>, vector<1x128xf32>
    %126 = vector.broadcast %125 : vector<1x128xf32> to vector<2x128xf32>
    %127 = arith.addf %124, %126 : vector<2x128xf32>
    %128 = arith.negf %127 : vector<2x128xf32>
    %129 = math.exp %128 : vector<2x128xf32>
    %cst_89 = arith.constant 1.000000e+00 : f32
    %130 = vector.broadcast %cst_89 : f32 to vector<2x128xf32>
    %131 = arith.addf %130, %129 : vector<2x128xf32>
    %132 = arith.divf %130, %131 : vector<2x128xf32>
    %c0_90 = arith.constant 0 : index
    %c0_91 = arith.constant 0 : index
    %c0_92 = arith.constant 0 : index
    %c0_93 = arith.constant 0 : index
    %133 = vector.load %arg14[%c0_90, %c0_91, %c0_92, %c0_93] : memref<2x16x16x128xf32, #tpu.memory_space<vmem>>, vector<2x16x16x128xf32>
    %134 = vector.shape_cast %133 : vector<2x16x16x128xf32> to vector<2x256x128xf32>
    %135 = vector.shape_cast %132 : vector<2x128xf32> to vector<2x1x128xf32>
    %136 = vector.broadcast %135 : vector<2x1x128xf32> to vector<2x256x128xf32>
    %137 = arith.mulf %134, %136 : vector<2x256x128xf32>
    %138 = arith.truncf %137 : vector<2x256x128xf32> to vector<2x256x128xbf16>
    %139 = vector.shape_cast %138 : vector<2x256x128xbf16> to vector<512x128xbf16>
    %c0_94 = arith.constant 0 : index
    %c0_95 = arith.constant 0 : index
    %140 = vector.load %arg10[%c0_94, %c0_95] : memref<128x128xbf16, #tpu.memory_space<vmem>>, vector<128x128xbf16>
    %cst_96 = arith.constant dense<0.000000e+00> : vector<512x128xf32>
    %141 = tpu.matmul %139, %140, %cst_96 {dimension_numbers = #tpu.dot_dimension_numbers<[1], [0], [0], [1], [0, 0, 1, 1], [], []>} : vector<512x128xbf16>, vector<128x128xbf16>, vector<512x128xf32> -> vector<512x128xf32>
    %c0_97 = arith.constant 0 : index
    %c0_98 = arith.constant 0 : index
    %142 = vector.load %arg11[%c0_97, %c0_98] : memref<1x128xf32, #tpu.memory_space<vmem>>, vector<1x128xf32>
    %143 = vector.broadcast %142 : vector<1x128xf32> to vector<512x128xf32>
    %144 = arith.addf %141, %143 : vector<512x128xf32>
    %145 = vector.shape_cast %144 : vector<512x128xf32> to vector<2x16x16x128xf32>
    %c0_99 = arith.constant 0 : index
    %c0_100 = arith.constant 0 : index
    %c0_101 = arith.constant 0 : index
    %c0_102 = arith.constant 0 : index
    %146 = vector.load %arg1[%c0_99, %c0_100, %c0_101, %c0_102] : memref<2x16x16x128xbf16, #tpu.memory_space<vmem>>, vector<2x16x16x128xbf16>
    %147 = arith.extf %146 : vector<2x16x16x128xbf16> to vector<2x16x16x128xf32>
    %148 = arith.addf %145, %147 : vector<2x16x16x128xf32>
    %149 = arith.truncf %148 : vector<2x16x16x128xf32> to vector<2x16x16x128xbf16>
    %c0_103 = arith.constant 0 : index
    %c0_104 = arith.constant 0 : index
    %c0_105 = arith.constant 0 : index
    %c0_106 = arith.constant 0 : index
    %150 = vector.load %arg12[%c0_103, %c0_104, %c0_105, %c0_106] : memref<2x16x16x128xbf16, #tpu.memory_space<vmem>>, vector<2x16x16x128xbf16>
    tpu.vector_store %arg12[%c0_103, %c0_104, %c0_105, %c0_106], %149 {strides = array<i32>} : memref<2x16x16x128xbf16, #tpu.memory_space<vmem>>, vector<2x16x16x128xbf16>,
    return
  }
  func.func @transform_0(%arg0: i32) -> (i32, i32, i32, i32) {
    %c0_i32 = arith.constant 0 : i32
    %c0_i32_0 = arith.constant 0 : i32
    %c0_i32_1 = arith.constant 0 : i32
    %c0_i32_2 = arith.constant 0 : i32
    return %arg0, %c0_i32, %c0_i32_0, %c0_i32_1 : i32, i32, i32, i32
  }
  func.func @transform_1(%arg0: i32) -> (i32, i32) {
    %c0_i32 = arith.constant 0 : i32
    %c0_i32_0 = arith.constant 0 : i32
    %c0_i32_1 = arith.constant 0 : i32
    return %c0_i32, %c0_i32_0 : i32, i32
  }
  func.func @transform_2(%arg0: i32) -> (i32, i32) {
    %c0_i32 = arith.constant 0 : i32
    %c0_i32_0 = arith.constant 0 : i32
    %c0_i32_1 = arith.constant 0 : i32
    return %c0_i32, %c0_i32_0 : i32, i32
  }
  func.func @transform_3(%arg0: i32) -> (i32, i32, i32) {
    %c0_i32 = arith.constant 0 : i32
    %c0_i32_0 = arith.constant 0 : i32
    %c0_i32_1 = arith.constant 0 : i32
    %c0_i32_2 = arith.constant 0 : i32
    return %c0_i32, %c0_i32_0, %c0_i32_1 : i32, i32, i32
  }
  func.func @transform_4(%arg0: i32) -> (i32, i32) {
    %c0_i32 = arith.constant 0 : i32
    %c0_i32_0 = arith.constant 0 : i32
    %c0_i32_1 = arith.constant 0 : i32
    return %c0_i32, %c0_i32_0 : i32, i32
  }
  func.func @transform_5(%arg0: i32) -> (i32, i32) {
    %c0_i32 = arith.constant 0 : i32
    %c0_i32_0 = arith.constant 0 : i32
    %c0_i32_1 = arith.constant 0 : i32
    return %c0_i32, %c0_i32_0 : i32, i32
  }
  func.func @transform_6(%arg0: i32) -> (i32, i32) {
    %c0_i32 = arith.constant 0 : i32
    %c0_i32_0 = arith.constant 0 : i32
    %c0_i32_1 = arith.constant 0 : i32
    return %c0_i32, %c0_i32_0 : i32, i32
  }
  func.func @transform_7(%arg0: i32) -> (i32, i32) {
    %c0_i32 = arith.constant 0 : i32
    %c0_i32_0 = arith.constant 0 : i32
    %c0_i32_1 = arith.constant 0 : i32
    return %c0_i32, %c0_i32_0 : i32, i32
  }
  func.func @transform_8(%arg0: i32) -> (i32, i32) {
    %c0_i32 = arith.constant 0 : i32
    %c0_i32_0 = arith.constant 0 : i32
    %c0_i32_1 = arith.constant 0 : i32
    return %c0_i32, %c0_i32_0 : i32, i32
  }
  func.func @transform_9(%arg0: i32) -> (i32, i32) {
    %c0_i32 = arith.constant 0 : i32
    %c0_i32_0 = arith.constant 0 : i32
    %c0_i32_1 = arith.constant 0 : i32
    return %c0_i32, %c0_i32_0 : i32, i32
  }
  func.func @transform_10(%arg0: i32) -> (i32, i32) {
    %c0_i32 = arith.constant 0 : i32
    %c0_i32_0 = arith.constant 0 : i32
    %c0_i32_1 = arith.constant 0 : i32
    return %c0_i32, %c0_i32_0 : i32, i32
  }
  func.func @transform_11(%arg0: i32) -> (i32, i32, i32, i32) {
    %c0_i32 = arith.constant 0 : i32
    %c0_i32_0 = arith.constant 0 : i32
    %c0_i32_1 = arith.constant 0 : i32
    %c0_i32_2 = arith.constant 0 : i32
    return %arg0, %c0_i32, %c0_i32_0, %c0_i32_1 : i32, i32, i32, i32
  }
}

</mosaic_0001>

<llo_original>
// kernel: tpu_custom_call.1
$region0: #{tpu_custom_call.1}
  #allocation0 [shape = 'u32[]', space=smem, size = 0x4, offset = 0x4, fixed_abs, tag = 'smem constant byte address 0x4 - core index']
  #allocation1 [shape = 'u32[144,128]{1,0:T(1,128)}', space=vmem, size = 0x12000, scoped, tag = 'internal scratch']
  #allocation2 [shape = 'bf16[2,18,33,128]{3,2,1,0:T(8,128)(2,1)}', space=vmem, size = 0x5a000, scoped, tag = 'scratch operand']
  #allocation3 [shape = 'f32[2,16,16,128]{3,2,1,0:T(8,128)}', space=vmem, size = 0x40000, scoped, tag = 'scratch operand']
  %s0 = inlined_call_operand.hbm [shape: bf16[2,16,16,128], index: 0, kind: input, shape index: {}]
  %s1 = inlined_call_operand.hbm [shape: bf16[128,128], index: 1, kind: input, shape index: {}]
  %s2 = inlined_call_operand.vmem [shape: f32[1,128], index: 2, kind: input, shape index: {}]
  %s3 = inlined_call_operand.hbm [shape: f32[3,3,128], index: 3, kind: input, shape index: {}]
  %s4 = inlined_call_operand.vmem [shape: f32[1,128], index: 4, kind: input, shape index: {}]
  %s5 = inlined_call_operand.hbm [shape: f32[128,128], index: 5, kind: input, shape index: {}]
  %s6 = inlined_call_operand.vmem [shape: f32[1,128], index: 6, kind: input, shape index: {}]
  %s7 = inlined_call_operand.hbm [shape: f32[128,128], index: 7, kind: input, shape index: {}]
  %s8 = inlined_call_operand.vmem [shape: f32[1,128], index: 8, kind: input, shape index: {}]
  %s9 = inlined_call_operand.hbm [shape: bf16[128,128], index: 9, kind: input, shape index: {}]
  %s10 = inlined_call_operand.vmem [shape: f32[1,128], index: 10, kind: input, shape index: {}]
  %s11 = inlined_call_operand.hbm [shape: bf16[2,16,16,128], index: 11, kind: output, shape index: {}]
  %s12 = sld [smem:[#allocation0]]
  $region78: #{tpu_custom_call.1} parent=0
    _
  %s14 = ssub.s32 1, %s12
  %s15 = scalar_select 0, %s14, %s12
  $region1: #{tpu_custom_call.1} parent=0
    #allocation4 [shape = 'u8[131072]{0}', space=vmem, size = 0x20000, scoped, tag = 'input window, operand 0, single buffered']
    #allocation5 [shape = 's32[1]{0}', space=sflag, size = 0x4, scoped, tag = 'scoped memory for tpu_custom_call.1']
    #allocation6 [shape = 's32[1]{0}', space=sflag, size = 0x4, scoped, tag = 'scoped memory for tpu_custom_call.1']
    #allocation7 [shape = 'u8[32768]{0}', space=vmem, size = 0x8000, scoped, tag = 'input window, operand 1, single buffered']
    #allocation8 [shape = 's32[1]{0}', space=sflag, size = 0x4, scoped, tag = 'scoped memory for tpu_custom_call.1']
    #allocation9 [shape = 'u8[6144]{0}', space=vmem, size = 0x1800, scoped, tag = 'input window, operand 3, single buffered']
    #allocation10 [shape = 'u8[65536]{0}', space=vmem, size = 0x10000, scoped, tag = 'input window, operand 5, single buffered']
    #allocation11 [shape = 's32[1]{0}', space=sflag, size = 0x4, scoped, tag = 'scoped memory for tpu_custom_call.1']
    #allocation12 [shape = 'u8[65536]{0}', space=vmem, size = 0x10000, scoped, tag = 'input window, operand 7, single buffered']
    #allocation13 [shape = 'u8[32768]{0}', space=vmem, size = 0x8000, scoped, tag = 'input window, operand 9, single buffered']
    #allocation14 [shape = 's32[1]{0}', space=sflag, size = 0x4, scoped, tag = 'scoped memory for tpu_custom_call.1']
    #allocation15 [shape = 'u8[131072]{0}', space=vmem, size = 0x20000, scoped, tag = 'output window, operand 0, single buffered']
    %16 = vsyncpa [#allocation5], 0
    %17 = vsyncpa [#allocation8], 0
    %18 = vsyncpa [#allocation11], 0
    %19 = vsyncpa [#allocation14], 0
    %20 = vsyncpa [#allocation6], 0
    // Predicated region
    $region2: #{tpu_custom_call.1} parent=1 // pred_check
      _
    $region3: #{tpu_custom_call.1} parent=1 // pred_check_branch
      %22 = sbr.rel (0) target = $region5
    $region4: #{tpu_custom_call.1} parent=1 // pred_region
      %s24 = ssub.s32 4096, 4096
      %25 = vsyncadd [#allocation5], %s24
      %s26 = sshll.u32 [#allocation4], 4
      %s27 = int_to_ptr.vmem [resolvable:$true] %s26
      %32 = dma.hbm_to_vmem [thread:$0]  %s0, 4096, %s27, [#allocation5], 64, 64, 4
    $region5: #{tpu_custom_call.1} parent=1 // pred_fallthru
      _
    // Predicated region
    $region6: #{tpu_custom_call.1} parent=1 // pred_check
      _
    $region7: #{tpu_custom_call.1} parent=1 // pred_check_branch
      %34 = sbr.rel (0) target = $region9
    $region8: #{tpu_custom_call.1} parent=1 // pred_region
      %s36 = ssub.s32 1024, 1024
      %37 = vsyncadd [#allocation8], %s36
      %s38 = sshll.u32 [#allocation7], 4
      %s39 = int_to_ptr.vmem [resolvable:$true] %s38
      %44 = dma.hbm_to_vmem [thread:$0]  %s1, 1024, %s39, [#allocation8], 64, 64, 4
    $region9: #{tpu_custom_call.1} parent=1 // pred_fallthru
      _
    // Predicated region
    $region10: #{tpu_custom_call.1} parent=1 // pred_check
      _
    $region11: #{tpu_custom_call.1} parent=1 // pred_check_branch
      %46 = sbr.rel (0) target = $region13
    $region12: #{tpu_custom_call.1} parent=1 // pred_region
      _
    $region13: #{tpu_custom_call.1} parent=1 // pred_fallthru
      _
    // Predicated region
    $region14: #{tpu_custom_call.1} parent=1 // pred_check
      _
    $region15: #{tpu_custom_call.1} parent=1 // pred_check_branch
      %48 = sbr.rel (0) target = $region17
    $region16: #{tpu_custom_call.1} parent=1 // pred_region
      %s50 = ssub.s32 192, 192
      %51 = vsyncadd [#allocation8], %s50
      %s52 = sshll.u32 [#allocation9], 4
      %s53 = int_to_ptr.vmem [resolvable:$true] %s52
      %58 = dma.hbm_to_vmem [thread:$0]  %s3, 192, %s53, [#allocation8], 64, 64, 4
    $region17: #{tpu_custom_call.1} parent=1 // pred_fallthru
      _
    // Predicated region
    $region18: #{tpu_custom_call.1} parent=1 // pred_check
      _
    $region19: #{tpu_custom_call.1} parent=1 // pred_check_branch
      %60 = sbr.rel (0) target = $region21
    $region20: #{tpu_custom_call.1} parent=1 // pred_region
      _
    $region21: #{tpu_custom_call.1} parent=1 // pred_fallthru
      _
    // Predicated region
    $region22: #{tpu_custom_call.1} parent=1 // pred_check
      _
    $region23: #{tpu_custom_call.1} parent=1 // pred_check_branch
      %62 = sbr.rel (0) target = $region25
    $region24: #{tpu_custom_call.1} parent=1 // pred_region
      %s64 = ssub.s32 2048, 2048
      %65 = vsyncadd [#allocation11], %s64
      %s66 = sshll.u32 [#allocation10], 4
      %s67 = int_to_ptr.vmem [resolvable:$true] %s66
      %72 = dma.hbm_to_vmem [thread:$0]  %s5, 2048, %s67, [#allocation11], 128, 128, 8
    $region25: #{tpu_custom_call.1} parent=1 // pred_fallthru
      _
    // Predicated region
    $region26: #{tpu_custom_call.1} parent=1 // pred_check
      _
    $region27: #{tpu_custom_call.1} parent=1 // pred_check_branch
      %74 = sbr.rel (0) target = $region29
    $region28: #{tpu_custom_call.1} parent=1 // pred_region
      _
    $region29: #{tpu_custom_call.1} parent=1 // pred_fallthru
      _
    // Predicated region
    $region30: #{tpu_custom_call.1} parent=1 // pred_check
      _
    $region31: #{tpu_custom_call.1} parent=1 // pred_check_branch
      %76 = sbr.rel (0) target = $region33
    $region32: #{tpu_custom_call.1} parent=1 // pred_region
      %s78 = ssub.s32 2048, 2048
      %79 = vsyncadd [#allocation11], %s78
      %s80 = sshll.u32 [#allocation12], 4
      %s81 = int_to_ptr.vmem [resolvable:$true] %s80
      %86 = dma.hbm_to_vmem [thread:$0]  %s7, 2048, %s81, [#allocation11], 128, 128, 8
    $region33: #{tpu_custom_call.1} parent=1 // pred_fallthru
      _
    // Predicated region
    $region34: #{tpu_custom_call.1} parent=1 // pred_check
      _
    $region35: #{tpu_custom_call.1} parent=1 // pred_check_branch
      %88 = sbr.rel (0) target = $region37
    $region36: #{tpu_custom_call.1} parent=1 // pred_region
      _
    $region37: #{tpu_custom_call.1} parent=1 // pred_fallthru
      _
    // Predicated region
    $region38: #{tpu_custom_call.1} parent=1 // pred_check
      _
    $region39: #{tpu_custom_call.1} parent=1 // pred_check_branch
      %90 = sbr.rel (0) target = $region41
    $region40: #{tpu_custom_call.1} parent=1 // pred_region
      %s92 = ssub.s32 1024, 1024
      %93 = vsyncadd [#allocation14], %s92
      %s94 = sshll.u32 [#allocation13], 4
      %s95 = int_to_ptr.vmem [resolvable:$true] %s94
      %100 = dma.hbm_to_vmem [thread:$0]  %s9, 1024, %s95, [#allocation14], 64, 64, 4
    $region41: #{tpu_custom_call.1} parent=1 // pred_fallthru
      _
    // Predicated region
    $region42: #{tpu_custom_call.1} parent=1 // pred_check
      _
    $region43: #{tpu_custom_call.1} parent=1 // pred_check_branch
      %102 = sbr.rel (0) target = $region45
    $region44: #{tpu_custom_call.1} parent=1 // pred_region
      _
    $region45: #{tpu_custom_call.1} parent=1 // pred_fallthru
      _
    // Predicated region
    $region46: #{tpu_custom_call.1} parent=1 // pred_check
      _
    $region47: #{tpu_custom_call.1} parent=1 // pred_check_branch
      %104 = sbr.rel (0) target = $region49
    $region48: #{tpu_custom_call.1} parent=1 // pred_region
      %105 = dma.done [#allocation5], 4096
    $region49: #{tpu_custom_call.1} parent=1 // pred_fallthru
      _
    // Predicated region
    $region50: #{tpu_custom_call.1} parent=1 // pred_check
      _
    $region51: #{tpu_custom_call.1} parent=1 // pred_check_branch
      %107 = sbr.rel (0) target = $region53
    $region52: #{tpu_custom_call.1} parent=1 // pred_region
      %108 = dma.done [#allocation8], 1024
    $region53: #{tpu_custom_call.1} parent=1 // pred_fallthru
      _
    // Predicated region
    $region54: #{tpu_custom_call.1} parent=1 // pred_check
      _
    $region55: #{tpu_custom_call.1} parent=1 // pred_check_branch
      %110 = sbr.rel (0) target = $region57
    $region56: #{tpu_custom_call.1} parent=1 // pred_region
      %111 = dma.done [#allocation8], 192
    $region57: #{tpu_custom_call.1} parent=1 // pred_fallthru
      _
    // Predicated region
    $region58: #{tpu_custom_call.1} parent=1 // pred_check
      _
    $region59: #{tpu_custom_call.1} parent=1 // pred_check_branch
      %113 = sbr.rel (0) target = $region61
    $region60: #{tpu_custom_call.1} parent=1 // pred_region
      %114 = dma.done [#allocation11], 2048
    $region61: #{tpu_custom_call.1} parent=1 // pred_fallthru
      _
    // Predicated region
    $region62: #{tpu_custom_call.1} parent=1 // pred_check
      _
    $region63: #{tpu_custom_call.1} parent=1 // pred_check_branch
      %116 = sbr.rel (0) target = $region65
    $region64: #{tpu_custom_call.1} parent=1 // pred_region
      %117 = dma.done [#allocation11], 2048
    $region65: #{tpu_custom_call.1} parent=1 // pred_fallthru
      _
    // Predicated region
    $region66: #{tpu_custom_call.1} parent=1 // pred_check
      _
    $region67: #{tpu_custom_call.1} parent=1 // pred_check_branch
      %119 = sbr.rel (0) target = $region69
    $region68: #{tpu_custom_call.1} parent=1 // pred_region
      %120 = dma.done [#allocation14], 1024
    $region69: #{tpu_custom_call.1} parent=1 // pred_fallthru
      _
    %v122 = vld [vmem:[#allocation4] sm:$0xf]
    %v123 = vld [vmem:[#allocation4 + $0x4] sm:$0xf]
    %v124 = vld [vmem:[#allocation4 + $0x8] sm:$0xf]
    %v125 = vld [vmem:[#allocation4 + $0xc] sm:$0xf]
    %v126 = vld [vmem:[#allocation4 + $0x10] sm:$0xf]
    %v127 = vld [vmem:[#allocation4 + $0x14] sm:$0xf]
    %v128 = vld [vmem:[#allocation4 + $0x18] sm:$0xf]
    %v129 = vld [vmem:[#allocation4 + $0x1c] sm:$0xf]
    %v130 = vld [vmem:[#allocation4 + $0x20] sm:$0xf]
    %v131 = vld [vmem:[#allocation4 + $0x24] sm:$0xf]
    %v132 = vld [vmem:[#allocation4 + $0x28] sm:$0xf]
    %v133 = vld [vmem:[#allocation4 + $0x2c] sm:$0xf]
    %v134 = vld [vmem:[#allocation4 + $0x30] sm:$0xf]
    %v135 = vld [vmem:[#allocation4 + $0x34] sm:$0xf]
    %v136 = vld [vmem:[#allocation4 + $0x38] sm:$0xf]
    %v137 = vld [vmem:[#allocation4 + $0x3c] sm:$0xf]
    %v138 = vld [vmem:[#allocation4 + $0x40] sm:$0xf]
    %v139 = vld [vmem:[#allocation4 + $0x44] sm:$0xf]
    %v140 = vld [vmem:[#allocation4 + $0x48] sm:$0xf]
    %v141 = vld [vmem:[#allocation4 + $0x4c] sm:$0xf]
    %v142 = vld [vmem:[#allocation4 + $0x50] sm:$0xf]
    %v143 = vld [vmem:[#allocation4 + $0x54] sm:$0xf]
    %v144 = vld [vmem:[#allocation4 + $0x58] sm:$0xf]
    %v145 = vld [vmem:[#allocation4 + $0x5c] sm:$0xf]
    %v146 = vld [vmem:[#allocation4 + $0x60] sm:$0xf]
    %v147 = vld [vmem:[#allocation4 + $0x64] sm:$0xf]
    %v148 = vld [vmem:[#allocation4 + $0x68] sm:$0xf]
    %v149 = vld [vmem:[#allocation4 + $0x6c] sm:$0xf]
    %v150 = vld [vmem:[#allocation4 + $0x70] sm:$0xf]
    %v151 = vld [vmem:[#allocation4 + $0x74] sm:$0xf]
    %v152 = vld [vmem:[#allocation4 + $0x78] sm:$0xf]
    %v153 = vld [vmem:[#allocation4 + $0x7c] sm:$0xf]
    %v154 = vld [vmem:[#allocation4 + $0x80] sm:$0xf]
    %v155 = vld [vmem:[#allocation4 + $0x84] sm:$0xf]
    %v156 = vld [vmem:[#allocation4 + $0x88] sm:$0xf]
    %v157 = vld [vmem:[#allocation4 + $0x8c] sm:$0xf]
    %v158 = vld [vmem:[#allocation4 + $0x90] sm:$0xf]
    %v159 = vld [vmem:[#allocation4 + $0x94] sm:$0xf]
    %v160 = vld [vmem:[#allocation4 + $0x98] sm:$0xf]
    %v161 = vld [vmem:[#allocation4 + $0x9c] sm:$0xf]
    %v162 = vld [vmem:[#allocation4 + $0xa0] sm:$0xf]
    %v163 = vld [vmem:[#allocation4 + $0xa4] sm:$0xf]
    %v164 = vld [vmem:[#allocation4 + $0xa8] sm:$0xf]
    %v165 = vld [vmem:[#allocation4 + $0xac] sm:$0xf]
    %v166 = vld [vmem:[#allocation4 + $0xb0] sm:$0xf]
    %v167 = vld [vmem:[#allocation4 + $0xb4] sm:$0xf]
    %v168 = vld [vmem:[#allocation4 + $0xb8] sm:$0xf]
    %v169 = vld [vmem:[#allocation4 + $0xbc] sm:$0xf]
    %v170 = vld [vmem:[#allocation4 + $0xc0] sm:$0xf]
    %v171 = vld [vmem:[#allocation4 + $0xc4] sm:$0xf]
    %v172 = vld [vmem:[#allocation4 + $0xc8] sm:$0xf]
    %v173 = vld [vmem:[#allocation4 + $0xcc] sm:$0xf]
    %v174 = vld [vmem:[#allocation4 + $0xd0] sm:$0xf]
    %v175 = vld [vmem:[#allocation4 + $0xd4] sm:$0xf]
    %v176 = vld [vmem:[#allocation4 + $0xd8] sm:$0xf]
    %v177 = vld [vmem:[#allocation4 + $0xdc] sm:$0xf]
    %v178 = vld [vmem:[#allocation4 + $0xe0] sm:$0xf]
    %v179 = vld [vmem:[#allocation4 + $0xe4] sm:$0xf]
    %v180 = vld [vmem:[#allocation4 + $0xe8] sm:$0xf]
    %v181 = vld [vmem:[#allocation4 + $0xec] sm:$0xf]
    %v182 = vld [vmem:[#allocation4 + $0xf0] sm:$0xf]
    %v183 = vld [vmem:[#allocation4 + $0xf4] sm:$0xf]
    %v184 = vld [vmem:[#allocation4 + $0xf8] sm:$0xf]
    %v185 = vld [vmem:[#allocation4 + $0xfc] sm:$0xf]
    %v186 = vld [vmem:[#allocation7] sm:$0xf]
    %v187 = vld [vmem:[#allocation7 + $0x4] sm:$0xf]
    %v188 = vld [vmem:[#allocation7 + $0x8] sm:$0xf]
    %v189 = vld [vmem:[#allocation7 + $0xc] sm:$0xf]
    %v190 = vld [vmem:[#allocation7 + $0x10] sm:$0xf]
    %v191 = vld [vmem:[#allocation7 + $0x14] sm:$0xf]
    %v192 = vld [vmem:[#allocation7 + $0x18] sm:$0xf]
    %v193 = vld [vmem:[#allocation7 + $0x1c] sm:$0xf]
    %v194 = vld [vmem:[#allocation7 + $0x20] sm:$0xf]
    %v195 = vld [vmem:[#allocation7 + $0x24] sm:$0xf]
    %v196 = vld [vmem:[#allocation7 + $0x28] sm:$0xf]
    %v197 = vld [vmem:[#allocation7 + $0x2c] sm:$0xf]
    %v198 = vld [vmem:[#allocation7 + $0x30] sm:$0xf]
    %v199 = vld [vmem:[#allocation7 + $0x34] sm:$0xf]
    %v200 = vld [vmem:[#allocation7 + $0x38] sm:$0xf]
    %v201 = vld [vmem:[#allocation7 + $0x3c] sm:$0xf]
    %v202 = vld [vmem:[%s2] sm:$0x1]
    %v204 = vlaneseq
    %v205 = vshrl.u32 %v204, 7
    %v206 = vsub.s32 0, %v205
    %v207 = vrot.slane %v202, %v206
    %v273 = vunpack.c.l.b16 %v122
    %v274 = vunpack.c.l.b16 %v123
    %v275 = vunpack.c.l.b16 %v124
    %v276 = vunpack.c.l.b16 %v125
    %v277 = vunpack.c.l.b16 %v126
    %v278 = vunpack.c.l.b16 %v127
    %v279 = vunpack.c.l.b16 %v128
    %v280 = vunpack.c.l.b16 %v129
    %v281 = vunpack.c.l.b16 %v130
    %v282 = vunpack.c.l.b16 %v131
    %v283 = vunpack.c.l.b16 %v132
    %v284 = vunpack.c.l.b16 %v133
    %v285 = vunpack.c.l.b16 %v134
    %v286 = vunpack.c.l.b16 %v135
    %v287 = vunpack.c.l.b16 %v136
    %v288 = vunpack.c.l.b16 %v137
    %v289 = vunpack.c.l.b16 %v138
    %v290 = vunpack.c.l.b16 %v139
    %v291 = vunpack.c.l.b16 %v140
    %v292 = vunpack.c.l.b16 %v141
    %v293 = vunpack.c.l.b16 %v142
    %v294 = vunpack.c.l.b16 %v143
    %v295 = vunpack.c.l.b16 %v144
    %v296 = vunpack.c.l.b16 %v145
    %v297 = vunpack.c.l.b16 %v146
    %v298 = vunpack.c.l.b16 %v147
    %v299 = vunpack.c.l.b16 %v148
    %v300 = vunpack.c.l.b16 %v149
    %v301 = vunpack.c.l.b16 %v150
    %v302 = vunpack.c.l.b16 %v151
    %v303 = vunpack.c.l.b16 %v152
    %v304 = vunpack.c.l.b16 %v153
    %v305 = vunpack.c.l.b16 %v154
    %v306 = vunpack.c.l.b16 %v155
    %v307 = vunpack.c.l.b16 %v156
    %v308 = vunpack.c.l.b16 %v157
    %v309 = vunpack.c.l.b16 %v158
    %v310 = vunpack.c.l.b16 %v159
    %v311 = vunpack.c.l.b16 %v160
    %v312 = vunpack.c.l.b16 %v161
    %v313 = vunpack.c.l.b16 %v162
    %v314 = vunpack.c.l.b16 %v163
    %v315 = vunpack.c.l.b16 %v164
    %v316 = vunpack.c.l.b16 %v165
    %v317 = vunpack.c.l.b16 %v166
    %v318 = vunpack.c.l.b16 %v167
    %v319 = vunpack.c.l.b16 %v168
    %v320 = vunpack.c.l.b16 %v169
    %v321 = vunpack.c.l.b16 %v170
    %v322 = vunpack.c.l.b16 %v171
    %v323 = vunpack.c.l.b16 %v172
    %v324 = vunpack.c.l.b16 %v173
    %v325 = vunpack.c.l.b16 %v174
    %v326 = vunpack.c.l.b16 %v175
    %v327 = vunpack.c.l.b16 %v176
    %v328 = vunpack.c.l.b16 %v177
    %v329 = vunpack.c.l.b16 %v178
    %v330 = vunpack.c.l.b16 %v179
    %v331 = vunpack.c.l.b16 %v180
    %v332 = vunpack.c.l.b16 %v181
    %v333 = vunpack.c.l.b16 %v182
    %v334 = vunpack.c.l.b16 %v183
    %v335 = vunpack.c.l.b16 %v184
    %v336 = vunpack.c.l.b16 %v185
    %v337 = vpack.c.b16 %v274, %v273
    %v338 = vpack.c.b16 %v276, %v275
    %v339 = vpack.c.b16 %v278, %v277
    %v340 = vpack.c.b16 %v280, %v279
    %v341 = vpack.c.b16 %v282, %v281
    %v342 = vpack.c.b16 %v284, %v283
    %v343 = vpack.c.b16 %v286, %v285
    %v344 = vpack.c.b16 %v288, %v287
    %v345 = vpack.c.b16 %v290, %v289
    %v346 = vpack.c.b16 %v292, %v291
    %v347 = vpack.c.b16 %v294, %v293
    %v348 = vpack.c.b16 %v296, %v295
    %v349 = vpack.c.b16 %v298, %v297
    %v350 = vpack.c.b16 %v300, %v299
    %v351 = vpack.c.b16 %v302, %v301
    %v352 = vpack.c.b16 %v304, %v303
    %v353 = vpack.c.b16 %v306, %v305
    %v354 = vpack.c.b16 %v308, %v307
    %v355 = vpack.c.b16 %v310, %v309
    %v356 = vpack.c.b16 %v312, %v311
    %v357 = vpack.c.b16 %v314, %v313
    %v358 = vpack.c.b16 %v316, %v315
    %v359 = vpack.c.b16 %v318, %v317
    %v360 = vpack.c.b16 %v320, %v319
    %v361 = vpack.c.b16 %v322, %v321
    %v362 = vpack.c.b16 %v324, %v323
    %v363 = vpack.c.b16 %v326, %v325
    %v364 = vpack.c.b16 %v328, %v327
    %v365 = vpack.c.b16 %v330, %v329
    %v366 = vpack.c.b16 %v332, %v331
    %v367 = vpack.c.b16 %v334, %v333
    %v368 = vpack.c.b16 %v336, %v335
    %v417 = vunpack.c.l.b16 %v186
    %v418 = vunpack.c.l.b16 %v187
    %v419 = vunpack.c.l.b16 %v188
    %v420 = vunpack.c.l.b16 %v189
    %v421 = vunpack.c.l.b16 %v190
    %v422 = vunpack.c.l.b16 %v191
    %v423 = vunpack.c.l.b16 %v192
    %v424 = vunpack.c.l.b16 %v193
    %v425 = vunpack.c.l.b16 %v194
    %v426 = vunpack.c.l.b16 %v195
    %v427 = vunpack.c.l.b16 %v196
    %v428 = vunpack.c.l.b16 %v197
    %v429 = vunpack.c.l.b16 %v198
    %v430 = vunpack.c.l.b16 %v199
    %v431 = vunpack.c.l.b16 %v200
    %v432 = vunpack.c.l.b16 %v201
    %v433 = vpack.c.b16 %v418, %v417
    %v434 = vpack.c.b16 %v420, %v419
    %v435 = vpack.c.b16 %v422, %v421
    %v436 = vpack.c.b16 %v424, %v423
    %v437 = vpack.c.b16 %v426, %v425
    %v438 = vpack.c.b16 %v428, %v427
    %v439 = vpack.c.b16 %v430, %v429
    %v440 = vpack.c.b16 %v432, %v431
    %449 = vmatprep.subr.bf16.mxu0 0
    %450 = vmatpush1.bf16.msra.mxu0 %v433
    %451 = vmatprep.subr.bf16.mxu0 0
    %452 = vmatpush1.bf16.msra.mxu0 %v434
    %453 = vmatprep.subr.bf16.mxu0 0
    %454 = vmatpush1.bf16.msra.mxu0 %v435
    %455 = vmatprep.subr.bf16.mxu0 0
    %456 = vmatpush1.bf16.msra.mxu0 %v436
    %457 = vmatprep.subr.bf16.mxu0 0
    %458 = vmatpush1.bf16.msra.mxu0 %v437
    %459 = vmatprep.subr.bf16.mxu0 0
    %460 = vmatpush1.bf16.msra.mxu0 %v438
    %461 = vmatprep.subr.bf16.mxu0 0
    %462 = vmatpush1.bf16.msra.mxu0 %v439
    %463 = vmatprep.subr.bf16.mxu0 0
    %464 = vmatpush1.bf16.msra.mxu0 %v440
    %465 = vmatprep.subr.bf16.mxu0 0
    %466 = vmatpush1.bf16.msra.mxu0 0
    %467 = vmatprep.subr.bf16.mxu0 0
    %468 = vmatpush1.bf16.msra.mxu0 0
    %469 = vmatprep.subr.bf16.mxu0 0
    %470 = vmatpush1.bf16.msra.mxu0 0
    %471 = vmatprep.subr.bf16.mxu0 0
    %472 = vmatpush1.bf16.msra.mxu0 0
    %473 = vmatprep.subr.bf16.mxu0 0
    %474 = vmatpush1.bf16.msra.mxu0 0
    %475 = vmatprep.subr.bf16.mxu0 0
    %476 = vmatpush1.bf16.msra.mxu0 0
    %477 = vmatprep.subr.bf16.mxu0 0
    %478 = vmatpush1.bf16.msra.mxu0 0
    %479 = vmatprep.subr.bf16.mxu0 0
    %480 = vmatpush1.bf16.msra.mxu0 0
    %481 = vmatprep.mubr.bf16.mxu0 0
    %482 = vmatmul.mubr.bf16.gmra.mrb[0].mxu0 %v337
    %v483 = vpop.f32.mrb[0].mxu0
    %v484 = vadd.f32 %v207, %v483
    %v485 = vpop.f32.mrb[0].mxu0
    %v486 = vpop.f32.mrb[0].mxu0
    %v487 = vadd.f32 %v207, %v486
    %v488 = vpop.f32.mrb[0].mxu0
    %489 = vmatprep.mubr.bf16.mxu0 0
    %490 = vmatmul.mubr.bf16.gmra.mrb[0].mxu0 %v338
    %v491 = vpop.f32.mrb[0].mxu0
    %v492 = vadd.f32 %v207, %v491
    %v493 = vpop.f32.mrb[0].mxu0
    %v494 = vpop.f32.mrb[0].mxu0
    %v495 = vadd.f32 %v207, %v494
    %v496 = vpop.f32.mrb[0].mxu0
    %497 = vmatprep.mubr.bf16.mxu0 0
    %498 = vmatmul.mubr.bf16.gmra.mrb[0].mxu0 %v339
    %v499 = vpop.f32.mrb[0].mxu0
    %v500 = vadd.f32 %v207, %v499
    %v501 = vpop.f32.mrb[0].mxu0
    %v502 = vpop.f32.mrb[0].mxu0
    %v503 = vadd.f32 %v207, %v502
    %v504 = vpop.f32.mrb[0].mxu0
    %505 = vmatprep.mubr.bf16.mxu0 0
    %506 = vmatmul.mubr.bf16.gmra.mrb[0].mxu0 %v340
    %v507 = vpop.f32.mrb[0].mxu0
    %v508 = vadd.f32 %v207, %v507
    %v509 = vpop.f32.mrb[0].mxu0
    %v510 = vpop.f32.mrb[0].mxu0
    %v511 = vadd.f32 %v207, %v510
    %v512 = vpop.f32.mrb[0].mxu0
    %513 = vmatprep.mubr.bf16.mxu0 0
    %514 = vmatmul.mubr.bf16.gmra.mrb[0].mxu0 %v341
    %v515 = vpop.f32.mrb[0].mxu0
    %v516 = vadd.f32 %v207, %v515
    %v517 = vpop.f32.mrb[0].mxu0
    %v518 = vpop.f32.mrb[0].mxu0
    %v519 = vadd.f32 %v207, %v518
    %v520 = vpop.f32.mrb[0].mxu0
    %521 = vmatprep.mubr.bf16.mxu0 0
    %522 = vmatmul.mubr.bf16.gmra.mrb[0].mxu0 %v342
    %v523 = vpop.f32.mrb[0].mxu0
    %v524 = vadd.f32 %v207, %v523
    %v525 = vpop.f32.mrb[0].mxu0
    %v526 = vpop.f32.mrb[0].mxu0
    %v527 = vadd.f32 %v207, %v526
    %v528 = vpop.f32.mrb[0].mxu0
    %529 = vmatprep.mubr.bf16.mxu0 0
    %530 = vmatmul.mubr.bf16.gmra.mrb[0].mxu0 %v343
    %v531 = vpop.f32.mrb[0].mxu0
    %v532 = vadd.f32 %v207, %v531
    %v533 = vpop.f32.mrb[0].mxu0
    %v534 = vpop.f32.mrb[0].mxu0
    %v535 = vadd.f32 %v207, %v534
    %v536 = vpop.f32.mrb[0].mxu0
    %537 = vmatprep.mubr.bf16.mxu0 0
    %538 = vmatmul.mubr.bf16.gmra.mrb[0].mxu0 %v344
    %v539 = vpop.f32.mrb[0].mxu0
    %v540 = vadd.f32 %v207, %v539
    %v541 = vpop.f32.mrb[0].mxu0
    %v542 = vpop.f32.mrb[0].mxu0
    %v543 = vadd.f32 %v207, %v542
    %v544 = vpop.f32.mrb[0].mxu0
    %545 = vmatprep.mubr.bf16.mxu0 0
    %546 = vmatmul.mubr.bf16.gmra.mrb[0].mxu0 %v345
    %v547 = vpop.f32.mrb[0].mxu0
    %v548 = vadd.f32 %v207, %v547
    %v549 = vpop.f32.mrb[0].mxu0
    %v550 = vpop.f32.mrb[0].mxu0
    %v551 = vadd.f32 %v207, %v550
    %v552 = vpop.f32.mrb[0].mxu0
    %553 = vmatprep.mubr.bf16.mxu0 0
    %554 = vmatmul.mubr.bf16.gmra.mrb[0].mxu0 %v346
    %v555 = vpop.f32.mrb[0].mxu0
    %v556 = vadd.f32 %v207, %v555
    %v557 = vpop.f32.mrb[0].mxu0
    %v558 = vpop.f32.mrb[0].mxu0
    %v559 = vadd.f32 %v207, %v558
    %v560 = vpop.f32.mrb[0].mxu0
    %561 = vmatprep.mubr.bf16.mxu0 0
    %562 = vmatmul.mubr.bf16.gmra.mrb[0].mxu0 %v347
    %v563 = vpop.f32.mrb[0].mxu0
    %v564 = vadd.f32 %v207, %v563
    %v565 = vpop.f32.mrb[0].mxu0
    %v566 = vpop.f32.mrb[0].mxu0
    %v567 = vadd.f32 %v207, %v566
    %v568 = vpop.f32.mrb[0].mxu0
    %569 = vmatprep.mubr.bf16.mxu0 0
    %570 = vmatmul.mubr.bf16.gmra.mrb[0].mxu0 %v348
    %v571 = vpop.f32.mrb[0].mxu0
    %v572 = vadd.f32 %v207, %v571
    %v573 = vpop.f32.mrb[0].mxu0
    %v574 = vpop.f32.mrb[0].mxu0
    %v575 = vadd.f32 %v207, %v574
    %v576 = vpop.f32.mrb[0].mxu0
    %577 = vmatprep.mubr.bf16.mxu0 0
    %578 = vmatmul.mubr.bf16.gmra.mrb[0].mxu0 %v349
    %v579 = vpop.f32.mrb[0].mxu0
    %v580 = vadd.f32 %v207, %v579
    %v581 = vpop.f32.mrb[0].mxu0
    %v582 = vpop.f32.mrb[0].mxu0
    %v583 = vadd.f32 %v207, %v582
    %v584 = vpop.f32.mrb[0].mxu0
    %585 = vmatprep.mubr.bf16.mxu0 0
    %586 = vmatmul.mubr.bf16.gmra.mrb[0].mxu0 %v350
    %v587 = vpop.f32.mrb[0].mxu0
    %v588 = vadd.f32 %v207, %v587
    %v589 = vpop.f32.mrb[0].mxu0
    %v590 = vpop.f32.mrb[0].mxu0
    %v591 = vadd.f32 %v207, %v590
    %v592 = vpop.f32.mrb[0].mxu0
    %593 = vmatprep.mubr.bf16.mxu0 0
    %594 = vmatmul.mubr.bf16.gmra.mrb[0].mxu0 %v351
    %v595 = vpop.f32.mrb[0].mxu0
    %v596 = vadd.f32 %v207, %v595
    %v597 = vpop.f32.mrb[0].mxu0
    %v598 = vpop.f32.mrb[0].mxu0
    %v599 = vadd.f32 %v207, %v598
    %v600 = vpop.f32.mrb[0].mxu0
    %601 = vmatprep.mubr.bf16.mxu0 0
    %602 = vmatmul.mubr.bf16.gmra.mrb[0].mxu0 %v352
    %v603 = vpop.f32.mrb[0].mxu0
    %v604 = vadd.f32 %v207, %v603
    %v605 = vpop.f32.mrb[0].mxu0
    %v606 = vpop.f32.mrb[0].mxu0
    %v607 = vadd.f32 %v207, %v606
    %v608 = vpop.f32.mrb[0].mxu0
    %609 = vmatprep.mubr.bf16.mxu0 0
    %610 = vmatmul.mubr.bf16.gmra.mrb[0].mxu0 %v353
    %v611 = vpop.f32.mrb[0].mxu0
    %v612 = vadd.f32 %v207, %v611
    %v613 = vpop.f32.mrb[0].mxu0
    %v614 = vpop.f32.mrb[0].mxu0
    %v615 = vadd.f32 %v207, %v614
    %v616 = vpop.f32.mrb[0].mxu0
    %617 = vmatprep.mubr.bf16.mxu0 0
    %618 = vmatmul.mubr.bf16.gmra.mrb[0].mxu0 %v354
    %v619 = vpop.f32.mrb[0].mxu0
    %v620 = vadd.f32 %v207, %v619
    %v621 = vpop.f32.mrb[0].mxu0
    %v622 = vpop.f32.mrb[0].mxu0
    %v623 = vadd.f32 %v207, %v622
    %v624 = vpop.f32.mrb[0].mxu0
    %625 = vmatprep.mubr.bf16.mxu0 0
    %626 = vmatmul.mubr.bf16.gmra.mrb[0].mxu0 %v355
    %v627 = vpop.f32.mrb[0].mxu0
    %v628 = vadd.f32 %v207, %v627
    %v629 = vpop.f32.mrb[0].mxu0
    %v630 = vpop.f32.mrb[0].mxu0
    %v631 = vadd.f32 %v207, %v630
    %v632 = vpop.f32.mrb[0].mxu0
    %633 = vmatprep.mubr.bf16.mxu0 0
    %634 = vmatmul.mubr.bf16.gmra.mrb[0].mxu0 %v356
    %v635 = vpop.f32.mrb[0].mxu0
    %v636 = vadd.f32 %v207, %v635
    %v637 = vpop.f32.mrb[0].mxu0
    %v638 = vpop.f32.mrb[0].mxu0
    %v639 = vadd.f32 %v207, %v638
    %v640 = vpop.f32.mrb[0].mxu0
    %641 = vmatprep.mubr.bf16.mxu0 0
    %642 = vmatmul.mubr.bf16.gmra.mrb[0].mxu0 %v357
    %v643 = vpop.f32.mrb[0].mxu0
    %v644 = vadd.f32 %v207, %v643
    %v645 = vpop.f32.mrb[0].mxu0
    %v646 = vpop.f32.mrb[0].mxu0
    %v647 = vadd.f32 %v207, %v646
    %v648 = vpop.f32.mrb[0].mxu0
    %649 = vmatprep.mubr.bf16.mxu0 0
    %650 = vmatmul.mubr.bf16.gmra.mrb[0].mxu0 %v358
    %v651 = vpop.f32.mrb[0].mxu0
    %v652 = vadd.f32 %v207, %v651
    %v653 = vpop.f32.mrb[0].mxu0
    %v654 = vpop.f32.mrb[0].mxu0
    %v655 = vadd.f32 %v207, %v654
    %v656 = vpop.f32.mrb[0].mxu0
    %657 = vmatprep.mubr.bf16.mxu0 0
    %658 = vmatmul.mubr.bf16.gmra.mrb[0].mxu0 %v359
    %v659 = vpop.f32.mrb[0].mxu0
    %v660 = vadd.f32 %v207, %v659
    %v661 = vpop.f32.mrb[0].mxu0
    %v662 = vpop.f32.mrb[0].mxu0
    %v663 = vadd.f32 %v207, %v662
    %v664 = vpop.f32.mrb[0].mxu0
    %665 = vmatprep.mubr.bf16.mxu0 0
    %666 = vmatmul.mubr.bf16.gmra.mrb[0].mxu0 %v360
    %v667 = vpop.f32.mrb[0].mxu0
    %v668 = vadd.f32 %v207, %v667
    %v669 = vpop.f32.mrb[0].mxu0
    %v670 = vpop.f32.mrb[0].mxu0
    %v671 = vadd.f32 %v207, %v670
    %v672 = vpop.f32.mrb[0].mxu0
    %673 = vmatprep.mubr.bf16.mxu0 0
    %674 = vmatmul.mubr.bf16.gmra.mrb[0].mxu0 %v361
    %v675 = vpop.f32.mrb[0].mxu0
    %v676 = vadd.f32 %v207, %v675
    %v677 = vpop.f32.mrb[0].mxu0
    %v678 = vpop.f32.mrb[0].mxu0
    %v679 = vadd.f32 %v207, %v678
    %v680 = vpop.f32.mrb[0].mxu0
    %681 = vmatprep.mubr.bf16.mxu0 0
    %682 = vmatmul.mubr.bf16.gmra.mrb[0].mxu0 %v362
    %v683 = vpop.f32.mrb[0].mxu0
    %v684 = vadd.f32 %v207, %v683
    %v685 = vpop.f32.mrb[0].mxu0
    %v686 = vpop.f32.mrb[0].mxu0
    %v687 = vadd.f32 %v207, %v686
    %v688 = vpop.f32.mrb[0].mxu0
    %689 = vmatprep.mubr.bf16.mxu0 0
    %690 = vmatmul.mubr.bf16.gmra.mrb[0].mxu0 %v363
    %v691 = vpop.f32.mrb[0].mxu0
    %v692 = vadd.f32 %v207, %v691
    %v693 = vpop.f32.mrb[0].mxu0
    %v694 = vpop.f32.mrb[0].mxu0
    %v695 = vadd.f32 %v207, %v694
    %v696 = vpop.f32.mrb[0].mxu0
    %697 = vmatprep.mubr.bf16.mxu0 0
    %698 = vmatmul.mubr.bf16.gmra.mrb[0].mxu0 %v364
    %v699 = vpop.f32.mrb[0].mxu0
    %v700 = vadd.f32 %v207, %v699
    %v701 = vpop.f32.mrb[0].mxu0
    %v702 = vpop.f32.mrb[0].mxu0
    %v703 = vadd.f32 %v207, %v702
    %v704 = vpop.f32.mrb[0].mxu0
    %705 = vmatprep.mubr.bf16.mxu0 0
    %706 = vmatmul.mubr.bf16.gmra.mrb[0].mxu0 %v365
    %v707 = vpop.f32.mrb[0].mxu0
    %v708 = vadd.f32 %v207, %v707
    %v709 = vpop.f32.mrb[0].mxu0
    %v710 = vpop.f32.mrb[0].mxu0
    %v711 = vadd.f32 %v207, %v710
    %v712 = vpop.f32.mrb[0].mxu0
    %713 = vmatprep.mubr.bf16.mxu0 0
    %714 = vmatmul.mubr.bf16.gmra.mrb[0].mxu0 %v366
    %v715 = vpop.f32.mrb[0].mxu0
    %v716 = vadd.f32 %v207, %v715
    %v717 = vpop.f32.mrb[0].mxu0
    %v718 = vpop.f32.mrb[0].mxu0
    %v719 = vadd.f32 %v207, %v718
    %v720 = vpop.f32.mrb[0].mxu0
    %721 = vmatprep.mubr.bf16.mxu0 0
    %722 = vmatmul.mubr.bf16.gmra.mrb[0].mxu0 %v367
    %v723 = vpop.f32.mrb[0].mxu0
    %v724 = vadd.f32 %v207, %v723
    %v725 = vpop.f32.mrb[0].mxu0
    %v726 = vpop.f32.mrb[0].mxu0
    %v727 = vadd.f32 %v207, %v726
    %v728 = vpop.f32.mrb[0].mxu0
    %729 = vmatprep.mubr.bf16.mxu0 0
    %730 = vmatmul.mubr.bf16.gmra.mrb[0].mxu0 %v368
    %v731 = vpop.f32.mrb[0].mxu0
    %v732 = vadd.f32 %v207, %v731
    %v733 = vpop.f32.mrb[0].mxu0
    %v734 = vpop.f32.mrb[0].mxu0
    %v735 = vadd.f32 %v207, %v734
    %v736 = vpop.f32.mrb[0].mxu0
    %737 = vdwg.mxu0
    %v738 = vxor.u32 %v484, 2147483648
    %v739 = vxor.u32 %v487, 2147483648
    %v740 = vxor.u32 %v492, 2147483648
    %v741 = vxor.u32 %v495, 2147483648
    %v742 = vxor.u32 %v500, 2147483648
    %v743 = vxor.u32 %v503, 2147483648
    %v744 = vxor.u32 %v508, 2147483648
    %v745 = vxor.u32 %v511, 2147483648
    %v746 = vxor.u32 %v516, 2147483648
    %v747 = vxor.u32 %v519, 2147483648
    %v748 = vxor.u32 %v524, 2147483648
    %v749 = vxor.u32 %v527, 2147483648
    %v750 = vxor.u32 %v532, 2147483648
    %v751 = vxor.u32 %v535, 2147483648
    %v752 = vxor.u32 %v540, 2147483648
    %v753 = vxor.u32 %v543, 2147483648
    %v754 = vxor.u32 %v548, 2147483648
    %v755 = vxor.u32 %v551, 2147483648
    %v756 = vxor.u32 %v556, 2147483648
    %v757 = vxor.u32 %v559, 2147483648
    %v758 = vxor.u32 %v564, 2147483648
    %v759 = vxor.u32 %v567, 2147483648
    %v760 = vxor.u32 %v572, 2147483648
    %v761 = vxor.u32 %v575, 2147483648
    %v762 = vxor.u32 %v580, 2147483648
    %v763 = vxor.u32 %v583, 2147483648
    %v764 = vxor.u32 %v588, 2147483648
    %v765 = vxor.u32 %v591, 2147483648
    %v766 = vxor.u32 %v596, 2147483648
    %v767 = vxor.u32 %v599, 2147483648
    %v768 = vxor.u32 %v604, 2147483648
    %v769 = vxor.u32 %v607, 2147483648
    %v770 = vxor.u32 %v612, 2147483648
    %v771 = vxor.u32 %v615, 2147483648
    %v772 = vxor.u32 %v620, 2147483648
    %v773 = vxor.u32 %v623, 2147483648
    %v774 = vxor.u32 %v628, 2147483648
    %v775 = vxor.u32 %v631, 2147483648
    %v776 = vxor.u32 %v636, 2147483648
    %v777 = vxor.u32 %v639, 2147483648
    %v778 = vxor.u32 %v644, 2147483648
    %v779 = vxor.u32 %v647, 2147483648
    %v780 = vxor.u32 %v652, 2147483648
    %v781 = vxor.u32 %v655, 2147483648
    %v782 = vxor.u32 %v660, 2147483648
    %v783 = vxor.u32 %v663, 2147483648
    %v784 = vxor.u32 %v668, 2147483648
    %v785 = vxor.u32 %v671, 2147483648
    %v786 = vxor.u32 %v676, 2147483648
    %v787 = vxor.u32 %v679, 2147483648
    %v788 = vxor.u32 %v684, 2147483648
    %v789 = vxor.u32 %v687, 2147483648
    %v790 = vxor.u32 %v692, 2147483648
    %v791 = vxor.u32 %v695, 2147483648
    %v792 = vxor.u32 %v700, 2147483648
    %v793 = vxor.u32 %v703, 2147483648
    %v794 = vxor.u32 %v708, 2147483648
    %v795 = vxor.u32 %v711, 2147483648
    %v796 = vxor.u32 %v716, 2147483648
    %v797 = vxor.u32 %v719, 2147483648
    %v798 = vxor.u32 %v724, 2147483648
    %v799 = vxor.u32 %v727, 2147483648
    %v800 = vxor.u32 %v732, 2147483648
    %v801 = vxor.u32 %v735, 2147483648
    %v802 = vmul.f32 %v738, 1.442695
    %v803 = vpow.pop %v802
    %v804 = vmul.f32 %v739, 1.442695
    %v805 = vpow.pop %v804
    %v806 = vmul.f32 %v740, 1.442695
    %v807 = vpow.pop %v806
    %v808 = vmul.f32 %v741, 1.442695
    %v809 = vpow.pop %v808
    %v810 = vmul.f32 %v742, 1.442695
    %v811 = vpow.pop %v810
    %v812 = vmul.f32 %v743, 1.442695
    %v813 = vpow.pop %v812
    %v814 = vmul.f32 %v744, 1.442695
    %v815 = vpow.pop %v814
    %v816 = vmul.f32 %v745, 1.442695
    %v817 = vpow.pop %v816
    %v818 = vmul.f32 %v746, 1.442695
    %v819 = vpow.pop %v818
    %v820 = vmul.f32 %v747, 1.442695
    %v821 = vpow.pop %v820
    %v822 = vmul.f32 %v748, 1.442695
    %v823 = vpow.pop %v822
    %v824 = vmul.f32 %v749, 1.442695
    %v825 = vpow.pop %v824
    %v826 = vmul.f32 %v750, 1.442695
    %v827 = vpow.pop %v826
    %v828 = vmul.f32 %v751, 1.442695
    %v829 = vpow.pop %v828
    %v830 = vmul.f32 %v752, 1.442695
    %v831 = vpow.pop %v830
    %v832 = vmul.f32 %v753, 1.442695
    %v833 = vpow.pop %v832
    %v834 = vmul.f32 %v754, 1.442695
    %v835 = vpow.pop %v834
    %v836 = vmul.f32 %v755, 1.442695
    %v837 = vpow.pop %v836
    %v838 = vmul.f32 %v756, 1.442695
    %v839 = vpow.pop %v838
    %v840 = vmul.f32 %v757, 1.442695
    %v841 = vpow.pop %v840
    %v842 = vmul.f32 %v758, 1.442695
    %v843 = vpow.pop %v842
    %v844 = vmul.f32 %v759, 1.442695
    %v845 = vpow.pop %v844
    %v846 = vmul.f32 %v760, 1.442695
    %v847 = vpow.pop %v846
    %v848 = vmul.f32 %v761, 1.442695
    %v849 = vpow.pop %v848
    %v850 = vmul.f32 %v762, 1.442695
    %v851 = vpow.pop %v850
    %v852 = vmul.f32 %v763, 1.442695
    %v853 = vpow.pop %v852
    %v854 = vmul.f32 %v764, 1.442695
    %v855 = vpow.pop %v854
    %v856 = vmul.f32 %v765, 1.442695
    %v857 = vpow.pop %v856
    %v858 = vmul.f32 %v766, 1.442695
    %v859 = vpow.pop %v858
    %v860 = vmul.f32 %v767, 1.442695
    %v861 = vpow.pop %v860
    %v862 = vmul.f32 %v768, 1.442695
    %v863 = vpow.pop %v862
    %v864 = vmul.f32 %v769, 1.442695
    %v865 = vpow.pop %v864
    %v866 = vmul.f32 %v770, 1.442695
    %v867 = vpow.pop %v866
    %v868 = vmul.f32 %v771, 1.442695
    %v869 = vpow.pop %v868
    %v870 = vmul.f32 %v772, 1.442695
    %v871 = vpow.pop %v870
    %v872 = vmul.f32 %v773, 1.442695
    %v873 = vpow.pop %v872
    %v874 = vmul.f32 %v774, 1.442695
    %v875 = vpow.pop %v874
    %v876 = vmul.f32 %v775, 1.442695
    %v877 = vpow.pop %v876
    %v878 = vmul.f32 %v776, 1.442695
    %v879 = vpow.pop %v878
    %v880 = vmul.f32 %v777, 1.442695
    %v881 = vpow.pop %v880
    %v882 = vmul.f32 %v778, 1.442695
    %v883 = vpow.pop %v882
    %v884 = vmul.f32 %v779, 1.442695
    %v885 = vpow.pop %v884
    %v886 = vmul.f32 %v780, 1.442695
    %v887 = vpow.pop %v886
    %v888 = vmul.f32 %v781, 1.442695
    %v889 = vpow.pop %v888
    %v890 = vmul.f32 %v782, 1.442695
    %v891 = vpow.pop %v890
    %v892 = vmul.f32 %v783, 1.442695
    %v893 = vpow.pop %v892
    %v894 = vmul.f32 %v784, 1.442695
    %v895 = vpow.pop %v894
    %v896 = vmul.f32 %v785, 1.442695
    %v897 = vpow.pop %v896
    %v898 = vmul.f32 %v786, 1.442695
    %v899 = vpow.pop %v898
    %v900 = vmul.f32 %v787, 1.442695
    %v901 = vpow.pop %v900
    %v902 = vmul.f32 %v788, 1.442695
    %v903 = vpow.pop %v902
    %v904 = vmul.f32 %v789, 1.442695
    %v905 = vpow.pop %v904
    %v906 = vmul.f32 %v790, 1.442695
    %v907 = vpow.pop %v906
    %v908 = vmul.f32 %v791, 1.442695
    %v909 = vpow.pop %v908
    %v910 = vmul.f32 %v792, 1.442695
    %v911 = vpow.pop %v910
    %v912 = vmul.f32 %v793, 1.442695
    %v913 = vpow.pop %v912
    %v914 = vmul.f32 %v794, 1.442695
    %v915 = vpow.pop %v914
    %v916 = vmul.f32 %v795, 1.442695
    %v917 = vpow.pop %v916
    %v918 = vmul.f32 %v796, 1.442695
    %v919 = vpow.pop %v918
    %v920 = vmul.f32 %v797, 1.442695
    %v921 = vpow.pop %v920
    %v922 = vmul.f32 %v798, 1.442695
    %v923 = vpow.pop %v922
    %v924 = vmul.f32 %v799, 1.442695
    %v925 = vpow.pop %v924
    %v926 = vmul.f32 %v800, 1.442695
    %v927 = vpow.pop %v926
    %v928 = vmul.f32 %v801, 1.442695
    %v929 = vpow.pop %v928
    %v930 = vadd.f32 %v803, 1.0
    %v931 = vadd.f32 %v805, 1.0
    %v932 = vadd.f32 %v807, 1.0
    %v933 = vadd.f32 %v809, 1.0
    %v934 = vadd.f32 %v811, 1.0
    %v935 = vadd.f32 %v813, 1.0
    %v936 = vadd.f32 %v815, 1.0
    %v937 = vadd.f32 %v817, 1.0
    %v938 = vadd.f32 %v819, 1.0
    %v939 = vadd.f32 %v821, 1.0
    %v940 = vadd.f32 %v823, 1.0
    %v941 = vadd.f32 %v825, 1.0
    %v942 = vadd.f32 %v827, 1.0
    %v943 = vadd.f32 %v829, 1.0
    %v944 = vadd.f32 %v831, 1.0
    %v945 = vadd.f32 %v833, 1.0
    %v946 = vadd.f32 %v835, 1.0
    %v947 = vadd.f32 %v837, 1.0
    %v948 = vadd.f32 %v839, 1.0
    %v949 = vadd.f32 %v841, 1.0
    %v950 = vadd.f32 %v843, 1.0
    %v951 = vadd.f32 %v845, 1.0
    %v952 = vadd.f32 %v847, 1.0
    %v953 = vadd.f32 %v849, 1.0
    %v954 = vadd.f32 %v851, 1.0
    %v955 = vadd.f32 %v853, 1.0
    %v956 = vadd.f32 %v855, 1.0
    %v957 = vadd.f32 %v857, 1.0
    %v958 = vadd.f32 %v859, 1.0
    %v959 = vadd.f32 %v861, 1.0
    %v960 = vadd.f32 %v863, 1.0
    %v961 = vadd.f32 %v865, 1.0
    %v962 = vadd.f32 %v867, 1.0
    %v963 = vadd.f32 %v869, 1.0
    %v964 = vadd.f32 %v871, 1.0
    %v965 = vadd.f32 %v873, 1.0
    %v966 = vadd.f32 %v875, 1.0
    %v967 = vadd.f32 %v877, 1.0
    %v968 = vadd.f32 %v879, 1.0
    %v969 = vadd.f32 %v881, 1.0
    %v970 = vadd.f32 %v883, 1.0
    %v971 = vadd.f32 %v885, 1.0
    %v972 = vadd.f32 %v887, 1.0
    %v973 = vadd.f32 %v889, 1.0
    %v974 = vadd.f32 %v891, 1.0
    %v975 = vadd.f32 %v893, 1.0
    %v976 = vadd.f32 %v895, 1.0
    %v977 = vadd.f32 %v897, 1.0
    %v978 = vadd.f32 %v899, 1.0
    %v979 = vadd.f32 %v901, 1.0
    %v980 = vadd.f32 %v903, 1.0
    %v981 = vadd.f32 %v905, 1.0
    %v982 = vadd.f32 %v907, 1.0
    %v983 = vadd.f32 %v909, 1.0
    %v984 = vadd.f32 %v911, 1.0
    %v985 = vadd.f32 %v913, 1.0
    %v986 = vadd.f32 %v915, 1.0
    %v987 = vadd.f32 %v917, 1.0
    %v988 = vadd.f32 %v919, 1.0
    %v989 = vadd.f32 %v921, 1.0
    %v990 = vadd.f32 %v923, 1.0
    %v991 = vadd.f32 %v925, 1.0
    %v992 = vadd.f32 %v927, 1.0
    %v993 = vadd.f32 %v929, 1.0
    %v994 = vrcp.pop %v930
    %v995 = vmul.f32 1.0, %v994
    %v996 = vrcp.pop %v931
    %v997 = vmul.f32 1.0, %v996
    %v998 = vrcp.pop %v932
    %v999 = vmul.f32 1.0, %v998
    %v1000 = vrcp.pop %v933
    %v1001 = vmul.f32 1.0, %v1000
    %v1002 = vrcp.pop %v934
    %v1003 = vmul.f32 1.0, %v1002
    %v1004 = vrcp.pop %v935
    %v1005 = vmul.f32 1.0, %v1004
    %v1006 = vrcp.pop %v936
    %v1007 = vmul.f32 1.0, %v1006
    %v1008 = vrcp.pop %v937
    %v1009 = vmul.f32 1.0, %v1008
    %v1010 = vrcp.pop %v938
    %v1011 = vmul.f32 1.0, %v1010
    %v1012 = vrcp.pop %v939
    %v1013 = vmul.f32 1.0, %v1012
    %v1014 = vrcp.pop %v940
    %v1015 = vmul.f32 1.0, %v1014
    %v1016 = vrcp.pop %v941
    %v1017 = vmul.f32 1.0, %v1016
    %v1018 = vrcp.pop %v942
    %v1019 = vmul.f32 1.0, %v1018
    %v1020 = vrcp.pop %v943
    %v1021 = vmul.f32 1.0, %v1020
    %v1022 = vrcp.pop %v944
    %v1023 = vmul.f32 1.0, %v1022
    %v1024 = vrcp.pop %v945
    %v1025 = vmul.f32 1.0, %v1024
    %v1026 = vrcp.pop %v946
    %v1027 = vmul.f32 1.0, %v1026
    %v1028 = vrcp.pop %v947
    %v1029 = vmul.f32 1.0, %v1028
    %v1030 = vrcp.pop %v948
    %v1031 = vmul.f32 1.0, %v1030
    %v1032 = vrcp.pop %v949
    %v1033 = vmul.f32 1.0, %v1032
    %v1034 = vrcp.pop %v950
    %v1035 = vmul.f32 1.0, %v1034
    %v1036 = vrcp.pop %v951
    %v1037 = vmul.f32 1.0, %v1036
    %v1038 = vrcp.pop %v952
    %v1039 = vmul.f32 1.0, %v1038
    %v1040 = vrcp.pop %v953
    %v1041 = vmul.f32 1.0, %v1040
    %v1042 = vrcp.pop %v954
    %v1043 = vmul.f32 1.0, %v1042
    %v1044 = vrcp.pop %v955
    %v1045 = vmul.f32 1.0, %v1044
    %v1046 = vrcp.pop %v956
    %v1047 = vmul.f32 1.0, %v1046
    %v1048 = vrcp.pop %v957
    %v1049 = vmul.f32 1.0, %v1048
    %v1050 = vrcp.pop %v958
    %v1051 = vmul.f32 1.0, %v1050
    %v1052 = vrcp.pop %v959
    %v1053 = vmul.f32 1.0, %v1052
    %v1054 = vrcp.pop %v960
    %v1055 = vmul.f32 1.0, %v1054
    %v1056 = vrcp.pop %v961
    %v1057 = vmul.f32 1.0, %v1056
    %v1058 = vrcp.pop %v962
    %v1059 = vmul.f32 1.0, %v1058
    %v1060 = vrcp.pop %v963
    %v1061 = vmul.f32 1.0, %v1060
    %v1062 = vrcp.pop %v964
    %v1063 = vmul.f32 1.0, %v1062
    %v1064 = vrcp.pop %v965
    %v1065 = vmul.f32 1.0, %v1064
    %v1066 = vrcp.pop %v966
    %v1067 = vmul.f32 1.0, %v1066
    %v1068 = vrcp.pop %v967
    %v1069 = vmul.f32 1.0, %v1068
    %v1070 = vrcp.pop %v968
    %v1071 = vmul.f32 1.0, %v1070
    %v1072 = vrcp.pop %v969
    %v1073 = vmul.f32 1.0, %v1072
    %v1074 = vrcp.pop %v970
    %v1075 = vmul.f32 1.0, %v1074
    %v1076 = vrcp.pop %v971
    %v1077 = vmul.f32 1.0, %v1076
    %v1078 = vrcp.pop %v972
    %v1079 = vmul.f32 1.0, %v1078
    %v1080 = vrcp.pop %v973
    %v1081 = vmul.f32 1.0, %v1080
    %v1082 = vrcp.pop %v974
    %v1083 = vmul.f32 1.0, %v1082
    %v1084 = vrcp.pop %v975
    %v1085 = vmul.f32 1.0, %v1084
    %v1086 = vrcp.pop %v976
    %v1087 = vmul.f32 1.0, %v1086
    %v1088 = vrcp.pop %v977
    %v1089 = vmul.f32 1.0, %v1088
    %v1090 = vrcp.pop %v978
    %v1091 = vmul.f32 1.0, %v1090
    %v1092 = vrcp.pop %v979
    %v1093 = vmul.f32 1.0, %v1092
    %v1094 = vrcp.pop %v980
    %v1095 = vmul.f32 1.0, %v1094
    %v1096 = vrcp.pop %v981
    %v1097 = vmul.f32 1.0, %v1096
    %v1098 = vrcp.pop %v982
    %v1099 = vmul.f32 1.0, %v1098
    %v1100 = vrcp.pop %v983
    %v1101 = vmul.f32 1.0, %v1100
    %v1102 = vrcp.pop %v984
    %v1103 = vmul.f32 1.0, %v1102
    %v1104 = vrcp.pop %v985
    %v1105 = vmul.f32 1.0, %v1104
    %v1106 = vrcp.pop %v986
    %v1107 = vmul.f32 1.0, %v1106
    %v1108 = vrcp.pop %v987
    %v1109 = vmul.f32 1.0, %v1108
    %v1110 = vrcp.pop %v988
    %v1111 = vmul.f32 1.0, %v1110
    %v1112 = vrcp.pop %v989
    %v1113 = vmul.f32 1.0, %v1112
    %v1114 = vrcp.pop %v990
    %v1115 = vmul.f32 1.0, %v1114
    %v1116 = vrcp.pop %v991
    %v1117 = vmul.f32 1.0, %v1116
    %v1118 = vrcp.pop %v992
    %v1119 = vmul.f32 1.0, %v1118
    %v1120 = vrcp.pop %v993
    %v1121 = vmul.f32 1.0, %v1120
    %v1122 = vmul.f32 %v484, %v995
    %v1123 = vmul.f32 %v487, %v997
    %v1124 = vmul.f32 %v492, %v999
    %v1125 = vmul.f32 %v495, %v1001
    %v1126 = vmul.f32 %v500, %v1003
    %v1127 = vmul.f32 %v503, %v1005
    %v1128 = vmul.f32 %v508, %v1007
    %v1129 = vmul.f32 %v511, %v1009
    %v1130 = vmul.f32 %v516, %v1011
    %v1131 = vmul.f32 %v519, %v1013
    %v1132 = vmul.f32 %v524, %v1015
    %v1133 = vmul.f32 %v527, %v1017
    %v1134 = vmul.f32 %v532, %v1019
    %v1135 = vmul.f32 %v535, %v1021
    %v1136 = vmul.f32 %v540, %v1023
    %v1137 = vmul.f32 %v543, %v1025
    %v1138 = vmul.f32 %v548, %v1027
    %v1139 = vmul.f32 %v551, %v1029
    %v1140 = vmul.f32 %v556, %v1031
    %v1141 = vmul.f32 %v559, %v1033
    %v1142 = vmul.f32 %v564, %v1035
    %v1143 = vmul.f32 %v567, %v1037
    %v1144 = vmul.f32 %v572, %v1039
    %v1145 = vmul.f32 %v575, %v1041
    %v1146 = vmul.f32 %v580, %v1043
    %v1147 = vmul.f32 %v583, %v1045
    %v1148 = vmul.f32 %v588, %v1047
    %v1149 = vmul.f32 %v591, %v1049
    %v1150 = vmul.f32 %v596, %v1051
    %v1151 = vmul.f32 %v599, %v1053
    %v1152 = vmul.f32 %v604, %v1055
    %v1153 = vmul.f32 %v607, %v1057
    %v1154 = vmul.f32 %v612, %v1059
    %v1155 = vmul.f32 %v615, %v1061
    %v1156 = vmul.f32 %v620, %v1063
    %v1157 = vmul.f32 %v623, %v1065
    %v1158 = vmul.f32 %v628, %v1067
    %v1159 = vmul.f32 %v631, %v1069
    %v1160 = vmul.f32 %v636, %v1071
    %v1161 = vmul.f32 %v639, %v1073
    %v1162 = vmul.f32 %v644, %v1075
    %v1163 = vmul.f32 %v647, %v1077
    %v1164 = vmul.f32 %v652, %v1079
    %v1165 = vmul.f32 %v655, %v1081
    %v1166 = vmul.f32 %v660, %v1083
    %v1167 = vmul.f32 %v663, %v1085
    %v1168 = vmul.f32 %v668, %v1087
    %v1169 = vmul.f32 %v671, %v1089
    %v1170 = vmul.f32 %v676, %v1091
    %v1171 = vmul.f32 %v679, %v1093
    %v1172 = vmul.f32 %v684, %v1095
    %v1173 = vmul.f32 %v687, %v1097
    %v1174 = vmul.f32 %v692, %v1099
    %v1175 = vmul.f32 %v695, %v1101
    %v1176 = vmul.f32 %v700, %v1103
    %v1177 = vmul.f32 %v703, %v1105
    %v1178 = vmul.f32 %v708, %v1107
    %v1179 = vmul.f32 %v711, %v1109
    %v1180 = vmul.f32 %v716, %v1111
    %v1181 = vmul.f32 %v719, %v1113
    %v1182 = vmul.f32 %v724, %v1115
    %v1183 = vmul.f32 %v727, %v1117
    %v1184 = vmul.f32 %v732, %v1119
    %v1185 = vmul.f32 %v735, %v1121
    %1186 = vst [vmem:[#allocation2] sm:$0xf] 0
    %1187 = vst [vmem:[#allocation2 + $0x4] sm:$0xf] 0
    %1188 = vst [vmem:[#allocation2 + $0x8] sm:$0xf] 0
    %1189 = vst [vmem:[#allocation2 + $0xc] sm:$0xf] 0
    %vm1190 = vcmask 1040384
    %vm1191 = vsmask.f32 256
    %vm1192 = vmand %vm1190, %vm1191
    %v1193 = vld [vmem:[#allocation2 + $0x10] sm:$0x1]
    %v1194 = vsel %vm1192, 0, %v1193
    %1195 = vst [vmem:[#allocation2 + $0x10] sm:$0x1] %v1194
    %1196 = vst [vmem:[#allocation2 + $0x168] sm:$0xf] 0
    %1197 = vst [vmem:[#allocation2 + $0x16c] sm:$0xf] 0
    %1198 = vst [vmem:[#allocation2 + $0x170] sm:$0xf] 0
    %1199 = vst [vmem:[#allocation2 + $0x174] sm:$0xf] 0
    %v1200 = vld [vmem:[#allocation2 + $0x178] sm:$0x1]
    %v1201 = vsel %vm1192, 0, %v1200
    %1202 = vst [vmem:[#allocation2 + $0x178] sm:$0x1] %v1201
    %s1203 = scalar_lea.vmem [#allocation2], 340
    %1204 = vst [vmem:[%s1203] sm:$0xf] 0
    %1205 = vst [vmem:[%s1203 + $0x4] sm:$0xf] 0
    %1206 = vst [vmem:[%s1203 + $0x8] sm:$0xf] 0
    %1207 = vst [vmem:[%s1203 + $0xc] sm:$0xf] 0
    %v1208 = vld [vmem:[%s1203 + $0x10] sm:$0x1]
    %v1209 = vsel %vm1192, 0, %v1208
    %1210 = vst [vmem:[%s1203 + $0x10] sm:$0x1] %v1209
    %1211 = vst [vmem:[%s1203 + $0x168] sm:$0xf] 0
    %1212 = vst [vmem:[%s1203 + $0x16c] sm:$0xf] 0
    %1213 = vst [vmem:[%s1203 + $0x170] sm:$0xf] 0
    %1214 = vst [vmem:[%s1203 + $0x174] sm:$0xf] 0
    %v1215 = vld [vmem:[%s1203 + $0x178] sm:$0x1]
    %v1216 = vsel %vm1192, 0, %v1215
    %1217 = vst [vmem:[%s1203 + $0x178] sm:$0x1] %v1216
    %vm1218 = vcmask 1043459
    %vm1219 = vsmask.f32 7950
    %vm1220 = vmand %vm1218, %vm1219
    %v1221 = vld [vmem:[#allocation2 + $0x4] sm:$0x8]
    %v1222 = vsel %vm1220, 0, %v1221
    %1223 = vst [vmem:[#allocation2 + $0x4] sm:$0x8] %v1222
    %v1224 = vld [vmem:[#allocation2 + $0x18] sm:$0x8]
    %v1225 = vsel %vm1220, 0, %v1224
    %1226 = vst [vmem:[#allocation2 + $0x18] sm:$0x8] %v1225
    %v1227 = vld [vmem:[#allocation2 + $0x2c] sm:$0x8]
    %v1228 = vsel %vm1220, 0, %v1227
    %1229 = vst [vmem:[#allocation2 + $0x2c] sm:$0x8] %v1228
    %v1230 = vld [vmem:[#allocation2 + $0x40] sm:$0x8]
    %v1231 = vsel %vm1220, 0, %v1230
    %1232 = vst [vmem:[#allocation2 + $0x40] sm:$0x8] %v1231
    %v1233 = vld [vmem:[#allocation2 + $0x54] sm:$0x8]
    %v1234 = vsel %vm1220, 0, %v1233
    %1235 = vst [vmem:[#allocation2 + $0x54] sm:$0x8] %v1234
    %v1236 = vld [vmem:[#allocation2 + $0x68] sm:$0x8]
    %v1237 = vsel %vm1220, 0, %v1236
    %1238 = vst [vmem:[#allocation2 + $0x68] sm:$0x8] %v1237
    %v1239 = vld [vmem:[#allocation2 + $0x7c] sm:$0x8]
    %v1240 = vsel %vm1220, 0, %v1239
    %1241 = vst [vmem:[#allocation2 + $0x7c] sm:$0x8] %v1240
    %v1242 = vld [vmem:[#allocation2 + $0x90] sm:$0x8]
    %v1243 = vsel %vm1220, 0, %v1242
    %1244 = vst [vmem:[#allocation2 + $0x90] sm:$0x8] %v1243
    %v1245 = vld [vmem:[#allocation2 + $0xa4] sm:$0x8]
    %v1246 = vsel %vm1220, 0, %v1245
    %1247 = vst [vmem:[#allocation2 + $0xa4] sm:$0x8] %v1246
    %v1248 = vld [vmem:[#allocation2 + $0xb8] sm:$0x8]
    %v1249 = vsel %vm1220, 0, %v1248
    %1250 = vst [vmem:[#allocation2 + $0xb8] sm:$0x8] %v1249
    %v1251 = vld [vmem:[#allocation2 + $0xcc] sm:$0x8]
    %v1252 = vsel %vm1220, 0, %v1251
    %1253 = vst [vmem:[#allocation2 + $0xcc] sm:$0x8] %v1252
    %v1254 = vld [vmem:[#allocation2 + $0xe0] sm:$0x8]
    %v1255 = vsel %vm1220, 0, %v1254
    %1256 = vst [vmem:[#allocation2 + $0xe0] sm:$0x8] %v1255
    %v1257 = vld [vmem:[#allocation2 + $0xf4] sm:$0x8]
    %v1258 = vsel %vm1220, 0, %v1257
    %1259 = vst [vmem:[#allocation2 + $0xf4] sm:$0x8] %v1258
    %v1260 = vld [vmem:[#allocation2 + $0x108] sm:$0x8]
    %v1261 = vsel %vm1220, 0, %v1260
    %1262 = vst [vmem:[#allocation2 + $0x108] sm:$0x8] %v1261
    %v1263 = vld [vmem:[#allocation2 + $0x11c] sm:$0x8]
    %v1264 = vsel %vm1220, 0, %v1263
    %1265 = vst [vmem:[#allocation2 + $0x11c] sm:$0x8] %v1264
    %v1266 = vld [vmem:[#allocation2 + $0x130] sm:$0x8]
    %v1267 = vsel %vm1220, 0, %v1266
    %1268 = vst [vmem:[#allocation2 + $0x130] sm:$0x8] %v1267
    %v1269 = vld [vmem:[#allocation2 + $0x144] sm:$0x8]
    %v1270 = vsel %vm1220, 0, %v1269
    %1271 = vst [vmem:[#allocation2 + $0x144] sm:$0x8] %v1270
    %v1272 = vld [vmem:[#allocation2 + $0x158] sm:$0x8]
    %v1273 = vsel %vm1220, 0, %v1272
    %1274 = vst [vmem:[#allocation2 + $0x158] sm:$0x8] %v1273
    %v1275 = vld [vmem:[#allocation2 + $0x16c] sm:$0x8]
    %v1276 = vsel %vm1220, 0, %v1275
    %1277 = vst [vmem:[#allocation2 + $0x16c] sm:$0x8] %v1276
    %v1278 = vld [vmem:[#allocation2 + $0x180] sm:$0x8]
    %v1279 = vsel %vm1220, 0, %v1278
    %1280 = vst [vmem:[#allocation2 + $0x180] sm:$0x8] %v1279
    %v1281 = vld [vmem:[#allocation2 + $0x194] sm:$0x8]
    %v1282 = vsel %vm1220, 0, %v1281
    %1283 = vst [vmem:[#allocation2 + $0x194] sm:$0x8] %v1282
    %v1284 = vld [vmem:[#allocation2 + $0x1a8] sm:$0x8]
    %v1285 = vsel %vm1220, 0, %v1284
    %1286 = vst [vmem:[#allocation2 + $0x1a8] sm:$0x8] %v1285
    %v1287 = vld [vmem:[#allocation2 + $0x1bc] sm:$0x8]
    %v1288 = vsel %vm1220, 0, %v1287
    %1289 = vst [vmem:[#allocation2 + $0x1bc] sm:$0x8] %v1288
    %v1290 = vld [vmem:[#allocation2 + $0x1d0] sm:$0x8]
    %v1291 = vsel %vm1220, 0, %v1290
    %1292 = vst [vmem:[#allocation2 + $0x1d0] sm:$0x8] %v1291
    %v1293 = vld [vmem:[#allocation2 + $0x1e4] sm:$0x8]
    %v1294 = vsel %vm1220, 0, %v1293
    %1295 = vst [vmem:[#allocation2 + $0x1e4] sm:$0x8] %v1294
    %v1296 = vld [vmem:[#allocation2 + $0x1f8] sm:$0x8]
    %v1297 = vsel %vm1220, 0, %v1296
    %1298 = vst [vmem:[#allocation2 + $0x1f8] sm:$0x8] %v1297
    %v1299 = vld [vmem:[#allocation2 + $0x20c] sm:$0x8]
    %v1300 = vsel %vm1220, 0, %v1299
    %1301 = vst [vmem:[#allocation2 + $0x20c] sm:$0x8] %v1300
    %v1302 = vld [vmem:[#allocation2 + $0x220] sm:$0x8]
    %v1303 = vsel %vm1220, 0, %v1302
    %1304 = vst [vmem:[#allocation2 + $0x220] sm:$0x8] %v1303
    %v1305 = vld [vmem:[#allocation2 + $0x234] sm:$0x8]
    %v1306 = vsel %vm1220, 0, %v1305
    %1307 = vst [vmem:[#allocation2 + $0x234] sm:$0x8] %v1306
    %v1308 = vld [vmem:[#allocation2 + $0x248] sm:$0x8]
    %v1309 = vsel %vm1220, 0, %v1308
    %1310 = vst [vmem:[#allocation2 + $0x248] sm:$0x8] %v1309
    %v1311 = vld [vmem:[#allocation2 + $0x25c] sm:$0x8]
    %v1312 = vsel %vm1220, 0, %v1311
    %1313 = vst [vmem:[#allocation2 + $0x25c] sm:$0x8] %v1312
    %v1314 = vld [vmem:[#allocation2 + $0x270] sm:$0x8]
    %v1315 = vsel %vm1220, 0, %v1314
    %1316 = vst [vmem:[#allocation2 + $0x270] sm:$0x8] %v1315
    %v1317 = vld [vmem:[#allocation2 + $0x284] sm:$0x8]
    %v1318 = vsel %vm1220, 0, %v1317
    %1319 = vst [vmem:[#allocation2 + $0x284] sm:$0x8] %v1318
    %v1320 = vld [vmem:[#allocation2 + $0x298] sm:$0x8]
    %v1321 = vsel %vm1220, 0, %v1320
    %1322 = vst [vmem:[#allocation2 + $0x298] sm:$0x8] %v1321
    %v1323 = vld [vmem:[#allocation2 + $0x2ac] sm:$0x8]
    %v1324 = vsel %vm1220, 0, %v1323
    %1325 = vst [vmem:[#allocation2 + $0x2ac] sm:$0x8] %v1324
    %v1326 = vld [vmem:[#allocation2 + $0x2c0] sm:$0x8]
    %v1327 = vsel %vm1220, 0, %v1326
    %1328 = vst [vmem:[#allocation2 + $0x2c0] sm:$0x8] %v1327
    %v1329 = vld [vmem:[#allocation2 + $0x10] sm:$0x1]
    %v1330 = vsel %vm1192, 0, %v1329
    %1331 = vst [vmem:[#allocation2 + $0x10] sm:$0x1] %v1330
    %v1332 = vld [vmem:[#allocation2 + $0x24] sm:$0x1]
    %v1333 = vsel %vm1192, 0, %v1332
    %1334 = vst [vmem:[#allocation2 + $0x24] sm:$0x1] %v1333
    %v1335 = vld [vmem:[#allocation2 + $0x38] sm:$0x1]
    %v1336 = vsel %vm1192, 0, %v1335
    %1337 = vst [vmem:[#allocation2 + $0x38] sm:$0x1] %v1336
    %v1338 = vld [vmem:[#allocation2 + $0x4c] sm:$0x1]
    %v1339 = vsel %vm1192, 0, %v1338
    %1340 = vst [vmem:[#allocation2 + $0x4c] sm:$0x1] %v1339
    %v1341 = vld [vmem:[#allocation2 + $0x60] sm:$0x1]
    %v1342 = vsel %vm1192, 0, %v1341
    %1343 = vst [vmem:[#allocation2 + $0x60] sm:$0x1] %v1342
    %v1344 = vld [vmem:[#allocation2 + $0x74] sm:$0x1]
    %v1345 = vsel %vm1192, 0, %v1344
    %1346 = vst [vmem:[#allocation2 + $0x74] sm:$0x1] %v1345
    %v1347 = vld [vmem:[#allocation2 + $0x88] sm:$0x1]
    %v1348 = vsel %vm1192, 0, %v1347
    %1349 = vst [vmem:[#allocation2 + $0x88] sm:$0x1] %v1348
    %v1350 = vld [vmem:[#allocation2 + $0x9c] sm:$0x1]
    %v1351 = vsel %vm1192, 0, %v1350
    %1352 = vst [vmem:[#allocation2 + $0x9c] sm:$0x1] %v1351
    %v1353 = vld [vmem:[#allocation2 + $0xb0] sm:$0x1]
    %v1354 = vsel %vm1192, 0, %v1353
    %1355 = vst [vmem:[#allocation2 + $0xb0] sm:$0x1] %v1354
    %v1356 = vld [vmem:[#allocation2 + $0xc4] sm:$0x1]
    %v1357 = vsel %vm1192, 0, %v1356
    %1358 = vst [vmem:[#allocation2 + $0xc4] sm:$0x1] %v1357
    %v1359 = vld [vmem:[#allocation2 + $0xd8] sm:$0x1]
    %v1360 = vsel %vm1192, 0, %v1359
    %1361 = vst [vmem:[#allocation2 + $0xd8] sm:$0x1] %v1360
    %v1362 = vld [vmem:[#allocation2 + $0xec] sm:$0x1]
    %v1363 = vsel %vm1192, 0, %v1362
    %1364 = vst [vmem:[#allocation2 + $0xec] sm:$0x1] %v1363
    %v1365 = vld [vmem:[#allocation2 + $0x100] sm:$0x1]
    %v1366 = vsel %vm1192, 0, %v1365
    %1367 = vst [vmem:[#allocation2 + $0x100] sm:$0x1] %v1366
    %v1368 = vld [vmem:[#allocation2 + $0x114] sm:$0x1]
    %v1369 = vsel %vm1192, 0, %v1368
    %1370 = vst [vmem:[#allocation2 + $0x114] sm:$0x1] %v1369
    %v1371 = vld [vmem:[#allocation2 + $0x128] sm:$0x1]
    %v1372 = vsel %vm1192, 0, %v1371
    %1373 = vst [vmem:[#allocation2 + $0x128] sm:$0x1] %v1372
    %v1374 = vld [vmem:[#allocation2 + $0x13c] sm:$0x1]
    %v1375 = vsel %vm1192, 0, %v1374
    %1376 = vst [vmem:[#allocation2 + $0x13c] sm:$0x1] %v1375
    %v1377 = vld [vmem:[#allocation2 + $0x150] sm:$0x1]
    %v1378 = vsel %vm1192, 0, %v1377
    %1379 = vst [vmem:[#allocation2 + $0x150] sm:$0x1] %v1378
    %v1380 = vld [vmem:[#allocation2 + $0x164] sm:$0x1]
    %v1381 = vsel %vm1192, 0, %v1380
    %1382 = vst [vmem:[#allocation2 + $0x164] sm:$0x1] %v1381
    %v1383 = vld [vmem:[#allocation2 + $0x178] sm:$0x1]
    %v1384 = vsel %vm1192, 0, %v1383
    %1385 = vst [vmem:[#allocation2 + $0x178] sm:$0x1] %v1384
    %v1386 = vld [vmem:[#allocation2 + $0x18c] sm:$0x1]
    %v1387 = vsel %vm1192, 0, %v1386
    %1388 = vst [vmem:[#allocation2 + $0x18c] sm:$0x1] %v1387
    %v1389 = vld [vmem:[#allocation2 + $0x1a0] sm:$0x1]
    %v1390 = vsel %vm1192, 0, %v1389
    %1391 = vst [vmem:[#allocation2 + $0x1a0] sm:$0x1] %v1390
    %v1392 = vld [vmem:[#allocation2 + $0x1b4] sm:$0x1]
    %v1393 = vsel %vm1192, 0, %v1392
    %1394 = vst [vmem:[#allocation2 + $0x1b4] sm:$0x1] %v1393
    %v1395 = vld [vmem:[#allocation2 + $0x1c8] sm:$0x1]
    %v1396 = vsel %vm1192, 0, %v1395
    %1397 = vst [vmem:[#allocation2 + $0x1c8] sm:$0x1] %v1396
    %v1398 = vld [vmem:[#allocation2 + $0x1dc] sm:$0x1]
    %v1399 = vsel %vm1192, 0, %v1398
    %1400 = vst [vmem:[#allocation2 + $0x1dc] sm:$0x1] %v1399
    %v1401 = vld [vmem:[#allocation2 + $0x1f0] sm:$0x1]
    %v1402 = vsel %vm1192, 0, %v1401
    %1403 = vst [vmem:[#allocation2 + $0x1f0] sm:$0x1] %v1402
    %v1404 = vld [vmem:[#allocation2 + $0x204] sm:$0x1]
    %v1405 = vsel %vm1192, 0, %v1404
    %1406 = vst [vmem:[#allocation2 + $0x204] sm:$0x1] %v1405
    %v1407 = vld [vmem:[#allocation2 + $0x218] sm:$0x1]
    %v1408 = vsel %vm1192, 0, %v1407
    %1409 = vst [vmem:[#allocation2 + $0x218] sm:$0x1] %v1408
    %v1410 = vld [vmem:[#allocation2 + $0x22c] sm:$0x1]
    %v1411 = vsel %vm1192, 0, %v1410
    %1412 = vst [vmem:[#allocation2 + $0x22c] sm:$0x1] %v1411
    %v1413 = vld [vmem:[#allocation2 + $0x240] sm:$0x1]
    %v1414 = vsel %vm1192, 0, %v1413
    %1415 = vst [vmem:[#allocation2 + $0x240] sm:$0x1] %v1414
    %v1416 = vld [vmem:[#allocation2 + $0x254] sm:$0x1]
    %v1417 = vsel %vm1192, 0, %v1416
    %1418 = vst [vmem:[#allocation2 + $0x254] sm:$0x1] %v1417
    %v1419 = vld [vmem:[#allocation2 + $0x268] sm:$0x1]
    %v1420 = vsel %vm1192, 0, %v1419
    %1421 = vst [vmem:[#allocation2 + $0x268] sm:$0x1] %v1420
    %v1422 = vld [vmem:[#allocation2 + $0x27c] sm:$0x1]
    %v1423 = vsel %vm1192, 0, %v1422
    %1424 = vst [vmem:[#allocation2 + $0x27c] sm:$0x1] %v1423
    %v1425 = vld [vmem:[#allocation2 + $0x290] sm:$0x1]
    %v1426 = vsel %vm1192, 0, %v1425
    %1427 = vst [vmem:[#allocation2 + $0x290] sm:$0x1] %v1426
    %v1428 = vld [vmem:[#allocation2 + $0x2a4] sm:$0x1]
    %v1429 = vsel %vm1192, 0, %v1428
    %1430 = vst [vmem:[#allocation2 + $0x2a4] sm:$0x1] %v1429
    %v1431 = vld [vmem:[#allocation2 + $0x2b8] sm:$0x1]
    %v1432 = vsel %vm1192, 0, %v1431
    %1433 = vst [vmem:[#allocation2 + $0x2b8] sm:$0x1] %v1432
    %v1434 = vld [vmem:[#allocation2 + $0x2cc] sm:$0x1]
    %v1435 = vsel %vm1192, 0, %v1434
    %1436 = vst [vmem:[#allocation2 + $0x2cc] sm:$0x1] %v1435
    %v1437 = vpack.c.bf16 %v1123, %v1122
    %v1438 = vpack.c.bf16 %v1125, %v1124
    %v1439 = vpack.c.bf16 %v1127, %v1126
    %v1440 = vpack.c.bf16 %v1129, %v1128
    %v1441 = vpack.c.bf16 %v1131, %v1130
    %v1442 = vpack.c.bf16 %v1133, %v1132
    %v1443 = vpack.c.bf16 %v1135, %v1134
    %v1444 = vpack.c.bf16 %v1137, %v1136
    %v1445 = vpack.c.bf16 %v1139, %v1138
    %v1446 = vpack.c.bf16 %v1141, %v1140
    %v1447 = vpack.c.bf16 %v1143, %v1142
    %v1448 = vpack.c.bf16 %v1145, %v1144
    %v1449 = vpack.c.bf16 %v1147, %v1146
    %v1450 = vpack.c.bf16 %v1149, %v1148
    %v1451 = vpack.c.bf16 %v1151, %v1150
    %v1452 = vpack.c.bf16 %v1153, %v1152
    %v1453 = vpack.c.bf16 %v1155, %v1154
    %v1454 = vpack.c.bf16 %v1157, %v1156
    %v1455 = vpack.c.bf16 %v1159, %v1158
    %v1456 = vpack.c.bf16 %v1161, %v1160
    %v1457 = vpack.c.bf16 %v1163, %v1162
    %v1458 = vpack.c.bf16 %v1165, %v1164
    %v1459 = vpack.c.bf16 %v1167, %v1166
    %v1460 = vpack.c.bf16 %v1169, %v1168
    %v1461 = vpack.c.bf16 %v1171, %v1170
    %v1462 = vpack.c.bf16 %v1173, %v1172
    %v1463 = vpack.c.bf16 %v1175, %v1174
    %v1464 = vpack.c.bf16 %v1177, %v1176
    %v1465 = vpack.c.bf16 %v1179, %v1178
    %v1466 = vpack.c.bf16 %v1181, %v1180
    %v1467 = vpack.c.bf16 %v1183, %v1182
    %v1468 = vpack.c.bf16 %v1185, %v1184
    %v1501 = vunpack.c.l.b16 %v1437
    %v1502 = vunpack.c.h.b16 %v1437
    %v1503 = vunpack.c.l.b16 %v1438
    %v1504 = vunpack.c.h.b16 %v1438
    %v1505 = vunpack.c.l.b16 %v1439
    %v1506 = vunpack.c.h.b16 %v1439
    %v1507 = vunpack.c.l.b16 %v1440
    %v1508 = vunpack.c.h.b16 %v1440
    %v1509 = vunpack.c.l.b16 %v1441
    %v1510 = vunpack.c.h.b16 %v1441
    %v1511 = vunpack.c.l.b16 %v1442
    %v1512 = vunpack.c.h.b16 %v1442
    %v1513 = vunpack.c.l.b16 %v1443
    %v1514 = vunpack.c.h.b16 %v1443
    %v1515 = vunpack.c.l.b16 %v1444
    %v1516 = vunpack.c.h.b16 %v1444
    %v1517 = vunpack.c.l.b16 %v1445
    %v1518 = vunpack.c.h.b16 %v1445
    %v1519 = vunpack.c.l.b16 %v1446
    %v1520 = vunpack.c.h.b16 %v1446
    %v1521 = vunpack.c.l.b16 %v1447
    %v1522 = vunpack.c.h.b16 %v1447
    %v1523 = vunpack.c.l.b16 %v1448
    %v1524 = vunpack.c.h.b16 %v1448
    %v1525 = vunpack.c.l.b16 %v1449
    %v1526 = vunpack.c.h.b16 %v1449
    %v1527 = vunpack.c.l.b16 %v1450
    %v1528 = vunpack.c.h.b16 %v1450
    %v1529 = vunpack.c.l.b16 %v1451
    %v1530 = vunpack.c.h.b16 %v1451
    %v1531 = vunpack.c.l.b16 %v1452
    %v1532 = vunpack.c.h.b16 %v1452
    %v1533 = vunpack.c.l.b16 %v1453
    %v1534 = vunpack.c.h.b16 %v1453
    %v1535 = vunpack.c.l.b16 %v1454
    %v1536 = vunpack.c.h.b16 %v1454
    %v1537 = vunpack.c.l.b16 %v1455
    %v1538 = vunpack.c.h.b16 %v1455
    %v1539 = vunpack.c.l.b16 %v1456
    %v1540 = vunpack.c.h.b16 %v1456
    %v1541 = vunpack.c.l.b16 %v1457
    %v1542 = vunpack.c.h.b16 %v1457
    %v1543 = vunpack.c.l.b16 %v1458
    %v1544 = vunpack.c.h.b16 %v1458
    %v1545 = vunpack.c.l.b16 %v1459
    %v1546 = vunpack.c.h.b16 %v1459
    %v1547 = vunpack.c.l.b16 %v1460
    %v1548 = vunpack.c.h.b16 %v1460
    %v1549 = vunpack.c.l.b16 %v1461
    %v1550 = vunpack.c.h.b16 %v1461
    %v1551 = vunpack.c.l.b16 %v1462
    %v1552 = vunpack.c.h.b16 %v1462
    %v1553 = vunpack.c.l.b16 %v1463
    %v1554 = vunpack.c.h.b16 %v1463
    %v1555 = vunpack.c.l.b16 %v1464
    %v1556 = vunpack.c.h.b16 %v1464
    %v1557 = vunpack.c.l.b16 %v1465
    %v1558 = vunpack.c.h.b16 %v1465
    %v1559 = vunpack.c.l.b16 %v1466
    %v1560 = vunpack.c.h.b16 %v1466
    %v1561 = vunpack.c.l.b16 %v1467
    %v1562 = vunpack.c.h.b16 %v1467
    %v1563 = vunpack.c.l.b16 %v1468
    %v1564 = vunpack.c.h.b16 %v1468
    %v1565 = vpack.c.b16 %v1501, %v1501
    %v1566 = vpack.c.b16 %v1502, %v1502
    %v1567 = vpack.c.b16 %v1503, %v1503
    %v1568 = vpack.c.b16 %v1504, %v1504
    %v1569 = vpack.c.b16 %v1505, %v1505
    %v1570 = vpack.c.b16 %v1506, %v1506
    %v1571 = vpack.c.b16 %v1507, %v1507
    %v1572 = vpack.c.b16 %v1508, %v1508
    %v1573 = vpack.c.b16 %v1509, %v1509
    %v1574 = vpack.c.b16 %v1510, %v1510
    %v1575 = vpack.c.b16 %v1511, %v1511
    %v1576 = vpack.c.b16 %v1512, %v1512
    %v1577 = vpack.c.b16 %v1513, %v1513
    %v1578 = vpack.c.b16 %v1514, %v1514
    %v1579 = vpack.c.b16 %v1515, %v1515
    %v1580 = vpack.c.b16 %v1516, %v1516
    %v1581 = vpack.c.b16 %v1517, %v1517
    %v1582 = vpack.c.b16 %v1518, %v1518
    %v1583 = vpack.c.b16 %v1519, %v1519
    %v1584 = vpack.c.b16 %v1520, %v1520
    %v1585 = vpack.c.b16 %v1521, %v1521
    %v1586 = vpack.c.b16 %v1522, %v1522
    %v1587 = vpack.c.b16 %v1523, %v1523
    %v1588 = vpack.c.b16 %v1524, %v1524
    %v1589 = vpack.c.b16 %v1525, %v1525
    %v1590 = vpack.c.b16 %v1526, %v1526
    %v1591 = vpack.c.b16 %v1527, %v1527
    %v1592 = vpack.c.b16 %v1528, %v1528
    %v1593 = vpack.c.b16 %v1529, %v1529
    %v1594 = vpack.c.b16 %v1530, %v1530
    %v1595 = vpack.c.b16 %v1531, %v1531
    %v1596 = vpack.c.b16 %v1532, %v1532
    %v1597 = vpack.c.b16 %v1533, %v1533
    %v1598 = vpack.c.b16 %v1534, %v1534
    %v1599 = vpack.c.b16 %v1535, %v1535
    %v1600 = vpack.c.b16 %v1536, %v1536
    %v1601 = vpack.c.b16 %v1537, %v1537
    %v1602 = vpack.c.b16 %v1538, %v1538
    %v1603 = vpack.c.b16 %v1539, %v1539
    %v1604 = vpack.c.b16 %v1540, %v1540
    %v1605 = vpack.c.b16 %v1541, %v1541
    %v1606 = vpack.c.b16 %v1542, %v1542
    %v1607 = vpack.c.b16 %v1543, %v1543
    %v1608 = vpack.c.b16 %v1544, %v1544
    %v1609 = vpack.c.b16 %v1545, %v1545
    %v1610 = vpack.c.b16 %v1546, %v1546
    %v1611 = vpack.c.b16 %v1547, %v1547
    %v1612 = vpack.c.b16 %v1548, %v1548
    %v1613 = vpack.c.b16 %v1549, %v1549
    %v1614 = vpack.c.b16 %v1550, %v1550
    %v1615 = vpack.c.b16 %v1551, %v1551
    %v1616 = vpack.c.b16 %v1552, %v1552
    %v1617 = vpack.c.b16 %v1553, %v1553
    %v1618 = vpack.c.b16 %v1554, %v1554
    %v1619 = vpack.c.b16 %v1555, %v1555
    %v1620 = vpack.c.b16 %v1556, %v1556
    %v1621 = vpack.c.b16 %v1557, %v1557
    %v1622 = vpack.c.b16 %v1558, %v1558
    %v1623 = vpack.c.b16 %v1559, %v1559
    %v1624 = vpack.c.b16 %v1560, %v1560
    %v1625 = vpack.c.b16 %v1561, %v1561
    %v1626 = vpack.c.b16 %v1562, %v1562
    %v1627 = vpack.c.b16 %v1563, %v1563
    %v1628 = vpack.c.b16 %v1564, %v1564
    %s1693 = scalar_lea.vmem [#allocation2], 20
    %1694 = vst [vmem:[%s1693 + $0x8] sm:$0xf] %v1565
    %1695 = vst [vmem:[%s1693 + $0xc] sm:$0xf] %v1566
    %1696 = vst [vmem:[%s1693 + $0x1c] sm:$0xf] %v1567
    %1697 = vst [vmem:[%s1693 + $0x20] sm:$0xf] %v1568
    %1698 = vst [vmem:[%s1693 + $0x30] sm:$0xf] %v1569
    %1699 = vst [vmem:[%s1693 + $0x34] sm:$0xf] %v1570
    %1700 = vst [vmem:[%s1693 + $0x44] sm:$0xf] %v1571
    %1701 = vst [vmem:[%s1693 + $0x48] sm:$0xf] %v1572
    %1702 = vst [vmem:[%s1693 + $0x58] sm:$0xf] %v1573
    %1703 = vst [vmem:[%s1693 + $0x5c] sm:$0xf] %v1574
    %1704 = vst [vmem:[%s1693 + $0x6c] sm:$0xf] %v1575
    %1705 = vst [vmem:[%s1693 + $0x70] sm:$0xf] %v1576
    %1706 = vst [vmem:[%s1693 + $0x80] sm:$0xf] %v1577
    %1707 = vst [vmem:[%s1693 + $0x84] sm:$0xf] %v1578
    %1708 = vst [vmem:[%s1693 + $0x94] sm:$0xf] %v1579
    %1709 = vst [vmem:[%s1693 + $0x98] sm:$0xf] %v1580
    %1710 = vst [vmem:[%s1693 + $0xa8] sm:$0xf] %v1581
    %1711 = vst [vmem:[%s1693 + $0xac] sm:$0xf] %v1582
    %1712 = vst [vmem:[%s1693 + $0xbc] sm:$0xf] %v1583
    %1713 = vst [vmem:[%s1693 + $0xc0] sm:$0xf] %v1584
    %1714 = vst [vmem:[%s1693 + $0xd0] sm:$0xf] %v1585
    %1715 = vst [vmem:[%s1693 + $0xd4] sm:$0xf] %v1586
    %1716 = vst [vmem:[%s1693 + $0xe4] sm:$0xf] %v1587
    %1717 = vst [vmem:[%s1693 + $0xe8] sm:$0xf] %v1588
    %1718 = vst [vmem:[%s1693 + $0xf8] sm:$0xf] %v1589
    %1719 = vst [vmem:[%s1693 + $0xfc] sm:$0xf] %v1590
    %1720 = vst [vmem:[%s1693 + $0x10c] sm:$0xf] %v1591
    %1721 = vst [vmem:[%s1693 + $0x110] sm:$0xf] %v1592
    %1722 = vst [vmem:[%s1693 + $0x120] sm:$0xf] %v1593
    %1723 = vst [vmem:[%s1693 + $0x124] sm:$0xf] %v1594
    %1724 = vst [vmem:[%s1693 + $0x134] sm:$0xf] %v1595
    %1725 = vst [vmem:[%s1693 + $0x138] sm:$0xf] %v1596
    %1726 = vst [vmem:[%s1693 + $0x170] sm:$0xf] %v1597
    %1727 = vst [vmem:[%s1693 + $0x174] sm:$0xf] %v1598
    %1728 = vst [vmem:[%s1693 + $0x184] sm:$0xf] %v1599
    %1729 = vst [vmem:[%s1693 + $0x188] sm:$0xf] %v1600
    %1730 = vst [vmem:[%s1693 + $0x198] sm:$0xf] %v1601
    %1731 = vst [vmem:[%s1693 + $0x19c] sm:$0xf] %v1602
    %1732 = vst [vmem:[%s1693 + $0x1ac] sm:$0xf] %v1603
    %1733 = vst [vmem:[%s1693 + $0x1b0] sm:$0xf] %v1604
    %1734 = vst [vmem:[%s1693 + $0x1c0] sm:$0xf] %v1605
    %1735 = vst [vmem:[%s1693 + $0x1c4] sm:$0xf] %v1606
    %1736 = vst [vmem:[%s1693 + $0x1d4] sm:$0xf] %v1607
    %1737 = vst [vmem:[%s1693 + $0x1d8] sm:$0xf] %v1608
    %1738 = vst [vmem:[%s1693 + $0x1e8] sm:$0xf] %v1609
    %1739 = vst [vmem:[%s1693 + $0x1ec] sm:$0xf] %v1610
    %1740 = vst [vmem:[%s1693 + $0x1fc] sm:$0xf] %v1611
    %1741 = vst [vmem:[%s1693 + $0x200] sm:$0xf] %v1612
    %1742 = vst [vmem:[%s1693 + $0x210] sm:$0xf] %v1613
    %1743 = vst [vmem:[%s1693 + $0x214] sm:$0xf] %v1614
    %1744 = vst [vmem:[%s1693 + $0x224] sm:$0xf] %v1615
    %1745 = vst [vmem:[%s1693 + $0x228] sm:$0xf] %v1616
    %1746 = vst [vmem:[%s1693 + $0x238] sm:$0xf] %v1617
    %1747 = vst [vmem:[%s1693 + $0x23c] sm:$0xf] %v1618
    %1748 = vst [vmem:[%s1693 + $0x24c] sm:$0xf] %v1619
    %1749 = vst [vmem:[%s1693 + $0x250] sm:$0xf] %v1620
    %1750 = vst [vmem:[%s1693 + $0x260] sm:$0xf] %v1621
    %1751 = vst [vmem:[%s1693 + $0x264] sm:$0xf] %v1622
    %1752 = vst [vmem:[%s1693 + $0x274] sm:$0xf] %v1623
    %1753 = vst [vmem:[%s1693 + $0x278] sm:$0xf] %v1624
    %1754 = vst [vmem:[%s1693 + $0x288] sm:$0xf] %v1625
    %1755 = vst [vmem:[%s1693 + $0x28c] sm:$0xf] %v1626
    %1756 = vst [vmem:[%s1693 + $0x29c] sm:$0xf] %v1627
    %1757 = vst [vmem:[%s1693 + $0x2a0] sm:$0xf] %v1628
    %v1758 = vld [vmem:[#allocation9] sm:$0x7]
    %v1759 = vld [vmem:[#allocation9 + $0x4] sm:$0x7]
    %v1760 = vld [vmem:[#allocation9 + $0x8] sm:$0x7]
    %v1761 = vld [vmem:[%s4] sm:$0x1]
    %v1762 = vld [vmem:[#allocation2 + $0x4] sm:$0x8]
    %v1763 = vld [vmem:[#allocation2 + $0x8] sm:$0xf]
    %v1764 = vld [vmem:[#allocation2 + $0xc] sm:$0xf]
    %v1765 = vld [vmem:[#allocation2 + $0x18] sm:$0x8]
    %v1766 = vld [vmem:[#allocation2 + $0x1c] sm:$0xf]
    %v1767 = vld [vmem:[#allocation2 + $0x20] sm:$0xf]
    %v1768 = vld [vmem:[#allocation2 + $0x2c] sm:$0x8]
    %v1769 = vld [vmem:[#allocation2 + $0x30] sm:$0xf]
    %v1770 = vld [vmem:[#allocation2 + $0x34] sm:$0xf]
    %v1771 = vld [vmem:[#allocation2 + $0x40] sm:$0x8]
    %v1772 = vld [vmem:[#allocation2 + $0x44] sm:$0xf]
    %v1773 = vld [vmem:[#allocation2 + $0x48] sm:$0xf]
    %v1774 = vld [vmem:[#allocation2 + $0x54] sm:$0x8]
    %v1775 = vld [vmem:[#allocation2 + $0x58] sm:$0xf]
    %v1776 = vld [vmem:[#allocation2 + $0x5c] sm:$0xf]
    %v1777 = vld [vmem:[#allocation2 + $0x68] sm:$0x8]
    %v1778 = vld [vmem:[#allocation2 + $0x6c] sm:$0xf]
    %v1779 = vld [vmem:[#allocation2 + $0x70] sm:$0xf]
    %v1780 = vld [vmem:[#allocation2 + $0x7c] sm:$0x8]
    %v1781 = vld [vmem:[#allocation2 + $0x80] sm:$0xf]
    %v1782 = vld [vmem:[#allocation2 + $0x84] sm:$0xf]
    %v1783 = vld [vmem:[#allocation2 + $0x90] sm:$0x8]
    %v1784 = vld [vmem:[#allocation2 + $0x94] sm:$0xf]
    %v1785 = vld [vmem:[#allocation2 + $0x98] sm:$0xf]
    %v1786 = vld [vmem:[#allocation2 + $0xa4] sm:$0x8]
    %v1787 = vld [vmem:[#allocation2 + $0xa8] sm:$0xf]
    %v1788 = vld [vmem:[#allocation2 + $0xac] sm:$0xf]
    %v1789 = vld [vmem:[#allocation2 + $0xb8] sm:$0x8]
    %v1790 = vld [vmem:[#allocation2 + $0xbc] sm:$0xf]
    %v1791 = vld [vmem:[#allocation2 + $0xc0] sm:$0xf]
    %v1792 = vld [vmem:[#allocation2 + $0xcc] sm:$0x8]
    %v1793 = vld [vmem:[#allocation2 + $0xd0] sm:$0xf]
    %v1794 = vld [vmem:[#allocation2 + $0xd4] sm:$0xf]
    %v1795 = vld [vmem:[#allocation2 + $0xe0] sm:$0x8]
    %v1796 = vld [vmem:[#allocation2 + $0xe4] sm:$0xf]
    %v1797 = vld [vmem:[#allocation2 + $0xe8] sm:$0xf]
    %v1798 = vld [vmem:[#allocation2 + $0xf4] sm:$0x8]
    %v1799 = vld [vmem:[#allocation2 + $0xf8] sm:$0xf]
    %v1800 = vld [vmem:[#allocation2 + $0xfc] sm:$0xf]
    %v1801 = vld [vmem:[#allocation2 + $0x108] sm:$0x8]
    %v1802 = vld [vmem:[#allocation2 + $0x10c] sm:$0xf]
    %v1803 = vld [vmem:[#allocation2 + $0x110] sm:$0xf]
    %v1804 = vld [vmem:[#allocation2 + $0x11c] sm:$0x8]
    %v1805 = vld [vmem:[#allocation2 + $0x120] sm:$0xf]
    %v1806 = vld [vmem:[#allocation2 + $0x124] sm:$0xf]
    %v1807 = vld [vmem:[#allocation2 + $0x130] sm:$0x8]
    %v1808 = vld [vmem:[#allocation2 + $0x134] sm:$0xf]
    %v1809 = vld [vmem:[#allocation2 + $0x138] sm:$0xf]
    %v1810 = vld [vmem:[#allocation2 + $0x16c] sm:$0x8]
    %v1811 = vld [vmem:[#allocation2 + $0x170] sm:$0xf]
    %v1812 = vld [vmem:[#allocation2 + $0x174] sm:$0xf]
    %v1813 = vld [vmem:[#allocation2 + $0x180] sm:$0x8]
    %v1814 = vld [vmem:[#allocation2 + $0x184] sm:$0xf]
    %v1815 = vld [vmem:[#allocation2 + $0x188] sm:$0xf]
    %v1816 = vld [vmem:[#allocation2 + $0x194] sm:$0x8]
    %v1817 = vld [vmem:[#allocation2 + $0x198] sm:$0xf]
    %v1818 = vld [vmem:[#allocation2 + $0x19c] sm:$0xf]
    %v1819 = vld [vmem:[#allocation2 + $0x1a8] sm:$0x8]
    %v1820 = vld [vmem:[#allocation2 + $0x1ac] sm:$0xf]
    %v1821 = vld [vmem:[#allocation2 + $0x1b0] sm:$0xf]
    %v1822 = vld [vmem:[#allocation2 + $0x1bc] sm:$0x8]
    %v1823 = vld [vmem:[#allocation2 + $0x1c0] sm:$0xf]
    %v1824 = vld [vmem:[#allocation2 + $0x1c4] sm:$0xf]
    %v1825 = vld [vmem:[#allocation2 + $0x1d0] sm:$0x8]
    %v1826 = vld [vmem:[#allocation2 + $0x1d4] sm:$0xf]
    %v1827 = vld [vmem:[#allocation2 + $0x1d8] sm:$0xf]
    %v1828 = vld [vmem:[#allocation2 + $0x1e4] sm:$0x8]
    %v1829 = vld [vmem:[#allocation2 + $0x1e8] sm:$0xf]
    %v1830 = vld [vmem:[#allocation2 + $0x1ec] sm:$0xf]
    %v1831 = vld [vmem:[#allocation2 + $0x1f8] sm:$0x8]
    %v1832 = vld [vmem:[#allocation2 + $0x1fc] sm:$0xf]
    %v1833 = vld [vmem:[#allocation2 + $0x200] sm:$0xf]
    %v1834 = vld [vmem:[#allocation2 + $0x20c] sm:$0x8]
    %v1835 = vld [vmem:[#allocation2 + $0x210] sm:$0xf]
    %v1836 = vld [vmem:[#allocation2 + $0x214] sm:$0xf]
    %v1837 = vld [vmem:[#allocation2 + $0x220] sm:$0x8]
    %v1838 = vld [vmem:[#allocation2 + $0x224] sm:$0xf]
    %v1839 = vld [vmem:[#allocation2 + $0x228] sm:$0xf]
    %v1840 = vld [vmem:[#allocation2 + $0x234] sm:$0x8]
    %v1841 = vld [vmem:[#allocation2 + $0x238] sm:$0xf]
    %v1842 = vld [vmem:[#allocation2 + $0x23c] sm:$0xf]
    %v1843 = vld [vmem:[#allocation2 + $0x248] sm:$0x8]
    %v1844 = vld [vmem:[#allocation2 + $0x24c] sm:$0xf]
    %v1845 = vld [vmem:[#allocation2 + $0x250] sm:$0xf]
    %v1846 = vld [vmem:[#allocation2 + $0x25c] sm:$0x8]
    %v1847 = vld [vmem:[#allocation2 + $0x260] sm:$0xf]
    %v1848 = vld [vmem:[#allocation2 + $0x264] sm:$0xf]
    %v1849 = vld [vmem:[#allocation2 + $0x270] sm:$0x8]
    %v1850 = vld [vmem:[#allocation2 + $0x274] sm:$0xf]
    %v1851 = vld [vmem:[#allocation2 + $0x278] sm:$0xf]
    %v1852 = vld [vmem:[#allocation2 + $0x284] sm:$0x8]
    %v1853 = vld [vmem:[#allocation2 + $0x288] sm:$0xf]
    %v1854 = vld [vmem:[#allocation2 + $0x28c] sm:$0xf]
    %v1855 = vld [vmem:[#allocation2 + $0x298] sm:$0x8]
    %v1856 = vld [vmem:[#allocation2 + $0x29c] sm:$0xf]
    %v1857 = vld [vmem:[#allocation2 + $0x2a0] sm:$0xf]
    %v1858 = vunpack.c.l.bf16 %v1762
    %v1859 = vunpack.c.l.bf16 %v1763
    %v1860 = vunpack.c.l.bf16 %v1764
    %v1861 = vunpack.c.l.bf16 %v1765
    %v1862 = vunpack.c.l.bf16 %v1766
    %v1863 = vunpack.c.l.bf16 %v1767
    %v1864 = vunpack.c.l.bf16 %v1768
    %v1865 = vunpack.c.l.bf16 %v1769
    %v1866 = vunpack.c.l.bf16 %v1770
    %v1867 = vunpack.c.l.bf16 %v1771
    %v1868 = vunpack.c.l.bf16 %v1772
    %v1869 = vunpack.c.l.bf16 %v1773
    %v1870 = vunpack.c.l.bf16 %v1774
    %v1871 = vunpack.c.l.bf16 %v1775
    %v1872 = vunpack.c.l.bf16 %v1776
    %v1873 = vunpack.c.l.bf16 %v1777
    %v1874 = vunpack.c.l.bf16 %v1778
    %v1875 = vunpack.c.l.bf16 %v1779
    %v1876 = vunpack.c.l.bf16 %v1780
    %v1877 = vunpack.c.l.bf16 %v1781
    %v1878 = vunpack.c.l.bf16 %v1782
    %v1879 = vunpack.c.l.bf16 %v1783
    %v1880 = vunpack.c.l.bf16 %v1784
    %v1881 = vunpack.c.l.bf16 %v1785
    %v1882 = vunpack.c.l.bf16 %v1786
    %v1883 = vunpack.c.l.bf16 %v1787
    %v1884 = vunpack.c.l.bf16 %v1788
    %v1885 = vunpack.c.l.bf16 %v1789
    %v1886 = vunpack.c.l.bf16 %v1790
    %v1887 = vunpack.c.l.bf16 %v1791
    %v1888 = vunpack.c.l.bf16 %v1792
    %v1889 = vunpack.c.l.bf16 %v1793
    %v1890 = vunpack.c.l.bf16 %v1794
    %v1891 = vunpack.c.l.bf16 %v1795
    %v1892 = vunpack.c.l.bf16 %v1796
    %v1893 = vunpack.c.l.bf16 %v1797
    %v1894 = vunpack.c.l.bf16 %v1798
    %v1895 = vunpack.c.l.bf16 %v1799
    %v1896 = vunpack.c.l.bf16 %v1800
    %v1897 = vunpack.c.l.bf16 %v1801
    %v1898 = vunpack.c.l.bf16 %v1802
    %v1899 = vunpack.c.l.bf16 %v1803
    %v1900 = vunpack.c.l.bf16 %v1804
    %v1901 = vunpack.c.l.bf16 %v1805
    %v1902 = vunpack.c.l.bf16 %v1806
    %v1903 = vunpack.c.l.bf16 %v1807
    %v1904 = vunpack.c.l.bf16 %v1808
    %v1905 = vunpack.c.l.bf16 %v1809
    %v1906 = vunpack.c.l.bf16 %v1810
    %v1907 = vunpack.c.l.bf16 %v1811
    %v1908 = vunpack.c.l.bf16 %v1812
    %v1909 = vunpack.c.l.bf16 %v1813
    %v1910 = vunpack.c.l.bf16 %v1814
    %v1911 = vunpack.c.l.bf16 %v1815
    %v1912 = vunpack.c.l.bf16 %v1816
    %v1913 = vunpack.c.l.bf16 %v1817
    %v1914 = vunpack.c.l.bf16 %v1818
    %v1915 = vunpack.c.l.bf16 %v1819
    %v1916 = vunpack.c.l.bf16 %v1820
    %v1917 = vunpack.c.l.bf16 %v1821
    %v1918 = vunpack.c.l.bf16 %v1822
    %v1919 = vunpack.c.l.bf16 %v1823
    %v1920 = vunpack.c.l.bf16 %v1824
    %v1921 = vunpack.c.l.bf16 %v1825
    %v1922 = vunpack.c.l.bf16 %v1826
    %v1923 = vunpack.c.l.bf16 %v1827
    %v1924 = vunpack.c.l.bf16 %v1828
    %v1925 = vunpack.c.l.bf16 %v1829
    %v1926 = vunpack.c.l.bf16 %v1830
    %v1927 = vunpack.c.l.bf16 %v1831
    %v1928 = vunpack.c.l.bf16 %v1832
    %v1929 = vunpack.c.l.bf16 %v1833
    %v1930 = vunpack.c.l.bf16 %v1834
    %v1931 = vunpack.c.l.bf16 %v1835
    %v1932 = vunpack.c.l.bf16 %v1836
    %v1933 = vunpack.c.l.bf16 %v1837
    %v1934 = vunpack.c.l.bf16 %v1838
    %v1935 = vunpack.c.l.bf16 %v1839
    %v1936 = vunpack.c.l.bf16 %v1840
    %v1937 = vunpack.c.l.bf16 %v1841
    %v1938 = vunpack.c.l.bf16 %v1842
    %v1939 = vunpack.c.l.bf16 %v1843
    %v1940 = vunpack.c.l.bf16 %v1844
    %v1941 = vunpack.c.l.bf16 %v1845
    %v1942 = vunpack.c.l.bf16 %v1846
    %v1943 = vunpack.c.l.bf16 %v1847
    %v1944 = vunpack.c.l.bf16 %v1848
    %v1945 = vunpack.c.l.bf16 %v1849
    %v1946 = vunpack.c.l.bf16 %v1850
    %v1947 = vunpack.c.l.bf16 %v1851
    %v1948 = vunpack.c.l.bf16 %v1852
    %v1949 = vunpack.c.l.bf16 %v1853
    %v1950 = vunpack.c.l.bf16 %v1854
    %v1951 = vunpack.c.l.bf16 %v1855
    %v1952 = vunpack.c.l.bf16 %v1856
    %v1953 = vunpack.c.l.bf16 %v1857
    %v1954 = vlaneseq
    %v1955 = vshrl.u32 %v1954, 7
    %v1956 = vsub.s32 0, %v1955
    %v1957 = vrot.slane %v1758, %v1956
    %v1958 = vmul.f32 %v1858, %v1957
    %v1959 = vmul.f32 %v1859, %v1957
    %v1960 = vmul.f32 %v1860, %v1957
    %v1961 = vmul.f32 %v1861, %v1957
    %v1962 = vmul.f32 %v1862, %v1957
    %v1963 = vmul.f32 %v1863, %v1957
    %v1964 = vmul.f32 %v1864, %v1957
    %v1965 = vmul.f32 %v1865, %v1957
    %v1966 = vmul.f32 %v1866, %v1957
    %v1967 = vmul.f32 %v1867, %v1957
    %v1968 = vmul.f32 %v1868, %v1957
    %v1969 = vmul.f32 %v1869, %v1957
    %v1970 = vmul.f32 %v1870, %v1957
    %v1971 = vmul.f32 %v1871, %v1957
    %v1972 = vmul.f32 %v1872, %v1957
    %v1973 = vmul.f32 %v1873, %v1957
    %v1974 = vmul.f32 %v1874, %v1957
    %v1975 = vmul.f32 %v1875, %v1957
    %v1976 = vmul.f32 %v1876, %v1957
    %v1977 = vmul.f32 %v1877, %v1957
    %v1978 = vmul.f32 %v1878, %v1957
    %v1979 = vmul.f32 %v1879, %v1957
    %v1980 = vmul.f32 %v1880, %v1957
    %v1981 = vmul.f32 %v1881, %v1957
    %v1982 = vmul.f32 %v1882, %v1957
    %v1983 = vmul.f32 %v1883, %v1957
    %v1984 = vmul.f32 %v1884, %v1957
    %v1985 = vmul.f32 %v1885, %v1957
    %v1986 = vmul.f32 %v1886, %v1957
    %v1987 = vmul.f32 %v1887, %v1957
    %v1988 = vmul.f32 %v1888, %v1957
    %v1989 = vmul.f32 %v1889, %v1957
    %v1990 = vmul.f32 %v1890, %v1957
    %v1991 = vmul.f32 %v1891, %v1957
    %v1992 = vmul.f32 %v1892, %v1957
    %v1993 = vmul.f32 %v1893, %v1957
    %v1994 = vmul.f32 %v1894, %v1957
    %v1995 = vmul.f32 %v1895, %v1957
    %v1996 = vmul.f32 %v1896, %v1957
    %v1997 = vmul.f32 %v1897, %v1957
    %v1998 = vmul.f32 %v1898, %v1957
    %v1999 = vmul.f32 %v1899, %v1957
    %v2000 = vmul.f32 %v1900, %v1957
    %v2001 = vmul.f32 %v1901, %v1957
    %v2002 = vmul.f32 %v1902, %v1957
    %v2003 = vmul.f32 %v1903, %v1957
    %v2004 = vmul.f32 %v1904, %v1957
    %v2005 = vmul.f32 %v1905, %v1957
    %v2006 = vmul.f32 %v1906, %v1957
    %v2007 = vmul.f32 %v1907, %v1957
    %v2008 = vmul.f32 %v1908, %v1957
    %v2009 = vmul.f32 %v1909, %v1957
    %v2010 = vmul.f32 %v1910, %v1957
    %v2011 = vmul.f32 %v1911, %v1957
    %v2012 = vmul.f32 %v1912, %v1957
    %v2013 = vmul.f32 %v1913, %v1957
    %v2014 = vmul.f32 %v1914, %v1957
    %v2015 = vmul.f32 %v1915, %v1957
    %v2016 = vmul.f32 %v1916, %v1957
    %v2017 = vmul.f32 %v1917, %v1957
    %v2018 = vmul.f32 %v1918, %v1957
    %v2019 = vmul.f32 %v1919, %v1957
    %v2020 = vmul.f32 %v1920, %v1957
    %v2021 = vmul.f32 %v1921, %v1957
    %v2022 = vmul.f32 %v1922, %v1957
    %v2023 = vmul.f32 %v1923, %v1957
    %v2024 = vmul.f32 %v1924, %v1957
    %v2025 = vmul.f32 %v1925, %v1957
    %v2026 = vmul.f32 %v1926, %v1957
    %v2027 = vmul.f32 %v1927, %v1957
    %v2028 = vmul.f32 %v1928, %v1957
    %v2029 = vmul.f32 %v1929, %v1957
    %v2030 = vmul.f32 %v1930, %v1957
    %v2031 = vmul.f32 %v1931, %v1957
    %v2032 = vmul.f32 %v1932, %v1957
    %v2033 = vmul.f32 %v1933, %v1957
    %v2034 = vmul.f32 %v1934, %v1957
    %v2035 = vmul.f32 %v1935, %v1957
    %v2036 = vmul.f32 %v1936, %v1957
    %v2037 = vmul.f32 %v1937, %v1957
    %v2038 = vmul.f32 %v1938, %v1957
    %v2039 = vmul.f32 %v1939, %v1957
    %v2040 = vmul.f32 %v1940, %v1957
    %v2041 = vmul.f32 %v1941, %v1957
    %v2042 = vmul.f32 %v1942, %v1957
    %v2043 = vmul.f32 %v1943, %v1957
    %v2044 = vmul.f32 %v1944, %v1957
    %v2045 = vmul.f32 %v1945, %v1957
    %v2046 = vmul.f32 %v1946, %v1957
    %v2047 = vmul.f32 %v1947, %v1957
    %v2048 = vmul.f32 %v1948, %v1957
    %v2049 = vmul.f32 %v1949, %v1957
    %v2050 = vmul.f32 %v1950, %v1957
    %v2051 = vmul.f32 %v1951, %v1957
    %v2052 = vmul.f32 %v1952, %v1957
    %v2053 = vmul.f32 %v1953, %v1957
    %v2054 = vlaneseq
    %v2055 = vshrl.u32 %v2054, 7
    %v2056 = vsub.s32 1, %v2055
    %v2057 = vrot.slane %v1758, %v2056
    %v2058 = vmul.f32 %v1859, %v2057
    %v2059 = vmul.f32 %v1860, %v2057
    %v2060 = vmul.f32 %v1862, %v2057
    %v2061 = vmul.f32 %v1863, %v2057
    %v2062 = vmul.f32 %v1865, %v2057
    %v2063 = vmul.f32 %v1866, %v2057
    %v2064 = vmul.f32 %v1868, %v2057
    %v2065 = vmul.f32 %v1869, %v2057
    %v2066 = vmul.f32 %v1871, %v2057
    %v2067 = vmul.f32 %v1872, %v2057
    %v2068 = vmul.f32 %v1874, %v2057
    %v2069 = vmul.f32 %v1875, %v2057
    %v2070 = vmul.f32 %v1877, %v2057
    %v2071 = vmul.f32 %v1878, %v2057
    %v2072 = vmul.f32 %v1880, %v2057
    %v2073 = vmul.f32 %v1881, %v2057
    %v2074 = vmul.f32 %v1883, %v2057
    %v2075 = vmul.f32 %v1884, %v2057
    %v2076 = vmul.f32 %v1886, %v2057
    %v2077 = vmul.f32 %v1887, %v2057
    %v2078 = vmul.f32 %v1889, %v2057
    %v2079 = vmul.f32 %v1890, %v2057
    %v2080 = vmul.f32 %v1892, %v2057
    %v2081 = vmul.f32 %v1893, %v2057
    %v2082 = vmul.f32 %v1895, %v2057
    %v2083 = vmul.f32 %v1896, %v2057
    %v2084 = vmul.f32 %v1898, %v2057
    %v2085 = vmul.f32 %v1899, %v2057
    %v2086 = vmul.f32 %v1901, %v2057
    %v2087 = vmul.f32 %v1902, %v2057
    %v2088 = vmul.f32 %v1904, %v2057
    %v2089 = vmul.f32 %v1905, %v2057
    %v2090 = vmul.f32 %v1907, %v2057
    %v2091 = vmul.f32 %v1908, %v2057
    %v2092 = vmul.f32 %v1910, %v2057
    %v2093 = vmul.f32 %v1911, %v2057
    %v2094 = vmul.f32 %v1913, %v2057
    %v2095 = vmul.f32 %v1914, %v2057
    %v2096 = vmul.f32 %v1916, %v2057
    %v2097 = vmul.f32 %v1917, %v2057
    %v2098 = vmul.f32 %v1919, %v2057
    %v2099 = vmul.f32 %v1920, %v2057
    %v2100 = vmul.f32 %v1922, %v2057
    %v2101 = vmul.f32 %v1923, %v2057
    %v2102 = vmul.f32 %v1925, %v2057
    %v2103 = vmul.f32 %v1926, %v2057
    %v2104 = vmul.f32 %v1928, %v2057
    %v2105 = vmul.f32 %v1929, %v2057
    %v2106 = vmul.f32 %v1931, %v2057
    %v2107 = vmul.f32 %v1932, %v2057
    %v2108 = vmul.f32 %v1934, %v2057
    %v2109 = vmul.f32 %v1935, %v2057
    %v2110 = vmul.f32 %v1937, %v2057
    %v2111 = vmul.f32 %v1938, %v2057
    %v2112 = vmul.f32 %v1940, %v2057
    %v2113 = vmul.f32 %v1941, %v2057
    %v2114 = vmul.f32 %v1943, %v2057
    %v2115 = vmul.f32 %v1944, %v2057
    %v2116 = vmul.f32 %v1946, %v2057
    %v2117 = vmul.f32 %v1947, %v2057
    %v2118 = vmul.f32 %v1949, %v2057
    %v2119 = vmul.f32 %v1950, %v2057
    %v2120 = vmul.f32 %v1952, %v2057
    %v2121 = vmul.f32 %v1953, %v2057
    %vm2186 = vcmask 1046528
    %v2187 = vrot.slane %v2058, 1
    %v2188 = vrot.slane %v2059, 1
    %v2189 = vsel %vm2186, %v2187, %v2188
    %v2190 = vrot.slane %v2060, 1
    %v2191 = vrot.slane %v2061, 1
    %v2192 = vsel %vm2186, %v2190, %v2191
    %v2193 = vrot.slane %v2062, 1
    %v2194 = vrot.slane %v2063, 1
    %v2195 = vsel %vm2186, %v2193, %v2194
    %v2196 = vrot.slane %v2064, 1
    %v2197 = vrot.slane %v2065, 1
    %v2198 = vsel %vm2186, %v2196, %v2197
    %v2199 = vrot.slane %v2066, 1
    %v2200 = vrot.slane %v2067, 1
    %v2201 = vsel %vm2186, %v2199, %v2200
    %v2202 = vrot.slane %v2068, 1
    %v2203 = vrot.slane %v2069, 1
    %v2204 = vsel %vm2186, %v2202, %v2203
    %v2205 = vrot.slane %v2070, 1
    %v2206 = vrot.slane %v2071, 1
    %v2207 = vsel %vm2186, %v2205, %v2206
    %v2208 = vrot.slane %v2072, 1
    %v2209 = vrot.slane %v2073, 1
    %v2210 = vsel %vm2186, %v2208, %v2209
    %v2211 = vrot.slane %v2074, 1
    %v2212 = vrot.slane %v2075, 1
    %v2213 = vsel %vm2186, %v2211, %v2212
    %v2214 = vrot.slane %v2076, 1
    %v2215 = vrot.slane %v2077, 1
    %v2216 = vsel %vm2186, %v2214, %v2215
    %v2217 = vrot.slane %v2078, 1
    %v2218 = vrot.slane %v2079, 1
    %v2219 = vsel %vm2186, %v2217, %v2218
    %v2220 = vrot.slane %v2080, 1
    %v2221 = vrot.slane %v2081, 1
    %v2222 = vsel %vm2186, %v2220, %v2221
    %v2223 = vrot.slane %v2082, 1
    %v2224 = vrot.slane %v2083, 1
    %v2225 = vsel %vm2186, %v2223, %v2224
    %v2226 = vrot.slane %v2084, 1
    %v2227 = vrot.slane %v2085, 1
    %v2228 = vsel %vm2186, %v2226, %v2227
    %v2229 = vrot.slane %v2086, 1
    %v2230 = vrot.slane %v2087, 1
    %v2231 = vsel %vm2186, %v2229, %v2230
    %v2232 = vrot.slane %v2088, 1
    %v2233 = vrot.slane %v2089, 1
    %v2234 = vsel %vm2186, %v2232, %v2233
    %v2235 = vrot.slane %v2090, 1
    %v2236 = vrot.slane %v2091, 1
    %v2237 = vsel %vm2186, %v2235, %v2236
    %v2238 = vrot.slane %v2092, 1
    %v2239 = vrot.slane %v2093, 1
    %v2240 = vsel %vm2186, %v2238, %v2239
    %v2241 = vrot.slane %v2094, 1
    %v2242 = vrot.slane %v2095, 1
    %v2243 = vsel %vm2186, %v2241, %v2242
    %v2244 = vrot.slane %v2096, 1
    %v2245 = vrot.slane %v2097, 1
    %v2246 = vsel %vm2186, %v2244, %v2245
    %v2247 = vrot.slane %v2098, 1
    %v2248 = vrot.slane %v2099, 1
    %v2249 = vsel %vm2186, %v2247, %v2248
    %v2250 = vrot.slane %v2100, 1
    %v2251 = vrot.slane %v2101, 1
    %v2252 = vsel %vm2186, %v2250, %v2251
    %v2253 = vrot.slane %v2102, 1
    %v2254 = vrot.slane %v2103, 1
    %v2255 = vsel %vm2186, %v2253, %v2254
    %v2256 = vrot.slane %v2104, 1
    %v2257 = vrot.slane %v2105, 1
    %v2258 = vsel %vm2186, %v2256, %v2257
    %v2259 = vrot.slane %v2106, 1
    %v2260 = vrot.slane %v2107, 1
    %v2261 = vsel %vm2186, %v2259, %v2260
    %v2262 = vrot.slane %v2108, 1
    %v2263 = vrot.slane %v2109, 1
    %v2264 = vsel %vm2186, %v2262, %v2263
    %v2265 = vrot.slane %v2110, 1
    %v2266 = vrot.slane %v2111, 1
    %v2267 = vsel %vm2186, %v2265, %v2266
    %v2268 = vrot.slane %v2112, 1
    %v2269 = vrot.slane %v2113, 1
    %v2270 = vsel %vm2186, %v2268, %v2269
    %v2271 = vrot.slane %v2114, 1
    %v2272 = vrot.slane %v2115, 1
    %v2273 = vsel %vm2186, %v2271, %v2272
    %v2274 = vrot.slane %v2116, 1
    %v2275 = vrot.slane %v2117, 1
    %v2276 = vsel %vm2186, %v2274, %v2275
    %v2277 = vrot.slane %v2118, 1
    %v2278 = vrot.slane %v2119, 1
    %v2279 = vsel %vm2186, %v2277, %v2278
    %v2280 = vrot.slane %v2120, 1
    %v2281 = vrot.slane %v2121, 1
    %v2282 = vsel %vm2186, %v2280, %v2281
    %v2379 = vadd.f32 %v1958, %v2187
    %v2380 = vadd.f32 %v1959, %v2189
    %v2381 = vadd.f32 %v1960, %v2188
    %v2382 = vadd.f32 %v1961, %v2190
    %v2383 = vadd.f32 %v1962, %v2192
    %v2384 = vadd.f32 %v1963, %v2191
    %v2385 = vadd.f32 %v1964, %v2193
    %v2386 = vadd.f32 %v1965, %v2195
    %v2387 = vadd.f32 %v1966, %v2194
    %v2388 = vadd.f32 %v1967, %v2196
    %v2389 = vadd.f32 %v1968, %v2198
    %v2390 = vadd.f32 %v1969, %v2197
    %v2391 = vadd.f32 %v1970, %v2199
    %v2392 = vadd.f32 %v1971, %v2201
    %v2393 = vadd.f32 %v1972, %v2200
    %v2394 = vadd.f32 %v1973, %v2202
    %v2395 = vadd.f32 %v1974, %v2204
    %v2396 = vadd.f32 %v1975, %v2203
    %v2397 = vadd.f32 %v1976, %v2205
    %v2398 = vadd.f32 %v1977, %v2207
    %v2399 = vadd.f32 %v1978, %v2206
    %v2400 = vadd.f32 %v1979, %v2208
    %v2401 = vadd.f32 %v1980, %v2210
    %v2402 = vadd.f32 %v1981, %v2209
    %v2403 = vadd.f32 %v1982, %v2211
    %v2404 = vadd.f32 %v1983, %v2213
    %v2405 = vadd.f32 %v1984, %v2212
    %v2406 = vadd.f32 %v1985, %v2214
    %v2407 = vadd.f32 %v1986, %v2216
    %v2408 = vadd.f32 %v1987, %v2215
    %v2409 = vadd.f32 %v1988, %v2217
    %v2410 = vadd.f32 %v1989, %v2219
    %v2411 = vadd.f32 %v1990, %v2218
    %v2412 = vadd.f32 %v1991, %v2220
    %v2413 = vadd.f32 %v1992, %v2222
    %v2414 = vadd.f32 %v1993, %v2221
    %v2415 = vadd.f32 %v1994, %v2223
    %v2416 = vadd.f32 %v1995, %v2225
    %v2417 = vadd.f32 %v1996, %v2224
    %v2418 = vadd.f32 %v1997, %v2226
    %v2419 = vadd.f32 %v1998, %v2228
    %v2420 = vadd.f32 %v1999, %v2227
    %v2421 = vadd.f32 %v2000, %v2229
    %v2422 = vadd.f32 %v2001, %v2231
    %v2423 = vadd.f32 %v2002, %v2230
    %v2424 = vadd.f32 %v2003, %v2232
    %v2425 = vadd.f32 %v2004, %v2234
    %v2426 = vadd.f32 %v2005, %v2233
    %v2427 = vadd.f32 %v2006, %v2235
    %v2428 = vadd.f32 %v2007, %v2237
    %v2429 = vadd.f32 %v2008, %v2236
    %v2430 = vadd.f32 %v2009, %v2238
    %v2431 = vadd.f32 %v2010, %v2240
    %v2432 = vadd.f32 %v2011, %v2239
    %v2433 = vadd.f32 %v2012, %v2241
    %v2434 = vadd.f32 %v2013, %v2243
    %v2435 = vadd.f32 %v2014, %v2242
    %v2436 = vadd.f32 %v2015, %v2244
    %v2437 = vadd.f32 %v2016, %v2246
    %v2438 = vadd.f32 %v2017, %v2245
    %v2439 = vadd.f32 %v2018, %v2247
    %v2440 = vadd.f32 %v2019, %v2249
    %v2441 = vadd.f32 %v2020, %v2248
    %v2442 = vadd.f32 %v2021, %v2250
    %v2443 = vadd.f32 %v2022, %v2252
    %v2444 = vadd.f32 %v2023, %v2251
    %v2445 = vadd.f32 %v2024, %v2253
    %v2446 = vadd.f32 %v2025, %v2255
    %v2447 = vadd.f32 %v2026, %v2254
    %v2448 = vadd.f32 %v2027, %v2256
    %v2449 = vadd.f32 %v2028, %v2258
    %v2450 = vadd.f32 %v2029, %v2257
    %v2451 = vadd.f32 %v2030, %v2259
    %v2452 = vadd.f32 %v2031, %v2261
    %v2453 = vadd.f32 %v2032, %v2260
    %v2454 = vadd.f32 %v2033, %v2262
    %v2455 = vadd.f32 %v2034, %v2264
    %v2456 = vadd.f32 %v2035, %v2263
    %v2457 = vadd.f32 %v2036, %v2265
    %v2458 = vadd.f32 %v2037, %v2267
    %v2459 = vadd.f32 %v2038, %v2266
    %v2460 = vadd.f32 %v2039, %v2268
    %v2461 = vadd.f32 %v2040, %v2270
    %v2462 = vadd.f32 %v2041, %v2269
    %v2463 = vadd.f32 %v2042, %v2271
    %v2464 = vadd.f32 %v2043, %v2273
    %v2465 = vadd.f32 %v2044, %v2272
    %v2466 = vadd.f32 %v2045, %v2274
    %v2467 = vadd.f32 %v2046, %v2276
    %v2468 = vadd.f32 %v2047, %v2275
    %v2469 = vadd.f32 %v2048, %v2277
    %v2470 = vadd.f32 %v2049, %v2279
    %v2471 = vadd.f32 %v2050, %v2278
    %v2472 = vadd.f32 %v2051, %v2280
    %v2473 = vadd.f32 %v2052, %v2282
    %v2474 = vadd.f32 %v2053, %v2281
    %v2475 = vld [vmem:[#allocation2 + $0x10] sm:$0x1]
    %v2476 = vld [vmem:[#allocation2 + $0x24] sm:$0x1]
    %v2477 = vld [vmem:[#allocation2 + $0x38] sm:$0x1]
    %v2478 = vld [vmem:[#allocation2 + $0x4c] sm:$0x1]
    %v2479 = vld [vmem:[#allocation2 + $0x60] sm:$0x1]
    %v2480 = vld [vmem:[#allocation2 + $0x74] sm:$0x1]
    %v2481 = vld [vmem:[#allocation2 + $0x88] sm:$0x1]
    %v2482 = vld [vmem:[#allocation2 + $0x9c] sm:$0x1]
    %v2483 = vld [vmem:[#allocation2 + $0xb0] sm:$0x1]
    %v2484 = vld [vmem:[#allocation2 + $0xc4] sm:$0x1]
    %v2485 = vld [vmem:[#allocation2 + $0xd8] sm:$0x1]
    %v2486 = vld [vmem:[#allocation2 + $0xec] sm:$0x1]
    %v2487 = vld [vmem:[#allocation2 + $0x100] sm:$0x1]
    %v2488 = vld [vmem:[#allocation2 + $0x114] sm:$0x1]
    %v2489 = vld [vmem:[#allocation2 + $0x128] sm:$0x1]
    %v2490 = vld [vmem:[#allocation2 + $0x13c] sm:$0x1]
    %v2491 = vld [vmem:[#allocation2 + $0x178] sm:$0x1]
    %v2492 = vld [vmem:[#allocation2 + $0x18c] sm:$0x1]
    %v2493 = vld [vmem:[#allocation2 + $0x1a0] sm:$0x1]
    %v2494 = vld [vmem:[#allocation2 + $0x1b4] sm:$0x1]
    %v2495 = vld [vmem:[#allocation2 + $0x1c8] sm:$0x1]
    %v2496 = vld [vmem:[#allocation2 + $0x1dc] sm:$0x1]
    %v2497 = vld [vmem:[#allocation2 + $0x1f0] sm:$0x1]
    %v2498 = vld [vmem:[#allocation2 + $0x204] sm:$0x1]
    %v2499 = vld [vmem:[#allocation2 + $0x218] sm:$0x1]
    %v2500 = vld [vmem:[#allocation2 + $0x22c] sm:$0x1]
    %v2501 = vld [vmem:[#allocation2 + $0x240] sm:$0x1]
    %v2502 = vld [vmem:[#allocation2 + $0x254] sm:$0x1]
    %v2503 = vld [vmem:[#allocation2 + $0x268] sm:$0x1]
    %v2504 = vld [vmem:[#allocation2 + $0x27c] sm:$0x1]
    %v2505 = vld [vmem:[#allocation2 + $0x290] sm:$0x1]
    %v2506 = vld [vmem:[#allocation2 + $0x2a4] sm:$0x1]
    %v2507 = vunpack.c.l.bf16 %v2475
    %v2508 = vunpack.c.l.bf16 %v2476
    %v2509 = vunpack.c.l.bf16 %v2477
    %v2510 = vunpack.c.l.bf16 %v2478
    %v2511 = vunpack.c.l.bf16 %v2479
    %v2512 = vunpack.c.l.bf16 %v2480
    %v2513 = vunpack.c.l.bf16 %v2481
    %v2514 = vunpack.c.l.bf16 %v2482
    %v2515 = vunpack.c.l.bf16 %v2483
    %v2516 = vunpack.c.l.bf16 %v2484
    %v2517 = vunpack.c.l.bf16 %v2485
    %v2518 = vunpack.c.l.bf16 %v2486
    %v2519 = vunpack.c.l.bf16 %v2487
    %v2520 = vunpack.c.l.bf16 %v2488
    %v2521 = vunpack.c.l.bf16 %v2489
    %v2522 = vunpack.c.l.bf16 %v2490
    %v2523 = vunpack.c.l.bf16 %v2491
    %v2524 = vunpack.c.l.bf16 %v2492
    %v2525 = vunpack.c.l.bf16 %v2493
    %v2526 = vunpack.c.l.bf16 %v2494
    %v2527 = vunpack.c.l.bf16 %v2495
    %v2528 = vunpack.c.l.bf16 %v2496
    %v2529 = vunpack.c.l.bf16 %v2497
    %v2530 = vunpack.c.l.bf16 %v2498
    %v2531 = vunpack.c.l.bf16 %v2499
    %v2532 = vunpack.c.l.bf16 %v2500
    %v2533 = vunpack.c.l.bf16 %v2501
    %v2534 = vunpack.c.l.bf16 %v2502
    %v2535 = vunpack.c.l.bf16 %v2503
    %v2536 = vunpack.c.l.bf16 %v2504
    %v2537 = vunpack.c.l.bf16 %v2505
    %v2538 = vunpack.c.l.bf16 %v2506
    %v2539 = vlaneseq
    %v2540 = vshrl.u32 %v2539, 7
    %v2541 = vsub.s32 2, %v2540
    %v2542 = vrot.slane %v1758, %v2541
    %v2543 = vmul.f32 %v1859, %v2542
    %v2544 = vmul.f32 %v1860, %v2542
    %v2545 = vmul.f32 %v2507, %v2542
    %v2546 = vmul.f32 %v1862, %v2542
    %v2547 = vmul.f32 %v1863, %v2542
    %v2548 = vmul.f32 %v2508, %v2542
    %v2549 = vmul.f32 %v1865, %v2542
    %v2550 = vmul.f32 %v1866, %v2542
    %v2551 = vmul.f32 %v2509, %v2542
    %v2552 = vmul.f32 %v1868, %v2542
    %v2553 = vmul.f32 %v1869, %v2542
    %v2554 = vmul.f32 %v2510, %v2542
    %v2555 = vmul.f32 %v1871, %v2542
    %v2556 = vmul.f32 %v1872, %v2542
    %v2557 = vmul.f32 %v2511, %v2542
    %v2558 = vmul.f32 %v1874, %v2542
    %v2559 = vmul.f32 %v1875, %v2542
    %v2560 = vmul.f32 %v2512, %v2542
    %v2561 = vmul.f32 %v1877, %v2542
    %v2562 = vmul.f32 %v1878, %v2542
    %v2563 = vmul.f32 %v2513, %v2542
    %v2564 = vmul.f32 %v1880, %v2542
    %v2565 = vmul.f32 %v1881, %v2542
    %v2566 = vmul.f32 %v2514, %v2542
    %v2567 = vmul.f32 %v1883, %v2542
    %v2568 = vmul.f32 %v1884, %v2542
    %v2569 = vmul.f32 %v2515, %v2542
    %v2570 = vmul.f32 %v1886, %v2542
    %v2571 = vmul.f32 %v1887, %v2542
    %v2572 = vmul.f32 %v2516, %v2542
    %v2573 = vmul.f32 %v1889, %v2542
    %v2574 = vmul.f32 %v1890, %v2542
    %v2575 = vmul.f32 %v2517, %v2542
    %v2576 = vmul.f32 %v1892, %v2542
    %v2577 = vmul.f32 %v1893, %v2542
    %v2578 = vmul.f32 %v2518, %v2542
    %v2579 = vmul.f32 %v1895, %v2542
    %v2580 = vmul.f32 %v1896, %v2542
    %v2581 = vmul.f32 %v2519, %v2542
    %v2582 = vmul.f32 %v1898, %v2542
    %v2583 = vmul.f32 %v1899, %v2542
    %v2584 = vmul.f32 %v2520, %v2542
    %v2585 = vmul.f32 %v1901, %v2542
    %v2586 = vmul.f32 %v1902, %v2542
    %v2587 = vmul.f32 %v2521, %v2542
    %v2588 = vmul.f32 %v1904, %v2542
    %v2589 = vmul.f32 %v1905, %v2542
    %v2590 = vmul.f32 %v2522, %v2542
    %v2591 = vmul.f32 %v1907, %v2542
    %v2592 = vmul.f32 %v1908, %v2542
    %v2593 = vmul.f32 %v2523, %v2542
    %v2594 = vmul.f32 %v1910, %v2542
    %v2595 = vmul.f32 %v1911, %v2542
    %v2596 = vmul.f32 %v2524, %v2542
    %v2597 = vmul.f32 %v1913, %v2542
    %v2598 = vmul.f32 %v1914, %v2542
    %v2599 = vmul.f32 %v2525, %v2542
    %v2600 = vmul.f32 %v1916, %v2542
    %v2601 = vmul.f32 %v1917, %v2542
    %v2602 = vmul.f32 %v2526, %v2542
    %v2603 = vmul.f32 %v1919, %v2542
    %v2604 = vmul.f32 %v1920, %v2542
    %v2605 = vmul.f32 %v2527, %v2542
    %v2606 = vmul.f32 %v1922, %v2542
    %v2607 = vmul.f32 %v1923, %v2542
    %v2608 = vmul.f32 %v2528, %v2542
    %v2609 = vmul.f32 %v1925, %v2542
    %v2610 = vmul.f32 %v1926, %v2542
    %v2611 = vmul.f32 %v2529, %v2542
    %v2612 = vmul.f32 %v1928, %v2542
    %v2613 = vmul.f32 %v1929, %v2542
    %v2614 = vmul.f32 %v2530, %v2542
    %v2615 = vmul.f32 %v1931, %v2542
    %v2616 = vmul.f32 %v1932, %v2542
    %v2617 = vmul.f32 %v2531, %v2542
    %v2618 = vmul.f32 %v1934, %v2542
    %v2619 = vmul.f32 %v1935, %v2542
    %v2620 = vmul.f32 %v2532, %v2542
    %v2621 = vmul.f32 %v1937, %v2542
    %v2622 = vmul.f32 %v1938, %v2542
    %v2623 = vmul.f32 %v2533, %v2542
    %v2624 = vmul.f32 %v1940, %v2542
    %v2625 = vmul.f32 %v1941, %v2542
    %v2626 = vmul.f32 %v2534, %v2542
    %v2627 = vmul.f32 %v1943, %v2542
    %v2628 = vmul.f32 %v1944, %v2542
    %v2629 = vmul.f32 %v2535, %v2542
    %v2630 = vmul.f32 %v1946, %v2542
    %v2631 = vmul.f32 %v1947, %v2542
    %v2632 = vmul.f32 %v2536, %v2542
    %v2633 = vmul.f32 %v1949, %v2542
    %v2634 = vmul.f32 %v1950, %v2542
    %v2635 = vmul.f32 %v2537, %v2542
    %v2636 = vmul.f32 %v1952, %v2542
    %v2637 = vmul.f32 %v1953, %v2542
    %v2638 = vmul.f32 %v2538, %v2542
    %vm2735 = vcmask 1045504
    %v2736 = vrot.slane %v2543, 2
    %v2737 = vrot.slane %v2544, 2
    %v2738 = vsel %vm2735, %v2736, %v2737
    %v2739 = vrot.slane %v2545, 2
    %v2740 = vsel %vm2735, %v2737, %v2739
    %v2741 = vrot.slane %v2546, 2
    %v2742 = vrot.slane %v2547, 2
    %v2743 = vsel %vm2735, %v2741, %v2742
    %v2744 = vrot.slane %v2548, 2
    %v2745 = vsel %vm2735, %v2742, %v2744
    %v2746 = vrot.slane %v2549, 2
    %v2747 = vrot.slane %v2550, 2
    %v2748 = vsel %vm2735, %v2746, %v2747
    %v2749 = vrot.slane %v2551, 2
    %v2750 = vsel %vm2735, %v2747, %v2749
    %v2751 = vrot.slane %v2552, 2
    %v2752 = vrot.slane %v2553, 2
    %v2753 = vsel %vm2735, %v2751, %v2752
    %v2754 = vrot.slane %v2554, 2
    %v2755 = vsel %vm2735, %v2752, %v2754
    %v2756 = vrot.slane %v2555, 2
    %v2757 = vrot.slane %v2556, 2
    %v2758 = vsel %vm2735, %v2756, %v2757
    %v2759 = vrot.slane %v2557, 2
    %v2760 = vsel %vm2735, %v2757, %v2759
    %v2761 = vrot.slane %v2558, 2
    %v2762 = vrot.slane %v2559, 2
    %v2763 = vsel %vm2735, %v2761, %v2762
    %v2764 = vrot.slane %v2560, 2
    %v2765 = vsel %vm2735, %v2762, %v2764
    %v2766 = vrot.slane %v2561, 2
    %v2767 = vrot.slane %v2562, 2
    %v2768 = vsel %vm2735, %v2766, %v2767
    %v2769 = vrot.slane %v2563, 2
    %v2770 = vsel %vm2735, %v2767, %v2769
    %v2771 = vrot.slane %v2564, 2
    %v2772 = vrot.slane %v2565, 2
    %v2773 = vsel %vm2735, %v2771, %v2772
    %v2774 = vrot.slane %v2566, 2
    %v2775 = vsel %vm2735, %v2772, %v2774
    %v2776 = vrot.slane %v2567, 2
    %v2777 = vrot.slane %v2568, 2
    %v2778 = vsel %vm2735, %v2776, %v2777
    %v2779 = vrot.slane %v2569, 2
    %v2780 = vsel %vm2735, %v2777, %v2779
    %v2781 = vrot.slane %v2570, 2
    %v2782 = vrot.slane %v2571, 2
    %v2783 = vsel %vm2735, %v2781, %v2782
    %v2784 = vrot.slane %v2572, 2
    %v2785 = vsel %vm2735, %v2782, %v2784
    %v2786 = vrot.slane %v2573, 2
    %v2787 = vrot.slane %v2574, 2
    %v2788 = vsel %vm2735, %v2786, %v2787
    %v2789 = vrot.slane %v2575, 2
    %v2790 = vsel %vm2735, %v2787, %v2789
    %v2791 = vrot.slane %v2576, 2
    %v2792 = vrot.slane %v2577, 2
    %v2793 = vsel %vm2735, %v2791, %v2792
    %v2794 = vrot.slane %v2578, 2
    %v2795 = vsel %vm2735, %v2792, %v2794
    %v2796 = vrot.slane %v2579, 2
    %v2797 = vrot.slane %v2580, 2
    %v2798 = vsel %vm2735, %v2796, %v2797
    %v2799 = vrot.slane %v2581, 2
    %v2800 = vsel %vm2735, %v2797, %v2799
    %v2801 = vrot.slane %v2582, 2
    %v2802 = vrot.slane %v2583, 2
    %v2803 = vsel %vm2735, %v2801, %v2802
    %v2804 = vrot.slane %v2584, 2
    %v2805 = vsel %vm2735, %v2802, %v2804
    %v2806 = vrot.slane %v2585, 2
    %v2807 = vrot.slane %v2586, 2
    %v2808 = vsel %vm2735, %v2806, %v2807
    %v2809 = vrot.slane %v2587, 2
    %v2810 = vsel %vm2735, %v2807, %v2809
    %v2811 = vrot.slane %v2588, 2
    %v2812 = vrot.slane %v2589, 2
    %v2813 = vsel %vm2735, %v2811, %v2812
    %v2814 = vrot.slane %v2590, 2
    %v2815 = vsel %vm2735, %v2812, %v2814
    %v2816 = vrot.slane %v2591, 2
    %v2817 = vrot.slane %v2592, 2
    %v2818 = vsel %vm2735, %v2816, %v2817
    %v2819 = vrot.slane %v2593, 2
    %v2820 = vsel %vm2735, %v2817, %v2819
    %v2821 = vrot.slane %v2594, 2
    %v2822 = vrot.slane %v2595, 2
    %v2823 = vsel %vm2735, %v2821, %v2822
    %v2824 = vrot.slane %v2596, 2
    %v2825 = vsel %vm2735, %v2822, %v2824
    %v2826 = vrot.slane %v2597, 2
    %v2827 = vrot.slane %v2598, 2
    %v2828 = vsel %vm2735, %v2826, %v2827
    %v2829 = vrot.slane %v2599, 2
    %v2830 = vsel %vm2735, %v2827, %v2829
    %v2831 = vrot.slane %v2600, 2
    %v2832 = vrot.slane %v2601, 2
    %v2833 = vsel %vm2735, %v2831, %v2832
    %v2834 = vrot.slane %v2602, 2
    %v2835 = vsel %vm2735, %v2832, %v2834
    %v2836 = vrot.slane %v2603, 2
    %v2837 = vrot.slane %v2604, 2
    %v2838 = vsel %vm2735, %v2836, %v2837
    %v2839 = vrot.slane %v2605, 2
    %v2840 = vsel %vm2735, %v2837, %v2839
    %v2841 = vrot.slane %v2606, 2
    %v2842 = vrot.slane %v2607, 2
    %v2843 = vsel %vm2735, %v2841, %v2842
    %v2844 = vrot.slane %v2608, 2
    %v2845 = vsel %vm2735, %v2842, %v2844
    %v2846 = vrot.slane %v2609, 2
    %v2847 = vrot.slane %v2610, 2
    %v2848 = vsel %vm2735, %v2846, %v2847
    %v2849 = vrot.slane %v2611, 2
    %v2850 = vsel %vm2735, %v2847, %v2849
    %v2851 = vrot.slane %v2612, 2
    %v2852 = vrot.slane %v2613, 2
    %v2853 = vsel %vm2735, %v2851, %v2852
    %v2854 = vrot.slane %v2614, 2
    %v2855 = vsel %vm2735, %v2852, %v2854
    %v2856 = vrot.slane %v2615, 2
    %v2857 = vrot.slane %v2616, 2
    %v2858 = vsel %vm2735, %v2856, %v2857
    %v2859 = vrot.slane %v2617, 2
    %v2860 = vsel %vm2735, %v2857, %v2859
    %v2861 = vrot.slane %v2618, 2
    %v2862 = vrot.slane %v2619, 2
    %v2863 = vsel %vm2735, %v2861, %v2862
    %v2864 = vrot.slane %v2620, 2
    %v2865 = vsel %vm2735, %v2862, %v2864
    %v2866 = vrot.slane %v2621, 2
    %v2867 = vrot.slane %v2622, 2
    %v2868 = vsel %vm2735, %v2866, %v2867
    %v2869 = vrot.slane %v2623, 2
    %v2870 = vsel %vm2735, %v2867, %v2869
    %v2871 = vrot.slane %v2624, 2
    %v2872 = vrot.slane %v2625, 2
    %v2873 = vsel %vm2735, %v2871, %v2872
    %v2874 = vrot.slane %v2626, 2
    %v2875 = vsel %vm2735, %v2872, %v2874
    %v2876 = vrot.slane %v2627, 2
    %v2877 = vrot.slane %v2628, 2
    %v2878 = vsel %vm2735, %v2876, %v2877
    %v2879 = vrot.slane %v2629, 2
    %v2880 = vsel %vm2735, %v2877, %v2879
    %v2881 = vrot.slane %v2630, 2
    %v2882 = vrot.slane %v2631, 2
    %v2883 = vsel %vm2735, %v2881, %v2882
    %v2884 = vrot.slane %v2632, 2
    %v2885 = vsel %vm2735, %v2882, %v2884
    %v2886 = vrot.slane %v2633, 2
    %v2887 = vrot.slane %v2634, 2
    %v2888 = vsel %vm2735, %v2886, %v2887
    %v2889 = vrot.slane %v2635, 2
    %v2890 = vsel %vm2735, %v2887, %v2889
    %v2891 = vrot.slane %v2636, 2
    %v2892 = vrot.slane %v2637, 2
    %v2893 = vsel %vm2735, %v2891, %v2892
    %v2894 = vrot.slane %v2638, 2
    %v2895 = vsel %vm2735, %v2892, %v2894
    %v2992 = vadd.f32 %v2379, %v2736
    %v2993 = vadd.f32 %v2380, %v2738
    %v2994 = vadd.f32 %v2381, %v2740
    %v2995 = vadd.f32 %v2382, %v2741
    %v2996 = vadd.f32 %v2383, %v2743
    %v2997 = vadd.f32 %v2384, %v2745
    %v2998 = vadd.f32 %v2385, %v2746
    %v2999 = vadd.f32 %v2386, %v2748
    %v3000 = vadd.f32 %v2387, %v2750
    %v3001 = vadd.f32 %v2388, %v2751
    %v3002 = vadd.f32 %v2389, %v2753
    %v3003 = vadd.f32 %v2390, %v2755
    %v3004 = vadd.f32 %v2391, %v2756
    %v3005 = vadd.f32 %v2392, %v2758
    %v3006 = vadd.f32 %v2393, %v2760
    %v3007 = vadd.f32 %v2394, %v2761
    %v3008 = vadd.f32 %v2395, %v2763
    %v3009 = vadd.f32 %v2396, %v2765
    %v3010 = vadd.f32 %v2397, %v2766
    %v3011 = vadd.f32 %v2398, %v2768
    %v3012 = vadd.f32 %v2399, %v2770
    %v3013 = vadd.f32 %v2400, %v2771
    %v3014 = vadd.f32 %v2401, %v2773
    %v3015 = vadd.f32 %v2402, %v2775
    %v3016 = vadd.f32 %v2403, %v2776
    %v3017 = vadd.f32 %v2404, %v2778
    %v3018 = vadd.f32 %v2405, %v2780
    %v3019 = vadd.f32 %v2406, %v2781
    %v3020 = vadd.f32 %v2407, %v2783
    %v3021 = vadd.f32 %v2408, %v2785
    %v3022 = vadd.f32 %v2409, %v2786
    %v3023 = vadd.f32 %v2410, %v2788
    %v3024 = vadd.f32 %v2411, %v2790
    %v3025 = vadd.f32 %v2412, %v2791
    %v3026 = vadd.f32 %v2413, %v2793
    %v3027 = vadd.f32 %v2414, %v2795
    %v3028 = vadd.f32 %v2415, %v2796
    %v3029 = vadd.f32 %v2416, %v2798
    %v3030 = vadd.f32 %v2417, %v2800
    %v3031 = vadd.f32 %v2418, %v2801
    %v3032 = vadd.f32 %v2419, %v2803
    %v3033 = vadd.f32 %v2420, %v2805
    %v3034 = vadd.f32 %v2421, %v2806
    %v3035 = vadd.f32 %v2422, %v2808
    %v3036 = vadd.f32 %v2423, %v2810
    %v3037 = vadd.f32 %v2424, %v2811
    %v3038 = vadd.f32 %v2425, %v2813
    %v3039 = vadd.f32 %v2426, %v2815
    %v3040 = vadd.f32 %v2427, %v2816
    %v3041 = vadd.f32 %v2428, %v2818
    %v3042 = vadd.f32 %v2429, %v2820
    %v3043 = vadd.f32 %v2430, %v2821
    %v3044 = vadd.f32 %v2431, %v2823
    %v3045 = vadd.f32 %v2432, %v2825
    %v3046 = vadd.f32 %v2433, %v2826
    %v3047 = vadd.f32 %v2434, %v2828
    %v3048 = vadd.f32 %v2435, %v2830
    %v3049 = vadd.f32 %v2436, %v2831
    %v3050 = vadd.f32 %v2437, %v2833
    %v3051 = vadd.f32 %v2438, %v2835
    %v3052 = vadd.f32 %v2439, %v2836
    %v3053 = vadd.f32 %v2440, %v2838
    %v3054 = vadd.f32 %v2441, %v2840
    %v3055 = vadd.f32 %v2442, %v2841
    %v3056 = vadd.f32 %v2443, %v2843
    %v3057 = vadd.f32 %v2444, %v2845
    %v3058 = vadd.f32 %v2445, %v2846
    %v3059 = vadd.f32 %v2446, %v2848
    %v3060 = vadd.f32 %v2447, %v2850
    %v3061 = vadd.f32 %v2448, %v2851
    %v3062 = vadd.f32 %v2449, %v2853
    %v3063 = vadd.f32 %v2450, %v2855
    %v3064 = vadd.f32 %v2451, %v2856
    %v3065 = vadd.f32 %v2452, %v2858
    %v3066 = vadd.f32 %v2453, %v2860
    %v3067 = vadd.f32 %v2454, %v2861
    %v3068 = vadd.f32 %v2455, %v2863
    %v3069 = vadd.f32 %v2456, %v2865
    %v3070 = vadd.f32 %v2457, %v2866
    %v3071 = vadd.f32 %v2458, %v2868
    %v3072 = vadd.f32 %v2459, %v2870
    %v3073 = vadd.f32 %v2460, %v2871
    %v3074 = vadd.f32 %v2461, %v2873
    %v3075 = vadd.f32 %v2462, %v2875
    %v3076 = vadd.f32 %v2463, %v2876
    %v3077 = vadd.f32 %v2464, %v2878
    %v3078 = vadd.f32 %v2465, %v2880
    %v3079 = vadd.f32 %v2466, %v2881
    %v3080 = vadd.f32 %v2467, %v2883
    %v3081 = vadd.f32 %v2468, %v2885
    %v3082 = vadd.f32 %v2469, %v2886
    %v3083 = vadd.f32 %v2470, %v2888
    %v3084 = vadd.f32 %v2471, %v2890
    %v3085 = vadd.f32 %v2472, %v2891
    %v3086 = vadd.f32 %v2473, %v2893
    %v3087 = vadd.f32 %v2474, %v2895
    %v3088 = vld [vmem:[%s1693 + $0x4] sm:$0x8]
    %v3089 = vld [vmem:[%s1693 + $0x8] sm:$0xf]
    %v3090 = vld [vmem:[%s1693 + $0xc] sm:$0xf]
    %v3091 = vld [vmem:[%s1693 + $0x18] sm:$0x8]
    %v3092 = vld [vmem:[%s1693 + $0x1c] sm:$0xf]
    %v3093 = vld [vmem:[%s1693 + $0x20] sm:$0xf]
    %v3094 = vld [vmem:[%s1693 + $0x2c] sm:$0x8]
    %v3095 = vld [vmem:[%s1693 + $0x30] sm:$0xf]
    %v3096 = vld [vmem:[%s1693 + $0x34] sm:$0xf]
    %v3097 = vld [vmem:[%s1693 + $0x40] sm:$0x8]
    %v3098 = vld [vmem:[%s1693 + $0x44] sm:$0xf]
    %v3099 = vld [vmem:[%s1693 + $0x48] sm:$0xf]
    %v3100 = vld [vmem:[%s1693 + $0x54] sm:$0x8]
    %v3101 = vld [vmem:[%s1693 + $0x58] sm:$0xf]
    %v3102 = vld [vmem:[%s1693 + $0x5c] sm:$0xf]
    %v3103 = vld [vmem:[%s1693 + $0x68] sm:$0x8]
    %v3104 = vld [vmem:[%s1693 + $0x6c] sm:$0xf]
    %v3105 = vld [vmem:[%s1693 + $0x70] sm:$0xf]
    %v3106 = vld [vmem:[%s1693 + $0x7c] sm:$0x8]
    %v3107 = vld [vmem:[%s1693 + $0x80] sm:$0xf]
    %v3108 = vld [vmem:[%s1693 + $0x84] sm:$0xf]
    %v3109 = vld [vmem:[%s1693 + $0x90] sm:$0x8]
    %v3110 = vld [vmem:[%s1693 + $0x94] sm:$0xf]
    %v3111 = vld [vmem:[%s1693 + $0x98] sm:$0xf]
    %v3112 = vld [vmem:[%s1693 + $0xa4] sm:$0x8]
    %v3113 = vld [vmem:[%s1693 + $0xa8] sm:$0xf]
    %v3114 = vld [vmem:[%s1693 + $0xac] sm:$0xf]
    %v3115 = vld [vmem:[%s1693 + $0xb8] sm:$0x8]
    %v3116 = vld [vmem:[%s1693 + $0xbc] sm:$0xf]
    %v3117 = vld [vmem:[%s1693 + $0xc0] sm:$0xf]
    %v3118 = vld [vmem:[%s1693 + $0xcc] sm:$0x8]
    %v3119 = vld [vmem:[%s1693 + $0xd0] sm:$0xf]
    %v3120 = vld [vmem:[%s1693 + $0xd4] sm:$0xf]
    %v3121 = vld [vmem:[%s1693 + $0xe0] sm:$0x8]
    %v3122 = vld [vmem:[%s1693 + $0xe4] sm:$0xf]
    %v3123 = vld [vmem:[%s1693 + $0xe8] sm:$0xf]
    %v3124 = vld [vmem:[%s1693 + $0xf4] sm:$0x8]
    %v3125 = vld [vmem:[%s1693 + $0xf8] sm:$0xf]
    %v3126 = vld [vmem:[%s1693 + $0xfc] sm:$0xf]
    %v3127 = vld [vmem:[%s1693 + $0x108] sm:$0x8]
    %v3128 = vld [vmem:[%s1693 + $0x10c] sm:$0xf]
    %v3129 = vld [vmem:[%s1693 + $0x110] sm:$0xf]
    %v3130 = vld [vmem:[%s1693 + $0x11c] sm:$0x8]
    %v3131 = vld [vmem:[%s1693 + $0x120] sm:$0xf]
    %v3132 = vld [vmem:[%s1693 + $0x124] sm:$0xf]
    %v3133 = vld [vmem:[%s1693 + $0x130] sm:$0x8]
    %v3134 = vld [vmem:[%s1693 + $0x134] sm:$0xf]
    %v3135 = vld [vmem:[%s1693 + $0x138] sm:$0xf]
    %v3136 = vld [vmem:[%s1693 + $0x16c] sm:$0x8]
    %v3137 = vld [vmem:[%s1693 + $0x170] sm:$0xf]
    %v3138 = vld [vmem:[%s1693 + $0x174] sm:$0xf]
    %v3139 = vld [vmem:[%s1693 + $0x180] sm:$0x8]
    %v3140 = vld [vmem:[%s1693 + $0x184] sm:$0xf]
    %v3141 = vld [vmem:[%s1693 + $0x188] sm:$0xf]
    %v3142 = vld [vmem:[%s1693 + $0x194] sm:$0x8]
    %v3143 = vld [vmem:[%s1693 + $0x198] sm:$0xf]
    %v3144 = vld [vmem:[%s1693 + $0x19c] sm:$0xf]
    %v3145 = vld [vmem:[%s1693 + $0x1a8] sm:$0x8]
    %v3146 = vld [vmem:[%s1693 + $0x1ac] sm:$0xf]
    %v3147 = vld [vmem:[%s1693 + $0x1b0] sm:$0xf]
    %v3148 = vld [vmem:[%s1693 + $0x1bc] sm:$0x8]
    %v3149 = vld [vmem:[%s1693 + $0x1c0] sm:$0xf]
    %v3150 = vld [vmem:[%s1693 + $0x1c4] sm:$0xf]
    %v3151 = vld [vmem:[%s1693 + $0x1d0] sm:$0x8]
    %v3152 = vld [vmem:[%s1693 + $0x1d4] sm:$0xf]
    %v3153 = vld [vmem:[%s1693 + $0x1d8] sm:$0xf]
    %v3154 = vld [vmem:[%s1693 + $0x1e4] sm:$0x8]
    %v3155 = vld [vmem:[%s1693 + $0x1e8] sm:$0xf]
    %v3156 = vld [vmem:[%s1693 + $0x1ec] sm:$0xf]
    %v3157 = vld [vmem:[%s1693 + $0x1f8] sm:$0x8]
    %v3158 = vld [vmem:[%s1693 + $0x1fc] sm:$0xf]
    %v3159 = vld [vmem:[%s1693 + $0x200] sm:$0xf]
    %v3160 = vld [vmem:[%s1693 + $0x20c] sm:$0x8]
    %v3161 = vld [vmem:[%s1693 + $0x210] sm:$0xf]
    %v3162 = vld [vmem:[%s1693 + $0x214] sm:$0xf]
    %v3163 = vld [vmem:[%s1693 + $0x220] sm:$0x8]
    %v3164 = vld [vmem:[%s1693 + $0x224] sm:$0xf]
    %v3165 = vld [vmem:[%s1693 + $0x228] sm:$0xf]
    %v3166 = vld [vmem:[%s1693 + $0x234] sm:$0x8]
    %v3167 = vld [vmem:[%s1693 + $0x238] sm:$0xf]
    %v3168 = vld [vmem:[%s1693 + $0x23c] sm:$0xf]
    %v3169 = vld [vmem:[%s1693 + $0x248] sm:$0x8]
    %v3170 = vld [vmem:[%s1693 + $0x24c] sm:$0xf]
    %v3171 = vld [vmem:[%s1693 + $0x250] sm:$0xf]
    %v3172 = vld [vmem:[%s1693 + $0x25c] sm:$0x8]
    %v3173 = vld [vmem:[%s1693 + $0x260] sm:$0xf]
    %v3174 = vld [vmem:[%s1693 + $0x264] sm:$0xf]
    %v3175 = vld [vmem:[%s1693 + $0x270] sm:$0x8]
    %v3176 = vld [vmem:[%s1693 + $0x274] sm:$0xf]
    %v3177 = vld [vmem:[%s1693 + $0x278] sm:$0xf]
    %v3178 = vld [vmem:[%s1693 + $0x284] sm:$0x8]
    %v3179 = vld [vmem:[%s1693 + $0x288] sm:$0xf]
    %v3180 = vld [vmem:[%s1693 + $0x28c] sm:$0xf]
    %v3181 = vld [vmem:[%s1693 + $0x298] sm:$0x8]
    %v3182 = vld [vmem:[%s1693 + $0x29c] sm:$0xf]
    %v3183 = vld [vmem:[%s1693 + $0x2a0] sm:$0xf]
    %v3184 = vunpack.c.l.bf16 %v3088
    %v3185 = vunpack.c.l.bf16 %v3089
    %v3186 = vunpack.c.l.bf16 %v3090
    %v3187 = vunpack.c.l.bf16 %v3091
    %v3188 = vunpack.c.l.bf16 %v3092
    %v3189 = vunpack.c.l.bf16 %v3093
    %v3190 = vunpack.c.l.bf16 %v3094
    %v3191 = vunpack.c.l.bf16 %v3095
    %v3192 = vunpack.c.l.bf16 %v3096
    %v3193 = vunpack.c.l.bf16 %v3097
    %v3194 = vunpack.c.l.bf16 %v3098
    %v3195 = vunpack.c.l.bf16 %v3099
    %v3196 = vunpack.c.l.bf16 %v3100
    %v3197 = vunpack.c.l.bf16 %v3101
    %v3198 = vunpack.c.l.bf16 %v3102
    %v3199 = vunpack.c.l.bf16 %v3103
    %v3200 = vunpack.c.l.bf16 %v3104
    %v3201 = vunpack.c.l.bf16 %v3105
    %v3202 = vunpack.c.l.bf16 %v3106
    %v3203 = vunpack.c.l.bf16 %v3107
    %v3204 = vunpack.c.l.bf16 %v3108
    %v3205 = vunpack.c.l.bf16 %v3109
    %v3206 = vunpack.c.l.bf16 %v3110
    %v3207 = vunpack.c.l.bf16 %v3111
    %v3208 = vunpack.c.l.bf16 %v3112
    %v3209 = vunpack.c.l.bf16 %v3113
    %v3210 = vunpack.c.l.bf16 %v3114
    %v3211 = vunpack.c.l.bf16 %v3115
    %v3212 = vunpack.c.l.bf16 %v3116
    %v3213 = vunpack.c.l.bf16 %v3117
    %v3214 = vunpack.c.l.bf16 %v3118
    %v3215 = vunpack.c.l.bf16 %v3119
    %v3216 = vunpack.c.l.bf16 %v3120
    %v3217 = vunpack.c.l.bf16 %v3121
    %v3218 = vunpack.c.l.bf16 %v3122
    %v3219 = vunpack.c.l.bf16 %v3123
    %v3220 = vunpack.c.l.bf16 %v3124
    %v3221 = vunpack.c.l.bf16 %v3125
    %v3222 = vunpack.c.l.bf16 %v3126
    %v3223 = vunpack.c.l.bf16 %v3127
    %v3224 = vunpack.c.l.bf16 %v3128
    %v3225 = vunpack.c.l.bf16 %v3129
    %v3226 = vunpack.c.l.bf16 %v3130
    %v3227 = vunpack.c.l.bf16 %v3131
    %v3228 = vunpack.c.l.bf16 %v3132
    %v3229 = vunpack.c.l.bf16 %v3133
    %v3230 = vunpack.c.l.bf16 %v3134
    %v3231 = vunpack.c.l.bf16 %v3135
    %v3232 = vunpack.c.l.bf16 %v3136
    %v3233 = vunpack.c.l.bf16 %v3137
    %v3234 = vunpack.c.l.bf16 %v3138
    %v3235 = vunpack.c.l.bf16 %v3139
    %v3236 = vunpack.c.l.bf16 %v3140
    %v3237 = vunpack.c.l.bf16 %v3141
    %v3238 = vunpack.c.l.bf16 %v3142
    %v3239 = vunpack.c.l.bf16 %v3143
    %v3240 = vunpack.c.l.bf16 %v3144
    %v3241 = vunpack.c.l.bf16 %v3145
    %v3242 = vunpack.c.l.bf16 %v3146
    %v3243 = vunpack.c.l.bf16 %v3147
    %v3244 = vunpack.c.l.bf16 %v3148
    %v3245 = vunpack.c.l.bf16 %v3149
    %v3246 = vunpack.c.l.bf16 %v3150
    %v3247 = vunpack.c.l.bf16 %v3151
    %v3248 = vunpack.c.l.bf16 %v3152
    %v3249 = vunpack.c.l.bf16 %v3153
    %v3250 = vunpack.c.l.bf16 %v3154
    %v3251 = vunpack.c.l.bf16 %v3155
    %v3252 = vunpack.c.l.bf16 %v3156
    %v3253 = vunpack.c.l.bf16 %v3157
    %v3254 = vunpack.c.l.bf16 %v3158
    %v3255 = vunpack.c.l.bf16 %v3159
    %v3256 = vunpack.c.l.bf16 %v3160
    %v3257 = vunpack.c.l.bf16 %v3161
    %v3258 = vunpack.c.l.bf16 %v3162
    %v3259 = vunpack.c.l.bf16 %v3163
    %v3260 = vunpack.c.l.bf16 %v3164
    %v3261 = vunpack.c.l.bf16 %v3165
    %v3262 = vunpack.c.l.bf16 %v3166
    %v3263 = vunpack.c.l.bf16 %v3167
    %v3264 = vunpack.c.l.bf16 %v3168
    %v3265 = vunpack.c.l.bf16 %v3169
    %v3266 = vunpack.c.l.bf16 %v3170
    %v3267 = vunpack.c.l.bf16 %v3171
    %v3268 = vunpack.c.l.bf16 %v3172
    %v3269 = vunpack.c.l.bf16 %v3173
    %v3270 = vunpack.c.l.bf16 %v3174
    %v3271 = vunpack.c.l.bf16 %v3175
    %v3272 = vunpack.c.l.bf16 %v3176
    %v3273 = vunpack.c.l.bf16 %v3177
    %v3274 = vunpack.c.l.bf16 %v3178
    %v3275 = vunpack.c.l.bf16 %v3179
    %v3276 = vunpack.c.l.bf16 %v3180
    %v3277 = vunpack.c.l.bf16 %v3181
    %v3278 = vunpack.c.l.bf16 %v3182
    %v3279 = vunpack.c.l.bf16 %v3183
    %v3280 = vlaneseq
    %v3281 = vshrl.u32 %v3280, 7
    %v3282 = vsub.s32 0, %v3281
    %v3283 = vrot.slane %v1759, %v3282
    %v3284 = vmul.f32 %v3184, %v3283
    %v3285 = vmul.f32 %v3185, %v3283
    %v3286 = vmul.f32 %v3186, %v3283
    %v3287 = vmul.f32 %v3187, %v3283
    %v3288 = vmul.f32 %v3188, %v3283
    %v3289 = vmul.f32 %v3189, %v3283
    %v3290 = vmul.f32 %v3190, %v3283
    %v3291 = vmul.f32 %v3191, %v3283
    %v3292 = vmul.f32 %v3192, %v3283
    %v3293 = vmul.f32 %v3193, %v3283
    %v3294 = vmul.f32 %v3194, %v3283
    %v3295 = vmul.f32 %v3195, %v3283
    %v3296 = vmul.f32 %v3196, %v3283
    %v3297 = vmul.f32 %v3197, %v3283
    %v3298 = vmul.f32 %v3198, %v3283
    %v3299 = vmul.f32 %v3199, %v3283
    %v3300 = vmul.f32 %v3200, %v3283
    %v3301 = vmul.f32 %v3201, %v3283
    %v3302 = vmul.f32 %v3202, %v3283
    %v3303 = vmul.f32 %v3203, %v3283
    %v3304 = vmul.f32 %v3204, %v3283
    %v3305 = vmul.f32 %v3205, %v3283
    %v3306 = vmul.f32 %v3206, %v3283
    %v3307 = vmul.f32 %v3207, %v3283
    %v3308 = vmul.f32 %v3208, %v3283
    %v3309 = vmul.f32 %v3209, %v3283
    %v3310 = vmul.f32 %v3210, %v3283
    %v3311 = vmul.f32 %v3211, %v3283
    %v3312 = vmul.f32 %v3212, %v3283
    %v3313 = vmul.f32 %v3213, %v3283
    %v3314 = vmul.f32 %v3214, %v3283
    %v3315 = vmul.f32 %v3215, %v3283
    %v3316 = vmul.f32 %v3216, %v3283
    %v3317 = vmul.f32 %v3217, %v3283
    %v3318 = vmul.f32 %v3218, %v3283
    %v3319 = vmul.f32 %v3219, %v3283
    %v3320 = vmul.f32 %v3220, %v3283
    %v3321 = vmul.f32 %v3221, %v3283
    %v3322 = vmul.f32 %v3222, %v3283
    %v3323 = vmul.f32 %v3223, %v3283
    %v3324 = vmul.f32 %v3224, %v3283
    %v3325 = vmul.f32 %v3225, %v3283
    %v3326 = vmul.f32 %v3226, %v3283
    %v3327 = vmul.f32 %v3227, %v3283
    %v3328 = vmul.f32 %v3228, %v3283
    %v3329 = vmul.f32 %v3229, %v3283
    %v3330 = vmul.f32 %v3230, %v3283
    %v3331 = vmul.f32 %v3231, %v3283
    %v3332 = vmul.f32 %v3232, %v3283
    %v3333 = vmul.f32 %v3233, %v3283
    %v3334 = vmul.f32 %v3234, %v3283
    %v3335 = vmul.f32 %v3235, %v3283
    %v3336 = vmul.f32 %v3236, %v3283
    %v3337 = vmul.f32 %v3237, %v3283
    %v3338 = vmul.f32 %v3238, %v3283
    %v3339 = vmul.f32 %v3239, %v3283
    %v3340 = vmul.f32 %v3240, %v3283
    %v3341 = vmul.f32 %v3241, %v3283
    %v3342 = vmul.f32 %v3242, %v3283
    %v3343 = vmul.f32 %v3243, %v3283
    %v3344 = vmul.f32 %v3244, %v3283
    %v3345 = vmul.f32 %v3245, %v3283
    %v3346 = vmul.f32 %v3246, %v3283
    %v3347 = vmul.f32 %v3247, %v3283
    %v3348 = vmul.f32 %v3248, %v3283
    %v3349 = vmul.f32 %v3249, %v3283
    %v3350 = vmul.f32 %v3250, %v3283
    %v3351 = vmul.f32 %v3251, %v3283
    %v3352 = vmul.f32 %v3252, %v3283
    %v3353 = vmul.f32 %v3253, %v3283
    %v3354 = vmul.f32 %v3254, %v3283
    %v3355 = vmul.f32 %v3255, %v3283
    %v3356 = vmul.f32 %v3256, %v3283
    %v3357 = vmul.f32 %v3257, %v3283
    %v3358 = vmul.f32 %v3258, %v3283
    %v3359 = vmul.f32 %v3259, %v3283
    %v3360 = vmul.f32 %v3260, %v3283
    %v3361 = vmul.f32 %v3261, %v3283
    %v3362 = vmul.f32 %v3262, %v3283
    %v3363 = vmul.f32 %v3263, %v3283
    %v3364 = vmul.f32 %v3264, %v3283
    %v3365 = vmul.f32 %v3265, %v3283
    %v3366 = vmul.f32 %v3266, %v3283
    %v3367 = vmul.f32 %v3267, %v3283
    %v3368 = vmul.f32 %v3268, %v3283
    %v3369 = vmul.f32 %v3269, %v3283
    %v3370 = vmul.f32 %v3270, %v3283
    %v3371 = vmul.f32 %v3271, %v3283
    %v3372 = vmul.f32 %v3272, %v3283
    %v3373 = vmul.f32 %v3273, %v3283
    %v3374 = vmul.f32 %v3274, %v3283
    %v3375 = vmul.f32 %v3275, %v3283
    %v3376 = vmul.f32 %v3276, %v3283
    %v3377 = vmul.f32 %v3277, %v3283
    %v3378 = vmul.f32 %v3278, %v3283
    %v3379 = vmul.f32 %v3279, %v3283
    %v3380 = vadd.f32 %v2992, %v3284
    %v3381 = vadd.f32 %v2993, %v3285
    %v3382 = vadd.f32 %v2994, %v3286
    %v3383 = vadd.f32 %v2995, %v3287
    %v3384 = vadd.f32 %v2996, %v3288
    %v3385 = vadd.f32 %v2997, %v3289
    %v3386 = vadd.f32 %v2998, %v3290
    %v3387 = vadd.f32 %v2999, %v3291
    %v3388 = vadd.f32 %v3000, %v3292
    %v3389 = vadd.f32 %v3001, %v3293
    %v3390 = vadd.f32 %v3002, %v3294
    %v3391 = vadd.f32 %v3003, %v3295
    %v3392 = vadd.f32 %v3004, %v3296
    %v3393 = vadd.f32 %v3005, %v3297
    %v3394 = vadd.f32 %v3006, %v3298
    %v3395 = vadd.f32 %v3007, %v3299
    %v3396 = vadd.f32 %v3008, %v3300
    %v3397 = vadd.f32 %v3009, %v3301
    %v3398 = vadd.f32 %v3010, %v3302
    %v3399 = vadd.f32 %v3011, %v3303
    %v3400 = vadd.f32 %v3012, %v3304
    %v3401 = vadd.f32 %v3013, %v3305
    %v3402 = vadd.f32 %v3014, %v3306
    %v3403 = vadd.f32 %v3015, %v3307
    %v3404 = vadd.f32 %v3016, %v3308
    %v3405 = vadd.f32 %v3017, %v3309
    %v3406 = vadd.f32 %v3018, %v3310
    %v3407 = vadd.f32 %v3019, %v3311
    %v3408 = vadd.f32 %v3020, %v3312
    %v3409 = vadd.f32 %v3021, %v3313
    %v3410 = vadd.f32 %v3022, %v3314
    %v3411 = vadd.f32 %v3023, %v3315
    %v3412 = vadd.f32 %v3024, %v3316
    %v3413 = vadd.f32 %v3025, %v3317
    %v3414 = vadd.f32 %v3026, %v3318
    %v3415 = vadd.f32 %v3027, %v3319
    %v3416 = vadd.f32 %v3028, %v3320
    %v3417 = vadd.f32 %v3029, %v3321
    %v3418 = vadd.f32 %v3030, %v3322
    %v3419 = vadd.f32 %v3031, %v3323
    %v3420 = vadd.f32 %v3032, %v3324
    %v3421 = vadd.f32 %v3033, %v3325
    %v3422 = vadd.f32 %v3034, %v3326
    %v3423 = vadd.f32 %v3035, %v3327
    %v3424 = vadd.f32 %v3036, %v3328
    %v3425 = vadd.f32 %v3037, %v3329
    %v3426 = vadd.f32 %v3038, %v3330
    %v3427 = vadd.f32 %v3039, %v3331
    %v3428 = vadd.f32 %v3040, %v3332
    %v3429 = vadd.f32 %v3041, %v3333
    %v3430 = vadd.f32 %v3042, %v3334
    %v3431 = vadd.f32 %v3043, %v3335
    %v3432 = vadd.f32 %v3044, %v3336
    %v3433 = vadd.f32 %v3045, %v3337
    %v3434 = vadd.f32 %v3046, %v3338
    %v3435 = vadd.f32 %v3047, %v3339
    %v3436 = vadd.f32 %v3048, %v3340
    %v3437 = vadd.f32 %v3049, %v3341
    %v3438 = vadd.f32 %v3050, %v3342
    %v3439 = vadd.f32 %v3051, %v3343
    %v3440 = vadd.f32 %v3052, %v3344
    %v3441 = vadd.f32 %v3053, %v3345
    %v3442 = vadd.f32 %v3054, %v3346
    %v3443 = vadd.f32 %v3055, %v3347
    %v3444 = vadd.f32 %v3056, %v3348
    %v3445 = vadd.f32 %v3057, %v3349
    %v3446 = vadd.f32 %v3058, %v3350
    %v3447 = vadd.f32 %v3059, %v3351
    %v3448 = vadd.f32 %v3060, %v3352
    %v3449 = vadd.f32 %v3061, %v3353
    %v3450 = vadd.f32 %v3062, %v3354
    %v3451 = vadd.f32 %v3063, %v3355
    %v3452 = vadd.f32 %v3064, %v3356
    %v3453 = vadd.f32 %v3065, %v3357
    %v3454 = vadd.f32 %v3066, %v3358
    %v3455 = vadd.f32 %v3067, %v3359
    %v3456 = vadd.f32 %v3068, %v3360
    %v3457 = vadd.f32 %v3069, %v3361
    %v3458 = vadd.f32 %v3070, %v3362
    %v3459 = vadd.f32 %v3071, %v3363
    %v3460 = vadd.f32 %v3072, %v3364
    %v3461 = vadd.f32 %v3073, %v3365
    %v3462 = vadd.f32 %v3074, %v3366
    %v3463 = vadd.f32 %v3075, %v3367
    %v3464 = vadd.f32 %v3076, %v3368
    %v3465 = vadd.f32 %v3077, %v3369
    %v3466 = vadd.f32 %v3078, %v3370
    %v3467 = vadd.f32 %v3079, %v3371
    %v3468 = vadd.f32 %v3080, %v3372
    %v3469 = vadd.f32 %v3081, %v3373
    %v3470 = vadd.f32 %v3082, %v3374
    %v3471 = vadd.f32 %v3083, %v3375
    %v3472 = vadd.f32 %v3084, %v3376
    %v3473 = vadd.f32 %v3085, %v3377
    %v3474 = vadd.f32 %v3086, %v3378
    %v3475 = vadd.f32 %v3087, %v3379
    %v3476 = vlaneseq
    %v3477 = vshrl.u32 %v3476, 7
    %v3478 = vsub.s32 1, %v3477
    %v3479 = vrot.slane %v1759, %v3478
    %v3480 = vmul.f32 %v3185, %v3479
    %v3481 = vmul.f32 %v3186, %v3479
    %v3482 = vmul.f32 %v3188, %v3479
    %v3483 = vmul.f32 %v3189, %v3479
    %v3484 = vmul.f32 %v3191, %v3479
    %v3485 = vmul.f32 %v3192, %v3479
    %v3486 = vmul.f32 %v3194, %v3479
    %v3487 = vmul.f32 %v3195, %v3479
    %v3488 = vmul.f32 %v3197, %v3479
    %v3489 = vmul.f32 %v3198, %v3479
    %v3490 = vmul.f32 %v3200, %v3479
    %v3491 = vmul.f32 %v3201, %v3479
    %v3492 = vmul.f32 %v3203, %v3479
    %v3493 = vmul.f32 %v3204, %v3479
    %v3494 = vmul.f32 %v3206, %v3479
    %v3495 = vmul.f32 %v3207, %v3479
    %v3496 = vmul.f32 %v3209, %v3479
    %v3497 = vmul.f32 %v3210, %v3479
    %v3498 = vmul.f32 %v3212, %v3479
    %v3499 = vmul.f32 %v3213, %v3479
    %v3500 = vmul.f32 %v3215, %v3479
    %v3501 = vmul.f32 %v3216, %v3479
    %v3502 = vmul.f32 %v3218, %v3479
    %v3503 = vmul.f32 %v3219, %v3479
    %v3504 = vmul.f32 %v3221, %v3479
    %v3505 = vmul.f32 %v3222, %v3479
    %v3506 = vmul.f32 %v3224, %v3479
    %v3507 = vmul.f32 %v3225, %v3479
    %v3508 = vmul.f32 %v3227, %v3479
    %v3509 = vmul.f32 %v3228, %v3479
    %v3510 = vmul.f32 %v3230, %v3479
    %v3511 = vmul.f32 %v3231, %v3479
    %v3512 = vmul.f32 %v3233, %v3479
    %v3513 = vmul.f32 %v3234, %v3479
    %v3514 = vmul.f32 %v3236, %v3479
    %v3515 = vmul.f32 %v3237, %v3479
    %v3516 = vmul.f32 %v3239, %v3479
    %v3517 = vmul.f32 %v3240, %v3479
    %v3518 = vmul.f32 %v3242, %v3479
    %v3519 = vmul.f32 %v3243, %v3479
    %v3520 = vmul.f32 %v3245, %v3479
    %v3521 = vmul.f32 %v3246, %v3479
    %v3522 = vmul.f32 %v3248, %v3479
    %v3523 = vmul.f32 %v3249, %v3479
    %v3524 = vmul.f32 %v3251, %v3479
    %v3525 = vmul.f32 %v3252, %v3479
    %v3526 = vmul.f32 %v3254, %v3479
    %v3527 = vmul.f32 %v3255, %v3479
    %v3528 = vmul.f32 %v3257, %v3479
    %v3529 = vmul.f32 %v3258, %v3479
    %v3530 = vmul.f32 %v3260, %v3479
    %v3531 = vmul.f32 %v3261, %v3479
    %v3532 = vmul.f32 %v3263, %v3479
    %v3533 = vmul.f32 %v3264, %v3479
    %v3534 = vmul.f32 %v3266, %v3479
    %v3535 = vmul.f32 %v3267, %v3479
    %v3536 = vmul.f32 %v3269, %v3479
    %v3537 = vmul.f32 %v3270, %v3479
    %v3538 = vmul.f32 %v3272, %v3479
    %v3539 = vmul.f32 %v3273, %v3479
    %v3540 = vmul.f32 %v3275, %v3479
    %v3541 = vmul.f32 %v3276, %v3479
    %v3542 = vmul.f32 %v3278, %v3479
    %v3543 = vmul.f32 %v3279, %v3479
    %v3608 = vrot.slane %v3480, 1
    %v3609 = vrot.slane %v3481, 1
    %v3610 = vsel %vm2186, %v3608, %v3609
    %v3611 = vrot.slane %v3482, 1
    %v3612 = vrot.slane %v3483, 1
    %v3613 = vsel %vm2186, %v3611, %v3612
    %v3614 = vrot.slane %v3484, 1
    %v3615 = vrot.slane %v3485, 1
    %v3616 = vsel %vm2186, %v3614, %v3615
    %v3617 = vrot.slane %v3486, 1
    %v3618 = vrot.slane %v3487, 1
    %v3619 = vsel %vm2186, %v3617, %v3618
    %v3620 = vrot.slane %v3488, 1
    %v3621 = vrot.slane %v3489, 1
    %v3622 = vsel %vm2186, %v3620, %v3621
    %v3623 = vrot.slane %v3490, 1
    %v3624 = vrot.slane %v3491, 1
    %v3625 = vsel %vm2186, %v3623, %v3624
    %v3626 = vrot.slane %v3492, 1
    %v3627 = vrot.slane %v3493, 1
    %v3628 = vsel %vm2186, %v3626, %v3627
    %v3629 = vrot.slane %v3494, 1
    %v3630 = vrot.slane %v3495, 1
    %v3631 = vsel %vm2186, %v3629, %v3630
    %v3632 = vrot.slane %v3496, 1
    %v3633 = vrot.slane %v3497, 1
    %v3634 = vsel %vm2186, %v3632, %v3633
    %v3635 = vrot.slane %v3498, 1
    %v3636 = vrot.slane %v3499, 1
    %v3637 = vsel %vm2186, %v3635, %v3636
    %v3638 = vrot.slane %v3500, 1
    %v3639 = vrot.slane %v3501, 1
    %v3640 = vsel %vm2186, %v3638, %v3639
    %v3641 = vrot.slane %v3502, 1
    %v3642 = vrot.slane %v3503, 1
    %v3643 = vsel %vm2186, %v3641, %v3642
    %v3644 = vrot.slane %v3504, 1
    %v3645 = vrot.slane %v3505, 1
    %v3646 = vsel %vm2186, %v3644, %v3645
    %v3647 = vrot.slane %v3506, 1
    %v3648 = vrot.slane %v3507, 1
    %v3649 = vsel %vm2186, %v3647, %v3648
    %v3650 = vrot.slane %v3508, 1
    %v3651 = vrot.slane %v3509, 1
    %v3652 = vsel %vm2186, %v3650, %v3651
    %v3653 = vrot.slane %v3510, 1
    %v3654 = vrot.slane %v3511, 1
    %v3655 = vsel %vm2186, %v3653, %v3654
    %v3656 = vrot.slane %v3512, 1
    %v3657 = vrot.slane %v3513, 1
    %v3658 = vsel %vm2186, %v3656, %v3657
    %v3659 = vrot.slane %v3514, 1
    %v3660 = vrot.slane %v3515, 1
    %v3661 = vsel %vm2186, %v3659, %v3660
    %v3662 = vrot.slane %v3516, 1
    %v3663 = vrot.slane %v3517, 1
    %v3664 = vsel %vm2186, %v3662, %v3663
    %v3665 = vrot.slane %v3518, 1
    %v3666 = vrot.slane %v3519, 1
    %v3667 = vsel %vm2186, %v3665, %v3666
    %v3668 = vrot.slane %v3520, 1
    %v3669 = vrot.slane %v3521, 1
    %v3670 = vsel %vm2186, %v3668, %v3669
    %v3671 = vrot.slane %v3522, 1
    %v3672 = vrot.slane %v3523, 1
    %v3673 = vsel %vm2186, %v3671, %v3672
    %v3674 = vrot.slane %v3524, 1
    %v3675 = vrot.slane %v3525, 1
    %v3676 = vsel %vm2186, %v3674, %v3675
    %v3677 = vrot.slane %v3526, 1
    %v3678 = vrot.slane %v3527, 1
    %v3679 = vsel %vm2186, %v3677, %v3678
    %v3680 = vrot.slane %v3528, 1
    %v3681 = vrot.slane %v3529, 1
    %v3682 = vsel %vm2186, %v3680, %v3681
    %v3683 = vrot.slane %v3530, 1
    %v3684 = vrot.slane %v3531, 1
    %v3685 = vsel %vm2186, %v3683, %v3684
    %v3686 = vrot.slane %v3532, 1
    %v3687 = vrot.slane %v3533, 1
    %v3688 = vsel %vm2186, %v3686, %v3687
    %v3689 = vrot.slane %v3534, 1
    %v3690 = vrot.slane %v3535, 1
    %v3691 = vsel %vm2186, %v3689, %v3690
    %v3692 = vrot.slane %v3536, 1
    %v3693 = vrot.slane %v3537, 1
    %v3694 = vsel %vm2186, %v3692, %v3693
    %v3695 = vrot.slane %v3538, 1
    %v3696 = vrot.slane %v3539, 1
    %v3697 = vsel %vm2186, %v3695, %v3696
    %v3698 = vrot.slane %v3540, 1
    %v3699 = vrot.slane %v3541, 1
    %v3700 = vsel %vm2186, %v3698, %v3699
    %v3701 = vrot.slane %v3542, 1
    %v3702 = vrot.slane %v3543, 1
    %v3703 = vsel %vm2186, %v3701, %v3702
    %v3800 = vadd.f32 %v3380, %v3608
    %v3801 = vadd.f32 %v3381, %v3610
    %v3802 = vadd.f32 %v3382, %v3609
    %v3803 = vadd.f32 %v3383, %v3611
    %v3804 = vadd.f32 %v3384, %v3613
    %v3805 = vadd.f32 %v3385, %v3612
    %v3806 = vadd.f32 %v3386, %v3614
    %v3807 = vadd.f32 %v3387, %v3616
    %v3808 = vadd.f32 %v3388, %v3615
    %v3809 = vadd.f32 %v3389, %v3617
    %v3810 = vadd.f32 %v3390, %v3619
    %v3811 = vadd.f32 %v3391, %v3618
    %v3812 = vadd.f32 %v3392, %v3620
    %v3813 = vadd.f32 %v3393, %v3622
    %v3814 = vadd.f32 %v3394, %v3621
    %v3815 = vadd.f32 %v3395, %v3623
    %v3816 = vadd.f32 %v3396, %v3625
    %v3817 = vadd.f32 %v3397, %v3624
    %v3818 = vadd.f32 %v3398, %v3626
    %v3819 = vadd.f32 %v3399, %v3628
    %v3820 = vadd.f32 %v3400, %v3627
    %v3821 = vadd.f32 %v3401, %v3629
    %v3822 = vadd.f32 %v3402, %v3631
    %v3823 = vadd.f32 %v3403, %v3630
    %v3824 = vadd.f32 %v3404, %v3632
    %v3825 = vadd.f32 %v3405, %v3634
    %v3826 = vadd.f32 %v3406, %v3633
    %v3827 = vadd.f32 %v3407, %v3635
    %v3828 = vadd.f32 %v3408, %v3637
    %v3829 = vadd.f32 %v3409, %v3636
    %v3830 = vadd.f32 %v3410, %v3638
    %v3831 = vadd.f32 %v3411, %v3640
    %v3832 = vadd.f32 %v3412, %v3639
    %v3833 = vadd.f32 %v3413, %v3641
    %v3834 = vadd.f32 %v3414, %v3643
    %v3835 = vadd.f32 %v3415, %v3642
    %v3836 = vadd.f32 %v3416, %v3644
    %v3837 = vadd.f32 %v3417, %v3646
    %v3838 = vadd.f32 %v3418, %v3645
    %v3839 = vadd.f32 %v3419, %v3647
    %v3840 = vadd.f32 %v3420, %v3649
    %v3841 = vadd.f32 %v3421, %v3648
    %v3842 = vadd.f32 %v3422, %v3650
    %v3843 = vadd.f32 %v3423, %v3652
    %v3844 = vadd.f32 %v3424, %v3651
    %v3845 = vadd.f32 %v3425, %v3653
    %v3846 = vadd.f32 %v3426, %v3655
    %v3847 = vadd.f32 %v3427, %v3654
    %v3848 = vadd.f32 %v3428, %v3656
    %v3849 = vadd.f32 %v3429, %v3658
    %v3850 = vadd.f32 %v3430, %v3657
    %v3851 = vadd.f32 %v3431, %v3659
    %v3852 = vadd.f32 %v3432, %v3661
    %v3853 = vadd.f32 %v3433, %v3660
    %v3854 = vadd.f32 %v3434, %v3662
    %v3855 = vadd.f32 %v3435, %v3664
    %v3856 = vadd.f32 %v3436, %v3663
    %v3857 = vadd.f32 %v3437, %v3665
    %v3858 = vadd.f32 %v3438, %v3667
    %v3859 = vadd.f32 %v3439, %v3666
    %v3860 = vadd.f32 %v3440, %v3668
    %v3861 = vadd.f32 %v3441, %v3670
    %v3862 = vadd.f32 %v3442, %v3669
    %v3863 = vadd.f32 %v3443, %v3671
    %v3864 = vadd.f32 %v3444, %v3673
    %v3865 = vadd.f32 %v3445, %v3672
    %v3866 = vadd.f32 %v3446, %v3674
    %v3867 = vadd.f32 %v3447, %v3676
    %v3868 = vadd.f32 %v3448, %v3675
    %v3869 = vadd.f32 %v3449, %v3677
    %v3870 = vadd.f32 %v3450, %v3679
    %v3871 = vadd.f32 %v3451, %v3678
    %v3872 = vadd.f32 %v3452, %v3680
    %v3873 = vadd.f32 %v3453, %v3682
    %v3874 = vadd.f32 %v3454, %v3681
    %v3875 = vadd.f32 %v3455, %v3683
    %v3876 = vadd.f32 %v3456, %v3685
    %v3877 = vadd.f32 %v3457, %v3684
    %v3878 = vadd.f32 %v3458, %v3686
    %v3879 = vadd.f32 %v3459, %v3688
    %v3880 = vadd.f32 %v3460, %v3687
    %v3881 = vadd.f32 %v3461, %v3689
    %v3882 = vadd.f32 %v3462, %v3691
    %v3883 = vadd.f32 %v3463, %v3690
    %v3884 = vadd.f32 %v3464, %v3692
    %v3885 = vadd.f32 %v3465, %v3694
    %v3886 = vadd.f32 %v3466, %v3693
    %v3887 = vadd.f32 %v3467, %v3695
    %v3888 = vadd.f32 %v3468, %v3697
    %v3889 = vadd.f32 %v3469, %v3696
    %v3890 = vadd.f32 %v3470, %v3698
    %v3891 = vadd.f32 %v3471, %v3700
    %v3892 = vadd.f32 %v3472, %v3699
    %v3893 = vadd.f32 %v3473, %v3701
    %v3894 = vadd.f32 %v3474, %v3703
    %v3895 = vadd.f32 %v3475, %v3702
    %v3896 = vld [vmem:[%s1693 + $0x10] sm:$0x1]
    %v3897 = vld [vmem:[%s1693 + $0x24] sm:$0x1]
    %v3898 = vld [vmem:[%s1693 + $0x38] sm:$0x1]
    %v3899 = vld [vmem:[%s1693 + $0x4c] sm:$0x1]
    %v3900 = vld [vmem:[%s1693 + $0x60] sm:$0x1]
    %v3901 = vld [vmem:[%s1693 + $0x74] sm:$0x1]
    %v3902 = vld [vmem:[%s1693 + $0x88] sm:$0x1]
    %v3903 = vld [vmem:[%s1693 + $0x9c] sm:$0x1]
    %v3904 = vld [vmem:[%s1693 + $0xb0] sm:$0x1]
    %v3905 = vld [vmem:[%s1693 + $0xc4] sm:$0x1]
    %v3906 = vld [vmem:[%s1693 + $0xd8] sm:$0x1]
    %v3907 = vld [vmem:[%s1693 + $0xec] sm:$0x1]
    %v3908 = vld [vmem:[%s1693 + $0x100] sm:$0x1]
    %v3909 = vld [vmem:[%s1693 + $0x114] sm:$0x1]
    %v3910 = vld [vmem:[%s1693 + $0x128] sm:$0x1]
    %v3911 = vld [vmem:[%s1693 + $0x13c] sm:$0x1]
    %v3912 = vld [vmem:[%s1693 + $0x178] sm:$0x1]
    %v3913 = vld [vmem:[%s1693 + $0x18c] sm:$0x1]
    %v3914 = vld [vmem:[%s1693 + $0x1a0] sm:$0x1]
    %v3915 = vld [vmem:[%s1693 + $0x1b4] sm:$0x1]
    %v3916 = vld [vmem:[%s1693 + $0x1c8] sm:$0x1]
    %v3917 = vld [vmem:[%s1693 + $0x1dc] sm:$0x1]
    %v3918 = vld [vmem:[%s1693 + $0x1f0] sm:$0x1]
    %v3919 = vld [vmem:[%s1693 + $0x204] sm:$0x1]
    %v3920 = vld [vmem:[%s1693 + $0x218] sm:$0x1]
    %v3921 = vld [vmem:[%s1693 + $0x22c] sm:$0x1]
    %v3922 = vld [vmem:[%s1693 + $0x240] sm:$0x1]
    %v3923 = vld [vmem:[%s1693 + $0x254] sm:$0x1]
    %v3924 = vld [vmem:[%s1693 + $0x268] sm:$0x1]
    %v3925 = vld [vmem:[%s1693 + $0x27c] sm:$0x1]
    %v3926 = vld [vmem:[%s1693 + $0x290] sm:$0x1]
    %v3927 = vld [vmem:[%s1693 + $0x2a4] sm:$0x1]
    %v3928 = vunpack.c.l.bf16 %v3896
    %v3929 = vunpack.c.l.bf16 %v3897
    %v3930 = vunpack.c.l.bf16 %v3898
    %v3931 = vunpack.c.l.bf16 %v3899
    %v3932 = vunpack.c.l.bf16 %v3900
    %v3933 = vunpack.c.l.bf16 %v3901
    %v3934 = vunpack.c.l.bf16 %v3902
    %v3935 = vunpack.c.l.bf16 %v3903
    %v3936 = vunpack.c.l.bf16 %v3904
    %v3937 = vunpack.c.l.bf16 %v3905
    %v3938 = vunpack.c.l.bf16 %v3906
    %v3939 = vunpack.c.l.bf16 %v3907
    %v3940 = vunpack.c.l.bf16 %v3908
    %v3941 = vunpack.c.l.bf16 %v3909
    %v3942 = vunpack.c.l.bf16 %v3910
    %v3943 = vunpack.c.l.bf16 %v3911
    %v3944 = vunpack.c.l.bf16 %v3912
    %v3945 = vunpack.c.l.bf16 %v3913
    %v3946 = vunpack.c.l.bf16 %v3914
    %v3947 = vunpack.c.l.bf16 %v3915
    %v3948 = vunpack.c.l.bf16 %v3916
    %v3949 = vunpack.c.l.bf16 %v3917
    %v3950 = vunpack.c.l.bf16 %v3918
    %v3951 = vunpack.c.l.bf16 %v3919
    %v3952 = vunpack.c.l.bf16 %v3920
    %v3953 = vunpack.c.l.bf16 %v3921
    %v3954 = vunpack.c.l.bf16 %v3922
    %v3955 = vunpack.c.l.bf16 %v3923
    %v3956 = vunpack.c.l.bf16 %v3924
    %v3957 = vunpack.c.l.bf16 %v3925
    %v3958 = vunpack.c.l.bf16 %v3926
    %v3959 = vunpack.c.l.bf16 %v3927
    %v3960 = vlaneseq
    %v3961 = vshrl.u32 %v3960, 7
    %v3962 = vsub.s32 2, %v3961
    %v3963 = vrot.slane %v1759, %v3962
    %v3964 = vmul.f32 %v3185, %v3963
    %v3965 = vmul.f32 %v3186, %v3963
    %v3966 = vmul.f32 %v3928, %v3963
    %v3967 = vmul.f32 %v3188, %v3963
    %v3968 = vmul.f32 %v3189, %v3963
    %v3969 = vmul.f32 %v3929, %v3963
    %v3970 = vmul.f32 %v3191, %v3963
    %v3971 = vmul.f32 %v3192, %v3963
    %v3972 = vmul.f32 %v3930, %v3963
    %v3973 = vmul.f32 %v3194, %v3963
    %v3974 = vmul.f32 %v3195, %v3963
    %v3975 = vmul.f32 %v3931, %v3963
    %v3976 = vmul.f32 %v3197, %v3963
    %v3977 = vmul.f32 %v3198, %v3963
    %v3978 = vmul.f32 %v3932, %v3963
    %v3979 = vmul.f32 %v3200, %v3963
    %v3980 = vmul.f32 %v3201, %v3963
    %v3981 = vmul.f32 %v3933, %v3963
    %v3982 = vmul.f32 %v3203, %v3963
    %v3983 = vmul.f32 %v3204, %v3963
    %v3984 = vmul.f32 %v3934, %v3963
    %v3985 = vmul.f32 %v3206, %v3963
    %v3986 = vmul.f32 %v3207, %v3963
    %v3987 = vmul.f32 %v3935, %v3963
    %v3988 = vmul.f32 %v3209, %v3963
    %v3989 = vmul.f32 %v3210, %v3963
    %v3990 = vmul.f32 %v3936, %v3963
    %v3991 = vmul.f32 %v3212, %v3963
    %v3992 = vmul.f32 %v3213, %v3963
    %v3993 = vmul.f32 %v3937, %v3963
    %v3994 = vmul.f32 %v3215, %v3963
    %v3995 = vmul.f32 %v3216, %v3963
    %v3996 = vmul.f32 %v3938, %v3963
    %v3997 = vmul.f32 %v3218, %v3963
    %v3998 = vmul.f32 %v3219, %v3963
    %v3999 = vmul.f32 %v3939, %v3963
    %v4000 = vmul.f32 %v3221, %v3963
    %v4001 = vmul.f32 %v3222, %v3963
    %v4002 = vmul.f32 %v3940, %v3963
    %v4003 = vmul.f32 %v3224, %v3963
    %v4004 = vmul.f32 %v3225, %v3963
    %v4005 = vmul.f32 %v3941, %v3963
    %v4006 = vmul.f32 %v3227, %v3963
    %v4007 = vmul.f32 %v3228, %v3963
    %v4008 = vmul.f32 %v3942, %v3963
    %v4009 = vmul.f32 %v3230, %v3963
    %v4010 = vmul.f32 %v3231, %v3963
    %v4011 = vmul.f32 %v3943, %v3963
    %v4012 = vmul.f32 %v3233, %v3963
    %v4013 = vmul.f32 %v3234, %v3963
    %v4014 = vmul.f32 %v3944, %v3963
    %v4015 = vmul.f32 %v3236, %v3963
    %v4016 = vmul.f32 %v3237, %v3963
    %v4017 = vmul.f32 %v3945, %v3963
    %v4018 = vmul.f32 %v3239, %v3963
    %v4019 = vmul.f32 %v3240, %v3963
    %v4020 = vmul.f32 %v3946, %v3963
    %v4021 = vmul.f32 %v3242, %v3963
    %v4022 = vmul.f32 %v3243, %v3963
    %v4023 = vmul.f32 %v3947, %v3963
    %v4024 = vmul.f32 %v3245, %v3963
    %v4025 = vmul.f32 %v3246, %v3963
    %v4026 = vmul.f32 %v3948, %v3963
    %v4027 = vmul.f32 %v3248, %v3963
    %v4028 = vmul.f32 %v3249, %v3963
    %v4029 = vmul.f32 %v3949, %v3963
    %v4030 = vmul.f32 %v3251, %v3963
    %v4031 = vmul.f32 %v3252, %v3963
    %v4032 = vmul.f32 %v3950, %v3963
    %v4033 = vmul.f32 %v3254, %v3963
    %v4034 = vmul.f32 %v3255, %v3963
    %v4035 = vmul.f32 %v3951, %v3963
    %v4036 = vmul.f32 %v3257, %v3963
    %v4037 = vmul.f32 %v3258, %v3963
    %v4038 = vmul.f32 %v3952, %v3963
    %v4039 = vmul.f32 %v3260, %v3963
    %v4040 = vmul.f32 %v3261, %v3963
    %v4041 = vmul.f32 %v3953, %v3963
    %v4042 = vmul.f32 %v3263, %v3963
    %v4043 = vmul.f32 %v3264, %v3963
    %v4044 = vmul.f32 %v3954, %v3963
    %v4045 = vmul.f32 %v3266, %v3963
    %v4046 = vmul.f32 %v3267, %v3963
    %v4047 = vmul.f32 %v3955, %v3963
    %v4048 = vmul.f32 %v3269, %v3963
    %v4049 = vmul.f32 %v3270, %v3963
    %v4050 = vmul.f32 %v3956, %v3963
    %v4051 = vmul.f32 %v3272, %v3963
    %v4052 = vmul.f32 %v3273, %v3963
    %v4053 = vmul.f32 %v3957, %v3963
    %v4054 = vmul.f32 %v3275, %v3963
    %v4055 = vmul.f32 %v3276, %v3963
    %v4056 = vmul.f32 %v3958, %v3963
    %v4057 = vmul.f32 %v3278, %v3963
    %v4058 = vmul.f32 %v3279, %v3963
    %v4059 = vmul.f32 %v3959, %v3963
    %v4156 = vrot.slane %v3964, 2
    %v4157 = vrot.slane %v3965, 2
    %v4158 = vsel %vm2735, %v4156, %v4157
    %v4159 = vrot.slane %v3966, 2
    %v4160 = vsel %vm2735, %v4157, %v4159
    %v4161 = vrot.slane %v3967, 2
    %v4162 = vrot.slane %v3968, 2
    %v4163 = vsel %vm2735, %v4161, %v4162
    %v4164 = vrot.slane %v3969, 2
    %v4165 = vsel %vm2735, %v4162, %v4164
    %v4166 = vrot.slane %v3970, 2
    %v4167 = vrot.slane %v3971, 2
    %v4168 = vsel %vm2735, %v4166, %v4167
    %v4169 = vrot.slane %v3972, 2
    %v4170 = vsel %vm2735, %v4167, %v4169
    %v4171 = vrot.slane %v3973, 2
    %v4172 = vrot.slane %v3974, 2
    %v4173 = vsel %vm2735, %v4171, %v4172
    %v4174 = vrot.slane %v3975, 2
    %v4175 = vsel %vm2735, %v4172, %v4174
    %v4176 = vrot.slane %v3976, 2
    %v4177 = vrot.slane %v3977, 2
    %v4178 = vsel %vm2735, %v4176, %v4177
    %v4179 = vrot.slane %v3978, 2
    %v4180 = vsel %vm2735, %v4177, %v4179
    %v4181 = vrot.slane %v3979, 2
    %v4182 = vrot.slane %v3980, 2
    %v4183 = vsel %vm2735, %v4181, %v4182
    %v4184 = vrot.slane %v3981, 2
    %v4185 = vsel %vm2735, %v4182, %v4184
    %v4186 = vrot.slane %v3982, 2
    %v4187 = vrot.slane %v3983, 2
    %v4188 = vsel %vm2735, %v4186, %v4187
    %v4189 = vrot.slane %v3984, 2
    %v4190 = vsel %vm2735, %v4187, %v4189
    %v4191 = vrot.slane %v3985, 2
    %v4192 = vrot.slane %v3986, 2
    %v4193 = vsel %vm2735, %v4191, %v4192
    %v4194 = vrot.slane %v3987, 2
    %v4195 = vsel %vm2735, %v4192, %v4194
    %v4196 = vrot.slane %v3988, 2
    %v4197 = vrot.slane %v3989, 2
    %v4198 = vsel %vm2735, %v4196, %v4197
    %v4199 = vrot.slane %v3990, 2
    %v4200 = vsel %vm2735, %v4197, %v4199
    %v4201 = vrot.slane %v3991, 2
    %v4202 = vrot.slane %v3992, 2
    %v4203 = vsel %vm2735, %v4201, %v4202
    %v4204 = vrot.slane %v3993, 2
    %v4205 = vsel %vm2735, %v4202, %v4204
    %v4206 = vrot.slane %v3994, 2
    %v4207 = vrot.slane %v3995, 2
    %v4208 = vsel %vm2735, %v4206, %v4207
    %v4209 = vrot.slane %v3996, 2
    %v4210 = vsel %vm2735, %v4207, %v4209
    %v4211 = vrot.slane %v3997, 2
    %v4212 = vrot.slane %v3998, 2
    %v4213 = vsel %vm2735, %v4211, %v4212
    %v4214 = vrot.slane %v3999, 2
    %v4215 = vsel %vm2735, %v4212, %v4214
    %v4216 = vrot.slane %v4000, 2
    %v4217 = vrot.slane %v4001, 2
    %v4218 = vsel %vm2735, %v4216, %v4217
    %v4219 = vrot.slane %v4002, 2
    %v4220 = vsel %vm2735, %v4217, %v4219
    %v4221 = vrot.slane %v4003, 2
    %v4222 = vrot.slane %v4004, 2
    %v4223 = vsel %vm2735, %v4221, %v4222
    %v4224 = vrot.slane %v4005, 2
    %v4225 = vsel %vm2735, %v4222, %v4224
    %v4226 = vrot.slane %v4006, 2
    %v4227 = vrot.slane %v4007, 2
    %v4228 = vsel %vm2735, %v4226, %v4227
    %v4229 = vrot.slane %v4008, 2
    %v4230 = vsel %vm2735, %v4227, %v4229
    %v4231 = vrot.slane %v4009, 2
    %v4232 = vrot.slane %v4010, 2
    %v4233 = vsel %vm2735, %v4231, %v4232
    %v4234 = vrot.slane %v4011, 2
    %v4235 = vsel %vm2735, %v4232, %v4234
    %v4236 = vrot.slane %v4012, 2
    %v4237 = vrot.slane %v4013, 2
    %v4238 = vsel %vm2735, %v4236, %v4237
    %v4239 = vrot.slane %v4014, 2
    %v4240 = vsel %vm2735, %v4237, %v4239
    %v4241 = vrot.slane %v4015, 2
    %v4242 = vrot.slane %v4016, 2
    %v4243 = vsel %vm2735, %v4241, %v4242
    %v4244 = vrot.slane %v4017, 2
    %v4245 = vsel %vm2735, %v4242, %v4244
    %v4246 = vrot.slane %v4018, 2
    %v4247 = vrot.slane %v4019, 2
    %v4248 = vsel %vm2735, %v4246, %v4247
    %v4249 = vrot.slane %v4020, 2
    %v4250 = vsel %vm2735, %v4247, %v4249
    %v4251 = vrot.slane %v4021, 2
    %v4252 = vrot.slane %v4022, 2
    %v4253 = vsel %vm2735, %v4251, %v4252
    %v4254 = vrot.slane %v4023, 2
    %v4255 = vsel %vm2735, %v4252, %v4254
    %v4256 = vrot.slane %v4024, 2
    %v4257 = vrot.slane %v4025, 2
    %v4258 = vsel %vm2735, %v4256, %v4257
    %v4259 = vrot.slane %v4026, 2
    %v4260 = vsel %vm2735, %v4257, %v4259
    %v4261 = vrot.slane %v4027, 2
    %v4262 = vrot.slane %v4028, 2
    %v4263 = vsel %vm2735, %v4261, %v4262
    %v4264 = vrot.slane %v4029, 2
    %v4265 = vsel %vm2735, %v4262, %v4264
    %v4266 = vrot.slane %v4030, 2
    %v4267 = vrot.slane %v4031, 2
    %v4268 = vsel %vm2735, %v4266, %v4267
    %v4269 = vrot.slane %v4032, 2
    %v4270 = vsel %vm2735, %v4267, %v4269
    %v4271 = vrot.slane %v4033, 2
    %v4272 = vrot.slane %v4034, 2
    %v4273 = vsel %vm2735, %v4271, %v4272
    %v4274 = vrot.slane %v4035, 2
    %v4275 = vsel %vm2735, %v4272, %v4274
    %v4276 = vrot.slane %v4036, 2
    %v4277 = vrot.slane %v4037, 2
    %v4278 = vsel %vm2735, %v4276, %v4277
    %v4279 = vrot.slane %v4038, 2
    %v4280 = vsel %vm2735, %v4277, %v4279
    %v4281 = vrot.slane %v4039, 2
    %v4282 = vrot.slane %v4040, 2
    %v4283 = vsel %vm2735, %v4281, %v4282
    %v4284 = vrot.slane %v4041, 2
    %v4285 = vsel %vm2735, %v4282, %v4284
    %v4286 = vrot.slane %v4042, 2
    %v4287 = vrot.slane %v4043, 2
    %v4288 = vsel %vm2735, %v4286, %v4287
    %v4289 = vrot.slane %v4044, 2
    %v4290 = vsel %vm2735, %v4287, %v4289
    %v4291 = vrot.slane %v4045, 2
    %v4292 = vrot.slane %v4046, 2
    %v4293 = vsel %vm2735, %v4291, %v4292
    %v4294 = vrot.slane %v4047, 2
    %v4295 = vsel %vm2735, %v4292, %v4294
    %v4296 = vrot.slane %v4048, 2
    %v4297 = vrot.slane %v4049, 2
    %v4298 = vsel %vm2735, %v4296, %v4297
    %v4299 = vrot.slane %v4050, 2
    %v4300 = vsel %vm2735, %v4297, %v4299
    %v4301 = vrot.slane %v4051, 2
    %v4302 = vrot.slane %v4052, 2
    %v4303 = vsel %vm2735, %v4301, %v4302
    %v4304 = vrot.slane %v4053, 2
    %v4305 = vsel %vm2735, %v4302, %v4304
    %v4306 = vrot.slane %v4054, 2
    %v4307 = vrot.slane %v4055, 2
    %v4308 = vsel %vm2735, %v4306, %v4307
    %v4309 = vrot.slane %v4056, 2
    %v4310 = vsel %vm2735, %v4307, %v4309
    %v4311 = vrot.slane %v4057, 2
    %v4312 = vrot.slane %v4058, 2
    %v4313 = vsel %vm2735, %v4311, %v4312
    %v4314 = vrot.slane %v4059, 2
    %v4315 = vsel %vm2735, %v4312, %v4314
    %v4412 = vadd.f32 %v3800, %v4156
    %v4413 = vadd.f32 %v3801, %v4158
    %v4414 = vadd.f32 %v3802, %v4160
    %v4415 = vadd.f32 %v3803, %v4161
    %v4416 = vadd.f32 %v3804, %v4163
    %v4417 = vadd.f32 %v3805, %v4165
    %v4418 = vadd.f32 %v3806, %v4166
    %v4419 = vadd.f32 %v3807, %v4168
    %v4420 = vadd.f32 %v3808, %v4170
    %v4421 = vadd.f32 %v3809, %v4171
    %v4422 = vadd.f32 %v3810, %v4173
    %v4423 = vadd.f32 %v3811, %v4175
    %v4424 = vadd.f32 %v3812, %v4176
    %v4425 = vadd.f32 %v3813, %v4178
    %v4426 = vadd.f32 %v3814, %v4180
    %v4427 = vadd.f32 %v3815, %v4181
    %v4428 = vadd.f32 %v3816, %v4183
    %v4429 = vadd.f32 %v3817, %v4185
    %v4430 = vadd.f32 %v3818, %v4186
    %v4431 = vadd.f32 %v3819, %v4188
    %v4432 = vadd.f32 %v3820, %v4190
    %v4433 = vadd.f32 %v3821, %v4191
    %v4434 = vadd.f32 %v3822, %v4193
    %v4435 = vadd.f32 %v3823, %v4195
    %v4436 = vadd.f32 %v3824, %v4196
    %v4437 = vadd.f32 %v3825, %v4198
    %v4438 = vadd.f32 %v3826, %v4200
    %v4439 = vadd.f32 %v3827, %v4201
    %v4440 = vadd.f32 %v3828, %v4203
    %v4441 = vadd.f32 %v3829, %v4205
    %v4442 = vadd.f32 %v3830, %v4206
    %v4443 = vadd.f32 %v3831, %v4208
    %v4444 = vadd.f32 %v3832, %v4210
    %v4445 = vadd.f32 %v3833, %v4211
    %v4446 = vadd.f32 %v3834, %v4213
    %v4447 = vadd.f32 %v3835, %v4215
    %v4448 = vadd.f32 %v3836, %v4216
    %v4449 = vadd.f32 %v3837, %v4218
    %v4450 = vadd.f32 %v3838, %v4220
    %v4451 = vadd.f32 %v3839, %v4221
    %v4452 = vadd.f32 %v3840, %v4223
    %v4453 = vadd.f32 %v3841, %v4225
    %v4454 = vadd.f32 %v3842, %v4226
    %v4455 = vadd.f32 %v3843, %v4228
    %v4456 = vadd.f32 %v3844, %v4230
    %v4457 = vadd.f32 %v3845, %v4231
    %v4458 = vadd.f32 %v3846, %v4233
    %v4459 = vadd.f32 %v3847, %v4235
    %v4460 = vadd.f32 %v3848, %v4236
    %v4461 = vadd.f32 %v3849, %v4238
    %v4462 = vadd.f32 %v3850, %v4240
    %v4463 = vadd.f32 %v3851, %v4241
    %v4464 = vadd.f32 %v3852, %v4243
    %v4465 = vadd.f32 %v3853, %v4245
    %v4466 = vadd.f32 %v3854, %v4246
    %v4467 = vadd.f32 %v3855, %v4248
    %v4468 = vadd.f32 %v3856, %v4250
    %v4469 = vadd.f32 %v3857, %v4251
    %v4470 = vadd.f32 %v3858, %v4253
    %v4471 = vadd.f32 %v3859, %v4255
    %v4472 = vadd.f32 %v3860, %v4256
    %v4473 = vadd.f32 %v3861, %v4258
    %v4474 = vadd.f32 %v3862, %v4260
    %v4475 = vadd.f32 %v3863, %v4261
    %v4476 = vadd.f32 %v3864, %v4263
    %v4477 = vadd.f32 %v3865, %v4265
    %v4478 = vadd.f32 %v3866, %v4266
    %v4479 = vadd.f32 %v3867, %v4268
    %v4480 = vadd.f32 %v3868, %v4270
    %v4481 = vadd.f32 %v3869, %v4271
    %v4482 = vadd.f32 %v3870, %v4273
    %v4483 = vadd.f32 %v3871, %v4275
    %v4484 = vadd.f32 %v3872, %v4276
    %v4485 = vadd.f32 %v3873, %v4278
    %v4486 = vadd.f32 %v3874, %v4280
    %v4487 = vadd.f32 %v3875, %v4281
    %v4488 = vadd.f32 %v3876, %v4283
    %v4489 = vadd.f32 %v3877, %v4285
    %v4490 = vadd.f32 %v3878, %v4286
    %v4491 = vadd.f32 %v3879, %v4288
    %v4492 = vadd.f32 %v3880, %v4290
    %v4493 = vadd.f32 %v3881, %v4291
    %v4494 = vadd.f32 %v3882, %v4293
    %v4495 = vadd.f32 %v3883, %v4295
    %v4496 = vadd.f32 %v3884, %v4296
    %v4497 = vadd.f32 %v3885, %v4298
    %v4498 = vadd.f32 %v3886, %v4300
    %v4499 = vadd.f32 %v3887, %v4301
    %v4500 = vadd.f32 %v3888, %v4303
    %v4501 = vadd.f32 %v3889, %v4305
    %v4502 = vadd.f32 %v3890, %v4306
    %v4503 = vadd.f32 %v3891, %v4308
    %v4504 = vadd.f32 %v3892, %v4310
    %v4505 = vadd.f32 %v3893, %v4311
    %v4506 = vadd.f32 %v3894, %v4313
    %v4507 = vadd.f32 %v3895, %v4315
    %s4508 = scalar_lea.vmem [#allocation2], 40
    %v4509 = vld [vmem:[%s4508 + $0x4] sm:$0x8]
    %v4510 = vld [vmem:[%s4508 + $0x8] sm:$0xf]
    %v4511 = vld [vmem:[%s4508 + $0xc] sm:$0xf]
    %v4512 = vld [vmem:[%s4508 + $0x18] sm:$0x8]
    %v4513 = vld [vmem:[%s4508 + $0x1c] sm:$0xf]
    %v4514 = vld [vmem:[%s4508 + $0x20] sm:$0xf]
    %v4515 = vld [vmem:[%s4508 + $0x2c] sm:$0x8]
    %v4516 = vld [vmem:[%s4508 + $0x30] sm:$0xf]
    %v4517 = vld [vmem:[%s4508 + $0x34] sm:$0xf]
    %v4518 = vld [vmem:[%s4508 + $0x40] sm:$0x8]
    %v4519 = vld [vmem:[%s4508 + $0x44] sm:$0xf]
    %v4520 = vld [vmem:[%s4508 + $0x48] sm:$0xf]
    %v4521 = vld [vmem:[%s4508 + $0x54] sm:$0x8]
    %v4522 = vld [vmem:[%s4508 + $0x58] sm:$0xf]
    %v4523 = vld [vmem:[%s4508 + $0x5c] sm:$0xf]
    %v4524 = vld [vmem:[%s4508 + $0x68] sm:$0x8]
    %v4525 = vld [vmem:[%s4508 + $0x6c] sm:$0xf]
    %v4526 = vld [vmem:[%s4508 + $0x70] sm:$0xf]
    %v4527 = vld [vmem:[%s4508 + $0x7c] sm:$0x8]
    %v4528 = vld [vmem:[%s4508 + $0x80] sm:$0xf]
    %v4529 = vld [vmem:[%s4508 + $0x84] sm:$0xf]
    %v4530 = vld [vmem:[%s4508 + $0x90] sm:$0x8]
    %v4531 = vld [vmem:[%s4508 + $0x94] sm:$0xf]
    %v4532 = vld [vmem:[%s4508 + $0x98] sm:$0xf]
    %v4533 = vld [vmem:[%s4508 + $0xa4] sm:$0x8]
    %v4534 = vld [vmem:[%s4508 + $0xa8] sm:$0xf]
    %v4535 = vld [vmem:[%s4508 + $0xac] sm:$0xf]
    %v4536 = vld [vmem:[%s4508 + $0xb8] sm:$0x8]
    %v4537 = vld [vmem:[%s4508 + $0xbc] sm:$0xf]
    %v4538 = vld [vmem:[%s4508 + $0xc0] sm:$0xf]
    %v4539 = vld [vmem:[%s4508 + $0xcc] sm:$0x8]
    %v4540 = vld [vmem:[%s4508 + $0xd0] sm:$0xf]
    %v4541 = vld [vmem:[%s4508 + $0xd4] sm:$0xf]
    %v4542 = vld [vmem:[%s4508 + $0xe0] sm:$0x8]
    %v4543 = vld [vmem:[%s4508 + $0xe4] sm:$0xf]
    %v4544 = vld [vmem:[%s4508 + $0xe8] sm:$0xf]
    %v4545 = vld [vmem:[%s4508 + $0xf4] sm:$0x8]
    %v4546 = vld [vmem:[%s4508 + $0xf8] sm:$0xf]
    %v4547 = vld [vmem:[%s4508 + $0xfc] sm:$0xf]
    %v4548 = vld [vmem:[%s4508 + $0x108] sm:$0x8]
    %v4549 = vld [vmem:[%s4508 + $0x10c] sm:$0xf]
    %v4550 = vld [vmem:[%s4508 + $0x110] sm:$0xf]
    %v4551 = vld [vmem:[%s4508 + $0x11c] sm:$0x8]
    %v4552 = vld [vmem:[%s4508 + $0x120] sm:$0xf]
    %v4553 = vld [vmem:[%s4508 + $0x124] sm:$0xf]
    %v4554 = vld [vmem:[%s4508 + $0x130] sm:$0x8]
    %v4555 = vld [vmem:[%s4508 + $0x134] sm:$0xf]
    %v4556 = vld [vmem:[%s4508 + $0x138] sm:$0xf]
    %v4557 = vld [vmem:[%s4508 + $0x16c] sm:$0x8]
    %v4558 = vld [vmem:[%s4508 + $0x170] sm:$0xf]
    %v4559 = vld [vmem:[%s4508 + $0x174] sm:$0xf]
    %v4560 = vld [vmem:[%s4508 + $0x180] sm:$0x8]
    %v4561 = vld [vmem:[%s4508 + $0x184] sm:$0xf]
    %v4562 = vld [vmem:[%s4508 + $0x188] sm:$0xf]
    %v4563 = vld [vmem:[%s4508 + $0x194] sm:$0x8]
    %v4564 = vld [vmem:[%s4508 + $0x198] sm:$0xf]
    %v4565 = vld [vmem:[%s4508 + $0x19c] sm:$0xf]
    %v4566 = vld [vmem:[%s4508 + $0x1a8] sm:$0x8]
    %v4567 = vld [vmem:[%s4508 + $0x1ac] sm:$0xf]
    %v4568 = vld [vmem:[%s4508 + $0x1b0] sm:$0xf]
    %v4569 = vld [vmem:[%s4508 + $0x1bc] sm:$0x8]
    %v4570 = vld [vmem:[%s4508 + $0x1c0] sm:$0xf]
    %v4571 = vld [vmem:[%s4508 + $0x1c4] sm:$0xf]
    %v4572 = vld [vmem:[%s4508 + $0x1d0] sm:$0x8]
    %v4573 = vld [vmem:[%s4508 + $0x1d4] sm:$0xf]
    %v4574 = vld [vmem:[%s4508 + $0x1d8] sm:$0xf]
    %v4575 = vld [vmem:[%s4508 + $0x1e4] sm:$0x8]
    %v4576 = vld [vmem:[%s4508 + $0x1e8] sm:$0xf]
    %v4577 = vld [vmem:[%s4508 + $0x1ec] sm:$0xf]
    %v4578 = vld [vmem:[%s4508 + $0x1f8] sm:$0x8]
    %v4579 = vld [vmem:[%s4508 + $0x1fc] sm:$0xf]
    %v4580 = vld [vmem:[%s4508 + $0x200] sm:$0xf]
    %v4581 = vld [vmem:[%s4508 + $0x20c] sm:$0x8]
    %v4582 = vld [vmem:[%s4508 + $0x210] sm:$0xf]
    %v4583 = vld [vmem:[%s4508 + $0x214] sm:$0xf]
    %v4584 = vld [vmem:[%s4508 + $0x220] sm:$0x8]
    %v4585 = vld [vmem:[%s4508 + $0x224] sm:$0xf]
    %v4586 = vld [vmem:[%s4508 + $0x228] sm:$0xf]
    %v4587 = vld [vmem:[%s4508 + $0x234] sm:$0x8]
    %v4588 = vld [vmem:[%s4508 + $0x238] sm:$0xf]
    %v4589 = vld [vmem:[%s4508 + $0x23c] sm:$0xf]
    %v4590 = vld [vmem:[%s4508 + $0x248] sm:$0x8]
    %v4591 = vld [vmem:[%s4508 + $0x24c] sm:$0xf]
    %v4592 = vld [vmem:[%s4508 + $0x250] sm:$0xf]
    %v4593 = vld [vmem:[%s4508 + $0x25c] sm:$0x8]
    %v4594 = vld [vmem:[%s4508 + $0x260] sm:$0xf]
    %v4595 = vld [vmem:[%s4508 + $0x264] sm:$0xf]
    %v4596 = vld [vmem:[%s4508 + $0x270] sm:$0x8]
    %v4597 = vld [vmem:[%s4508 + $0x274] sm:$0xf]
    %v4598 = vld [vmem:[%s4508 + $0x278] sm:$0xf]
    %v4599 = vld [vmem:[%s4508 + $0x284] sm:$0x8]
    %v4600 = vld [vmem:[%s4508 + $0x288] sm:$0xf]
    %v4601 = vld [vmem:[%s4508 + $0x28c] sm:$0xf]
    %v4602 = vld [vmem:[%s4508 + $0x298] sm:$0x8]
    %v4603 = vld [vmem:[%s4508 + $0x29c] sm:$0xf]
    %v4604 = vld [vmem:[%s4508 + $0x2a0] sm:$0xf]
    %v4605 = vunpack.c.l.bf16 %v4509
    %v4606 = vunpack.c.l.bf16 %v4510
    %v4607 = vunpack.c.l.bf16 %v4511
    %v4608 = vunpack.c.l.bf16 %v4512
    %v4609 = vunpack.c.l.bf16 %v4513
    %v4610 = vunpack.c.l.bf16 %v4514
    %v4611 = vunpack.c.l.bf16 %v4515
    %v4612 = vunpack.c.l.bf16 %v4516
    %v4613 = vunpack.c.l.bf16 %v4517
    %v4614 = vunpack.c.l.bf16 %v4518
    %v4615 = vunpack.c.l.bf16 %v4519
    %v4616 = vunpack.c.l.bf16 %v4520
    %v4617 = vunpack.c.l.bf16 %v4521
    %v4618 = vunpack.c.l.bf16 %v4522
    %v4619 = vunpack.c.l.bf16 %v4523
    %v4620 = vunpack.c.l.bf16 %v4524
    %v4621 = vunpack.c.l.bf16 %v4525
    %v4622 = vunpack.c.l.bf16 %v4526
    %v4623 = vunpack.c.l.bf16 %v4527
    %v4624 = vunpack.c.l.bf16 %v4528
    %v4625 = vunpack.c.l.bf16 %v4529
    %v4626 = vunpack.c.l.bf16 %v4530
    %v4627 = vunpack.c.l.bf16 %v4531
    %v4628 = vunpack.c.l.bf16 %v4532
    %v4629 = vunpack.c.l.bf16 %v4533
    %v4630 = vunpack.c.l.bf16 %v4534
    %v4631 = vunpack.c.l.bf16 %v4535
    %v4632 = vunpack.c.l.bf16 %v4536
    %v4633 = vunpack.c.l.bf16 %v4537
    %v4634 = vunpack.c.l.bf16 %v4538
    %v4635 = vunpack.c.l.bf16 %v4539
    %v4636 = vunpack.c.l.bf16 %v4540
    %v4637 = vunpack.c.l.bf16 %v4541
    %v4638 = vunpack.c.l.bf16 %v4542
    %v4639 = vunpack.c.l.bf16 %v4543
    %v4640 = vunpack.c.l.bf16 %v4544
    %v4641 = vunpack.c.l.bf16 %v4545
    %v4642 = vunpack.c.l.bf16 %v4546
    %v4643 = vunpack.c.l.bf16 %v4547
    %v4644 = vunpack.c.l.bf16 %v4548
    %v4645 = vunpack.c.l.bf16 %v4549
    %v4646 = vunpack.c.l.bf16 %v4550
    %v4647 = vunpack.c.l.bf16 %v4551
    %v4648 = vunpack.c.l.bf16 %v4552
    %v4649 = vunpack.c.l.bf16 %v4553
    %v4650 = vunpack.c.l.bf16 %v4554
    %v4651 = vunpack.c.l.bf16 %v4555
    %v4652 = vunpack.c.l.bf16 %v4556
    %v4653 = vunpack.c.l.bf16 %v4557
    %v4654 = vunpack.c.l.bf16 %v4558
    %v4655 = vunpack.c.l.bf16 %v4559
    %v4656 = vunpack.c.l.bf16 %v4560
    %v4657 = vunpack.c.l.bf16 %v4561
    %v4658 = vunpack.c.l.bf16 %v4562
    %v4659 = vunpack.c.l.bf16 %v4563
    %v4660 = vunpack.c.l.bf16 %v4564
    %v4661 = vunpack.c.l.bf16 %v4565
    %v4662 = vunpack.c.l.bf16 %v4566
    %v4663 = vunpack.c.l.bf16 %v4567
    %v4664 = vunpack.c.l.bf16 %v4568
    %v4665 = vunpack.c.l.bf16 %v4569
    %v4666 = vunpack.c.l.bf16 %v4570
    %v4667 = vunpack.c.l.bf16 %v4571
    %v4668 = vunpack.c.l.bf16 %v4572
    %v4669 = vunpack.c.l.bf16 %v4573
    %v4670 = vunpack.c.l.bf16 %v4574
    %v4671 = vunpack.c.l.bf16 %v4575
    %v4672 = vunpack.c.l.bf16 %v4576
    %v4673 = vunpack.c.l.bf16 %v4577
    %v4674 = vunpack.c.l.bf16 %v4578
    %v4675 = vunpack.c.l.bf16 %v4579
    %v4676 = vunpack.c.l.bf16 %v4580
    %v4677 = vunpack.c.l.bf16 %v4581
    %v4678 = vunpack.c.l.bf16 %v4582
    %v4679 = vunpack.c.l.bf16 %v4583
    %v4680 = vunpack.c.l.bf16 %v4584
    %v4681 = vunpack.c.l.bf16 %v4585
    %v4682 = vunpack.c.l.bf16 %v4586
    %v4683 = vunpack.c.l.bf16 %v4587
    %v4684 = vunpack.c.l.bf16 %v4588
    %v4685 = vunpack.c.l.bf16 %v4589
    %v4686 = vunpack.c.l.bf16 %v4590
    %v4687 = vunpack.c.l.bf16 %v4591
    %v4688 = vunpack.c.l.bf16 %v4592
    %v4689 = vunpack.c.l.bf16 %v4593
    %v4690 = vunpack.c.l.bf16 %v4594
    %v4691 = vunpack.c.l.bf16 %v4595
    %v4692 = vunpack.c.l.bf16 %v4596
    %v4693 = vunpack.c.l.bf16 %v4597
    %v4694 = vunpack.c.l.bf16 %v4598
    %v4695 = vunpack.c.l.bf16 %v4599
    %v4696 = vunpack.c.l.bf16 %v4600
    %v4697 = vunpack.c.l.bf16 %v4601
    %v4698 = vunpack.c.l.bf16 %v4602
    %v4699 = vunpack.c.l.bf16 %v4603
    %v4700 = vunpack.c.l.bf16 %v4604
    %v4701 = vlaneseq
    %v4702 = vshrl.u32 %v4701, 7
    %v4703 = vsub.s32 0, %v4702
    %v4704 = vrot.slane %v1760, %v4703
    %v4705 = vmul.f32 %v4605, %v4704
    %v4706 = vmul.f32 %v4606, %v4704
    %v4707 = vmul.f32 %v4607, %v4704
    %v4708 = vmul.f32 %v4608, %v4704
    %v4709 = vmul.f32 %v4609, %v4704
    %v4710 = vmul.f32 %v4610, %v4704
    %v4711 = vmul.f32 %v4611, %v4704
    %v4712 = vmul.f32 %v4612, %v4704
    %v4713 = vmul.f32 %v4613, %v4704
    %v4714 = vmul.f32 %v4614, %v4704
    %v4715 = vmul.f32 %v4615, %v4704
    %v4716 = vmul.f32 %v4616, %v4704
    %v4717 = vmul.f32 %v4617, %v4704
    %v4718 = vmul.f32 %v4618, %v4704
    %v4719 = vmul.f32 %v4619, %v4704
    %v4720 = vmul.f32 %v4620, %v4704
    %v4721 = vmul.f32 %v4621, %v4704
    %v4722 = vmul.f32 %v4622, %v4704
    %v4723 = vmul.f32 %v4623, %v4704
    %v4724 = vmul.f32 %v4624, %v4704
    %v4725 = vmul.f32 %v4625, %v4704
    %v4726 = vmul.f32 %v4626, %v4704
    %v4727 = vmul.f32 %v4627, %v4704
    %v4728 = vmul.f32 %v4628, %v4704
    %v4729 = vmul.f32 %v4629, %v4704
    %v4730 = vmul.f32 %v4630, %v4704
    %v4731 = vmul.f32 %v4631, %v4704
    %v4732 = vmul.f32 %v4632, %v4704
    %v4733 = vmul.f32 %v4633, %v4704
    %v4734 = vmul.f32 %v4634, %v4704
    %v4735 = vmul.f32 %v4635, %v4704
    %v4736 = vmul.f32 %v4636, %v4704
    %v4737 = vmul.f32 %v4637, %v4704
    %v4738 = vmul.f32 %v4638, %v4704
    %v4739 = vmul.f32 %v4639, %v4704
    %v4740 = vmul.f32 %v4640, %v4704
    %v4741 = vmul.f32 %v4641, %v4704
    %v4742 = vmul.f32 %v4642, %v4704
    %v4743 = vmul.f32 %v4643, %v4704
    %v4744 = vmul.f32 %v4644, %v4704
    %v4745 = vmul.f32 %v4645, %v4704
    %v4746 = vmul.f32 %v4646, %v4704
    %v4747 = vmul.f32 %v4647, %v4704
    %v4748 = vmul.f32 %v4648, %v4704
    %v4749 = vmul.f32 %v4649, %v4704
    %v4750 = vmul.f32 %v4650, %v4704
    %v4751 = vmul.f32 %v4651, %v4704
    %v4752 = vmul.f32 %v4652, %v4704
    %v4753 = vmul.f32 %v4653, %v4704
    %v4754 = vmul.f32 %v4654, %v4704
    %v4755 = vmul.f32 %v4655, %v4704
    %v4756 = vmul.f32 %v4656, %v4704
    %v4757 = vmul.f32 %v4657, %v4704
    %v4758 = vmul.f32 %v4658, %v4704
    %v4759 = vmul.f32 %v4659, %v4704
    %v4760 = vmul.f32 %v4660, %v4704
    %v4761 = vmul.f32 %v4661, %v4704
    %v4762 = vmul.f32 %v4662, %v4704
    %v4763 = vmul.f32 %v4663, %v4704
    %v4764 = vmul.f32 %v4664, %v4704
    %v4765 = vmul.f32 %v4665, %v4704
    %v4766 = vmul.f32 %v4666, %v4704
    %v4767 = vmul.f32 %v4667, %v4704
    %v4768 = vmul.f32 %v4668, %v4704
    %v4769 = vmul.f32 %v4669, %v4704
    %v4770 = vmul.f32 %v4670, %v4704
    %v4771 = vmul.f32 %v4671, %v4704
    %v4772 = vmul.f32 %v4672, %v4704
    %v4773 = vmul.f32 %v4673, %v4704
    %v4774 = vmul.f32 %v4674, %v4704
    %v4775 = vmul.f32 %v4675, %v4704
    %v4776 = vmul.f32 %v4676, %v4704
    %v4777 = vmul.f32 %v4677, %v4704
    %v4778 = vmul.f32 %v4678, %v4704
    %v4779 = vmul.f32 %v4679, %v4704
    %v4780 = vmul.f32 %v4680, %v4704
    %v4781 = vmul.f32 %v4681, %v4704
    %v4782 = vmul.f32 %v4682, %v4704
    %v4783 = vmul.f32 %v4683, %v4704
    %v4784 = vmul.f32 %v4684, %v4704
    %v4785 = vmul.f32 %v4685, %v4704
    %v4786 = vmul.f32 %v4686, %v4704
    %v4787 = vmul.f32 %v4687, %v4704
    %v4788 = vmul.f32 %v4688, %v4704
    %v4789 = vmul.f32 %v4689, %v4704
    %v4790 = vmul.f32 %v4690, %v4704
    %v4791 = vmul.f32 %v4691, %v4704
    %v4792 = vmul.f32 %v4692, %v4704
    %v4793 = vmul.f32 %v4693, %v4704
    %v4794 = vmul.f32 %v4694, %v4704
    %v4795 = vmul.f32 %v4695, %v4704
    %v4796 = vmul.f32 %v4696, %v4704
    %v4797 = vmul.f32 %v4697, %v4704
    %v4798 = vmul.f32 %v4698, %v4704
    %v4799 = vmul.f32 %v4699, %v4704
    %v4800 = vmul.f32 %v4700, %v4704
    %v4801 = vadd.f32 %v4412, %v4705
    %v4802 = vadd.f32 %v4413, %v4706
    %v4803 = vadd.f32 %v4414, %v4707
    %v4804 = vadd.f32 %v4415, %v4708
    %v4805 = vadd.f32 %v4416, %v4709
    %v4806 = vadd.f32 %v4417, %v4710
    %v4807 = vadd.f32 %v4418, %v4711
    %v4808 = vadd.f32 %v4419, %v4712
    %v4809 = vadd.f32 %v4420, %v4713
    %v4810 = vadd.f32 %v4421, %v4714
    %v4811 = vadd.f32 %v4422, %v4715
    %v4812 = vadd.f32 %v4423, %v4716
    %v4813 = vadd.f32 %v4424, %v4717
    %v4814 = vadd.f32 %v4425, %v4718
    %v4815 = vadd.f32 %v4426, %v4719
    %v4816 = vadd.f32 %v4427, %v4720
    %v4817 = vadd.f32 %v4428, %v4721
    %v4818 = vadd.f32 %v4429, %v4722
    %v4819 = vadd.f32 %v4430, %v4723
    %v4820 = vadd.f32 %v4431, %v4724
    %v4821 = vadd.f32 %v4432, %v4725
    %v4822 = vadd.f32 %v4433, %v4726
    %v4823 = vadd.f32 %v4434, %v4727
    %v4824 = vadd.f32 %v4435, %v4728
    %v4825 = vadd.f32 %v4436, %v4729
    %v4826 = vadd.f32 %v4437, %v4730
    %v4827 = vadd.f32 %v4438, %v4731
    %v4828 = vadd.f32 %v4439, %v4732
    %v4829 = vadd.f32 %v4440, %v4733
    %v4830 = vadd.f32 %v4441, %v4734
    %v4831 = vadd.f32 %v4442, %v4735
    %v4832 = vadd.f32 %v4443, %v4736
    %v4833 = vadd.f32 %v4444, %v4737
    %v4834 = vadd.f32 %v4445, %v4738
    %v4835 = vadd.f32 %v4446, %v4739
    %v4836 = vadd.f32 %v4447, %v4740
    %v4837 = vadd.f32 %v4448, %v4741
    %v4838 = vadd.f32 %v4449, %v4742
    %v4839 = vadd.f32 %v4450, %v4743
    %v4840 = vadd.f32 %v4451, %v4744
    %v4841 = vadd.f32 %v4452, %v4745
    %v4842 = vadd.f32 %v4453, %v4746
    %v4843 = vadd.f32 %v4454, %v4747
    %v4844 = vadd.f32 %v4455, %v4748
    %v4845 = vadd.f32 %v4456, %v4749
    %v4846 = vadd.f32 %v4457, %v4750
    %v4847 = vadd.f32 %v4458, %v4751
    %v4848 = vadd.f32 %v4459, %v4752
    %v4849 = vadd.f32 %v4460, %v4753
    %v4850 = vadd.f32 %v4461, %v4754
    %v4851 = vadd.f32 %v4462, %v4755
    %v4852 = vadd.f32 %v4463, %v4756
    %v4853 = vadd.f32 %v4464, %v4757
    %v4854 = vadd.f32 %v4465, %v4758
    %v4855 = vadd.f32 %v4466, %v4759
    %v4856 = vadd.f32 %v4467, %v4760
    %v4857 = vadd.f32 %v4468, %v4761
    %v4858 = vadd.f32 %v4469, %v4762
    %v4859 = vadd.f32 %v4470, %v4763
    %v4860 = vadd.f32 %v4471, %v4764
    %v4861 = vadd.f32 %v4472, %v4765
    %v4862 = vadd.f32 %v4473, %v4766
    %v4863 = vadd.f32 %v4474, %v4767
    %v4864 = vadd.f32 %v4475, %v4768
    %v4865 = vadd.f32 %v4476, %v4769
    %v4866 = vadd.f32 %v4477, %v4770
    %v4867 = vadd.f32 %v4478, %v4771
    %v4868 = vadd.f32 %v4479, %v4772
    %v4869 = vadd.f32 %v4480, %v4773
    %v4870 = vadd.f32 %v4481, %v4774
    %v4871 = vadd.f32 %v4482, %v4775
    %v4872 = vadd.f32 %v4483, %v4776
    %v4873 = vadd.f32 %v4484, %v4777
    %v4874 = vadd.f32 %v4485, %v4778
    %v4875 = vadd.f32 %v4486, %v4779
    %v4876 = vadd.f32 %v4487, %v4780
    %v4877 = vadd.f32 %v4488, %v4781
    %v4878 = vadd.f32 %v4489, %v4782
    %v4879 = vadd.f32 %v4490, %v4783
    %v4880 = vadd.f32 %v4491, %v4784
    %v4881 = vadd.f32 %v4492, %v4785
    %v4882 = vadd.f32 %v4493, %v4786
    %v4883 = vadd.f32 %v4494, %v4787
    %v4884 = vadd.f32 %v4495, %v4788
    %v4885 = vadd.f32 %v4496, %v4789
    %v4886 = vadd.f32 %v4497, %v4790
    %v4887 = vadd.f32 %v4498, %v4791
    %v4888 = vadd.f32 %v4499, %v4792
    %v4889 = vadd.f32 %v4500, %v4793
    %v4890 = vadd.f32 %v4501, %v4794
    %v4891 = vadd.f32 %v4502, %v4795
    %v4892 = vadd.f32 %v4503, %v4796
    %v4893 = vadd.f32 %v4504, %v4797
    %v4894 = vadd.f32 %v4505, %v4798
    %v4895 = vadd.f32 %v4506, %v4799
    %v4896 = vadd.f32 %v4507, %v4800
    %v4897 = vlaneseq
    %v4898 = vshrl.u32 %v4897, 7
    %v4899 = vsub.s32 1, %v4898
    %v4900 = vrot.slane %v1760, %v4899
    %v4901 = vmul.f32 %v4606, %v4900
    %v4902 = vmul.f32 %v4607, %v4900
    %v4903 = vmul.f32 %v4609, %v4900
    %v4904 = vmul.f32 %v4610, %v4900
    %v4905 = vmul.f32 %v4612, %v4900
    %v4906 = vmul.f32 %v4613, %v4900
    %v4907 = vmul.f32 %v4615, %v4900
    %v4908 = vmul.f32 %v4616, %v4900
    %v4909 = vmul.f32 %v4618, %v4900
    %v4910 = vmul.f32 %v4619, %v4900
    %v4911 = vmul.f32 %v4621, %v4900
    %v4912 = vmul.f32 %v4622, %v4900
    %v4913 = vmul.f32 %v4624, %v4900
    %v4914 = vmul.f32 %v4625, %v4900
    %v4915 = vmul.f32 %v4627, %v4900
    %v4916 = vmul.f32 %v4628, %v4900
    %v4917 = vmul.f32 %v4630, %v4900
    %v4918 = vmul.f32 %v4631, %v4900
    %v4919 = vmul.f32 %v4633, %v4900
    %v4920 = vmul.f32 %v4634, %v4900
    %v4921 = vmul.f32 %v4636, %v4900
    %v4922 = vmul.f32 %v4637, %v4900
    %v4923 = vmul.f32 %v4639, %v4900
    %v4924 = vmul.f32 %v4640, %v4900
    %v4925 = vmul.f32 %v4642, %v4900
    %v4926 = vmul.f32 %v4643, %v4900
    %v4927 = vmul.f32 %v4645, %v4900
    %v4928 = vmul.f32 %v4646, %v4900
    %v4929 = vmul.f32 %v4648, %v4900
    %v4930 = vmul.f32 %v4649, %v4900
    %v4931 = vmul.f32 %v4651, %v4900
    %v4932 = vmul.f32 %v4652, %v4900
    %v4933 = vmul.f32 %v4654, %v4900
    %v4934 = vmul.f32 %v4655, %v4900
    %v4935 = vmul.f32 %v4657, %v4900
    %v4936 = vmul.f32 %v4658, %v4900
    %v4937 = vmul.f32 %v4660, %v4900
    %v4938 = vmul.f32 %v4661, %v4900
    %v4939 = vmul.f32 %v4663, %v4900
    %v4940 = vmul.f32 %v4664, %v4900
    %v4941 = vmul.f32 %v4666, %v4900
    %v4942 = vmul.f32 %v4667, %v4900
    %v4943 = vmul.f32 %v4669, %v4900
    %v4944 = vmul.f32 %v4670, %v4900
    %v4945 = vmul.f32 %v4672, %v4900
    %v4946 = vmul.f32 %v4673, %v4900
    %v4947 = vmul.f32 %v4675, %v4900
    %v4948 = vmul.f32 %v4676, %v4900
    %v4949 = vmul.f32 %v4678, %v4900
    %v4950 = vmul.f32 %v4679, %v4900
    %v4951 = vmul.f32 %v4681, %v4900
    %v4952 = vmul.f32 %v4682, %v4900
    %v4953 = vmul.f32 %v4684, %v4900
    %v4954 = vmul.f32 %v4685, %v4900
    %v4955 = vmul.f32 %v4687, %v4900
    %v4956 = vmul.f32 %v4688, %v4900
    %v4957 = vmul.f32 %v4690, %v4900
    %v4958 = vmul.f32 %v4691, %v4900
    %v4959 = vmul.f32 %v4693, %v4900
    %v4960 = vmul.f32 %v4694, %v4900
    %v4961 = vmul.f32 %v4696, %v4900
    %v4962 = vmul.f32 %v4697, %v4900
    %v4963 = vmul.f32 %v4699, %v4900
    %v4964 = vmul.f32 %v4700, %v4900
    %v5029 = vrot.slane %v4901, 1
    %v5030 = vrot.slane %v4902, 1
    %v5031 = vsel %vm2186, %v5029, %v5030
    %v5032 = vrot.slane %v4903, 1
    %v5033 = vrot.slane %v4904, 1
    %v5034 = vsel %vm2186, %v5032, %v5033
    %v5035 = vrot.slane %v4905, 1
    %v5036 = vrot.slane %v4906, 1
    %v5037 = vsel %vm2186, %v5035, %v5036
    %v5038 = vrot.slane %v4907, 1
    %v5039 = vrot.slane %v4908, 1
    %v5040 = vsel %vm2186, %v5038, %v5039
    %v5041 = vrot.slane %v4909, 1
    %v5042 = vrot.slane %v4910, 1
    %v5043 = vsel %vm2186, %v5041, %v5042
    %v5044 = vrot.slane %v4911, 1
    %v5045 = vrot.slane %v4912, 1
    %v5046 = vsel %vm2186, %v5044, %v5045
    %v5047 = vrot.slane %v4913, 1
    %v5048 = vrot.slane %v4914, 1
    %v5049 = vsel %vm2186, %v5047, %v5048
    %v5050 = vrot.slane %v4915, 1
    %v5051 = vrot.slane %v4916, 1
    %v5052 = vsel %vm2186, %v5050, %v5051
    %v5053 = vrot.slane %v4917, 1
    %v5054 = vrot.slane %v4918, 1
    %v5055 = vsel %vm2186, %v5053, %v5054
    %v5056 = vrot.slane %v4919, 1
    %v5057 = vrot.slane %v4920, 1
    %v5058 = vsel %vm2186, %v5056, %v5057
    %v5059 = vrot.slane %v4921, 1
    %v5060 = vrot.slane %v4922, 1
    %v5061 = vsel %vm2186, %v5059, %v5060
    %v5062 = vrot.slane %v4923, 1
    %v5063 = vrot.slane %v4924, 1
    %v5064 = vsel %vm2186, %v5062, %v5063
    %v5065 = vrot.slane %v4925, 1
    %v5066 = vrot.slane %v4926, 1
    %v5067 = vsel %vm2186, %v5065, %v5066
    %v5068 = vrot.slane %v4927, 1
    %v5069 = vrot.slane %v4928, 1
    %v5070 = vsel %vm2186, %v5068, %v5069
    %v5071 = vrot.slane %v4929, 1
    %v5072 = vrot.slane %v4930, 1
    %v5073 = vsel %vm2186, %v5071, %v5072
    %v5074 = vrot.slane %v4931, 1
    %v5075 = vrot.slane %v4932, 1
    %v5076 = vsel %vm2186, %v5074, %v5075
    %v5077 = vrot.slane %v4933, 1
    %v5078 = vrot.slane %v4934, 1
    %v5079 = vsel %vm2186, %v5077, %v5078
    %v5080 = vrot.slane %v4935, 1
    %v5081 = vrot.slane %v4936, 1
    %v5082 = vsel %vm2186, %v5080, %v5081
    %v5083 = vrot.slane %v4937, 1
    %v5084 = vrot.slane %v4938, 1
    %v5085 = vsel %vm2186, %v5083, %v5084
    %v5086 = vrot.slane %v4939, 1
    %v5087 = vrot.slane %v4940, 1
    %v5088 = vsel %vm2186, %v5086, %v5087
    %v5089 = vrot.slane %v4941, 1
    %v5090 = vrot.slane %v4942, 1
    %v5091 = vsel %vm2186, %v5089, %v5090
    %v5092 = vrot.slane %v4943, 1
    %v5093 = vrot.slane %v4944, 1
    %v5094 = vsel %vm2186, %v5092, %v5093
    %v5095 = vrot.slane %v4945, 1
    %v5096 = vrot.slane %v4946, 1
    %v5097 = vsel %vm2186, %v5095, %v5096
    %v5098 = vrot.slane %v4947, 1
    %v5099 = vrot.slane %v4948, 1
    %v5100 = vsel %vm2186, %v5098, %v5099
    %v5101 = vrot.slane %v4949, 1
    %v5102 = vrot.slane %v4950, 1
    %v5103 = vsel %vm2186, %v5101, %v5102
    %v5104 = vrot.slane %v4951, 1
    %v5105 = vrot.slane %v4952, 1
    %v5106 = vsel %vm2186, %v5104, %v5105
    %v5107 = vrot.slane %v4953, 1
    %v5108 = vrot.slane %v4954, 1
    %v5109 = vsel %vm2186, %v5107, %v5108
    %v5110 = vrot.slane %v4955, 1
    %v5111 = vrot.slane %v4956, 1
    %v5112 = vsel %vm2186, %v5110, %v5111
    %v5113 = vrot.slane %v4957, 1
    %v5114 = vrot.slane %v4958, 1
    %v5115 = vsel %vm2186, %v5113, %v5114
    %v5116 = vrot.slane %v4959, 1
    %v5117 = vrot.slane %v4960, 1
    %v5118 = vsel %vm2186, %v5116, %v5117
    %v5119 = vrot.slane %v4961, 1
    %v5120 = vrot.slane %v4962, 1
    %v5121 = vsel %vm2186, %v5119, %v5120
    %v5122 = vrot.slane %v4963, 1
    %v5123 = vrot.slane %v4964, 1
    %v5124 = vsel %vm2186, %v5122, %v5123
    %v5221 = vadd.f32 %v4801, %v5029
    %v5222 = vadd.f32 %v4802, %v5031
    %v5223 = vadd.f32 %v4803, %v5030
    %v5224 = vadd.f32 %v4804, %v5032
    %v5225 = vadd.f32 %v4805, %v5034
    %v5226 = vadd.f32 %v4806, %v5033
    %v5227 = vadd.f32 %v4807, %v5035
    %v5228 = vadd.f32 %v4808, %v5037
    %v5229 = vadd.f32 %v4809, %v5036
    %v5230 = vadd.f32 %v4810, %v5038
    %v5231 = vadd.f32 %v4811, %v5040
    %v5232 = vadd.f32 %v4812, %v5039
    %v5233 = vadd.f32 %v4813, %v5041
    %v5234 = vadd.f32 %v4814, %v5043
    %v5235 = vadd.f32 %v4815, %v5042
    %v5236 = vadd.f32 %v4816, %v5044
    %v5237 = vadd.f32 %v4817, %v5046
    %v5238 = vadd.f32 %v4818, %v5045
    %v5239 = vadd.f32 %v4819, %v5047
    %v5240 = vadd.f32 %v4820, %v5049
    %v5241 = vadd.f32 %v4821, %v5048
    %v5242 = vadd.f32 %v4822, %v5050
    %v5243 = vadd.f32 %v4823, %v5052
    %v5244 = vadd.f32 %v4824, %v5051
    %v5245 = vadd.f32 %v4825, %v5053
    %v5246 = vadd.f32 %v4826, %v5055
    %v5247 = vadd.f32 %v4827, %v5054
    %v5248 = vadd.f32 %v4828, %v5056
    %v5249 = vadd.f32 %v4829, %v5058
    %v5250 = vadd.f32 %v4830, %v5057
    %v5251 = vadd.f32 %v4831, %v5059
    %v5252 = vadd.f32 %v4832, %v5061
    %v5253 = vadd.f32 %v4833, %v5060
    %v5254 = vadd.f32 %v4834, %v5062
    %v5255 = vadd.f32 %v4835, %v5064
    %v5256 = vadd.f32 %v4836, %v5063
    %v5257 = vadd.f32 %v4837, %v5065
    %v5258 = vadd.f32 %v4838, %v5067
    %v5259 = vadd.f32 %v4839, %v5066
    %v5260 = vadd.f32 %v4840, %v5068
    %v5261 = vadd.f32 %v4841, %v5070
    %v5262 = vadd.f32 %v4842, %v5069
    %v5263 = vadd.f32 %v4843, %v5071
    %v5264 = vadd.f32 %v4844, %v5073
    %v5265 = vadd.f32 %v4845, %v5072
    %v5266 = vadd.f32 %v4846, %v5074
    %v5267 = vadd.f32 %v4847, %v5076
    %v5268 = vadd.f32 %v4848, %v5075
    %v5269 = vadd.f32 %v4849, %v5077
    %v5270 = vadd.f32 %v4850, %v5079
    %v5271 = vadd.f32 %v4851, %v5078
    %v5272 = vadd.f32 %v4852, %v5080
    %v5273 = vadd.f32 %v4853, %v5082
    %v5274 = vadd.f32 %v4854, %v5081
    %v5275 = vadd.f32 %v4855, %v5083
    %v5276 = vadd.f32 %v4856, %v5085
    %v5277 = vadd.f32 %v4857, %v5084
    %v5278 = vadd.f32 %v4858, %v5086
    %v5279 = vadd.f32 %v4859, %v5088
    %v5280 = vadd.f32 %v4860, %v5087
    %v5281 = vadd.f32 %v4861, %v5089
    %v5282 = vadd.f32 %v4862, %v5091
    %v5283 = vadd.f32 %v4863, %v5090
    %v5284 = vadd.f32 %v4864, %v5092
    %v5285 = vadd.f32 %v4865, %v5094
    %v5286 = vadd.f32 %v4866, %v5093
    %v5287 = vadd.f32 %v4867, %v5095
    %v5288 = vadd.f32 %v4868, %v5097
    %v5289 = vadd.f32 %v4869, %v5096
    %v5290 = vadd.f32 %v4870, %v5098
    %v5291 = vadd.f32 %v4871, %v5100
    %v5292 = vadd.f32 %v4872, %v5099
    %v5293 = vadd.f32 %v4873, %v5101
    %v5294 = vadd.f32 %v4874, %v5103
    %v5295 = vadd.f32 %v4875, %v5102
    %v5296 = vadd.f32 %v4876, %v5104
    %v5297 = vadd.f32 %v4877, %v5106
    %v5298 = vadd.f32 %v4878, %v5105
    %v5299 = vadd.f32 %v4879, %v5107
    %v5300 = vadd.f32 %v4880, %v5109
    %v5301 = vadd.f32 %v4881, %v5108
    %v5302 = vadd.f32 %v4882, %v5110
    %v5303 = vadd.f32 %v4883, %v5112
    %v5304 = vadd.f32 %v4884, %v5111
    %v5305 = vadd.f32 %v4885, %v5113
    %v5306 = vadd.f32 %v4886, %v5115
    %v5307 = vadd.f32 %v4887, %v5114
    %v5308 = vadd.f32 %v4888, %v5116
    %v5309 = vadd.f32 %v4889, %v5118
    %v5310 = vadd.f32 %v4890, %v5117
    %v5311 = vadd.f32 %v4891, %v5119
    %v5312 = vadd.f32 %v4892, %v5121
    %v5313 = vadd.f32 %v4893, %v5120
    %v5314 = vadd.f32 %v4894, %v5122
    %v5315 = vadd.f32 %v4895, %v5124
    %v5316 = vadd.f32 %v4896, %v5123
    %v5317 = vld [vmem:[%s4508 + $0x10] sm:$0x1]
    %v5318 = vld [vmem:[%s4508 + $0x24] sm:$0x1]
    %v5319 = vld [vmem:[%s4508 + $0x38] sm:$0x1]
    %v5320 = vld [vmem:[%s4508 + $0x4c] sm:$0x1]
    %v5321 = vld [vmem:[%s4508 + $0x60] sm:$0x1]
    %v5322 = vld [vmem:[%s4508 + $0x74] sm:$0x1]
    %v5323 = vld [vmem:[%s4508 + $0x88] sm:$0x1]
    %v5324 = vld [vmem:[%s4508 + $0x9c] sm:$0x1]
    %v5325 = vld [vmem:[%s4508 + $0xb0] sm:$0x1]
    %v5326 = vld [vmem:[%s4508 + $0xc4] sm:$0x1]
    %v5327 = vld [vmem:[%s4508 + $0xd8] sm:$0x1]
    %v5328 = vld [vmem:[%s4508 + $0xec] sm:$0x1]
    %v5329 = vld [vmem:[%s4508 + $0x100] sm:$0x1]
    %v5330 = vld [vmem:[%s4508 + $0x114] sm:$0x1]
    %v5331 = vld [vmem:[%s4508 + $0x128] sm:$0x1]
    %v5332 = vld [vmem:[%s4508 + $0x13c] sm:$0x1]
    %v5333 = vld [vmem:[%s4508 + $0x178] sm:$0x1]
    %v5334 = vld [vmem:[%s4508 + $0x18c] sm:$0x1]
    %v5335 = vld [vmem:[%s4508 + $0x1a0] sm:$0x1]
    %v5336 = vld [vmem:[%s4508 + $0x1b4] sm:$0x1]
    %v5337 = vld [vmem:[%s4508 + $0x1c8] sm:$0x1]
    %v5338 = vld [vmem:[%s4508 + $0x1dc] sm:$0x1]
    %v5339 = vld [vmem:[%s4508 + $0x1f0] sm:$0x1]
    %v5340 = vld [vmem:[%s4508 + $0x204] sm:$0x1]
    %v5341 = vld [vmem:[%s4508 + $0x218] sm:$0x1]
    %v5342 = vld [vmem:[%s4508 + $0x22c] sm:$0x1]
    %v5343 = vld [vmem:[%s4508 + $0x240] sm:$0x1]
    %v5344 = vld [vmem:[%s4508 + $0x254] sm:$0x1]
    %v5345 = vld [vmem:[%s4508 + $0x268] sm:$0x1]
    %v5346 = vld [vmem:[%s4508 + $0x27c] sm:$0x1]
    %v5347 = vld [vmem:[%s4508 + $0x290] sm:$0x1]
    %v5348 = vld [vmem:[%s4508 + $0x2a4] sm:$0x1]
    %v5349 = vunpack.c.l.bf16 %v5317
    %v5350 = vunpack.c.l.bf16 %v5318
    %v5351 = vunpack.c.l.bf16 %v5319
    %v5352 = vunpack.c.l.bf16 %v5320
    %v5353 = vunpack.c.l.bf16 %v5321
    %v5354 = vunpack.c.l.bf16 %v5322
    %v5355 = vunpack.c.l.bf16 %v5323
    %v5356 = vunpack.c.l.bf16 %v5324
    %v5357 = vunpack.c.l.bf16 %v5325
    %v5358 = vunpack.c.l.bf16 %v5326
    %v5359 = vunpack.c.l.bf16 %v5327
    %v5360 = vunpack.c.l.bf16 %v5328
    %v5361 = vunpack.c.l.bf16 %v5329
    %v5362 = vunpack.c.l.bf16 %v5330
    %v5363 = vunpack.c.l.bf16 %v5331
    %v5364 = vunpack.c.l.bf16 %v5332
    %v5365 = vunpack.c.l.bf16 %v5333
    %v5366 = vunpack.c.l.bf16 %v5334
    %v5367 = vunpack.c.l.bf16 %v5335
    %v5368 = vunpack.c.l.bf16 %v5336
    %v5369 = vunpack.c.l.bf16 %v5337
    %v5370 = vunpack.c.l.bf16 %v5338
    %v5371 = vunpack.c.l.bf16 %v5339
    %v5372 = vunpack.c.l.bf16 %v5340
    %v5373 = vunpack.c.l.bf16 %v5341
    %v5374 = vunpack.c.l.bf16 %v5342
    %v5375 = vunpack.c.l.bf16 %v5343
    %v5376 = vunpack.c.l.bf16 %v5344
    %v5377 = vunpack.c.l.bf16 %v5345
    %v5378 = vunpack.c.l.bf16 %v5346
    %v5379 = vunpack.c.l.bf16 %v5347
    %v5380 = vunpack.c.l.bf16 %v5348
    %v5381 = vlaneseq
    %v5382 = vshrl.u32 %v5381, 7
    %v5383 = vsub.s32 2, %v5382
    %v5384 = vrot.slane %v1760, %v5383
    %v5385 = vmul.f32 %v4606, %v5384
    %v5386 = vmul.f32 %v4607, %v5384
    %v5387 = vmul.f32 %v5349, %v5384
    %v5388 = vmul.f32 %v4609, %v5384
    %v5389 = vmul.f32 %v4610, %v5384
    %v5390 = vmul.f32 %v5350, %v5384
    %v5391 = vmul.f32 %v4612, %v5384
    %v5392 = vmul.f32 %v4613, %v5384
    %v5393 = vmul.f32 %v5351, %v5384
    %v5394 = vmul.f32 %v4615, %v5384
    %v5395 = vmul.f32 %v4616, %v5384
    %v5396 = vmul.f32 %v5352, %v5384
    %v5397 = vmul.f32 %v4618, %v5384
    %v5398 = vmul.f32 %v4619, %v5384
    %v5399 = vmul.f32 %v5353, %v5384
    %v5400 = vmul.f32 %v4621, %v5384
    %v5401 = vmul.f32 %v4622, %v5384
    %v5402 = vmul.f32 %v5354, %v5384
    %v5403 = vmul.f32 %v4624, %v5384
    %v5404 = vmul.f32 %v4625, %v5384
    %v5405 = vmul.f32 %v5355, %v5384
    %v5406 = vmul.f32 %v4627, %v5384
    %v5407 = vmul.f32 %v4628, %v5384
    %v5408 = vmul.f32 %v5356, %v5384
    %v5409 = vmul.f32 %v4630, %v5384
    %v5410 = vmul.f32 %v4631, %v5384
    %v5411 = vmul.f32 %v5357, %v5384
    %v5412 = vmul.f32 %v4633, %v5384
    %v5413 = vmul.f32 %v4634, %v5384
    %v5414 = vmul.f32 %v5358, %v5384
    %v5415 = vmul.f32 %v4636, %v5384
    %v5416 = vmul.f32 %v4637, %v5384
    %v5417 = vmul.f32 %v5359, %v5384
    %v5418 = vmul.f32 %v4639, %v5384
    %v5419 = vmul.f32 %v4640, %v5384
    %v5420 = vmul.f32 %v5360, %v5384
    %v5421 = vmul.f32 %v4642, %v5384
    %v5422 = vmul.f32 %v4643, %v5384
    %v5423 = vmul.f32 %v5361, %v5384
    %v5424 = vmul.f32 %v4645, %v5384
    %v5425 = vmul.f32 %v4646, %v5384
    %v5426 = vmul.f32 %v5362, %v5384
    %v5427 = vmul.f32 %v4648, %v5384
    %v5428 = vmul.f32 %v4649, %v5384
    %v5429 = vmul.f32 %v5363, %v5384
    %v5430 = vmul.f32 %v4651, %v5384
    %v5431 = vmul.f32 %v4652, %v5384
    %v5432 = vmul.f32 %v5364, %v5384
    %v5433 = vmul.f32 %v4654, %v5384
    %v5434 = vmul.f32 %v4655, %v5384
    %v5435 = vmul.f32 %v5365, %v5384
    %v5436 = vmul.f32 %v4657, %v5384
    %v5437 = vmul.f32 %v4658, %v5384
    %v5438 = vmul.f32 %v5366, %v5384
    %v5439 = vmul.f32 %v4660, %v5384
    %v5440 = vmul.f32 %v4661, %v5384
    %v5441 = vmul.f32 %v5367, %v5384
    %v5442 = vmul.f32 %v4663, %v5384
    %v5443 = vmul.f32 %v4664, %v5384
    %v5444 = vmul.f32 %v5368, %v5384
    %v5445 = vmul.f32 %v4666, %v5384
    %v5446 = vmul.f32 %v4667, %v5384
    %v5447 = vmul.f32 %v5369, %v5384
    %v5448 = vmul.f32 %v4669, %v5384
    %v5449 = vmul.f32 %v4670, %v5384
    %v5450 = vmul.f32 %v5370, %v5384
    %v5451 = vmul.f32 %v4672, %v5384
    %v5452 = vmul.f32 %v4673, %v5384
    %v5453 = vmul.f32 %v5371, %v5384
    %v5454 = vmul.f32 %v4675, %v5384
    %v5455 = vmul.f32 %v4676, %v5384
    %v5456 = vmul.f32 %v5372, %v5384
    %v5457 = vmul.f32 %v4678, %v5384
    %v5458 = vmul.f32 %v4679, %v5384
    %v5459 = vmul.f32 %v5373, %v5384
    %v5460 = vmul.f32 %v4681, %v5384
    %v5461 = vmul.f32 %v4682, %v5384
    %v5462 = vmul.f32 %v5374, %v5384
    %v5463 = vmul.f32 %v4684, %v5384
    %v5464 = vmul.f32 %v4685, %v5384
    %v5465 = vmul.f32 %v5375, %v5384
    %v5466 = vmul.f32 %v4687, %v5384
    %v5467 = vmul.f32 %v4688, %v5384
    %v5468 = vmul.f32 %v5376, %v5384
    %v5469 = vmul.f32 %v4690, %v5384
    %v5470 = vmul.f32 %v4691, %v5384
    %v5471 = vmul.f32 %v5377, %v5384
    %v5472 = vmul.f32 %v4693, %v5384
    %v5473 = vmul.f32 %v4694, %v5384
    %v5474 = vmul.f32 %v5378, %v5384
    %v5475 = vmul.f32 %v4696, %v5384
    %v5476 = vmul.f32 %v4697, %v5384
    %v5477 = vmul.f32 %v5379, %v5384
    %v5478 = vmul.f32 %v4699, %v5384
    %v5479 = vmul.f32 %v4700, %v5384
    %v5480 = vmul.f32 %v5380, %v5384
    %v5577 = vrot.slane %v5385, 2
    %v5578 = vrot.slane %v5386, 2
    %v5579 = vsel %vm2735, %v5577, %v5578
    %v5580 = vrot.slane %v5387, 2
    %v5581 = vsel %vm2735, %v5578, %v5580
    %v5582 = vrot.slane %v5388, 2
    %v5583 = vrot.slane %v5389, 2
    %v5584 = vsel %vm2735, %v5582, %v5583
    %v5585 = vrot.slane %v5390, 2
    %v5586 = vsel %vm2735, %v5583, %v5585
    %v5587 = vrot.slane %v5391, 2
    %v5588 = vrot.slane %v5392, 2
    %v5589 = vsel %vm2735, %v5587, %v5588
    %v5590 = vrot.slane %v5393, 2
    %v5591 = vsel %vm2735, %v5588, %v5590
    %v5592 = vrot.slane %v5394, 2
    %v5593 = vrot.slane %v5395, 2
    %v5594 = vsel %vm2735, %v5592, %v5593
    %v5595 = vrot.slane %v5396, 2
    %v5596 = vsel %vm2735, %v5593, %v5595
    %v5597 = vrot.slane %v5397, 2
    %v5598 = vrot.slane %v5398, 2
    %v5599 = vsel %vm2735, %v5597, %v5598
    %v5600 = vrot.slane %v5399, 2
    %v5601 = vsel %vm2735, %v5598, %v5600
    %v5602 = vrot.slane %v5400, 2
    %v5603 = vrot.slane %v5401, 2
    %v5604 = vsel %vm2735, %v5602, %v5603
    %v5605 = vrot.slane %v5402, 2
    %v5606 = vsel %vm2735, %v5603, %v5605
    %v5607 = vrot.slane %v5403, 2
    %v5608 = vrot.slane %v5404, 2
    %v5609 = vsel %vm2735, %v5607, %v5608
    %v5610 = vrot.slane %v5405, 2
    %v5611 = vsel %vm2735, %v5608, %v5610
    %v5612 = vrot.slane %v5406, 2
    %v5613 = vrot.slane %v5407, 2
    %v5614 = vsel %vm2735, %v5612, %v5613
    %v5615 = vrot.slane %v5408, 2
    %v5616 = vsel %vm2735, %v5613, %v5615
    %v5617 = vrot.slane %v5409, 2
    %v5618 = vrot.slane %v5410, 2
    %v5619 = vsel %vm2735, %v5617, %v5618
    %v5620 = vrot.slane %v5411, 2
    %v5621 = vsel %vm2735, %v5618, %v5620
    %v5622 = vrot.slane %v5412, 2
    %v5623 = vrot.slane %v5413, 2
    %v5624 = vsel %vm2735, %v5622, %v5623
    %v5625 = vrot.slane %v5414, 2
    %v5626 = vsel %vm2735, %v5623, %v5625
    %v5627 = vrot.slane %v5415, 2
    %v5628 = vrot.slane %v5416, 2
    %v5629 = vsel %vm2735, %v5627, %v5628
    %v5630 = vrot.slane %v5417, 2
    %v5631 = vsel %vm2735, %v5628, %v5630
    %v5632 = vrot.slane %v5418, 2
    %v5633 = vrot.slane %v5419, 2
    %v5634 = vsel %vm2735, %v5632, %v5633
    %v5635 = vrot.slane %v5420, 2
    %v5636 = vsel %vm2735, %v5633, %v5635
    %v5637 = vrot.slane %v5421, 2
    %v5638 = vrot.slane %v5422, 2
    %v5639 = vsel %vm2735, %v5637, %v5638
    %v5640 = vrot.slane %v5423, 2
    %v5641 = vsel %vm2735, %v5638, %v5640
    %v5642 = vrot.slane %v5424, 2
    %v5643 = vrot.slane %v5425, 2
    %v5644 = vsel %vm2735, %v5642, %v5643
    %v5645 = vrot.slane %v5426, 2
    %v5646 = vsel %vm2735, %v5643, %v5645
    %v5647 = vrot.slane %v5427, 2
    %v5648 = vrot.slane %v5428, 2
    %v5649 = vsel %vm2735, %v5647, %v5648
    %v5650 = vrot.slane %v5429, 2
    %v5651 = vsel %vm2735, %v5648, %v5650
    %v5652 = vrot.slane %v5430, 2
    %v5653 = vrot.slane %v5431, 2
    %v5654 = vsel %vm2735, %v5652, %v5653
    %v5655 = vrot.slane %v5432, 2
    %v5656 = vsel %vm2735, %v5653, %v5655
    %v5657 = vrot.slane %v5433, 2
    %v5658 = vrot.slane %v5434, 2
    %v5659 = vsel %vm2735, %v5657, %v5658
    %v5660 = vrot.slane %v5435, 2
    %v5661 = vsel %vm2735, %v5658, %v5660
    %v5662 = vrot.slane %v5436, 2
    %v5663 = vrot.slane %v5437, 2
    %v5664 = vsel %vm2735, %v5662, %v5663
    %v5665 = vrot.slane %v5438, 2
    %v5666 = vsel %vm2735, %v5663, %v5665
    %v5667 = vrot.slane %v5439, 2
    %v5668 = vrot.slane %v5440, 2
    %v5669 = vsel %vm2735, %v5667, %v5668
    %v5670 = vrot.slane %v5441, 2
    %v5671 = vsel %vm2735, %v5668, %v5670
    %v5672 = vrot.slane %v5442, 2
    %v5673 = vrot.slane %v5443, 2
    %v5674 = vsel %vm2735, %v5672, %v5673
    %v5675 = vrot.slane %v5444, 2
    %v5676 = vsel %vm2735, %v5673, %v5675
    %v5677 = vrot.slane %v5445, 2
    %v5678 = vrot.slane %v5446, 2
    %v5679 = vsel %vm2735, %v5677, %v5678
    %v5680 = vrot.slane %v5447, 2
    %v5681 = vsel %vm2735, %v5678, %v5680
    %v5682 = vrot.slane %v5448, 2
    %v5683 = vrot.slane %v5449, 2
    %v5684 = vsel %vm2735, %v5682, %v5683
    %v5685 = vrot.slane %v5450, 2
    %v5686 = vsel %vm2735, %v5683, %v5685
    %v5687 = vrot.slane %v5451, 2
    %v5688 = vrot.slane %v5452, 2
    %v5689 = vsel %vm2735, %v5687, %v5688
    %v5690 = vrot.slane %v5453, 2
    %v5691 = vsel %vm2735, %v5688, %v5690
    %v5692 = vrot.slane %v5454, 2
    %v5693 = vrot.slane %v5455, 2
    %v5694 = vsel %vm2735, %v5692, %v5693
    %v5695 = vrot.slane %v5456, 2
    %v5696 = vsel %vm2735, %v5693, %v5695
    %v5697 = vrot.slane %v5457, 2
    %v5698 = vrot.slane %v5458, 2
    %v5699 = vsel %vm2735, %v5697, %v5698
    %v5700 = vrot.slane %v5459, 2
    %v5701 = vsel %vm2735, %v5698, %v5700
    %v5702 = vrot.slane %v5460, 2
    %v5703 = vrot.slane %v5461, 2
    %v5704 = vsel %vm2735, %v5702, %v5703
    %v5705 = vrot.slane %v5462, 2
    %v5706 = vsel %vm2735, %v5703, %v5705
    %v5707 = vrot.slane %v5463, 2
    %v5708 = vrot.slane %v5464, 2
    %v5709 = vsel %vm2735, %v5707, %v5708
    %v5710 = vrot.slane %v5465, 2
    %v5711 = vsel %vm2735, %v5708, %v5710
    %v5712 = vrot.slane %v5466, 2
    %v5713 = vrot.slane %v5467, 2
    %v5714 = vsel %vm2735, %v5712, %v5713
    %v5715 = vrot.slane %v5468, 2
    %v5716 = vsel %vm2735, %v5713, %v5715
    %v5717 = vrot.slane %v5469, 2
    %v5718 = vrot.slane %v5470, 2
    %v5719 = vsel %vm2735, %v5717, %v5718
    %v5720 = vrot.slane %v5471, 2
    %v5721 = vsel %vm2735, %v5718, %v5720
    %v5722 = vrot.slane %v5472, 2
    %v5723 = vrot.slane %v5473, 2
    %v5724 = vsel %vm2735, %v5722, %v5723
    %v5725 = vrot.slane %v5474, 2
    %v5726 = vsel %vm2735, %v5723, %v5725
    %v5727 = vrot.slane %v5475, 2
    %v5728 = vrot.slane %v5476, 2
    %v5729 = vsel %vm2735, %v5727, %v5728
    %v5730 = vrot.slane %v5477, 2
    %v5731 = vsel %vm2735, %v5728, %v5730
    %v5732 = vrot.slane %v5478, 2
    %v5733 = vrot.slane %v5479, 2
    %v5734 = vsel %vm2735, %v5732, %v5733
    %v5735 = vrot.slane %v5480, 2
    %v5736 = vsel %vm2735, %v5733, %v5735
    %v5833 = vadd.f32 %v5221, %v5577
    %v5834 = vadd.f32 %v5222, %v5579
    %v5835 = vadd.f32 %v5223, %v5581
    %v5836 = vadd.f32 %v5224, %v5582
    %v5837 = vadd.f32 %v5225, %v5584
    %v5838 = vadd.f32 %v5226, %v5586
    %v5839 = vadd.f32 %v5227, %v5587
    %v5840 = vadd.f32 %v5228, %v5589
    %v5841 = vadd.f32 %v5229, %v5591
    %v5842 = vadd.f32 %v5230, %v5592
    %v5843 = vadd.f32 %v5231, %v5594
    %v5844 = vadd.f32 %v5232, %v5596
    %v5845 = vadd.f32 %v5233, %v5597
    %v5846 = vadd.f32 %v5234, %v5599
    %v5847 = vadd.f32 %v5235, %v5601
    %v5848 = vadd.f32 %v5236, %v5602
    %v5849 = vadd.f32 %v5237, %v5604
    %v5850 = vadd.f32 %v5238, %v5606
    %v5851 = vadd.f32 %v5239, %v5607
    %v5852 = vadd.f32 %v5240, %v5609
    %v5853 = vadd.f32 %v5241, %v5611
    %v5854 = vadd.f32 %v5242, %v5612
    %v5855 = vadd.f32 %v5243, %v5614
    %v5856 = vadd.f32 %v5244, %v5616
    %v5857 = vadd.f32 %v5245, %v5617
    %v5858 = vadd.f32 %v5246, %v5619
    %v5859 = vadd.f32 %v5247, %v5621
    %v5860 = vadd.f32 %v5248, %v5622
    %v5861 = vadd.f32 %v5249, %v5624
    %v5862 = vadd.f32 %v5250, %v5626
    %v5863 = vadd.f32 %v5251, %v5627
    %v5864 = vadd.f32 %v5252, %v5629
    %v5865 = vadd.f32 %v5253, %v5631
    %v5866 = vadd.f32 %v5254, %v5632
    %v5867 = vadd.f32 %v5255, %v5634
    %v5868 = vadd.f32 %v5256, %v5636
    %v5869 = vadd.f32 %v5257, %v5637
    %v5870 = vadd.f32 %v5258, %v5639
    %v5871 = vadd.f32 %v5259, %v5641
    %v5872 = vadd.f32 %v5260, %v5642
    %v5873 = vadd.f32 %v5261, %v5644
    %v5874 = vadd.f32 %v5262, %v5646
    %v5875 = vadd.f32 %v5263, %v5647
    %v5876 = vadd.f32 %v5264, %v5649
    %v5877 = vadd.f32 %v5265, %v5651
    %v5878 = vadd.f32 %v5266, %v5652
    %v5879 = vadd.f32 %v5267, %v5654
    %v5880 = vadd.f32 %v5268, %v5656
    %v5881 = vadd.f32 %v5269, %v5657
    %v5882 = vadd.f32 %v5270, %v5659
    %v5883 = vadd.f32 %v5271, %v5661
    %v5884 = vadd.f32 %v5272, %v5662
    %v5885 = vadd.f32 %v5273, %v5664
    %v5886 = vadd.f32 %v5274, %v5666
    %v5887 = vadd.f32 %v5275, %v5667
    %v5888 = vadd.f32 %v5276, %v5669
    %v5889 = vadd.f32 %v5277, %v5671
    %v5890 = vadd.f32 %v5278, %v5672
    %v5891 = vadd.f32 %v5279, %v5674
    %v5892 = vadd.f32 %v5280, %v5676
    %v5893 = vadd.f32 %v5281, %v5677
    %v5894 = vadd.f32 %v5282, %v5679
    %v5895 = vadd.f32 %v5283, %v5681
    %v5896 = vadd.f32 %v5284, %v5682
    %v5897 = vadd.f32 %v5285, %v5684
    %v5898 = vadd.f32 %v5286, %v5686
    %v5899 = vadd.f32 %v5287, %v5687
    %v5900 = vadd.f32 %v5288, %v5689
    %v5901 = vadd.f32 %v5289, %v5691
    %v5902 = vadd.f32 %v5290, %v5692
    %v5903 = vadd.f32 %v5291, %v5694
    %v5904 = vadd.f32 %v5292, %v5696
    %v5905 = vadd.f32 %v5293, %v5697
    %v5906 = vadd.f32 %v5294, %v5699
    %v5907 = vadd.f32 %v5295, %v5701
    %v5908 = vadd.f32 %v5296, %v5702
    %v5909 = vadd.f32 %v5297, %v5704
    %v5910 = vadd.f32 %v5298, %v5706
    %v5911 = vadd.f32 %v5299, %v5707
    %v5912 = vadd.f32 %v5300, %v5709
    %v5913 = vadd.f32 %v5301, %v5711
    %v5914 = vadd.f32 %v5302, %v5712
    %v5915 = vadd.f32 %v5303, %v5714
    %v5916 = vadd.f32 %v5304, %v5716
    %v5917 = vadd.f32 %v5305, %v5717
    %v5918 = vadd.f32 %v5306, %v5719
    %v5919 = vadd.f32 %v5307, %v5721
    %v5920 = vadd.f32 %v5308, %v5722
    %v5921 = vadd.f32 %v5309, %v5724
    %v5922 = vadd.f32 %v5310, %v5726
    %v5923 = vadd.f32 %v5311, %v5727
    %v5924 = vadd.f32 %v5312, %v5729
    %v5925 = vadd.f32 %v5313, %v5731
    %v5926 = vadd.f32 %v5314, %v5732
    %v5927 = vadd.f32 %v5315, %v5734
    %v5928 = vadd.f32 %v5316, %v5736
    %v5930 = vlaneseq
    %v5931 = vshrl.u32 %v5930, 7
    %v5932 = vsub.s32 0, %v5931
    %v5933 = vrot.slane %v1761, %v5932
    %v5935 = vadd.f32 %v5833, %v5933
    %v5936 = vadd.f32 %v5834, %v5933
    %v5937 = vadd.f32 %v5835, %v5933
    %v5938 = vadd.f32 %v5836, %v5933
    %v5939 = vadd.f32 %v5837, %v5933
    %v5940 = vadd.f32 %v5838, %v5933
    %v5941 = vadd.f32 %v5839, %v5933
    %v5942 = vadd.f32 %v5840, %v5933
    %v5943 = vadd.f32 %v5841, %v5933
    %v5944 = vadd.f32 %v5842, %v5933
    %v5945 = vadd.f32 %v5843, %v5933
    %v5946 = vadd.f32 %v5844, %v5933
    %v5947 = vadd.f32 %v5845, %v5933
    %v5948 = vadd.f32 %v5846, %v5933
    %v5949 = vadd.f32 %v5847, %v5933
    %v5950 = vadd.f32 %v5848, %v5933
    %v5951 = vadd.f32 %v5849, %v5933
    %v5952 = vadd.f32 %v5850, %v5933
    %v5953 = vadd.f32 %v5851, %v5933
    %v5954 = vadd.f32 %v5852, %v5933
    %v5955 = vadd.f32 %v5853, %v5933
    %v5956 = vadd.f32 %v5854, %v5933
    %v5957 = vadd.f32 %v5855, %v5933
    %v5958 = vadd.f32 %v5856, %v5933
    %v5959 = vadd.f32 %v5857, %v5933
    %v5960 = vadd.f32 %v5858, %v5933
    %v5961 = vadd.f32 %v5859, %v5933
    %v5962 = vadd.f32 %v5860, %v5933
    %v5963 = vadd.f32 %v5861, %v5933
    %v5964 = vadd.f32 %v5862, %v5933
    %v5965 = vadd.f32 %v5863, %v5933
    %v5966 = vadd.f32 %v5864, %v5933
    %v5967 = vadd.f32 %v5865, %v5933
    %v5968 = vadd.f32 %v5866, %v5933
    %v5969 = vadd.f32 %v5867, %v5933
    %v5970 = vadd.f32 %v5868, %v5933
    %v5971 = vadd.f32 %v5869, %v5933
    %v5972 = vadd.f32 %v5870, %v5933
    %v5973 = vadd.f32 %v5871, %v5933
    %v5974 = vadd.f32 %v5872, %v5933
    %v5975 = vadd.f32 %v5873, %v5933
    %v5976 = vadd.f32 %v5874, %v5933
    %v5977 = vadd.f32 %v5875, %v5933
    %v5978 = vadd.f32 %v5876, %v5933
    %v5979 = vadd.f32 %v5877, %v5933
    %v5980 = vadd.f32 %v5878, %v5933
    %v5981 = vadd.f32 %v5879, %v5933
    %v5982 = vadd.f32 %v5880, %v5933
    %v5983 = vadd.f32 %v5881, %v5933
    %v5984 = vadd.f32 %v5882, %v5933
    %v5985 = vadd.f32 %v5883, %v5933
    %v5986 = vadd.f32 %v5884, %v5933
    %v5987 = vadd.f32 %v5885, %v5933
    %v5988 = vadd.f32 %v5886, %v5933
    %v5989 = vadd.f32 %v5887, %v5933
    %v5990 = vadd.f32 %v5888, %v5933
    %v5991 = vadd.f32 %v5889, %v5933
    %v5992 = vadd.f32 %v5890, %v5933
    %v5993 = vadd.f32 %v5891, %v5933
    %v5994 = vadd.f32 %v5892, %v5933
    %v5995 = vadd.f32 %v5893, %v5933
    %v5996 = vadd.f32 %v5894, %v5933
    %v5997 = vadd.f32 %v5895, %v5933
    %v5998 = vadd.f32 %v5896, %v5933
    %v5999 = vadd.f32 %v5897, %v5933
    %v6000 = vadd.f32 %v5898, %v5933
    %v6001 = vadd.f32 %v5899, %v5933
    %v6002 = vadd.f32 %v5900, %v5933
    %v6003 = vadd.f32 %v5901, %v5933
    %v6004 = vadd.f32 %v5902, %v5933
    %v6005 = vadd.f32 %v5903, %v5933
    %v6006 = vadd.f32 %v5904, %v5933
    %v6007 = vadd.f32 %v5905, %v5933
    %v6008 = vadd.f32 %v5906, %v5933
    %v6009 = vadd.f32 %v5907, %v5933
    %v6010 = vadd.f32 %v5908, %v5933
    %v6011 = vadd.f32 %v5909, %v5933
    %v6012 = vadd.f32 %v5910, %v5933
    %v6013 = vadd.f32 %v5911, %v5933
    %v6014 = vadd.f32 %v5912, %v5933
    %v6015 = vadd.f32 %v5913, %v5933
    %v6016 = vadd.f32 %v5914, %v5933
    %v6017 = vadd.f32 %v5915, %v5933
    %v6018 = vadd.f32 %v5916, %v5933
    %v6019 = vadd.f32 %v5917, %v5933
    %v6020 = vadd.f32 %v5918, %v5933
    %v6021 = vadd.f32 %v5919, %v5933
    %v6022 = vadd.f32 %v5920, %v5933
    %v6023 = vadd.f32 %v5921, %v5933
    %v6024 = vadd.f32 %v5922, %v5933
    %v6025 = vadd.f32 %v5923, %v5933
    %v6026 = vadd.f32 %v5924, %v5933
    %v6027 = vadd.f32 %v5925, %v5933
    %v6028 = vadd.f32 %v5926, %v5933
    %v6029 = vadd.f32 %v5927, %v5933
    %v6030 = vadd.f32 %v5928, %v5933
    %v6031 = vxor.u32 %v5935, 2147483648
    %v6032 = vxor.u32 %v5936, 2147483648
    %v6033 = vxor.u32 %v5937, 2147483648
    %v6034 = vxor.u32 %v5938, 2147483648
    %v6035 = vxor.u32 %v5939, 2147483648
    %v6036 = vxor.u32 %v5940, 2147483648
    %v6037 = vxor.u32 %v5941, 2147483648
    %v6038 = vxor.u32 %v5942, 2147483648
    %v6039 = vxor.u32 %v5943, 2147483648
    %v6040 = vxor.u32 %v5944, 2147483648
    %v6041 = vxor.u32 %v5945, 2147483648
    %v6042 = vxor.u32 %v5946, 2147483648
    %v6043 = vxor.u32 %v5947, 2147483648
    %v6044 = vxor.u32 %v5948, 2147483648
    %v6045 = vxor.u32 %v5949, 2147483648
    %v6046 = vxor.u32 %v5950, 2147483648
    %v6047 = vxor.u32 %v5951, 2147483648
    %v6048 = vxor.u32 %v5952, 2147483648
    %v6049 = vxor.u32 %v5953, 2147483648
    %v6050 = vxor.u32 %v5954, 2147483648
    %v6051 = vxor.u32 %v5955, 2147483648
    %v6052 = vxor.u32 %v5956, 2147483648
    %v6053 = vxor.u32 %v5957, 2147483648
    %v6054 = vxor.u32 %v5958, 2147483648
    %v6055 = vxor.u32 %v5959, 2147483648
    %v6056 = vxor.u32 %v5960, 2147483648
    %v6057 = vxor.u32 %v5961, 2147483648
    %v6058 = vxor.u32 %v5962, 2147483648
    %v6059 = vxor.u32 %v5963, 2147483648
    %v6060 = vxor.u32 %v5964, 2147483648
    %v6061 = vxor.u32 %v5965, 2147483648
    %v6062 = vxor.u32 %v5966, 2147483648
    %v6063 = vxor.u32 %v5967, 2147483648
    %v6064 = vxor.u32 %v5968, 2147483648
    %v6065 = vxor.u32 %v5969, 2147483648
    %v6066 = vxor.u32 %v5970, 2147483648
    %v6067 = vxor.u32 %v5971, 2147483648
    %v6068 = vxor.u32 %v5972, 2147483648
    %v6069 = vxor.u32 %v5973, 2147483648
    %v6070 = vxor.u32 %v5974, 2147483648
    %v6071 = vxor.u32 %v5975, 2147483648
    %v6072 = vxor.u32 %v5976, 2147483648
    %v6073 = vxor.u32 %v5977, 2147483648
    %v6074 = vxor.u32 %v5978, 2147483648
    %v6075 = vxor.u32 %v5979, 2147483648
    %v6076 = vxor.u32 %v5980, 2147483648
    %v6077 = vxor.u32 %v5981, 2147483648
    %v6078 = vxor.u32 %v5982, 2147483648
    %v6079 = vxor.u32 %v5983, 2147483648
    %v6080 = vxor.u32 %v5984, 2147483648
    %v6081 = vxor.u32 %v5985, 2147483648
    %v6082 = vxor.u32 %v5986, 2147483648
    %v6083 = vxor.u32 %v5987, 2147483648
    %v6084 = vxor.u32 %v5988, 2147483648
    %v6085 = vxor.u32 %v5989, 2147483648
    %v6086 = vxor.u32 %v5990, 2147483648
    %v6087 = vxor.u32 %v5991, 2147483648
    %v6088 = vxor.u32 %v5992, 2147483648
    %v6089 = vxor.u32 %v5993, 2147483648
    %v6090 = vxor.u32 %v5994, 2147483648
    %v6091 = vxor.u32 %v5995, 2147483648
    %v6092 = vxor.u32 %v5996, 2147483648
    %v6093 = vxor.u32 %v5997, 2147483648
    %v6094 = vxor.u32 %v5998, 2147483648
    %v6095 = vxor.u32 %v5999, 2147483648
    %v6096 = vxor.u32 %v6000, 2147483648
    %v6097 = vxor.u32 %v6001, 2147483648
    %v6098 = vxor.u32 %v6002, 2147483648
    %v6099 = vxor.u32 %v6003, 2147483648
    %v6100 = vxor.u32 %v6004, 2147483648
    %v6101 = vxor.u32 %v6005, 2147483648
    %v6102 = vxor.u32 %v6006, 2147483648
    %v6103 = vxor.u32 %v6007, 2147483648
    %v6104 = vxor.u32 %v6008, 2147483648
    %v6105 = vxor.u32 %v6009, 2147483648
    %v6106 = vxor.u32 %v6010, 2147483648
    %v6107 = vxor.u32 %v6011, 2147483648
    %v6108 = vxor.u32 %v6012, 2147483648
    %v6109 = vxor.u32 %v6013, 2147483648
    %v6110 = vxor.u32 %v6014, 2147483648
    %v6111 = vxor.u32 %v6015, 2147483648
    %v6112 = vxor.u32 %v6016, 2147483648
    %v6113 = vxor.u32 %v6017, 2147483648
    %v6114 = vxor.u32 %v6018, 2147483648
    %v6115 = vxor.u32 %v6019, 2147483648
    %v6116 = vxor.u32 %v6020, 2147483648
    %v6117 = vxor.u32 %v6021, 2147483648
    %v6118 = vxor.u32 %v6022, 2147483648
    %v6119 = vxor.u32 %v6023, 2147483648
    %v6120 = vxor.u32 %v6024, 2147483648
    %v6121 = vxor.u32 %v6025, 2147483648
    %v6122 = vxor.u32 %v6026, 2147483648
    %v6123 = vxor.u32 %v6027, 2147483648
    %v6124 = vxor.u32 %v6028, 2147483648
    %v6125 = vxor.u32 %v6029, 2147483648
    %v6126 = vxor.u32 %v6030, 2147483648
    %v6127 = vmul.f32 %v6031, 1.442695
    %v6128 = vpow.pop %v6127
    %v6129 = vmul.f32 %v6032, 1.442695
    %v6130 = vpow.pop %v6129
    %v6131 = vmul.f32 %v6033, 1.442695
    %v6132 = vpow.pop %v6131
    %v6133 = vmul.f32 %v6034, 1.442695
    %v6134 = vpow.pop %v6133
    %v6135 = vmul.f32 %v6035, 1.442695
    %v6136 = vpow.pop %v6135
    %v6137 = vmul.f32 %v6036, 1.442695
    %v6138 = vpow.pop %v6137
    %v6139 = vmul.f32 %v6037, 1.442695
    %v6140 = vpow.pop %v6139
    %v6141 = vmul.f32 %v6038, 1.442695
    %v6142 = vpow.pop %v6141
    %v6143 = vmul.f32 %v6039, 1.442695
    %v6144 = vpow.pop %v6143
    %v6145 = vmul.f32 %v6040, 1.442695
    %v6146 = vpow.pop %v6145
    %v6147 = vmul.f32 %v6041, 1.442695
    %v6148 = vpow.pop %v6147
    %v6149 = vmul.f32 %v6042, 1.442695
    %v6150 = vpow.pop %v6149
    %v6151 = vmul.f32 %v6043, 1.442695
    %v6152 = vpow.pop %v6151
    %v6153 = vmul.f32 %v6044, 1.442695
    %v6154 = vpow.pop %v6153
    %v6155 = vmul.f32 %v6045, 1.442695
    %v6156 = vpow.pop %v6155
    %v6157 = vmul.f32 %v6046, 1.442695
    %v6158 = vpow.pop %v6157
    %v6159 = vmul.f32 %v6047, 1.442695
    %v6160 = vpow.pop %v6159
    %v6161 = vmul.f32 %v6048, 1.442695
    %v6162 = vpow.pop %v6161
    %v6163 = vmul.f32 %v6049, 1.442695
    %v6164 = vpow.pop %v6163
    %v6165 = vmul.f32 %v6050, 1.442695
    %v6166 = vpow.pop %v6165
    %v6167 = vmul.f32 %v6051, 1.442695
    %v6168 = vpow.pop %v6167
    %v6169 = vmul.f32 %v6052, 1.442695
    %v6170 = vpow.pop %v6169
    %v6171 = vmul.f32 %v6053, 1.442695
    %v6172 = vpow.pop %v6171
    %v6173 = vmul.f32 %v6054, 1.442695
    %v6174 = vpow.pop %v6173
    %v6175 = vmul.f32 %v6055, 1.442695
    %v6176 = vpow.pop %v6175
    %v6177 = vmul.f32 %v6056, 1.442695
    %v6178 = vpow.pop %v6177
    %v6179 = vmul.f32 %v6057, 1.442695
    %v6180 = vpow.pop %v6179
    %v6181 = vmul.f32 %v6058, 1.442695
    %v6182 = vpow.pop %v6181
    %v6183 = vmul.f32 %v6059, 1.442695
    %v6184 = vpow.pop %v6183
    %v6185 = vmul.f32 %v6060, 1.442695
    %v6186 = vpow.pop %v6185
    %v6187 = vmul.f32 %v6061, 1.442695
    %v6188 = vpow.pop %v6187
    %v6189 = vmul.f32 %v6062, 1.442695
    %v6190 = vpow.pop %v6189
    %v6191 = vmul.f32 %v6063, 1.442695
    %v6192 = vpow.pop %v6191
    %v6193 = vmul.f32 %v6064, 1.442695
    %v6194 = vpow.pop %v6193
    %v6195 = vmul.f32 %v6065, 1.442695
    %v6196 = vpow.pop %v6195
    %v6197 = vmul.f32 %v6066, 1.442695
    %v6198 = vpow.pop %v6197
    %v6199 = vmul.f32 %v6067, 1.442695
    %v6200 = vpow.pop %v6199
    %v6201 = vmul.f32 %v6068, 1.442695
    %v6202 = vpow.pop %v6201
    %v6203 = vmul.f32 %v6069, 1.442695
    %v6204 = vpow.pop %v6203
    %v6205 = vmul.f32 %v6070, 1.442695
    %v6206 = vpow.pop %v6205
    %v6207 = vmul.f32 %v6071, 1.442695
    %v6208 = vpow.pop %v6207
    %v6209 = vmul.f32 %v6072, 1.442695
    %v6210 = vpow.pop %v6209
    %v6211 = vmul.f32 %v6073, 1.442695
    %v6212 = vpow.pop %v6211
    %v6213 = vmul.f32 %v6074, 1.442695
    %v6214 = vpow.pop %v6213
    %v6215 = vmul.f32 %v6075, 1.442695
    %v6216 = vpow.pop %v6215
    %v6217 = vmul.f32 %v6076, 1.442695
    %v6218 = vpow.pop %v6217
    %v6219 = vmul.f32 %v6077, 1.442695
    %v6220 = vpow.pop %v6219
    %v6221 = vmul.f32 %v6078, 1.442695
    %v6222 = vpow.pop %v6221
    %v6223 = vmul.f32 %v6079, 1.442695
    %v6224 = vpow.pop %v6223
    %v6225 = vmul.f32 %v6080, 1.442695
    %v6226 = vpow.pop %v6225
    %v6227 = vmul.f32 %v6081, 1.442695
    %v6228 = vpow.pop %v6227
    %v6229 = vmul.f32 %v6082, 1.442695
    %v6230 = vpow.pop %v6229
    %v6231 = vmul.f32 %v6083, 1.442695
    %v6232 = vpow.pop %v6231
    %v6233 = vmul.f32 %v6084, 1.442695
    %v6234 = vpow.pop %v6233
    %v6235 = vmul.f32 %v6085, 1.442695
    %v6236 = vpow.pop %v6235
    %v6237 = vmul.f32 %v6086, 1.442695
    %v6238 = vpow.pop %v6237
    %v6239 = vmul.f32 %v6087, 1.442695
    %v6240 = vpow.pop %v6239
    %v6241 = vmul.f32 %v6088, 1.442695
    %v6242 = vpow.pop %v6241
    %v6243 = vmul.f32 %v6089, 1.442695
    %v6244 = vpow.pop %v6243
    %v6245 = vmul.f32 %v6090, 1.442695
    %v6246 = vpow.pop %v6245
    %v6247 = vmul.f32 %v6091, 1.442695
    %v6248 = vpow.pop %v6247
    %v6249 = vmul.f32 %v6092, 1.442695
    %v6250 = vpow.pop %v6249
    %v6251 = vmul.f32 %v6093, 1.442695
    %v6252 = vpow.pop %v6251
    %v6253 = vmul.f32 %v6094, 1.442695
    %v6254 = vpow.pop %v6253
    %v6255 = vmul.f32 %v6095, 1.442695
    %v6256 = vpow.pop %v6255
    %v6257 = vmul.f32 %v6096, 1.442695
    %v6258 = vpow.pop %v6257
    %v6259 = vmul.f32 %v6097, 1.442695
    %v6260 = vpow.pop %v6259
    %v6261 = vmul.f32 %v6098, 1.442695
    %v6262 = vpow.pop %v6261
    %v6263 = vmul.f32 %v6099, 1.442695
    %v6264 = vpow.pop %v6263
    %v6265 = vmul.f32 %v6100, 1.442695
    %v6266 = vpow.pop %v6265
    %v6267 = vmul.f32 %v6101, 1.442695
    %v6268 = vpow.pop %v6267
    %v6269 = vmul.f32 %v6102, 1.442695
    %v6270 = vpow.pop %v6269
    %v6271 = vmul.f32 %v6103, 1.442695
    %v6272 = vpow.pop %v6271
    %v6273 = vmul.f32 %v6104, 1.442695
    %v6274 = vpow.pop %v6273
    %v6275 = vmul.f32 %v6105, 1.442695
    %v6276 = vpow.pop %v6275
    %v6277 = vmul.f32 %v6106, 1.442695
    %v6278 = vpow.pop %v6277
    %v6279 = vmul.f32 %v6107, 1.442695
    %v6280 = vpow.pop %v6279
    %v6281 = vmul.f32 %v6108, 1.442695
    %v6282 = vpow.pop %v6281
    %v6283 = vmul.f32 %v6109, 1.442695
    %v6284 = vpow.pop %v6283
    %v6285 = vmul.f32 %v6110, 1.442695
    %v6286 = vpow.pop %v6285
    %v6287 = vmul.f32 %v6111, 1.442695
    %v6288 = vpow.pop %v6287
    %v6289 = vmul.f32 %v6112, 1.442695
    %v6290 = vpow.pop %v6289
    %v6291 = vmul.f32 %v6113, 1.442695
    %v6292 = vpow.pop %v6291
    %v6293 = vmul.f32 %v6114, 1.442695
    %v6294 = vpow.pop %v6293
    %v6295 = vmul.f32 %v6115, 1.442695
    %v6296 = vpow.pop %v6295
    %v6297 = vmul.f32 %v6116, 1.442695
    %v6298 = vpow.pop %v6297
    %v6299 = vmul.f32 %v6117, 1.442695
    %v6300 = vpow.pop %v6299
    %v6301 = vmul.f32 %v6118, 1.442695
    %v6302 = vpow.pop %v6301
    %v6303 = vmul.f32 %v6119, 1.442695
    %v6304 = vpow.pop %v6303
    %v6305 = vmul.f32 %v6120, 1.442695
    %v6306 = vpow.pop %v6305
    %v6307 = vmul.f32 %v6121, 1.442695
    %v6308 = vpow.pop %v6307
    %v6309 = vmul.f32 %v6122, 1.442695
    %v6310 = vpow.pop %v6309
    %v6311 = vmul.f32 %v6123, 1.442695
    %v6312 = vpow.pop %v6311
    %v6313 = vmul.f32 %v6124, 1.442695
    %v6314 = vpow.pop %v6313
    %v6315 = vmul.f32 %v6125, 1.442695
    %v6316 = vpow.pop %v6315
    %v6317 = vmul.f32 %v6126, 1.442695
    %v6318 = vpow.pop %v6317
    %v6319 = vadd.f32 %v6128, 1.0
    %v6320 = vadd.f32 %v6130, 1.0
    %v6321 = vadd.f32 %v6132, 1.0
    %v6322 = vadd.f32 %v6134, 1.0
    %v6323 = vadd.f32 %v6136, 1.0
    %v6324 = vadd.f32 %v6138, 1.0
    %v6325 = vadd.f32 %v6140, 1.0
    %v6326 = vadd.f32 %v6142, 1.0
    %v6327 = vadd.f32 %v6144, 1.0
    %v6328 = vadd.f32 %v6146, 1.0
    %v6329 = vadd.f32 %v6148, 1.0
    %v6330 = vadd.f32 %v6150, 1.0
    %v6331 = vadd.f32 %v6152, 1.0
    %v6332 = vadd.f32 %v6154, 1.0
    %v6333 = vadd.f32 %v6156, 1.0
    %v6334 = vadd.f32 %v6158, 1.0
    %v6335 = vadd.f32 %v6160, 1.0
    %v6336 = vadd.f32 %v6162, 1.0
    %v6337 = vadd.f32 %v6164, 1.0
    %v6338 = vadd.f32 %v6166, 1.0
    %v6339 = vadd.f32 %v6168, 1.0
    %v6340 = vadd.f32 %v6170, 1.0
    %v6341 = vadd.f32 %v6172, 1.0
    %v6342 = vadd.f32 %v6174, 1.0
    %v6343 = vadd.f32 %v6176, 1.0
    %v6344 = vadd.f32 %v6178, 1.0
    %v6345 = vadd.f32 %v6180, 1.0
    %v6346 = vadd.f32 %v6182, 1.0
    %v6347 = vadd.f32 %v6184, 1.0
    %v6348 = vadd.f32 %v6186, 1.0
    %v6349 = vadd.f32 %v6188, 1.0
    %v6350 = vadd.f32 %v6190, 1.0
    %v6351 = vadd.f32 %v6192, 1.0
    %v6352 = vadd.f32 %v6194, 1.0
    %v6353 = vadd.f32 %v6196, 1.0
    %v6354 = vadd.f32 %v6198, 1.0
    %v6355 = vadd.f32 %v6200, 1.0
    %v6356 = vadd.f32 %v6202, 1.0
    %v6357 = vadd.f32 %v6204, 1.0
    %v6358 = vadd.f32 %v6206, 1.0
    %v6359 = vadd.f32 %v6208, 1.0
    %v6360 = vadd.f32 %v6210, 1.0
    %v6361 = vadd.f32 %v6212, 1.0
    %v6362 = vadd.f32 %v6214, 1.0
    %v6363 = vadd.f32 %v6216, 1.0
    %v6364 = vadd.f32 %v6218, 1.0
    %v6365 = vadd.f32 %v6220, 1.0
    %v6366 = vadd.f32 %v6222, 1.0
    %v6367 = vadd.f32 %v6224, 1.0
    %v6368 = vadd.f32 %v6226, 1.0
    %v6369 = vadd.f32 %v6228, 1.0
    %v6370 = vadd.f32 %v6230, 1.0
    %v6371 = vadd.f32 %v6232, 1.0
    %v6372 = vadd.f32 %v6234, 1.0
    %v6373 = vadd.f32 %v6236, 1.0
    %v6374 = vadd.f32 %v6238, 1.0
    %v6375 = vadd.f32 %v6240, 1.0
    %v6376 = vadd.f32 %v6242, 1.0
    %v6377 = vadd.f32 %v6244, 1.0
    %v6378 = vadd.f32 %v6246, 1.0
    %v6379 = vadd.f32 %v6248, 1.0
    %v6380 = vadd.f32 %v6250, 1.0
    %v6381 = vadd.f32 %v6252, 1.0
    %v6382 = vadd.f32 %v6254, 1.0
    %v6383 = vadd.f32 %v6256, 1.0
    %v6384 = vadd.f32 %v6258, 1.0
    %v6385 = vadd.f32 %v6260, 1.0
    %v6386 = vadd.f32 %v6262, 1.0
    %v6387 = vadd.f32 %v6264, 1.0
    %v6388 = vadd.f32 %v6266, 1.0
    %v6389 = vadd.f32 %v6268, 1.0
    %v6390 = vadd.f32 %v6270, 1.0
    %v6391 = vadd.f32 %v6272, 1.0
    %v6392 = vadd.f32 %v6274, 1.0
    %v6393 = vadd.f32 %v6276, 1.0
    %v6394 = vadd.f32 %v6278, 1.0
    %v6395 = vadd.f32 %v6280, 1.0
    %v6396 = vadd.f32 %v6282, 1.0
    %v6397 = vadd.f32 %v6284, 1.0
    %v6398 = vadd.f32 %v6286, 1.0
    %v6399 = vadd.f32 %v6288, 1.0
    %v6400 = vadd.f32 %v6290, 1.0
    %v6401 = vadd.f32 %v6292, 1.0
    %v6402 = vadd.f32 %v6294, 1.0
    %v6403 = vadd.f32 %v6296, 1.0
    %v6404 = vadd.f32 %v6298, 1.0
    %v6405 = vadd.f32 %v6300, 1.0
    %v6406 = vadd.f32 %v6302, 1.0
    %v6407 = vadd.f32 %v6304, 1.0
    %v6408 = vadd.f32 %v6306, 1.0
    %v6409 = vadd.f32 %v6308, 1.0
    %v6410 = vadd.f32 %v6310, 1.0
    %v6411 = vadd.f32 %v6312, 1.0
    %v6412 = vadd.f32 %v6314, 1.0
    %v6413 = vadd.f32 %v6316, 1.0
    %v6414 = vadd.f32 %v6318, 1.0
    %v6415 = vrcp.pop %v6319
    %v6416 = vmul.f32 1.0, %v6415
    %v6417 = vrcp.pop %v6320
    %v6418 = vmul.f32 1.0, %v6417
    %v6419 = vrcp.pop %v6321
    %v6420 = vmul.f32 1.0, %v6419
    %v6421 = vrcp.pop %v6322
    %v6422 = vmul.f32 1.0, %v6421
    %v6423 = vrcp.pop %v6323
    %v6424 = vmul.f32 1.0, %v6423
    %v6425 = vrcp.pop %v6324
    %v6426 = vmul.f32 1.0, %v6425
    %v6427 = vrcp.pop %v6325
    %v6428 = vmul.f32 1.0, %v6427
    %v6429 = vrcp.pop %v6326
    %v6430 = vmul.f32 1.0, %v6429
    %v6431 = vrcp.pop %v6327
    %v6432 = vmul.f32 1.0, %v6431
    %v6433 = vrcp.pop %v6328
    %v6434 = vmul.f32 1.0, %v6433
    %v6435 = vrcp.pop %v6329
    %v6436 = vmul.f32 1.0, %v6435
    %v6437 = vrcp.pop %v6330
    %v6438 = vmul.f32 1.0, %v6437
    %v6439 = vrcp.pop %v6331
    %v6440 = vmul.f32 1.0, %v6439
    %v6441 = vrcp.pop %v6332
    %v6442 = vmul.f32 1.0, %v6441
    %v6443 = vrcp.pop %v6333
    %v6444 = vmul.f32 1.0, %v6443
    %v6445 = vrcp.pop %v6334
    %v6446 = vmul.f32 1.0, %v6445
    %v6447 = vrcp.pop %v6335
    %v6448 = vmul.f32 1.0, %v6447
    %v6449 = vrcp.pop %v6336
    %v6450 = vmul.f32 1.0, %v6449
    %v6451 = vrcp.pop %v6337
    %v6452 = vmul.f32 1.0, %v6451
    %v6453 = vrcp.pop %v6338
    %v6454 = vmul.f32 1.0, %v6453
    %v6455 = vrcp.pop %v6339
    %v6456 = vmul.f32 1.0, %v6455
    %v6457 = vrcp.pop %v6340
    %v6458 = vmul.f32 1.0, %v6457
    %v6459 = vrcp.pop %v6341
    %v6460 = vmul.f32 1.0, %v6459
    %v6461 = vrcp.pop %v6342
    %v6462 = vmul.f32 1.0, %v6461
    %v6463 = vrcp.pop %v6343
    %v6464 = vmul.f32 1.0, %v6463
    %v6465 = vrcp.pop %v6344
    %v6466 = vmul.f32 1.0, %v6465
    %v6467 = vrcp.pop %v6345
    %v6468 = vmul.f32 1.0, %v6467
    %v6469 = vrcp.pop %v6346
    %v6470 = vmul.f32 1.0, %v6469
    %v6471 = vrcp.pop %v6347
    %v6472 = vmul.f32 1.0, %v6471
    %v6473 = vrcp.pop %v6348
    %v6474 = vmul.f32 1.0, %v6473
    %v6475 = vrcp.pop %v6349
    %v6476 = vmul.f32 1.0, %v6475
    %v6477 = vrcp.pop %v6350
    %v6478 = vmul.f32 1.0, %v6477
    %v6479 = vrcp.pop %v6351
    %v6480 = vmul.f32 1.0, %v6479
    %v6481 = vrcp.pop %v6352
    %v6482 = vmul.f32 1.0, %v6481
    %v6483 = vrcp.pop %v6353
    %v6484 = vmul.f32 1.0, %v6483
    %v6485 = vrcp.pop %v6354
    %v6486 = vmul.f32 1.0, %v6485
    %v6487 = vrcp.pop %v6355
    %v6488 = vmul.f32 1.0, %v6487
    %v6489 = vrcp.pop %v6356
    %v6490 = vmul.f32 1.0, %v6489
    %v6491 = vrcp.pop %v6357
    %v6492 = vmul.f32 1.0, %v6491
    %v6493 = vrcp.pop %v6358
    %v6494 = vmul.f32 1.0, %v6493
    %v6495 = vrcp.pop %v6359
    %v6496 = vmul.f32 1.0, %v6495
    %v6497 = vrcp.pop %v6360
    %v6498 = vmul.f32 1.0, %v6497
    %v6499 = vrcp.pop %v6361
    %v6500 = vmul.f32 1.0, %v6499
    %v6501 = vrcp.pop %v6362
    %v6502 = vmul.f32 1.0, %v6501
    %v6503 = vrcp.pop %v6363
    %v6504 = vmul.f32 1.0, %v6503
    %v6505 = vrcp.pop %v6364
    %v6506 = vmul.f32 1.0, %v6505
    %v6507 = vrcp.pop %v6365
    %v6508 = vmul.f32 1.0, %v6507
    %v6509 = vrcp.pop %v6366
    %v6510 = vmul.f32 1.0, %v6509
    %v6511 = vrcp.pop %v6367
    %v6512 = vmul.f32 1.0, %v6511
    %v6513 = vrcp.pop %v6368
    %v6514 = vmul.f32 1.0, %v6513
    %v6515 = vrcp.pop %v6369
    %v6516 = vmul.f32 1.0, %v6515
    %v6517 = vrcp.pop %v6370
    %v6518 = vmul.f32 1.0, %v6517
    %v6519 = vrcp.pop %v6371
    %v6520 = vmul.f32 1.0, %v6519
    %v6521 = vrcp.pop %v6372
    %v6522 = vmul.f32 1.0, %v6521
    %v6523 = vrcp.pop %v6373
    %v6524 = vmul.f32 1.0, %v6523
    %v6525 = vrcp.pop %v6374
    %v6526 = vmul.f32 1.0, %v6525
    %v6527 = vrcp.pop %v6375
    %v6528 = vmul.f32 1.0, %v6527
    %v6529 = vrcp.pop %v6376
    %v6530 = vmul.f32 1.0, %v6529
    %v6531 = vrcp.pop %v6377
    %v6532 = vmul.f32 1.0, %v6531
    %v6533 = vrcp.pop %v6378
    %v6534 = vmul.f32 1.0, %v6533
    %v6535 = vrcp.pop %v6379
    %v6536 = vmul.f32 1.0, %v6535
    %v6537 = vrcp.pop %v6380
    %v6538 = vmul.f32 1.0, %v6537
    %v6539 = vrcp.pop %v6381
    %v6540 = vmul.f32 1.0, %v6539
    %v6541 = vrcp.pop %v6382
    %v6542 = vmul.f32 1.0, %v6541
    %v6543 = vrcp.pop %v6383
    %v6544 = vmul.f32 1.0, %v6543
    %v6545 = vrcp.pop %v6384
    %v6546 = vmul.f32 1.0, %v6545
    %v6547 = vrcp.pop %v6385
    %v6548 = vmul.f32 1.0, %v6547
    %v6549 = vrcp.pop %v6386
    %v6550 = vmul.f32 1.0, %v6549
    %v6551 = vrcp.pop %v6387
    %v6552 = vmul.f32 1.0, %v6551
    %v6553 = vrcp.pop %v6388
    %v6554 = vmul.f32 1.0, %v6553
    %v6555 = vrcp.pop %v6389
    %v6556 = vmul.f32 1.0, %v6555
    %v6557 = vrcp.pop %v6390
    %v6558 = vmul.f32 1.0, %v6557
    %v6559 = vrcp.pop %v6391
    %v6560 = vmul.f32 1.0, %v6559
    %v6561 = vrcp.pop %v6392
    %v6562 = vmul.f32 1.0, %v6561
    %v6563 = vrcp.pop %v6393
    %v6564 = vmul.f32 1.0, %v6563
    %v6565 = vrcp.pop %v6394
    %v6566 = vmul.f32 1.0, %v6565
    %v6567 = vrcp.pop %v6395
    %v6568 = vmul.f32 1.0, %v6567
    %v6569 = vrcp.pop %v6396
    %v6570 = vmul.f32 1.0, %v6569
    %v6571 = vrcp.pop %v6397
    %v6572 = vmul.f32 1.0, %v6571
    %v6573 = vrcp.pop %v6398
    %v6574 = vmul.f32 1.0, %v6573
    %v6575 = vrcp.pop %v6399
    %v6576 = vmul.f32 1.0, %v6575
    %v6577 = vrcp.pop %v6400
    %v6578 = vmul.f32 1.0, %v6577
    %v6579 = vrcp.pop %v6401
    %v6580 = vmul.f32 1.0, %v6579
    %v6581 = vrcp.pop %v6402
    %v6582 = vmul.f32 1.0, %v6581
    %v6583 = vrcp.pop %v6403
    %v6584 = vmul.f32 1.0, %v6583
    %v6585 = vrcp.pop %v6404
    %v6586 = vmul.f32 1.0, %v6585
    %v6587 = vrcp.pop %v6405
    %v6588 = vmul.f32 1.0, %v6587
    %v6589 = vrcp.pop %v6406
    %v6590 = vmul.f32 1.0, %v6589
    %v6591 = vrcp.pop %v6407
    %v6592 = vmul.f32 1.0, %v6591
    %v6593 = vrcp.pop %v6408
    %v6594 = vmul.f32 1.0, %v6593
    %v6595 = vrcp.pop %v6409
    %v6596 = vmul.f32 1.0, %v6595
    %v6597 = vrcp.pop %v6410
    %v6598 = vmul.f32 1.0, %v6597
    %v6599 = vrcp.pop %v6411
    %v6600 = vmul.f32 1.0, %v6599
    %v6601 = vrcp.pop %v6412
    %v6602 = vmul.f32 1.0, %v6601
    %v6603 = vrcp.pop %v6413
    %v6604 = vmul.f32 1.0, %v6603
    %v6605 = vrcp.pop %v6414
    %v6606 = vmul.f32 1.0, %v6605
    %v6607 = vmul.f32 %v5935, %v6416
    %v6608 = vmul.f32 %v5936, %v6418
    %v6609 = vmul.f32 %v5937, %v6420
    %v6610 = vmul.f32 %v5938, %v6422
    %v6611 = vmul.f32 %v5939, %v6424
    %v6612 = vmul.f32 %v5940, %v6426
    %v6613 = vmul.f32 %v5941, %v6428
    %v6614 = vmul.f32 %v5942, %v6430
    %v6615 = vmul.f32 %v5943, %v6432
    %v6616 = vmul.f32 %v5944, %v6434
    %v6617 = vmul.f32 %v5945, %v6436
    %v6618 = vmul.f32 %v5946, %v6438
    %v6619 = vmul.f32 %v5947, %v6440
    %v6620 = vmul.f32 %v5948, %v6442
    %v6621 = vmul.f32 %v5949, %v6444
    %v6622 = vmul.f32 %v5950, %v6446
    %v6623 = vmul.f32 %v5951, %v6448
    %v6624 = vmul.f32 %v5952, %v6450
    %v6625 = vmul.f32 %v5953, %v6452
    %v6626 = vmul.f32 %v5954, %v6454
    %v6627 = vmul.f32 %v5955, %v6456
    %v6628 = vmul.f32 %v5956, %v6458
    %v6629 = vmul.f32 %v5957, %v6460
    %v6630 = vmul.f32 %v5958, %v6462
    %v6631 = vmul.f32 %v5959, %v6464
    %v6632 = vmul.f32 %v5960, %v6466
    %v6633 = vmul.f32 %v5961, %v6468
    %v6634 = vmul.f32 %v5962, %v6470
    %v6635 = vmul.f32 %v5963, %v6472
    %v6636 = vmul.f32 %v5964, %v6474
    %v6637 = vmul.f32 %v5965, %v6476
    %v6638 = vmul.f32 %v5966, %v6478
    %v6639 = vmul.f32 %v5967, %v6480
    %v6640 = vmul.f32 %v5968, %v6482
    %v6641 = vmul.f32 %v5969, %v6484
    %v6642 = vmul.f32 %v5970, %v6486
    %v6643 = vmul.f32 %v5971, %v6488
    %v6644 = vmul.f32 %v5972, %v6490
    %v6645 = vmul.f32 %v5973, %v6492
    %v6646 = vmul.f32 %v5974, %v6494
    %v6647 = vmul.f32 %v5975, %v6496
    %v6648 = vmul.f32 %v5976, %v6498
    %v6649 = vmul.f32 %v5977, %v6500
    %v6650 = vmul.f32 %v5978, %v6502
    %v6651 = vmul.f32 %v5979, %v6504
    %v6652 = vmul.f32 %v5980, %v6506
    %v6653 = vmul.f32 %v5981, %v6508
    %v6654 = vmul.f32 %v5982, %v6510
    %v6655 = vmul.f32 %v5983, %v6512
    %v6656 = vmul.f32 %v5984, %v6514
    %v6657 = vmul.f32 %v5985, %v6516
    %v6658 = vmul.f32 %v5986, %v6518
    %v6659 = vmul.f32 %v5987, %v6520
    %v6660 = vmul.f32 %v5988, %v6522
    %v6661 = vmul.f32 %v5989, %v6524
    %v6662 = vmul.f32 %v5990, %v6526
    %v6663 = vmul.f32 %v5991, %v6528
    %v6664 = vmul.f32 %v5992, %v6530
    %v6665 = vmul.f32 %v5993, %v6532
    %v6666 = vmul.f32 %v5994, %v6534
    %v6667 = vmul.f32 %v5995, %v6536
    %v6668 = vmul.f32 %v5996, %v6538
    %v6669 = vmul.f32 %v5997, %v6540
    %v6670 = vmul.f32 %v5998, %v6542
    %v6671 = vmul.f32 %v5999, %v6544
    %v6672 = vmul.f32 %v6000, %v6546
    %v6673 = vmul.f32 %v6001, %v6548
    %v6674 = vmul.f32 %v6002, %v6550
    %v6675 = vmul.f32 %v6003, %v6552
    %v6676 = vmul.f32 %v6004, %v6554
    %v6677 = vmul.f32 %v6005, %v6556
    %v6678 = vmul.f32 %v6006, %v6558
    %v6679 = vmul.f32 %v6007, %v6560
    %v6680 = vmul.f32 %v6008, %v6562
    %v6681 = vmul.f32 %v6009, %v6564
    %v6682 = vmul.f32 %v6010, %v6566
    %v6683 = vmul.f32 %v6011, %v6568
    %v6684 = vmul.f32 %v6012, %v6570
    %v6685 = vmul.f32 %v6013, %v6572
    %v6686 = vmul.f32 %v6014, %v6574
    %v6687 = vmul.f32 %v6015, %v6576
    %v6688 = vmul.f32 %v6016, %v6578
    %v6689 = vmul.f32 %v6017, %v6580
    %v6690 = vmul.f32 %v6018, %v6582
    %v6691 = vmul.f32 %v6019, %v6584
    %v6692 = vmul.f32 %v6020, %v6586
    %v6693 = vmul.f32 %v6021, %v6588
    %v6694 = vmul.f32 %v6022, %v6590
    %v6695 = vmul.f32 %v6023, %v6592
    %v6696 = vmul.f32 %v6024, %v6594
    %v6697 = vmul.f32 %v6025, %v6596
    %v6698 = vmul.f32 %v6026, %v6598
    %v6699 = vmul.f32 %v6027, %v6600
    %v6700 = vmul.f32 %v6028, %v6602
    %v6701 = vmul.f32 %v6029, %v6604
    %v6702 = vmul.f32 %v6030, %v6606
    %6703 = vst [vmem:[#allocation3 - $0x7] sm:$0x80] %v6607
    %6704 = vst [vmem:[#allocation3 + $0x1] sm:$0xff] %v6608
    %6705 = vst [vmem:[#allocation3 + $0x9] sm:$0x7f] %v6609
    %6706 = vst [vmem:[#allocation3 + $0x9] sm:$0x80] %v6610
    %6707 = vst [vmem:[#allocation3 + $0x11] sm:$0xff] %v6611
    %6708 = vst [vmem:[#allocation3 + $0x19] sm:$0x7f] %v6612
    %6709 = vst [vmem:[#allocation3 + $0x19] sm:$0x80] %v6613
    %6710 = vst [vmem:[#allocation3 + $0x21] sm:$0xff] %v6614
    %6711 = vst [vmem:[#allocation3 + $0x29] sm:$0x7f] %v6615
    %6712 = vst [vmem:[#allocation3 + $0x29] sm:$0x80] %v6616
    %6713 = vst [vmem:[#allocation3 + $0x31] sm:$0xff] %v6617
    %6714 = vst [vmem:[#allocation3 + $0x39] sm:$0x7f] %v6618
    %6715 = vst [vmem:[#allocation3 + $0x39] sm:$0x80] %v6619
    %6716 = vst [vmem:[#allocation3 + $0x41] sm:$0xff] %v6620
    %6717 = vst [vmem:[#allocation3 + $0x49] sm:$0x7f] %v6621
    %6718 = vst [vmem:[#allocation3 + $0x49] sm:$0x80] %v6622
    %6719 = vst [vmem:[#allocation3 + $0x51] sm:$0xff] %v6623
    %6720 = vst [vmem:[#allocation3 + $0x59] sm:$0x7f] %v6624
    %6721 = vst [vmem:[#allocation3 + $0x59] sm:$0x80] %v6625
    %6722 = vst [vmem:[#allocation3 + $0x61] sm:$0xff] %v6626
    %6723 = vst [vmem:[#allocation3 + $0x69] sm:$0x7f] %v6627
    %6724 = vst [vmem:[#allocation3 + $0x69] sm:$0x80] %v6628
    %6725 = vst [vmem:[#allocation3 + $0x71] sm:$0xff] %v6629
    %6726 = vst [vmem:[#allocation3 + $0x79] sm:$0x7f] %v6630
    %6727 = vst [vmem:[#allocation3 + $0x79] sm:$0x80] %v6631
    %6728 = vst [vmem:[#allocation3 + $0x81] sm:$0xff] %v6632
    %6729 = vst [vmem:[#allocation3 + $0x89] sm:$0x7f] %v6633
    %6730 = vst [vmem:[#allocation3 + $0x89] sm:$0x80] %v6634
    %6731 = vst [vmem:[#allocation3 + $0x91] sm:$0xff] %v6635
    %6732 = vst [vmem:[#allocation3 + $0x99] sm:$0x7f] %v6636
    %6733 = vst [vmem:[#allocation3 + $0x99] sm:$0x80] %v6637
    %6734 = vst [vmem:[#allocation3 + $0xa1] sm:$0xff] %v6638
    %6735 = vst [vmem:[#allocation3 + $0xa9] sm:$0x7f] %v6639
    %6736 = vst [vmem:[#allocation3 + $0xa9] sm:$0x80] %v6640
    %6737 = vst [vmem:[#allocation3 + $0xb1] sm:$0xff] %v6641
    %6738 = vst [vmem:[#allocation3 + $0xb9] sm:$0x7f] %v6642
    %6739 = vst [vmem:[#allocation3 + $0xb9] sm:$0x80] %v6643
    %6740 = vst [vmem:[#allocation3 + $0xc1] sm:$0xff] %v6644
    %6741 = vst [vmem:[#allocation3 + $0xc9] sm:$0x7f] %v6645
    %6742 = vst [vmem:[#allocation3 + $0xc9] sm:$0x80] %v6646
    %6743 = vst [vmem:[#allocation3 + $0xd1] sm:$0xff] %v6647
    %6744 = vst [vmem:[#allocation3 + $0xd9] sm:$0x7f] %v6648
    %6745 = vst [vmem:[#allocation3 + $0xd9] sm:$0x80] %v6649
    %6746 = vst [vmem:[#allocation3 + $0xe1] sm:$0xff] %v6650
    %6747 = vst [vmem:[#allocation3 + $0xe9] sm:$0x7f] %v6651
    %6748 = vst [vmem:[#allocation3 + $0xe9] sm:$0x80] %v6652
    %6749 = vst [vmem:[#allocation3 + $0xf1] sm:$0xff] %v6653
    %6750 = vst [vmem:[#allocation3 + $0xf9] sm:$0x7f] %v6654
    %6751 = vst [vmem:[#allocation3 + $0xf9] sm:$0x80] %v6655
    %6752 = vst [vmem:[#allocation3 + $0x101] sm:$0xff] %v6656
    %6753 = vst [vmem:[#allocation3 + $0x109] sm:$0x7f] %v6657
    %6754 = vst [vmem:[#allocation3 + $0x109] sm:$0x80] %v6658
    %6755 = vst [vmem:[#allocation3 + $0x111] sm:$0xff] %v6659
    %6756 = vst [vmem:[#allocation3 + $0x119] sm:$0x7f] %v6660
    %6757 = vst [vmem:[#allocation3 + $0x119] sm:$0x80] %v6661
    %6758 = vst [vmem:[#allocation3 + $0x121] sm:$0xff] %v6662
    %6759 = vst [vmem:[#allocation3 + $0x129] sm:$0x7f] %v6663
    %6760 = vst [vmem:[#allocation3 + $0x129] sm:$0x80] %v6664
    %6761 = vst [vmem:[#allocation3 + $0x131] sm:$0xff] %v6665
    %6762 = vst [vmem:[#allocation3 + $0x139] sm:$0x7f] %v6666
    %6763 = vst [vmem:[#allocation3 + $0x139] sm:$0x80] %v6667
    %6764 = vst [vmem:[#allocation3 + $0x141] sm:$0xff] %v6668
    %6765 = vst [vmem:[#allocation3 + $0x149] sm:$0x7f] %v6669
    %6766 = vst [vmem:[#allocation3 + $0x149] sm:$0x80] %v6670
    %6767 = vst [vmem:[#allocation3 + $0x151] sm:$0xff] %v6671
    %6768 = vst [vmem:[#allocation3 + $0x159] sm:$0x7f] %v6672
    %6769 = vst [vmem:[#allocation3 + $0x159] sm:$0x80] %v6673
    %6770 = vst [vmem:[#allocation3 + $0x161] sm:$0xff] %v6674
    %6771 = vst [vmem:[#allocation3 + $0x169] sm:$0x7f] %v6675
    %6772 = vst [vmem:[#allocation3 + $0x169] sm:$0x80] %v6676
    %6773 = vst [vmem:[#allocation3 + $0x171] sm:$0xff] %v6677
    %6774 = vst [vmem:[#allocation3 + $0x179] sm:$0x7f] %v6678
    %6775 = vst [vmem:[#allocation3 + $0x179] sm:$0x80] %v6679
    %6776 = vst [vmem:[#allocation3 + $0x181] sm:$0xff] %v6680
    %6777 = vst [vmem:[#allocation3 + $0x189] sm:$0x7f] %v6681
    %6778 = vst [vmem:[#allocation3 + $0x189] sm:$0x80] %v6682
    %6779 = vst [vmem:[#allocation3 + $0x191] sm:$0xff] %v6683
    %6780 = vst [vmem:[#allocation3 + $0x199] sm:$0x7f] %v6684
    %6781 = vst [vmem:[#allocation3 + $0x199] sm:$0x80] %v6685
    %6782 = vst [vmem:[#allocation3 + $0x1a1] sm:$0xff] %v6686
    %6783 = vst [vmem:[#allocation3 + $0x1a9] sm:$0x7f] %v6687
    %6784 = vst [vmem:[#allocation3 + $0x1a9] sm:$0x80] %v6688
    %6785 = vst [vmem:[#allocation3 + $0x1b1] sm:$0xff] %v6689
    %6786 = vst [vmem:[#allocation3 + $0x1b9] sm:$0x7f] %v6690
    %6787 = vst [vmem:[#allocation3 + $0x1b9] sm:$0x80] %v6691
    %6788 = vst [vmem:[#allocation3 + $0x1c1] sm:$0xff] %v6692
    %6789 = vst [vmem:[#allocation3 + $0x1c9] sm:$0x7f] %v6693
    %6790 = vst [vmem:[#allocation3 + $0x1c9] sm:$0x80] %v6694
    %6791 = vst [vmem:[#allocation3 + $0x1d1] sm:$0xff] %v6695
    %6792 = vst [vmem:[#allocation3 + $0x1d9] sm:$0x7f] %v6696
    %6793 = vst [vmem:[#allocation3 + $0x1d9] sm:$0x80] %v6697
    %6794 = vst [vmem:[#allocation3 + $0x1e1] sm:$0xff] %v6698
    %6795 = vst [vmem:[#allocation3 + $0x1e9] sm:$0x7f] %v6699
    %6796 = vst [vmem:[#allocation3 + $0x1e9] sm:$0x80] %v6700
    %6797 = vst [vmem:[#allocation3 + $0x1f1] sm:$0xff] %v6701
    %6798 = vst [vmem:[#allocation3 + $0x1f9] sm:$0x7f] %v6702
    %v6799 = vld [vmem:[#allocation3] sm:$0xff]
    %v6800 = vld [vmem:[#allocation3 + $0x8] sm:$0xff]
    %v6801 = vld [vmem:[#allocation3 + $0x10] sm:$0xff]
    %v6802 = vld [vmem:[#allocation3 + $0x18] sm:$0xff]
    %v6803 = vld [vmem:[#allocation3 + $0x20] sm:$0xff]
    %v6804 = vld [vmem:[#allocation3 + $0x28] sm:$0xff]
    %v6805 = vld [vmem:[#allocation3 + $0x30] sm:$0xff]
    %v6806 = vld [vmem:[#allocation3 + $0x38] sm:$0xff]
    %v6807 = vld [vmem:[#allocation3 + $0x40] sm:$0xff]
    %v6808 = vld [vmem:[#allocation3 + $0x48] sm:$0xff]
    %v6809 = vld [vmem:[#allocation3 + $0x50] sm:$0xff]
    %v6810 = vld [vmem:[#allocation3 + $0x58] sm:$0xff]
    %v6811 = vld [vmem:[#allocation3 + $0x60] sm:$0xff]
    %v6812 = vld [vmem:[#allocation3 + $0x68] sm:$0xff]
    %v6813 = vld [vmem:[#allocation3 + $0x70] sm:$0xff]
    %v6814 = vld [vmem:[#allocation3 + $0x78] sm:$0xff]
    %v6815 = vld [vmem:[#allocation3 + $0x80] sm:$0xff]
    %v6816 = vld [vmem:[#allocation3 + $0x88] sm:$0xff]
    %v6817 = vld [vmem:[#allocation3 + $0x90] sm:$0xff]
    %v6818 = vld [vmem:[#allocation3 + $0x98] sm:$0xff]
    %v6819 = vld [vmem:[#allocation3 + $0xa0] sm:$0xff]
    %v6820 = vld [vmem:[#allocation3 + $0xa8] sm:$0xff]
    %v6821 = vld [vmem:[#allocation3 + $0xb0] sm:$0xff]
    %v6822 = vld [vmem:[#allocation3 + $0xb8] sm:$0xff]
    %v6823 = vld [vmem:[#allocation3 + $0xc0] sm:$0xff]
    %v6824 = vld [vmem:[#allocation3 + $0xc8] sm:$0xff]
    %v6825 = vld [vmem:[#allocation3 + $0xd0] sm:$0xff]
    %v6826 = vld [vmem:[#allocation3 + $0xd8] sm:$0xff]
    %v6827 = vld [vmem:[#allocation3 + $0xe0] sm:$0xff]
    %v6828 = vld [vmem:[#allocation3 + $0xe8] sm:$0xff]
    %v6829 = vld [vmem:[#allocation3 + $0xf0] sm:$0xff]
    %v6830 = vld [vmem:[#allocation3 + $0xf8] sm:$0xff]
    %v6831 = vld [vmem:[#allocation3 + $0x100] sm:$0xff]
    %v6832 = vld [vmem:[#allocation3 + $0x108] sm:$0xff]
    %v6833 = vld [vmem:[#allocation3 + $0x110] sm:$0xff]
    %v6834 = vld [vmem:[#allocation3 + $0x118] sm:$0xff]
    %v6835 = vld [vmem:[#allocation3 + $0x120] sm:$0xff]
    %v6836 = vld [vmem:[#allocation3 + $0x128] sm:$0xff]
    %v6837 = vld [vmem:[#allocation3 + $0x130] sm:$0xff]
    %v6838 = vld [vmem:[#allocation3 + $0x138] sm:$0xff]
    %v6839 = vld [vmem:[#allocation3 + $0x140] sm:$0xff]
    %v6840 = vld [vmem:[#allocation3 + $0x148] sm:$0xff]
    %v6841 = vld [vmem:[#allocation3 + $0x150] sm:$0xff]
    %v6842 = vld [vmem:[#allocation3 + $0x158] sm:$0xff]
    %v6843 = vld [vmem:[#allocation3 + $0x160] sm:$0xff]
    %v6844 = vld [vmem:[#allocation3 + $0x168] sm:$0xff]
    %v6845 = vld [vmem:[#allocation3 + $0x170] sm:$0xff]
    %v6846 = vld [vmem:[#allocation3 + $0x178] sm:$0xff]
    %v6847 = vld [vmem:[#allocation3 + $0x180] sm:$0xff]
    %v6848 = vld [vmem:[#allocation3 + $0x188] sm:$0xff]
    %v6849 = vld [vmem:[#allocation3 + $0x190] sm:$0xff]
    %v6850 = vld [vmem:[#allocation3 + $0x198] sm:$0xff]
    %v6851 = vld [vmem:[#allocation3 + $0x1a0] sm:$0xff]
    %v6852 = vld [vmem:[#allocation3 + $0x1a8] sm:$0xff]
    %v6853 = vld [vmem:[#allocation3 + $0x1b0] sm:$0xff]
    %v6854 = vld [vmem:[#allocation3 + $0x1b8] sm:$0xff]
    %v6855 = vld [vmem:[#allocation3 + $0x1c0] sm:$0xff]
    %v6856 = vld [vmem:[#allocation3 + $0x1c8] sm:$0xff]
    %v6857 = vld [vmem:[#allocation3 + $0x1d0] sm:$0xff]
    %v6858 = vld [vmem:[#allocation3 + $0x1d8] sm:$0xff]
    %v6859 = vld [vmem:[#allocation3 + $0x1e0] sm:$0xff]
    %v6860 = vld [vmem:[#allocation3 + $0x1e8] sm:$0xff]
    %v6861 = vld [vmem:[#allocation3 + $0x1f0] sm:$0xff]
    %v6862 = vld [vmem:[#allocation3 + $0x1f8] sm:$0xff]
    %v6863 = vadd.f32 %v6799, %v6800
    %v6864 = vadd.f32 %v6863, %v6801
    %v6865 = vadd.f32 %v6864, %v6802
    %v6866 = vadd.f32 %v6865, %v6803
    %v6867 = vadd.f32 %v6866, %v6804
    %v6868 = vadd.f32 %v6867, %v6805
    %v6869 = vadd.f32 %v6868, %v6806
    %v6870 = vadd.f32 %v6869, %v6807
    %v6871 = vadd.f32 %v6870, %v6808
    %v6872 = vadd.f32 %v6871, %v6809
    %v6873 = vadd.f32 %v6872, %v6810
    %v6874 = vadd.f32 %v6873, %v6811
    %v6875 = vadd.f32 %v6874, %v6812
    %v6876 = vadd.f32 %v6875, %v6813
    %v6877 = vadd.f32 %v6876, %v6814
    %v6878 = vadd.f32 %v6877, %v6815
    %v6879 = vadd.f32 %v6878, %v6816
    %v6880 = vadd.f32 %v6879, %v6817
    %v6881 = vadd.f32 %v6880, %v6818
    %v6882 = vadd.f32 %v6881, %v6819
    %v6883 = vadd.f32 %v6882, %v6820
    %v6884 = vadd.f32 %v6883, %v6821
    %v6885 = vadd.f32 %v6884, %v6822
    %v6886 = vadd.f32 %v6885, %v6823
    %v6887 = vadd.f32 %v6886, %v6824
    %v6888 = vadd.f32 %v6887, %v6825
    %v6889 = vadd.f32 %v6888, %v6826
    %v6890 = vadd.f32 %v6889, %v6827
    %v6891 = vadd.f32 %v6890, %v6828
    %v6892 = vadd.f32 %v6891, %v6829
    %v6893 = vadd.f32 %v6892, %v6830
    %v6894 = vrot.slane %v6893, 4
    %v6895 = vadd.f32 %v6893, %v6894
    %v6896 = vrot.slane %v6895, 2
    %v6897 = vadd.f32 %v6895, %v6896
    %v6898 = vrot.slane %v6897, 1
    %v6899 = vadd.f32 %v6897, %v6898
    %v6900 = vadd.f32 %v6831, %v6832
    %v6901 = vadd.f32 %v6900, %v6833
    %v6902 = vadd.f32 %v6901, %v6834
    %v6903 = vadd.f32 %v6902, %v6835
    %v6904 = vadd.f32 %v6903, %v6836
    %v6905 = vadd.f32 %v6904, %v6837
    %v6906 = vadd.f32 %v6905, %v6838
    %v6907 = vadd.f32 %v6906, %v6839
    %v6908 = vadd.f32 %v6907, %v6840
    %v6909 = vadd.f32 %v6908, %v6841
    %v6910 = vadd.f32 %v6909, %v6842
    %v6911 = vadd.f32 %v6910, %v6843
    %v6912 = vadd.f32 %v6911, %v6844
    %v6913 = vadd.f32 %v6912, %v6845
    %v6914 = vadd.f32 %v6913, %v6846
    %v6915 = vadd.f32 %v6914, %v6847
    %v6916 = vadd.f32 %v6915, %v6848
    %v6917 = vadd.f32 %v6916, %v6849
    %v6918 = vadd.f32 %v6917, %v6850
    %v6919 = vadd.f32 %v6918, %v6851
    %v6920 = vadd.f32 %v6919, %v6852
    %v6921 = vadd.f32 %v6920, %v6853
    %v6922 = vadd.f32 %v6921, %v6854
    %v6923 = vadd.f32 %v6922, %v6855
    %v6924 = vadd.f32 %v6923, %v6856
    %v6925 = vadd.f32 %v6924, %v6857
    %v6926 = vadd.f32 %v6925, %v6858
    %v6927 = vadd.f32 %v6926, %v6859
    %v6928 = vadd.f32 %v6927, %v6860
    %v6929 = vadd.f32 %v6928, %v6861
    %v6930 = vadd.f32 %v6929, %v6862
    %v6931 = vrot.slane %v6930, 4
    %v6932 = vadd.f32 %v6930, %v6931
    %v6933 = vrot.slane %v6932, 2
    %v6934 = vadd.f32 %v6932, %v6933
    %v6935 = vrot.slane %v6934, 1
    %v6936 = vadd.f32 %v6934, %v6935
    %v6937 = vrcp.pop 256.0
    %v6938 = vmul.f32 %v6899, %v6937
    %v6939 = vmul.f32 %v6936, %v6937
    %v6940 = vld [vmem:[#allocation10] sm:$0xff]
    %v6941 = vld [vmem:[#allocation10 + $0x8] sm:$0xff]
    %v6942 = vld [vmem:[#allocation10 + $0x10] sm:$0xff]
    %v6943 = vld [vmem:[#allocation10 + $0x18] sm:$0xff]
    %v6944 = vld [vmem:[#allocation10 + $0x20] sm:$0xff]
    %v6945 = vld [vmem:[#allocation10 + $0x28] sm:$0xff]
    %v6946 = vld [vmem:[#allocation10 + $0x30] sm:$0xff]
    %v6947 = vld [vmem:[#allocation10 + $0x38] sm:$0xff]
    %v6948 = vld [vmem:[#allocation10 + $0x40] sm:$0xff]
    %v6949 = vld [vmem:[#allocation10 + $0x48] sm:$0xff]
    %v6950 = vld [vmem:[#allocation10 + $0x50] sm:$0xff]
    %v6951 = vld [vmem:[#allocation10 + $0x58] sm:$0xff]
    %v6952 = vld [vmem:[#allocation10 + $0x60] sm:$0xff]
    %v6953 = vld [vmem:[#allocation10 + $0x68] sm:$0xff]
    %v6954 = vld [vmem:[#allocation10 + $0x70] sm:$0xff]
    %v6955 = vld [vmem:[#allocation10 + $0x78] sm:$0xff]
    %v6956 = vld [vmem:[%s6] sm:$0x1]
    %v6958 = vlaneseq
    %v6959 = vshrl.u32 %v6958, 7
    %v6960 = vsub.s32 0, %v6959
    %v6961 = vrot.slane %v6956, %v6960
    %vm6965 = vcmask 1041409
    %v6966 = vsel %vm6965, %v6939, %v6938
    %6968 = vmatprep.subr.mxu0 0.0
    %6969 = vmatpush1.msra.mxu0 %v6940
    %6970 = vmatprep.subr.mxu0 0.0
    %6971 = vmatpush1.msra.mxu0 %v6941
    %6972 = vmatprep.subr.mxu0 0.0
    %6973 = vmatpush1.msra.mxu0 %v6942
    %6974 = vmatprep.subr.mxu0 0.0
    %6975 = vmatpush1.msra.mxu0 %v6943
    %6976 = vmatprep.subr.mxu0 0.0
    %6977 = vmatpush1.msra.mxu0 %v6944
    %6978 = vmatprep.subr.mxu0 0.0
    %6979 = vmatpush1.msra.mxu0 %v6945
    %6980 = vmatprep.subr.mxu0 0.0
    %6981 = vmatpush1.msra.mxu0 %v6946
    %6982 = vmatprep.subr.mxu0 0.0
    %6983 = vmatpush1.msra.mxu0 %v6947
    %6984 = vmatprep.subr.mxu0 0.0
    %6985 = vmatpush1.msra.mxu0 %v6948
    %6986 = vmatprep.subr.mxu0 0.0
    %6987 = vmatpush1.msra.mxu0 %v6949
    %6988 = vmatprep.subr.mxu0 0.0
    %6989 = vmatpush1.msra.mxu0 %v6950
    %6990 = vmatprep.subr.mxu0 0.0
    %6991 = vmatpush1.msra.mxu0 %v6951
    %6992 = vmatprep.subr.mxu0 0.0
    %6993 = vmatpush1.msra.mxu0 %v6952
    %6994 = vmatprep.subr.mxu0 0.0
    %6995 = vmatpush1.msra.mxu0 %v6953
    %6996 = vmatprep.subr.mxu0 0.0
    %6997 = vmatpush1.msra.mxu0 %v6954
    %6998 = vmatprep.subr.mxu0 0.0
    %6999 = vmatpush1.msra.mxu0 %v6955
    %7000 = vmatprep.subr.mxu0 0.0
    %7001 = vmatpush1.msra.mxu0 0.0
    %7002 = vmatprep.subr.mxu0 0.0
    %7003 = vmatpush1.msra.mxu0 0.0
    %7004 = vmatprep.subr.mxu0 0.0
    %7005 = vmatpush1.msra.mxu0 0.0
    %7006 = vmatprep.subr.mxu0 0.0
    %7007 = vmatpush1.msra.mxu0 0.0
    %7008 = vmatprep.subr.mxu0 0.0
    %7009 = vmatpush1.msra.mxu0 0.0
    %7010 = vmatprep.subr.mxu0 0.0
    %7011 = vmatpush1.msra.mxu0 0.0
    %7012 = vmatprep.subr.mxu0 0.0
    %7013 = vmatpush1.msra.mxu0 0.0
    %7014 = vmatprep.subr.mxu0 0.0
    %7015 = vmatpush1.msra.mxu0 0.0
    %7016 = vmatprep.subr.mxu0 0.0
    %7017 = vmatpush1.msra.mxu0 0.0
    %7018 = vmatprep.subr.mxu0 0.0
    %7019 = vmatpush1.msra.mxu0 0.0
    %7020 = vmatprep.subr.mxu0 0.0
    %7021 = vmatpush1.msra.mxu0 0.0
    %7022 = vmatprep.subr.mxu0 0.0
    %7023 = vmatpush1.msra.mxu0 0.0
    %7024 = vmatprep.subr.mxu0 0.0
    %7025 = vmatpush1.msra.mxu0 0.0
    %7026 = vmatprep.subr.mxu0 0.0
    %7027 = vmatpush1.msra.mxu0 0.0
    %7028 = vmatprep.subr.mxu0 0.0
    %7029 = vmatpush1.msra.mxu0 0.0
    %7030 = vmatprep.subr.mxu0 0.0
    %7031 = vmatpush1.msra.mxu0 0.0
    %7032 = vmatprep.mubr.f32.mxu0 0.0
    %7033 = vmatmul.mubr.f32.gmra.mrb[0].mxu0 %v6966
    %v7034 = vpop.f32.mrb[0].mxu0
    %v7035 = vadd.f32 %v6961, %v7034
    %v7036 = vpop.f32.mrb[0].mxu0
    %7037 = vdwg.mxu0
    %v7038 = vxor.u32 %v7035, 2147483648
    %v7039 = vmul.f32 %v7038, 1.442695
    %v7040 = vpow.pop %v7039
    %v7041 = vadd.f32 %v7040, 1.0
    %v7042 = vrcp.pop %v7041
    %v7043 = vmul.f32 1.0, %v7042
    %v7044 = vmul.f32 %v7035, %v7043
    %v7045 = vld [vmem:[#allocation12] sm:$0xff]
    %v7046 = vld [vmem:[#allocation12 + $0x8] sm:$0xff]
    %v7047 = vld [vmem:[#allocation12 + $0x10] sm:$0xff]
    %v7048 = vld [vmem:[#allocation12 + $0x18] sm:$0xff]
    %v7049 = vld [vmem:[#allocation12 + $0x20] sm:$0xff]
    %v7050 = vld [vmem:[#allocation12 + $0x28] sm:$0xff]
    %v7051 = vld [vmem:[#allocation12 + $0x30] sm:$0xff]
    %v7052 = vld [vmem:[#allocation12 + $0x38] sm:$0xff]
    %v7053 = vld [vmem:[#allocation12 + $0x40] sm:$0xff]
    %v7054 = vld [vmem:[#allocation12 + $0x48] sm:$0xff]
    %v7055 = vld [vmem:[#allocation12 + $0x50] sm:$0xff]
    %v7056 = vld [vmem:[#allocation12 + $0x58] sm:$0xff]
    %v7057 = vld [vmem:[#allocation12 + $0x60] sm:$0xff]
    %v7058 = vld [vmem:[#allocation12 + $0x68] sm:$0xff]
    %v7059 = vld [vmem:[#allocation12 + $0x70] sm:$0xff]
    %v7060 = vld [vmem:[#allocation12 + $0x78] sm:$0xff]
    %v7061 = vld [vmem:[%s8] sm:$0x1]
    %v7063 = vlaneseq
    %v7064 = vshrl.u32 %v7063, 7
    %v7065 = vsub.s32 0, %v7064
    %v7066 = vrot.slane %v7061, %v7065
    %7068 = vmatprep.subr.mxu0 0.0
    %7069 = vmatpush1.msra.mxu0 %v7045
    %7070 = vmatprep.subr.mxu0 0.0
    %7071 = vmatpush1.msra.mxu0 %v7046
    %7072 = vmatprep.subr.mxu0 0.0
    %7073 = vmatpush1.msra.mxu0 %v7047
    %7074 = vmatprep.subr.mxu0 0.0
    %7075 = vmatpush1.msra.mxu0 %v7048
    %7076 = vmatprep.subr.mxu0 0.0
    %7077 = vmatpush1.msra.mxu0 %v7049
    %7078 = vmatprep.subr.mxu0 0.0
    %7079 = vmatpush1.msra.mxu0 %v7050
    %7080 = vmatprep.subr.mxu0 0.0
    %7081 = vmatpush1.msra.mxu0 %v7051
    %7082 = vmatprep.subr.mxu0 0.0
    %7083 = vmatpush1.msra.mxu0 %v7052
    %7084 = vmatprep.subr.mxu0 0.0
    %7085 = vmatpush1.msra.mxu0 %v7053
    %7086 = vmatprep.subr.mxu0 0.0
    %7087 = vmatpush1.msra.mxu0 %v7054
    %7088 = vmatprep.subr.mxu0 0.0
    %7089 = vmatpush1.msra.mxu0 %v7055
    %7090 = vmatprep.subr.mxu0 0.0
    %7091 = vmatpush1.msra.mxu0 %v7056
    %7092 = vmatprep.subr.mxu0 0.0
    %7093 = vmatpush1.msra.mxu0 %v7057
    %7094 = vmatprep.subr.mxu0 0.0
    %7095 = vmatpush1.msra.mxu0 %v7058
    %7096 = vmatprep.subr.mxu0 0.0
    %7097 = vmatpush1.msra.mxu0 %v7059
    %7098 = vmatprep.subr.mxu0 0.0
    %7099 = vmatpush1.msra.mxu0 %v7060
    %7100 = vmatprep.subr.mxu0 0.0
    %7101 = vmatpush1.msra.mxu0 0.0
    %7102 = vmatprep.subr.mxu0 0.0
    %7103 = vmatpush1.msra.mxu0 0.0
    %7104 = vmatprep.subr.mxu0 0.0
    %7105 = vmatpush1.msra.mxu0 0.0
    %7106 = vmatprep.subr.mxu0 0.0
    %7107 = vmatpush1.msra.mxu0 0.0
    %7108 = vmatprep.subr.mxu0 0.0
    %7109 = vmatpush1.msra.mxu0 0.0
    %7110 = vmatprep.subr.mxu0 0.0
    %7111 = vmatpush1.msra.mxu0 0.0
    %7112 = vmatprep.subr.mxu0 0.0
    %7113 = vmatpush1.msra.mxu0 0.0
    %7114 = vmatprep.subr.mxu0 0.0
    %7115 = vmatpush1.msra.mxu0 0.0
    %7116 = vmatprep.subr.mxu0 0.0
    %7117 = vmatpush1.msra.mxu0 0.0
    %7118 = vmatprep.subr.mxu0 0.0
    %7119 = vmatpush1.msra.mxu0 0.0
    %7120 = vmatprep.subr.mxu0 0.0
    %7121 = vmatpush1.msra.mxu0 0.0
    %7122 = vmatprep.subr.mxu0 0.0
    %7123 = vmatpush1.msra.mxu0 0.0
    %7124 = vmatprep.subr.mxu0 0.0
    %7125 = vmatpush1.msra.mxu0 0.0
    %7126 = vmatprep.subr.mxu0 0.0
    %7127 = vmatpush1.msra.mxu0 0.0
    %7128 = vmatprep.subr.mxu0 0.0
    %7129 = vmatpush1.msra.mxu0 0.0
    %7130 = vmatprep.subr.mxu0 0.0
    %7131 = vmatpush1.msra.mxu0 0.0
    %7132 = vmatprep.mubr.f32.mxu0 0.0
    %7133 = vmatmul.mubr.f32.gmra.mrb[0].mxu0 %v7044
    %v7134 = vpop.f32.mrb[0].mxu0
    %v7135 = vadd.f32 %v7066, %v7134
    %v7136 = vpop.f32.mrb[0].mxu0
    %7137 = vdwg.mxu0
    %v7138 = vxor.u32 %v7135, 2147483648
    %v7139 = vmul.f32 %v7138, 1.442695
    %v7140 = vpow.pop %v7139
    %v7141 = vadd.f32 %v7140, 1.0
    %v7142 = vrcp.pop %v7141
    %v7143 = vmul.f32 1.0, %v7142
    %v7146 = vunpack.c.l.s4 1966171168
    %v7147 = vunpack.c.0.s8 %v7146
    %v7148 = vlaneseq
    %v7149 = vshrl.u32 %v7148, 7
    %v7150 = vsub.s32 %v7147, %v7149
    %v7151 = vrot.slane %v7143, %v7150
    %v7152 = vcombine.high %v7151, %v7151
    %v7154 = vunpack.c.l.s4 1966171168
    %v7155 = vunpack.c.0.s8 %v7154
    %v7156 = vlaneseq
    %v7157 = vshrl.u32 %v7156, 7
    %v7158 = vsub.s32 %v7155, %v7157
    %v7159 = vrot.slane %v7151, %v7158
    %v7161 = vunpack.c.l.s4 1966171168
    %v7162 = vunpack.c.0.s8 %v7161
    %v7163 = vlaneseq
    %v7164 = vshrl.u32 %v7163, 7
    %v7165 = vsub.s32 %v7162, %v7164
    %v7166 = vrot.slane %v7152, %v7165
    %v7167 = vlaneseq
    %v7168 = vshrl.u32 %v7167, 7
    %v7169 = vsub.s32 0, %v7168
    %v7170 = vrot.slane %v7159, %v7169
    %v7171 = vlaneseq
    %v7172 = vshrl.u32 %v7171, 7
    %v7173 = vsub.s32 0, %v7172
    %v7174 = vrot.slane %v7166, %v7173
    %v7177 = vmul.f32 %v6799, %v7170
    %v7178 = vmul.f32 %v6800, %v7170
    %v7179 = vmul.f32 %v6801, %v7170
    %v7180 = vmul.f32 %v6802, %v7170
    %v7181 = vmul.f32 %v6803, %v7170
    %v7182 = vmul.f32 %v6804, %v7170
    %v7183 = vmul.f32 %v6805, %v7170
    %v7184 = vmul.f32 %v6806, %v7170
    %v7185 = vmul.f32 %v6807, %v7170
    %v7186 = vmul.f32 %v6808, %v7170
    %v7187 = vmul.f32 %v6809, %v7170
    %v7188 = vmul.f32 %v6810, %v7170
    %v7189 = vmul.f32 %v6811, %v7170
    %v7190 = vmul.f32 %v6812, %v7170
    %v7191 = vmul.f32 %v6813, %v7170
    %v7192 = vmul.f32 %v6814, %v7170
    %v7193 = vmul.f32 %v6815, %v7170
    %v7194 = vmul.f32 %v6816, %v7170
    %v7195 = vmul.f32 %v6817, %v7170
    %v7196 = vmul.f32 %v6818, %v7170
    %v7197 = vmul.f32 %v6819, %v7170
    %v7198 = vmul.f32 %v6820, %v7170
    %v7199 = vmul.f32 %v6821, %v7170
    %v7200 = vmul.f32 %v6822, %v7170
    %v7201 = vmul.f32 %v6823, %v7170
    %v7202 = vmul.f32 %v6824, %v7170
    %v7203 = vmul.f32 %v6825, %v7170
    %v7204 = vmul.f32 %v6826, %v7170
    %v7205 = vmul.f32 %v6827, %v7170
    %v7206 = vmul.f32 %v6828, %v7170
    %v7207 = vmul.f32 %v6829, %v7170
    %v7208 = vmul.f32 %v6830, %v7170
    %v7209 = vmul.f32 %v6831, %v7174
    %v7210 = vmul.f32 %v6832, %v7174
    %v7211 = vmul.f32 %v6833, %v7174
    %v7212 = vmul.f32 %v6834, %v7174
    %v7213 = vmul.f32 %v6835, %v7174
    %v7214 = vmul.f32 %v6836, %v7174
    %v7215 = vmul.f32 %v6837, %v7174
    %v7216 = vmul.f32 %v6838, %v7174
    %v7217 = vmul.f32 %v6839, %v7174
    %v7218 = vmul.f32 %v6840, %v7174
    %v7219 = vmul.f32 %v6841, %v7174
    %v7220 = vmul.f32 %v6842, %v7174
    %v7221 = vmul.f32 %v6843, %v7174
    %v7222 = vmul.f32 %v6844, %v7174
    %v7223 = vmul.f32 %v6845, %v7174
    %v7224 = vmul.f32 %v6846, %v7174
    %v7225 = vmul.f32 %v6847, %v7174
    %v7226 = vmul.f32 %v6848, %v7174
    %v7227 = vmul.f32 %v6849, %v7174
    %v7228 = vmul.f32 %v6850, %v7174
    %v7229 = vmul.f32 %v6851, %v7174
    %v7230 = vmul.f32 %v6852, %v7174
    %v7231 = vmul.f32 %v6853, %v7174
    %v7232 = vmul.f32 %v6854, %v7174
    %v7233 = vmul.f32 %v6855, %v7174
    %v7234 = vmul.f32 %v6856, %v7174
    %v7235 = vmul.f32 %v6857, %v7174
    %v7236 = vmul.f32 %v6858, %v7174
    %v7237 = vmul.f32 %v6859, %v7174
    %v7238 = vmul.f32 %v6860, %v7174
    %v7239 = vmul.f32 %v6861, %v7174
    %v7240 = vmul.f32 %v6862, %v7174
    %v7241 = vpack.c.bf16 %v7178, %v7177
    %v7242 = vpack.c.bf16 %v7180, %v7179
    %v7243 = vpack.c.bf16 %v7182, %v7181
    %v7244 = vpack.c.bf16 %v7184, %v7183
    %v7245 = vpack.c.bf16 %v7186, %v7185
    %v7246 = vpack.c.bf16 %v7188, %v7187
    %v7247 = vpack.c.bf16 %v7190, %v7189
    %v7248 = vpack.c.bf16 %v7192, %v7191
    %v7249 = vpack.c.bf16 %v7194, %v7193
    %v7250 = vpack.c.bf16 %v7196, %v7195
    %v7251 = vpack.c.bf16 %v7198, %v7197
    %v7252 = vpack.c.bf16 %v7200, %v7199
    %v7253 = vpack.c.bf16 %v7202, %v7201
    %v7254 = vpack.c.bf16 %v7204, %v7203
    %v7255 = vpack.c.bf16 %v7206, %v7205
    %v7256 = vpack.c.bf16 %v7208, %v7207
    %v7257 = vpack.c.bf16 %v7210, %v7209
    %v7258 = vpack.c.bf16 %v7212, %v7211
    %v7259 = vpack.c.bf16 %v7214, %v7213
    %v7260 = vpack.c.bf16 %v7216, %v7215
    %v7261 = vpack.c.bf16 %v7218, %v7217
    %v7262 = vpack.c.bf16 %v7220, %v7219
    %v7263 = vpack.c.bf16 %v7222, %v7221
    %v7264 = vpack.c.bf16 %v7224, %v7223
    %v7265 = vpack.c.bf16 %v7226, %v7225
    %v7266 = vpack.c.bf16 %v7228, %v7227
    %v7267 = vpack.c.bf16 %v7230, %v7229
    %v7268 = vpack.c.bf16 %v7232, %v7231
    %v7269 = vpack.c.bf16 %v7234, %v7233
    %v7270 = vpack.c.bf16 %v7236, %v7235
    %v7271 = vpack.c.bf16 %v7238, %v7237
    %v7272 = vpack.c.bf16 %v7240, %v7239
    %v7273 = vld [vmem:[#allocation13] sm:$0xf]
    %v7274 = vld [vmem:[#allocation13 + $0x4] sm:$0xf]
    %v7275 = vld [vmem:[#allocation13 + $0x8] sm:$0xf]
    %v7276 = vld [vmem:[#allocation13 + $0xc] sm:$0xf]
    %v7277 = vld [vmem:[#allocation13 + $0x10] sm:$0xf]
    %v7278 = vld [vmem:[#allocation13 + $0x14] sm:$0xf]
    %v7279 = vld [vmem:[#allocation13 + $0x18] sm:$0xf]
    %v7280 = vld [vmem:[#allocation13 + $0x1c] sm:$0xf]
    %v7281 = vld [vmem:[#allocation13 + $0x20] sm:$0xf]
    %v7282 = vld [vmem:[#allocation13 + $0x24] sm:$0xf]
    %v7283 = vld [vmem:[#allocation13 + $0x28] sm:$0xf]
    %v7284 = vld [vmem:[#allocation13 + $0x2c] sm:$0xf]
    %v7285 = vld [vmem:[#allocation13 + $0x30] sm:$0xf]
    %v7286 = vld [vmem:[#allocation13 + $0x34] sm:$0xf]
    %v7287 = vld [vmem:[#allocation13 + $0x38] sm:$0xf]
    %v7288 = vld [vmem:[#allocation13 + $0x3c] sm:$0xf]
    %v7289 = vld [vmem:[%s10] sm:$0x1]
    %v7291 = vlaneseq
    %v7292 = vshrl.u32 %v7291, 7
    %v7293 = vsub.s32 0, %v7292
    %v7294 = vrot.slane %v7289, %v7293
    %v7312 = vunpack.c.l.b16 %v7273
    %v7313 = vunpack.c.l.b16 %v7274
    %v7314 = vunpack.c.l.b16 %v7275
    %v7315 = vunpack.c.l.b16 %v7276
    %v7316 = vunpack.c.l.b16 %v7277
    %v7317 = vunpack.c.l.b16 %v7278
    %v7318 = vunpack.c.l.b16 %v7279
    %v7319 = vunpack.c.l.b16 %v7280
    %v7320 = vunpack.c.l.b16 %v7281
    %v7321 = vunpack.c.l.b16 %v7282
    %v7322 = vunpack.c.l.b16 %v7283
    %v7323 = vunpack.c.l.b16 %v7284
    %v7324 = vunpack.c.l.b16 %v7285
    %v7325 = vunpack.c.l.b16 %v7286
    %v7326 = vunpack.c.l.b16 %v7287
    %v7327 = vunpack.c.l.b16 %v7288
    %v7328 = vpack.c.b16 %v7313, %v7312
    %v7329 = vpack.c.b16 %v7315, %v7314
    %v7330 = vpack.c.b16 %v7317, %v7316
    %v7331 = vpack.c.b16 %v7319, %v7318
    %v7332 = vpack.c.b16 %v7321, %v7320
    %v7333 = vpack.c.b16 %v7323, %v7322
    %v7334 = vpack.c.b16 %v7325, %v7324
    %v7335 = vpack.c.b16 %v7327, %v7326
    %7344 = vmatprep.subr.bf16.mxu0 0
    %7345 = vmatpush1.bf16.msra.mxu0 %v7328
    %7346 = vmatprep.subr.bf16.mxu0 0
    %7347 = vmatpush1.bf16.msra.mxu0 %v7329
    %7348 = vmatprep.subr.bf16.mxu0 0
    %7349 = vmatpush1.bf16.msra.mxu0 %v7330
    %7350 = vmatprep.subr.bf16.mxu0 0
    %7351 = vmatpush1.bf16.msra.mxu0 %v7331
    %7352 = vmatprep.subr.bf16.mxu0 0
    %7353 = vmatpush1.bf16.msra.mxu0 %v7332
    %7354 = vmatprep.subr.bf16.mxu0 0
    %7355 = vmatpush1.bf16.msra.mxu0 %v7333
    %7356 = vmatprep.subr.bf16.mxu0 0
    %7357 = vmatpush1.bf16.msra.mxu0 %v7334
    %7358 = vmatprep.subr.bf16.mxu0 0
    %7359 = vmatpush1.bf16.msra.mxu0 %v7335
    %7360 = vmatprep.subr.bf16.mxu0 0
    %7361 = vmatpush1.bf16.msra.mxu0 0
    %7362 = vmatprep.subr.bf16.mxu0 0
    %7363 = vmatpush1.bf16.msra.mxu0 0
    %7364 = vmatprep.subr.bf16.mxu0 0
    %7365 = vmatpush1.bf16.msra.mxu0 0
    %7366 = vmatprep.subr.bf16.mxu0 0
    %7367 = vmatpush1.bf16.msra.mxu0 0
    %7368 = vmatprep.subr.bf16.mxu0 0
    %7369 = vmatpush1.bf16.msra.mxu0 0
    %7370 = vmatprep.subr.bf16.mxu0 0
    %7371 = vmatpush1.bf16.msra.mxu0 0
    %7372 = vmatprep.subr.bf16.mxu0 0
    %7373 = vmatpush1.bf16.msra.mxu0 0
    %7374 = vmatprep.subr.bf16.mxu0 0
    %7375 = vmatpush1.bf16.msra.mxu0 0
    %7376 = vmatprep.mubr.bf16.mxu0 0
    %7377 = vmatmul.mubr.bf16.gmra.mrb[0].mxu0 %v7241
    %v7378 = vpop.f32.mrb[0].mxu0
    %v7379 = vadd.f32 %v7294, %v7378
    %v7380 = vpop.f32.mrb[0].mxu0
    %v7381 = vpop.f32.mrb[0].mxu0
    %v7382 = vadd.f32 %v7294, %v7381
    %v7383 = vpop.f32.mrb[0].mxu0
    %7384 = vmatprep.mubr.bf16.mxu0 0
    %7385 = vmatmul.mubr.bf16.gmra.mrb[0].mxu0 %v7242
    %v7386 = vpop.f32.mrb[0].mxu0
    %v7387 = vadd.f32 %v7294, %v7386
    %v7388 = vpop.f32.mrb[0].mxu0
    %v7389 = vpop.f32.mrb[0].mxu0
    %v7390 = vadd.f32 %v7294, %v7389
    %v7391 = vpop.f32.mrb[0].mxu0
    %7392 = vmatprep.mubr.bf16.mxu0 0
    %7393 = vmatmul.mubr.bf16.gmra.mrb[0].mxu0 %v7243
    %v7394 = vpop.f32.mrb[0].mxu0
    %v7395 = vadd.f32 %v7294, %v7394
    %v7396 = vpop.f32.mrb[0].mxu0
    %v7397 = vpop.f32.mrb[0].mxu0
    %v7398 = vadd.f32 %v7294, %v7397
    %v7399 = vpop.f32.mrb[0].mxu0
    %7400 = vmatprep.mubr.bf16.mxu0 0
    %7401 = vmatmul.mubr.bf16.gmra.mrb[0].mxu0 %v7244
    %v7402 = vpop.f32.mrb[0].mxu0
    %v7403 = vadd.f32 %v7294, %v7402
    %v7404 = vpop.f32.mrb[0].mxu0
    %v7405 = vpop.f32.mrb[0].mxu0
    %v7406 = vadd.f32 %v7294, %v7405
    %v7407 = vpop.f32.mrb[0].mxu0
    %7408 = vmatprep.mubr.bf16.mxu0 0
    %7409 = vmatmul.mubr.bf16.gmra.mrb[0].mxu0 %v7245
    %v7410 = vpop.f32.mrb[0].mxu0
    %v7411 = vadd.f32 %v7294, %v7410
    %v7412 = vpop.f32.mrb[0].mxu0
    %v7413 = vpop.f32.mrb[0].mxu0
    %v7414 = vadd.f32 %v7294, %v7413
    %v7415 = vpop.f32.mrb[0].mxu0
    %7416 = vmatprep.mubr.bf16.mxu0 0
    %7417 = vmatmul.mubr.bf16.gmra.mrb[0].mxu0 %v7246
    %v7418 = vpop.f32.mrb[0].mxu0
    %v7419 = vadd.f32 %v7294, %v7418
    %v7420 = vpop.f32.mrb[0].mxu0
    %v7421 = vpop.f32.mrb[0].mxu0
    %v7422 = vadd.f32 %v7294, %v7421
    %v7423 = vpop.f32.mrb[0].mxu0
    %7424 = vmatprep.mubr.bf16.mxu0 0
    %7425 = vmatmul.mubr.bf16.gmra.mrb[0].mxu0 %v7247
    %v7426 = vpop.f32.mrb[0].mxu0
    %v7427 = vadd.f32 %v7294, %v7426
    %v7428 = vpop.f32.mrb[0].mxu0
    %v7429 = vpop.f32.mrb[0].mxu0
    %v7430 = vadd.f32 %v7294, %v7429
    %v7431 = vpop.f32.mrb[0].mxu0
    %7432 = vmatprep.mubr.bf16.mxu0 0
    %7433 = vmatmul.mubr.bf16.gmra.mrb[0].mxu0 %v7248
    %v7434 = vpop.f32.mrb[0].mxu0
    %v7435 = vadd.f32 %v7294, %v7434
    %v7436 = vpop.f32.mrb[0].mxu0
    %v7437 = vpop.f32.mrb[0].mxu0
    %v7438 = vadd.f32 %v7294, %v7437
    %v7439 = vpop.f32.mrb[0].mxu0
    %7440 = vmatprep.mubr.bf16.mxu0 0
    %7441 = vmatmul.mubr.bf16.gmra.mrb[0].mxu0 %v7249
    %v7442 = vpop.f32.mrb[0].mxu0
    %v7443 = vadd.f32 %v7294, %v7442
    %v7444 = vpop.f32.mrb[0].mxu0
    %v7445 = vpop.f32.mrb[0].mxu0
    %v7446 = vadd.f32 %v7294, %v7445
    %v7447 = vpop.f32.mrb[0].mxu0
    %7448 = vmatprep.mubr.bf16.mxu0 0
    %7449 = vmatmul.mubr.bf16.gmra.mrb[0].mxu0 %v7250
    %v7450 = vpop.f32.mrb[0].mxu0
    %v7451 = vadd.f32 %v7294, %v7450
    %v7452 = vpop.f32.mrb[0].mxu0
    %v7453 = vpop.f32.mrb[0].mxu0
    %v7454 = vadd.f32 %v7294, %v7453
    %v7455 = vpop.f32.mrb[0].mxu0
    %7456 = vmatprep.mubr.bf16.mxu0 0
    %7457 = vmatmul.mubr.bf16.gmra.mrb[0].mxu0 %v7251
    %v7458 = vpop.f32.mrb[0].mxu0
    %v7459 = vadd.f32 %v7294, %v7458
    %v7460 = vpop.f32.mrb[0].mxu0
    %v7461 = vpop.f32.mrb[0].mxu0
    %v7462 = vadd.f32 %v7294, %v7461
    %v7463 = vpop.f32.mrb[0].mxu0
    %7464 = vmatprep.mubr.bf16.mxu0 0
    %7465 = vmatmul.mubr.bf16.gmra.mrb[0].mxu0 %v7252
    %v7466 = vpop.f32.mrb[0].mxu0
    %v7467 = vadd.f32 %v7294, %v7466
    %v7468 = vpop.f32.mrb[0].mxu0
    %v7469 = vpop.f32.mrb[0].mxu0
    %v7470 = vadd.f32 %v7294, %v7469
    %v7471 = vpop.f32.mrb[0].mxu0
    %7472 = vmatprep.mubr.bf16.mxu0 0
    %7473 = vmatmul.mubr.bf16.gmra.mrb[0].mxu0 %v7253
    %v7474 = vpop.f32.mrb[0].mxu0
    %v7475 = vadd.f32 %v7294, %v7474
    %v7476 = vpop.f32.mrb[0].mxu0
    %v7477 = vpop.f32.mrb[0].mxu0
    %v7478 = vadd.f32 %v7294, %v7477
    %v7479 = vpop.f32.mrb[0].mxu0
    %7480 = vmatprep.mubr.bf16.mxu0 0
    %7481 = vmatmul.mubr.bf16.gmra.mrb[0].mxu0 %v7254
    %v7482 = vpop.f32.mrb[0].mxu0
    %v7483 = vadd.f32 %v7294, %v7482
    %v7484 = vpop.f32.mrb[0].mxu0
    %v7485 = vpop.f32.mrb[0].mxu0
    %v7486 = vadd.f32 %v7294, %v7485
    %v7487 = vpop.f32.mrb[0].mxu0
    %7488 = vmatprep.mubr.bf16.mxu0 0
    %7489 = vmatmul.mubr.bf16.gmra.mrb[0].mxu0 %v7255
    %v7490 = vpop.f32.mrb[0].mxu0
    %v7491 = vadd.f32 %v7294, %v7490
    %v7492 = vpop.f32.mrb[0].mxu0
    %v7493 = vpop.f32.mrb[0].mxu0
    %v7494 = vadd.f32 %v7294, %v7493
    %v7495 = vpop.f32.mrb[0].mxu0
    %7496 = vmatprep.mubr.bf16.mxu0 0
    %7497 = vmatmul.mubr.bf16.gmra.mrb[0].mxu0 %v7256
    %v7498 = vpop.f32.mrb[0].mxu0
    %v7499 = vadd.f32 %v7294, %v7498
    %v7500 = vpop.f32.mrb[0].mxu0
    %v7501 = vpop.f32.mrb[0].mxu0
    %v7502 = vadd.f32 %v7294, %v7501
    %v7503 = vpop.f32.mrb[0].mxu0
    %7504 = vmatprep.mubr.bf16.mxu0 0
    %7505 = vmatmul.mubr.bf16.gmra.mrb[0].mxu0 %v7257
    %v7506 = vpop.f32.mrb[0].mxu0
    %v7507 = vadd.f32 %v7294, %v7506
    %v7508 = vpop.f32.mrb[0].mxu0
    %v7509 = vpop.f32.mrb[0].mxu0
    %v7510 = vadd.f32 %v7294, %v7509
    %v7511 = vpop.f32.mrb[0].mxu0
    %7512 = vmatprep.mubr.bf16.mxu0 0
    %7513 = vmatmul.mubr.bf16.gmra.mrb[0].mxu0 %v7258
    %v7514 = vpop.f32.mrb[0].mxu0
    %v7515 = vadd.f32 %v7294, %v7514
    %v7516 = vpop.f32.mrb[0].mxu0
    %v7517 = vpop.f32.mrb[0].mxu0
    %v7518 = vadd.f32 %v7294, %v7517
    %v7519 = vpop.f32.mrb[0].mxu0
    %7520 = vmatprep.mubr.bf16.mxu0 0
    %7521 = vmatmul.mubr.bf16.gmra.mrb[0].mxu0 %v7259
    %v7522 = vpop.f32.mrb[0].mxu0
    %v7523 = vadd.f32 %v7294, %v7522
    %v7524 = vpop.f32.mrb[0].mxu0
    %v7525 = vpop.f32.mrb[0].mxu0
    %v7526 = vadd.f32 %v7294, %v7525
    %v7527 = vpop.f32.mrb[0].mxu0
    %7528 = vmatprep.mubr.bf16.mxu0 0
    %7529 = vmatmul.mubr.bf16.gmra.mrb[0].mxu0 %v7260
    %v7530 = vpop.f32.mrb[0].mxu0
    %v7531 = vadd.f32 %v7294, %v7530
    %v7532 = vpop.f32.mrb[0].mxu0
    %v7533 = vpop.f32.mrb[0].mxu0
    %v7534 = vadd.f32 %v7294, %v7533
    %v7535 = vpop.f32.mrb[0].mxu0
    %7536 = vmatprep.mubr.bf16.mxu0 0
    %7537 = vmatmul.mubr.bf16.gmra.mrb[0].mxu0 %v7261
    %v7538 = vpop.f32.mrb[0].mxu0
    %v7539 = vadd.f32 %v7294, %v7538
    %v7540 = vpop.f32.mrb[0].mxu0
    %v7541 = vpop.f32.mrb[0].mxu0
    %v7542 = vadd.f32 %v7294, %v7541
    %v7543 = vpop.f32.mrb[0].mxu0
    %7544 = vmatprep.mubr.bf16.mxu0 0
    %7545 = vmatmul.mubr.bf16.gmra.mrb[0].mxu0 %v7262
    %v7546 = vpop.f32.mrb[0].mxu0
    %v7547 = vadd.f32 %v7294, %v7546
    %v7548 = vpop.f32.mrb[0].mxu0
    %v7549 = vpop.f32.mrb[0].mxu0
    %v7550 = vadd.f32 %v7294, %v7549
    %v7551 = vpop.f32.mrb[0].mxu0
    %7552 = vmatprep.mubr.bf16.mxu0 0
    %7553 = vmatmul.mubr.bf16.gmra.mrb[0].mxu0 %v7263
    %v7554 = vpop.f32.mrb[0].mxu0
    %v7555 = vadd.f32 %v7294, %v7554
    %v7556 = vpop.f32.mrb[0].mxu0
    %v7557 = vpop.f32.mrb[0].mxu0
    %v7558 = vadd.f32 %v7294, %v7557
    %v7559 = vpop.f32.mrb[0].mxu0
    %7560 = vmatprep.mubr.bf16.mxu0 0
    %7561 = vmatmul.mubr.bf16.gmra.mrb[0].mxu0 %v7264
    %v7562 = vpop.f32.mrb[0].mxu0
    %v7563 = vadd.f32 %v7294, %v7562
    %v7564 = vpop.f32.mrb[0].mxu0
    %v7565 = vpop.f32.mrb[0].mxu0
    %v7566 = vadd.f32 %v7294, %v7565
    %v7567 = vpop.f32.mrb[0].mxu0
    %7568 = vmatprep.mubr.bf16.mxu0 0
    %7569 = vmatmul.mubr.bf16.gmra.mrb[0].mxu0 %v7265
    %v7570 = vpop.f32.mrb[0].mxu0
    %v7571 = vadd.f32 %v7294, %v7570
    %v7572 = vpop.f32.mrb[0].mxu0
    %v7573 = vpop.f32.mrb[0].mxu0
    %v7574 = vadd.f32 %v7294, %v7573
    %v7575 = vpop.f32.mrb[0].mxu0
    %7576 = vmatprep.mubr.bf16.mxu0 0
    %7577 = vmatmul.mubr.bf16.gmra.mrb[0].mxu0 %v7266
    %v7578 = vpop.f32.mrb[0].mxu0
    %v7579 = vadd.f32 %v7294, %v7578
    %v7580 = vpop.f32.mrb[0].mxu0
    %v7581 = vpop.f32.mrb[0].mxu0
    %v7582 = vadd.f32 %v7294, %v7581
    %v7583 = vpop.f32.mrb[0].mxu0
    %7584 = vmatprep.mubr.bf16.mxu0 0
    %7585 = vmatmul.mubr.bf16.gmra.mrb[0].mxu0 %v7267
    %v7586 = vpop.f32.mrb[0].mxu0
    %v7587 = vadd.f32 %v7294, %v7586
    %v7588 = vpop.f32.mrb[0].mxu0
    %v7589 = vpop.f32.mrb[0].mxu0
    %v7590 = vadd.f32 %v7294, %v7589
    %v7591 = vpop.f32.mrb[0].mxu0
    %7592 = vmatprep.mubr.bf16.mxu0 0
    %7593 = vmatmul.mubr.bf16.gmra.mrb[0].mxu0 %v7268
    %v7594 = vpop.f32.mrb[0].mxu0
    %v7595 = vadd.f32 %v7294, %v7594
    %v7596 = vpop.f32.mrb[0].mxu0
    %v7597 = vpop.f32.mrb[0].mxu0
    %v7598 = vadd.f32 %v7294, %v7597
    %v7599 = vpop.f32.mrb[0].mxu0
    %7600 = vmatprep.mubr.bf16.mxu0 0
    %7601 = vmatmul.mubr.bf16.gmra.mrb[0].mxu0 %v7269
    %v7602 = vpop.f32.mrb[0].mxu0
    %v7603 = vadd.f32 %v7294, %v7602
    %v7604 = vpop.f32.mrb[0].mxu0
    %v7605 = vpop.f32.mrb[0].mxu0
    %v7606 = vadd.f32 %v7294, %v7605
    %v7607 = vpop.f32.mrb[0].mxu0
    %7608 = vmatprep.mubr.bf16.mxu0 0
    %7609 = vmatmul.mubr.bf16.gmra.mrb[0].mxu0 %v7270
    %v7610 = vpop.f32.mrb[0].mxu0
    %v7611 = vadd.f32 %v7294, %v7610
    %v7612 = vpop.f32.mrb[0].mxu0
    %v7613 = vpop.f32.mrb[0].mxu0
    %v7614 = vadd.f32 %v7294, %v7613
    %v7615 = vpop.f32.mrb[0].mxu0
    %7616 = vmatprep.mubr.bf16.mxu0 0
    %7617 = vmatmul.mubr.bf16.gmra.mrb[0].mxu0 %v7271
    %v7618 = vpop.f32.mrb[0].mxu0
    %v7619 = vadd.f32 %v7294, %v7618
    %v7620 = vpop.f32.mrb[0].mxu0
    %v7621 = vpop.f32.mrb[0].mxu0
    %v7622 = vadd.f32 %v7294, %v7621
    %v7623 = vpop.f32.mrb[0].mxu0
    %7624 = vmatprep.mubr.bf16.mxu0 0
    %7625 = vmatmul.mubr.bf16.gmra.mrb[0].mxu0 %v7272
    %v7626 = vpop.f32.mrb[0].mxu0
    %v7627 = vadd.f32 %v7294, %v7626
    %v7628 = vpop.f32.mrb[0].mxu0
    %v7629 = vpop.f32.mrb[0].mxu0
    %v7630 = vadd.f32 %v7294, %v7629
    %v7631 = vpop.f32.mrb[0].mxu0
    %7632 = vdwg.mxu0
    %v7633 = vld [vmem:[#allocation4] sm:$0xf]
    %v7634 = vld [vmem:[#allocation4 + $0x4] sm:$0xf]
    %v7635 = vld [vmem:[#allocation4 + $0x8] sm:$0xf]
    %v7636 = vld [vmem:[#allocation4 + $0xc] sm:$0xf]
    %v7637 = vld [vmem:[#allocation4 + $0x10] sm:$0xf]
    %v7638 = vld [vmem:[#allocation4 + $0x14] sm:$0xf]
    %v7639 = vld [vmem:[#allocation4 + $0x18] sm:$0xf]
    %v7640 = vld [vmem:[#allocation4 + $0x1c] sm:$0xf]
    %v7641 = vld [vmem:[#allocation4 + $0x20] sm:$0xf]
    %v7642 = vld [vmem:[#allocation4 + $0x24] sm:$0xf]
    %v7643 = vld [vmem:[#allocation4 + $0x28] sm:$0xf]
    %v7644 = vld [vmem:[#allocation4 + $0x2c] sm:$0xf]
    %v7645 = vld [vmem:[#allocation4 + $0x30] sm:$0xf]
    %v7646 = vld [vmem:[#allocation4 + $0x34] sm:$0xf]
    %v7647 = vld [vmem:[#allocation4 + $0x38] sm:$0xf]
    %v7648 = vld [vmem:[#allocation4 + $0x3c] sm:$0xf]
    %v7649 = vld [vmem:[#allocation4 + $0x40] sm:$0xf]
    %v7650 = vld [vmem:[#allocation4 + $0x44] sm:$0xf]
    %v7651 = vld [vmem:[#allocation4 + $0x48] sm:$0xf]
    %v7652 = vld [vmem:[#allocation4 + $0x4c] sm:$0xf]
    %v7653 = vld [vmem:[#allocation4 + $0x50] sm:$0xf]
    %v7654 = vld [vmem:[#allocation4 + $0x54] sm:$0xf]
    %v7655 = vld [vmem:[#allocation4 + $0x58] sm:$0xf]
    %v7656 = vld [vmem:[#allocation4 + $0x5c] sm:$0xf]
    %v7657 = vld [vmem:[#allocation4 + $0x60] sm:$0xf]
    %v7658 = vld [vmem:[#allocation4 + $0x64] sm:$0xf]
    %v7659 = vld [vmem:[#allocation4 + $0x68] sm:$0xf]
    %v7660 = vld [vmem:[#allocation4 + $0x6c] sm:$0xf]
    %v7661 = vld [vmem:[#allocation4 + $0x70] sm:$0xf]
    %v7662 = vld [vmem:[#allocation4 + $0x74] sm:$0xf]
    %v7663 = vld [vmem:[#allocation4 + $0x78] sm:$0xf]
    %v7664 = vld [vmem:[#allocation4 + $0x7c] sm:$0xf]
    %v7665 = vld [vmem:[#allocation4 + $0x80] sm:$0xf]
    %v7666 = vld [vmem:[#allocation4 + $0x84] sm:$0xf]
    %v7667 = vld [vmem:[#allocation4 + $0x88] sm:$0xf]
    %v7668 = vld [vmem:[#allocation4 + $0x8c] sm:$0xf]
    %v7669 = vld [vmem:[#allocation4 + $0x90] sm:$0xf]
    %v7670 = vld [vmem:[#allocation4 + $0x94] sm:$0xf]
    %v7671 = vld [vmem:[#allocation4 + $0x98] sm:$0xf]
    %v7672 = vld [vmem:[#allocation4 + $0x9c] sm:$0xf]
    %v7673 = vld [vmem:[#allocation4 + $0xa0] sm:$0xf]
    %v7674 = vld [vmem:[#allocation4 + $0xa4] sm:$0xf]
    %v7675 = vld [vmem:[#allocation4 + $0xa8] sm:$0xf]
    %v7676 = vld [vmem:[#allocation4 + $0xac] sm:$0xf]
    %v7677 = vld [vmem:[#allocation4 + $0xb0] sm:$0xf]
    %v7678 = vld [vmem:[#allocation4 + $0xb4] sm:$0xf]
    %v7679 = vld [vmem:[#allocation4 + $0xb8] sm:$0xf]
    %v7680 = vld [vmem:[#allocation4 + $0xbc] sm:$0xf]
    %v7681 = vld [vmem:[#allocation4 + $0xc0] sm:$0xf]
    %v7682 = vld [vmem:[#allocation4 + $0xc4] sm:$0xf]
    %v7683 = vld [vmem:[#allocation4 + $0xc8] sm:$0xf]
    %v7684 = vld [vmem:[#allocation4 + $0xcc] sm:$0xf]
    %v7685 = vld [vmem:[#allocation4 + $0xd0] sm:$0xf]
    %v7686 = vld [vmem:[#allocation4 + $0xd4] sm:$0xf]
    %v7687 = vld [vmem:[#allocation4 + $0xd8] sm:$0xf]
    %v7688 = vld [vmem:[#allocation4 + $0xdc] sm:$0xf]
    %v7689 = vld [vmem:[#allocation4 + $0xe0] sm:$0xf]
    %v7690 = vld [vmem:[#allocation4 + $0xe4] sm:$0xf]
    %v7691 = vld [vmem:[#allocation4 + $0xe8] sm:$0xf]
    %v7692 = vld [vmem:[#allocation4 + $0xec] sm:$0xf]
    %v7693 = vld [vmem:[#allocation4 + $0xf0] sm:$0xf]
    %v7694 = vld [vmem:[#allocation4 + $0xf4] sm:$0xf]
    %v7695 = vld [vmem:[#allocation4 + $0xf8] sm:$0xf]
    %v7696 = vld [vmem:[#allocation4 + $0xfc] sm:$0xf]
    %v7697 = vunpack.c.l.bf16 %v7633
    %v7698 = vunpack.c.l.bf16 %v7634
    %v7699 = vunpack.c.l.bf16 %v7635
    %v7700 = vunpack.c.l.bf16 %v7636
    %v7701 = vunpack.c.l.bf16 %v7637
    %v7702 = vunpack.c.l.bf16 %v7638
    %v7703 = vunpack.c.l.bf16 %v7639
    %v7704 = vunpack.c.l.bf16 %v7640
    %v7705 = vunpack.c.l.bf16 %v7641
    %v7706 = vunpack.c.l.bf16 %v7642
    %v7707 = vunpack.c.l.bf16 %v7643
    %v7708 = vunpack.c.l.bf16 %v7644
    %v7709 = vunpack.c.l.bf16 %v7645
    %v7710 = vunpack.c.l.bf16 %v7646
    %v7711 = vunpack.c.l.bf16 %v7647
    %v7712 = vunpack.c.l.bf16 %v7648
    %v7713 = vunpack.c.l.bf16 %v7649
    %v7714 = vunpack.c.l.bf16 %v7650
    %v7715 = vunpack.c.l.bf16 %v7651
    %v7716 = vunpack.c.l.bf16 %v7652
    %v7717 = vunpack.c.l.bf16 %v7653
    %v7718 = vunpack.c.l.bf16 %v7654
    %v7719 = vunpack.c.l.bf16 %v7655
    %v7720 = vunpack.c.l.bf16 %v7656
    %v7721 = vunpack.c.l.bf16 %v7657
    %v7722 = vunpack.c.l.bf16 %v7658
    %v7723 = vunpack.c.l.bf16 %v7659
    %v7724 = vunpack.c.l.bf16 %v7660
    %v7725 = vunpack.c.l.bf16 %v7661
    %v7726 = vunpack.c.l.bf16 %v7662
    %v7727 = vunpack.c.l.bf16 %v7663
    %v7728 = vunpack.c.l.bf16 %v7664
    %v7729 = vunpack.c.l.bf16 %v7665
    %v7730 = vunpack.c.l.bf16 %v7666
    %v7731 = vunpack.c.l.bf16 %v7667
    %v7732 = vunpack.c.l.bf16 %v7668
    %v7733 = vunpack.c.l.bf16 %v7669
    %v7734 = vunpack.c.l.bf16 %v7670
    %v7735 = vunpack.c.l.bf16 %v7671
    %v7736 = vunpack.c.l.bf16 %v7672
    %v7737 = vunpack.c.l.bf16 %v7673
    %v7738 = vunpack.c.l.bf16 %v7674
    %v7739 = vunpack.c.l.bf16 %v7675
    %v7740 = vunpack.c.l.bf16 %v7676
    %v7741 = vunpack.c.l.bf16 %v7677
    %v7742 = vunpack.c.l.bf16 %v7678
    %v7743 = vunpack.c.l.bf16 %v7679
    %v7744 = vunpack.c.l.bf16 %v7680
    %v7745 = vunpack.c.l.bf16 %v7681
    %v7746 = vunpack.c.l.bf16 %v7682
    %v7747 = vunpack.c.l.bf16 %v7683
    %v7748 = vunpack.c.l.bf16 %v7684
    %v7749 = vunpack.c.l.bf16 %v7685
    %v7750 = vunpack.c.l.bf16 %v7686
    %v7751 = vunpack.c.l.bf16 %v7687
    %v7752 = vunpack.c.l.bf16 %v7688
    %v7753 = vunpack.c.l.bf16 %v7689
    %v7754 = vunpack.c.l.bf16 %v7690
    %v7755 = vunpack.c.l.bf16 %v7691
    %v7756 = vunpack.c.l.bf16 %v7692
    %v7757 = vunpack.c.l.bf16 %v7693
    %v7758 = vunpack.c.l.bf16 %v7694
    %v7759 = vunpack.c.l.bf16 %v7695
    %v7760 = vunpack.c.l.bf16 %v7696
    %v7761 = vadd.f32 %v7379, %v7697
    %v7762 = vadd.f32 %v7382, %v7698
    %v7763 = vadd.f32 %v7387, %v7699
    %v7764 = vadd.f32 %v7390, %v7700
    %v7765 = vadd.f32 %v7395, %v7701
    %v7766 = vadd.f32 %v7398, %v7702
    %v7767 = vadd.f32 %v7403, %v7703
    %v7768 = vadd.f32 %v7406, %v7704
    %v7769 = vadd.f32 %v7411, %v7705
    %v7770 = vadd.f32 %v7414, %v7706
    %v7771 = vadd.f32 %v7419, %v7707
    %v7772 = vadd.f32 %v7422, %v7708
    %v7773 = vadd.f32 %v7427, %v7709
    %v7774 = vadd.f32 %v7430, %v7710
    %v7775 = vadd.f32 %v7435, %v7711
    %v7776 = vadd.f32 %v7438, %v7712
    %v7777 = vadd.f32 %v7443, %v7713
    %v7778 = vadd.f32 %v7446, %v7714
    %v7779 = vadd.f32 %v7451, %v7715
    %v7780 = vadd.f32 %v7454, %v7716
    %v7781 = vadd.f32 %v7459, %v7717
    %v7782 = vadd.f32 %v7462, %v7718
    %v7783 = vadd.f32 %v7467, %v7719
    %v7784 = vadd.f32 %v7470, %v7720
    %v7785 = vadd.f32 %v7475, %v7721
    %v7786 = vadd.f32 %v7478, %v7722
    %v7787 = vadd.f32 %v7483, %v7723
    %v7788 = vadd.f32 %v7486, %v7724
    %v7789 = vadd.f32 %v7491, %v7725
    %v7790 = vadd.f32 %v7494, %v7726
    %v7791 = vadd.f32 %v7499, %v7727
    %v7792 = vadd.f32 %v7502, %v7728
    %v7793 = vadd.f32 %v7507, %v7729
    %v7794 = vadd.f32 %v7510, %v7730
    %v7795 = vadd.f32 %v7515, %v7731
    %v7796 = vadd.f32 %v7518, %v7732
    %v7797 = vadd.f32 %v7523, %v7733
    %v7798 = vadd.f32 %v7526, %v7734
    %v7799 = vadd.f32 %v7531, %v7735
    %v7800 = vadd.f32 %v7534, %v7736
    %v7801 = vadd.f32 %v7539, %v7737
    %v7802 = vadd.f32 %v7542, %v7738
    %v7803 = vadd.f32 %v7547, %v7739
    %v7804 = vadd.f32 %v7550, %v7740
    %v7805 = vadd.f32 %v7555, %v7741
    %v7806 = vadd.f32 %v7558, %v7742
    %v7807 = vadd.f32 %v7563, %v7743
    %v7808 = vadd.f32 %v7566, %v7744
    %v7809 = vadd.f32 %v7571, %v7745
    %v7810 = vadd.f32 %v7574, %v7746
    %v7811 = vadd.f32 %v7579, %v7747
    %v7812 = vadd.f32 %v7582, %v7748
    %v7813 = vadd.f32 %v7587, %v7749
    %v7814 = vadd.f32 %v7590, %v7750
    %v7815 = vadd.f32 %v7595, %v7751
    %v7816 = vadd.f32 %v7598, %v7752
    %v7817 = vadd.f32 %v7603, %v7753
    %v7818 = vadd.f32 %v7606, %v7754
    %v7819 = vadd.f32 %v7611, %v7755
    %v7820 = vadd.f32 %v7614, %v7756
    %v7821 = vadd.f32 %v7619, %v7757
    %v7822 = vadd.f32 %v7622, %v7758
    %v7823 = vadd.f32 %v7627, %v7759
    %v7824 = vadd.f32 %v7630, %v7760
    %v7825 = vpack.c.bf16 %v7762, %v7761
    %v7826 = vpack.c.bf16 %v7764, %v7763
    %v7827 = vpack.c.bf16 %v7766, %v7765
    %v7828 = vpack.c.bf16 %v7768, %v7767
    %v7829 = vpack.c.bf16 %v7770, %v7769
    %v7830 = vpack.c.bf16 %v7772, %v7771
    %v7831 = vpack.c.bf16 %v7774, %v7773
    %v7832 = vpack.c.bf16 %v7776, %v7775
    %v7833 = vpack.c.bf16 %v7778, %v7777
    %v7834 = vpack.c.bf16 %v7780, %v7779
    %v7835 = vpack.c.bf16 %v7782, %v7781
    %v7836 = vpack.c.bf16 %v7784, %v7783
    %v7837 = vpack.c.bf16 %v7786, %v7785
    %v7838 = vpack.c.bf16 %v7788, %v7787
    %v7839 = vpack.c.bf16 %v7790, %v7789
    %v7840 = vpack.c.bf16 %v7792, %v7791
    %v7841 = vpack.c.bf16 %v7794, %v7793
    %v7842 = vpack.c.bf16 %v7796, %v7795
    %v7843 = vpack.c.bf16 %v7798, %v7797
    %v7844 = vpack.c.bf16 %v7800, %v7799
    %v7845 = vpack.c.bf16 %v7802, %v7801
    %v7846 = vpack.c.bf16 %v7804, %v7803
    %v7847 = vpack.c.bf16 %v7806, %v7805
    %v7848 = vpack.c.bf16 %v7808, %v7807
    %v7849 = vpack.c.bf16 %v7810, %v7809
    %v7850 = vpack.c.bf16 %v7812, %v7811
    %v7851 = vpack.c.bf16 %v7814, %v7813
    %v7852 = vpack.c.bf16 %v7816, %v7815
    %v7853 = vpack.c.bf16 %v7818, %v7817
    %v7854 = vpack.c.bf16 %v7820, %v7819
    %v7855 = vpack.c.bf16 %v7822, %v7821
    %v7856 = vpack.c.bf16 %v7824, %v7823
    %v7889 = vunpack.c.l.b16 %v7825
    %v7890 = vunpack.c.h.b16 %v7825
    %v7891 = vunpack.c.l.b16 %v7826
    %v7892 = vunpack.c.h.b16 %v7826
    %v7893 = vunpack.c.l.b16 %v7827
    %v7894 = vunpack.c.h.b16 %v7827
    %v7895 = vunpack.c.l.b16 %v7828
    %v7896 = vunpack.c.h.b16 %v7828
    %v7897 = vunpack.c.l.b16 %v7829
    %v7898 = vunpack.c.h.b16 %v7829
    %v7899 = vunpack.c.l.b16 %v7830
    %v7900 = vunpack.c.h.b16 %v7830
    %v7901 = vunpack.c.l.b16 %v7831
    %v7902 = vunpack.c.h.b16 %v7831
    %v7903 = vunpack.c.l.b16 %v7832
    %v7904 = vunpack.c.h.b16 %v7832
    %v7905 = vunpack.c.l.b16 %v7833
    %v7906 = vunpack.c.h.b16 %v7833
    %v7907 = vunpack.c.l.b16 %v7834
    %v7908 = vunpack.c.h.b16 %v7834
    %v7909 = vunpack.c.l.b16 %v7835
    %v7910 = vunpack.c.h.b16 %v7835
    %v7911 = vunpack.c.l.b16 %v7836
    %v7912 = vunpack.c.h.b16 %v7836
    %v7913 = vunpack.c.l.b16 %v7837
    %v7914 = vunpack.c.h.b16 %v7837
    %v7915 = vunpack.c.l.b16 %v7838
    %v7916 = vunpack.c.h.b16 %v7838
    %v7917 = vunpack.c.l.b16 %v7839
    %v7918 = vunpack.c.h.b16 %v7839
    %v7919 = vunpack.c.l.b16 %v7840
    %v7920 = vunpack.c.h.b16 %v7840
    %v7921 = vunpack.c.l.b16 %v7841
    %v7922 = vunpack.c.h.b16 %v7841
    %v7923 = vunpack.c.l.b16 %v7842
    %v7924 = vunpack.c.h.b16 %v7842
    %v7925 = vunpack.c.l.b16 %v7843
    %v7926 = vunpack.c.h.b16 %v7843
    %v7927 = vunpack.c.l.b16 %v7844
    %v7928 = vunpack.c.h.b16 %v7844
    %v7929 = vunpack.c.l.b16 %v7845
    %v7930 = vunpack.c.h.b16 %v7845
    %v7931 = vunpack.c.l.b16 %v7846
    %v7932 = vunpack.c.h.b16 %v7846
    %v7933 = vunpack.c.l.b16 %v7847
    %v7934 = vunpack.c.h.b16 %v7847
    %v7935 = vunpack.c.l.b16 %v7848
    %v7936 = vunpack.c.h.b16 %v7848
    %v7937 = vunpack.c.l.b16 %v7849
    %v7938 = vunpack.c.h.b16 %v7849
    %v7939 = vunpack.c.l.b16 %v7850
    %v7940 = vunpack.c.h.b16 %v7850
    %v7941 = vunpack.c.l.b16 %v7851
    %v7942 = vunpack.c.h.b16 %v7851
    %v7943 = vunpack.c.l.b16 %v7852
    %v7944 = vunpack.c.h.b16 %v7852
    %v7945 = vunpack.c.l.b16 %v7853
    %v7946 = vunpack.c.h.b16 %v7853
    %v7947 = vunpack.c.l.b16 %v7854
    %v7948 = vunpack.c.h.b16 %v7854
    %v7949 = vunpack.c.l.b16 %v7855
    %v7950 = vunpack.c.h.b16 %v7855
    %v7951 = vunpack.c.l.b16 %v7856
    %v7952 = vunpack.c.h.b16 %v7856
    %v7953 = vpack.c.b16 %v7889, %v7889
    %v7954 = vpack.c.b16 %v7890, %v7890
    %v7955 = vpack.c.b16 %v7891, %v7891
    %v7956 = vpack.c.b16 %v7892, %v7892
    %v7957 = vpack.c.b16 %v7893, %v7893
    %v7958 = vpack.c.b16 %v7894, %v7894
    %v7959 = vpack.c.b16 %v7895, %v7895
    %v7960 = vpack.c.b16 %v7896, %v7896
    %v7961 = vpack.c.b16 %v7897, %v7897
    %v7962 = vpack.c.b16 %v7898, %v7898
    %v7963 = vpack.c.b16 %v7899, %v7899
    %v7964 = vpack.c.b16 %v7900, %v7900
    %v7965 = vpack.c.b16 %v7901, %v7901
    %v7966 = vpack.c.b16 %v7902, %v7902
    %v7967 = vpack.c.b16 %v7903, %v7903
    %v7968 = vpack.c.b16 %v7904, %v7904
    %v7969 = vpack.c.b16 %v7905, %v7905
    %v7970 = vpack.c.b16 %v7906, %v7906
    %v7971 = vpack.c.b16 %v7907, %v7907
    %v7972 = vpack.c.b16 %v7908, %v7908
    %v7973 = vpack.c.b16 %v7909, %v7909
    %v7974 = vpack.c.b16 %v7910, %v7910
    %v7975 = vpack.c.b16 %v7911, %v7911
    %v7976 = vpack.c.b16 %v7912, %v7912
    %v7977 = vpack.c.b16 %v7913, %v7913
    %v7978 = vpack.c.b16 %v7914, %v7914
    %v7979 = vpack.c.b16 %v7915, %v7915
    %v7980 = vpack.c.b16 %v7916, %v7916
    %v7981 = vpack.c.b16 %v7917, %v7917
    %v7982 = vpack.c.b16 %v7918, %v7918
    %v7983 = vpack.c.b16 %v7919, %v7919
    %v7984 = vpack.c.b16 %v7920, %v7920
    %v7985 = vpack.c.b16 %v7921, %v7921
    %v7986 = vpack.c.b16 %v7922, %v7922
    %v7987 = vpack.c.b16 %v7923, %v7923
    %v7988 = vpack.c.b16 %v7924, %v7924
    %v7989 = vpack.c.b16 %v7925, %v7925
    %v7990 = vpack.c.b16 %v7926, %v7926
    %v7991 = vpack.c.b16 %v7927, %v7927
    %v7992 = vpack.c.b16 %v7928, %v7928
    %v7993 = vpack.c.b16 %v7929, %v7929
    %v7994 = vpack.c.b16 %v7930, %v7930
    %v7995 = vpack.c.b16 %v7931, %v7931
    %v7996 = vpack.c.b16 %v7932, %v7932
    %v7997 = vpack.c.b16 %v7933, %v7933
    %v7998 = vpack.c.b16 %v7934, %v7934
    %v7999 = vpack.c.b16 %v7935, %v7935
    %v8000 = vpack.c.b16 %v7936, %v7936
    %v8001 = vpack.c.b16 %v7937, %v7937
    %v8002 = vpack.c.b16 %v7938, %v7938
    %v8003 = vpack.c.b16 %v7939, %v7939
    %v8004 = vpack.c.b16 %v7940, %v7940
    %v8005 = vpack.c.b16 %v7941, %v7941
    %v8006 = vpack.c.b16 %v7942, %v7942
    %v8007 = vpack.c.b16 %v7943, %v7943
    %v8008 = vpack.c.b16 %v7944, %v7944
    %v8009 = vpack.c.b16 %v7945, %v7945
    %v8010 = vpack.c.b16 %v7946, %v7946
    %v8011 = vpack.c.b16 %v7947, %v7947
    %v8012 = vpack.c.b16 %v7948, %v7948
    %v8013 = vpack.c.b16 %v7949, %v7949
    %v8014 = vpack.c.b16 %v7950, %v7950
    %v8015 = vpack.c.b16 %v7951, %v7951
    %v8016 = vpack.c.b16 %v7952, %v7952
    %8081 = vst [vmem:[#allocation15] sm:$0xf] %v7953
    %8082 = vst [vmem:[#allocation15 + $0x4] sm:$0xf] %v7954
    %8083 = vst [vmem:[#allocation15 + $0x8] sm:$0xf] %v7955
    %8084 = vst [vmem:[#allocation15 + $0xc] sm:$0xf] %v7956
    %8085 = vst [vmem:[#allocation15 + $0x10] sm:$0xf] %v7957
    %8086 = vst [vmem:[#allocation15 + $0x14] sm:$0xf] %v7958
    %8087 = vst [vmem:[#allocation15 + $0x18] sm:$0xf] %v7959
    %8088 = vst [vmem:[#allocation15 + $0x1c] sm:$0xf] %v7960
    %8089 = vst [vmem:[#allocation15 + $0x20] sm:$0xf] %v7961
    %8090 = vst [vmem:[#allocation15 + $0x24] sm:$0xf] %v7962
    %8091 = vst [vmem:[#allocation15 + $0x28] sm:$0xf] %v7963
    %8092 = vst [vmem:[#allocation15 + $0x2c] sm:$0xf] %v7964
    %8093 = vst [vmem:[#allocation15 + $0x30] sm:$0xf] %v7965
    %8094 = vst [vmem:[#allocation15 + $0x34] sm:$0xf] %v7966
    %8095 = vst [vmem:[#allocation15 + $0x38] sm:$0xf] %v7967
    %8096 = vst [vmem:[#allocation15 + $0x3c] sm:$0xf] %v7968
    %8097 = vst [vmem:[#allocation15 + $0x40] sm:$0xf] %v7969
    %8098 = vst [vmem:[#allocation15 + $0x44] sm:$0xf] %v7970
    %8099 = vst [vmem:[#allocation15 + $0x48] sm:$0xf] %v7971
    %8100 = vst [vmem:[#allocation15 + $0x4c] sm:$0xf] %v7972
    %8101 = vst [vmem:[#allocation15 + $0x50] sm:$0xf] %v7973
    %8102 = vst [vmem:[#allocation15 + $0x54] sm:$0xf] %v7974
    %8103 = vst [vmem:[#allocation15 + $0x58] sm:$0xf] %v7975
    %8104 = vst [vmem:[#allocation15 + $0x5c] sm:$0xf] %v7976
    %8105 = vst [vmem:[#allocation15 + $0x60] sm:$0xf] %v7977
    %8106 = vst [vmem:[#allocation15 + $0x64] sm:$0xf] %v7978
    %8107 = vst [vmem:[#allocation15 + $0x68] sm:$0xf] %v7979
    %8108 = vst [vmem:[#allocation15 + $0x6c] sm:$0xf] %v7980
    %8109 = vst [vmem:[#allocation15 + $0x70] sm:$0xf] %v7981
    %8110 = vst [vmem:[#allocation15 + $0x74] sm:$0xf] %v7982
    %8111 = vst [vmem:[#allocation15 + $0x78] sm:$0xf] %v7983
    %8112 = vst [vmem:[#allocation15 + $0x7c] sm:$0xf] %v7984
    %8113 = vst [vmem:[#allocation15 + $0x80] sm:$0xf] %v7985
    %8114 = vst [vmem:[#allocation15 + $0x84] sm:$0xf] %v7986
    %8115 = vst [vmem:[#allocation15 + $0x88] sm:$0xf] %v7987
    %8116 = vst [vmem:[#allocation15 + $0x8c] sm:$0xf] %v7988
    %8117 = vst [vmem:[#allocation15 + $0x90] sm:$0xf] %v7989
    %8118 = vst [vmem:[#allocation15 + $0x94] sm:$0xf] %v7990
    %8119 = vst [vmem:[#allocation15 + $0x98] sm:$0xf] %v7991
    %8120 = vst [vmem:[#allocation15 + $0x9c] sm:$0xf] %v7992
    %8121 = vst [vmem:[#allocation15 + $0xa0] sm:$0xf] %v7993
    %8122 = vst [vmem:[#allocation15 + $0xa4] sm:$0xf] %v7994
    %8123 = vst [vmem:[#allocation15 + $0xa8] sm:$0xf] %v7995
    %8124 = vst [vmem:[#allocation15 + $0xac] sm:$0xf] %v7996
    %8125 = vst [vmem:[#allocation15 + $0xb0] sm:$0xf] %v7997
    %8126 = vst [vmem:[#allocation15 + $0xb4] sm:$0xf] %v7998
    %8127 = vst [vmem:[#allocation15 + $0xb8] sm:$0xf] %v7999
    %8128 = vst [vmem:[#allocation15 + $0xbc] sm:$0xf] %v8000
    %8129 = vst [vmem:[#allocation15 + $0xc0] sm:$0xf] %v8001
    %8130 = vst [vmem:[#allocation15 + $0xc4] sm:$0xf] %v8002
    %8131 = vst [vmem:[#allocation15 + $0xc8] sm:$0xf] %v8003
    %8132 = vst [vmem:[#allocation15 + $0xcc] sm:$0xf] %v8004
    %8133 = vst [vmem:[#allocation15 + $0xd0] sm:$0xf] %v8005
    %8134 = vst [vmem:[#allocation15 + $0xd4] sm:$0xf] %v8006
    %8135 = vst [vmem:[#allocation15 + $0xd8] sm:$0xf] %v8007
    %8136 = vst [vmem:[#allocation15 + $0xdc] sm:$0xf] %v8008
    %8137 = vst [vmem:[#allocation15 + $0xe0] sm:$0xf] %v8009
    %8138 = vst [vmem:[#allocation15 + $0xe4] sm:$0xf] %v8010
    %8139 = vst [vmem:[#allocation15 + $0xe8] sm:$0xf] %v8011
    %8140 = vst [vmem:[#allocation15 + $0xec] sm:$0xf] %v8012
    %8141 = vst [vmem:[#allocation15 + $0xf0] sm:$0xf] %v8013
    %8142 = vst [vmem:[#allocation15 + $0xf4] sm:$0xf] %v8014
    %8143 = vst [vmem:[#allocation15 + $0xf8] sm:$0xf] %v8015
    %8144 = vst [vmem:[#allocation15 + $0xfc] sm:$0xf] %v8016
    // Predicated region
    $region70: #{tpu_custom_call.1} parent=1 // pred_check
      _
    $region71: #{tpu_custom_call.1} parent=1 // pred_check_branch
      %8146 = sbr.rel (0) target = $region73
    $region72: #{tpu_custom_call.1} parent=1 // pred_region
      %s8148 = ssub.s32 4096, 4096
      %8149 = vsyncadd [#allocation6], %s8148
      %s8150 = sshll.u32 [#allocation15], 4
      %s8151 = int_to_ptr.vmem [resolvable:$true] %s8150
      %8156 = dma.vmem_to_hbm [thread:$0]  %s8151, 4096, %s11, [#allocation6], 64, 64, 4
    $region73: #{tpu_custom_call.1} parent=1 // pred_fallthru
      _
    // Predicated region
    $region74: #{tpu_custom_call.1} parent=1 // pred_check
      _
    $region75: #{tpu_custom_call.1} parent=1 // pred_check_branch
      %8158 = sbr.rel (0) target = $region77
    $region76: #{tpu_custom_call.1} parent=1 // pred_region
      %8159 = dma.done [#allocation6], 4096
    $region77: #{tpu_custom_call.1} parent=1 // pred_fallthru
      _
    %8160 = vsyncpa [#allocation5], 1
    %8161 = vsyncpa [#allocation8], 1
    %8162 = vsyncpa [#allocation11], 1
    %8163 = vsyncpa [#allocation14], 1
    %8164 = vsyncpa [#allocation6], 1

</llo_original>
